<compile_context>
chip_gen: v6e
topology: v6e:2x2x1
jax: 0.10.0
libtpu: 0.0.40
codegen_flags: <defaults>
</compile_context>

<pallas_src>
import functools

import jax
import jax.numpy as jnp
from jax.experimental import pallas as pl
from jax.experimental.pallas import tpu as pltpu

BN_EPS = 1e-5


# --------------------------------------------------------------------------
# Pallas kernels
# --------------------------------------------------------------------------
def _mmT_kernel(w_ref, x_ref, b_ref, o_ref, *, relu):
    # w: (Cout, K) bf16, x: (K, tm) bf16, b: (Cout, 1) f32, o: (Cout, tm) f32
    acc = jnp.dot(w_ref[...], x_ref[...], preferred_element_type=jnp.float32)
    acc = acc + b_ref[...]
    if relu:
        acc = jnp.maximum(acc, 0.0)
    o_ref[...] = acc.astype(o_ref.dtype)


def _mmT_res_kernel(w_ref, x_ref, b_ref, r_ref, o_ref, *, relu):
    acc = jnp.dot(w_ref[...], x_ref[...], preferred_element_type=jnp.float32)
    acc = acc + b_ref[...] + r_ref[...]
    if relu:
        acc = jnp.maximum(acc, 0.0)
    o_ref[...] = acc.astype(o_ref.dtype)


def _pool_fc_kernel(x_ref, w_ref, b_ref, o_ref, *, inv_hw):
    # x: (C, N, H*W) f32, w: (10, C) f32, b: (10, 1) f32 -> o: (10, N) f32
    pooled = jnp.sum(x_ref[...], axis=2) * inv_hw                # (C, N)
    logits = jnp.dot(w_ref[...], pooled, preferred_element_type=jnp.float32)
    o_ref[...] = logits + b_ref[...]


# --------------------------------------------------------------------------
# Pallas wrappers
# --------------------------------------------------------------------------
def fused_matmul_t(wT, colsT, bias, residual=None, relu=False):
    """out^T = act(w^T @ cols^T + bias [+ residual]); lane-dense in M."""
    Cout, K = wT.shape
    M = colsT.shape[1]

    # Prefer one big tile; split into 1024-wide tiles when M >= 2048 so that
    # there are >=2 parallel grid steps (keeps both TensorCores busy on v7x).
    tm = M
    if M % 1024 == 0 and M // 1024 >= 2:
        tm = 1024
    grid = (M // tm,)

    in_specs = [
        pl.BlockSpec((Cout, K), lambda i: (0, 0)),
        pl.BlockSpec((K, tm), lambda i: (0, i)),
        pl.BlockSpec((Cout, 1), lambda i: (0, 0)),
    ]
    args = [wT, colsT, bias]

    if residual is not None:
        in_specs.append(pl.BlockSpec((Cout, tm), lambda i: (0, i)))
        args.append(residual.astype(jnp.float32))
        kernel = functools.partial(_mmT_res_kernel, relu=relu)
    else:
        kernel = functools.partial(_mmT_kernel, relu=relu)

    bytes_accessed = (wT.size * wT.dtype.itemsize
                      + colsT.size * colsT.dtype.itemsize
                      + Cout * M * 4
                      + (Cout * M * 4 if residual is not None else 0))
    cost = pl.CostEstimate(flops=2 * M * K * Cout, transcendentals=0,
                           bytes_accessed=int(bytes_accessed))

    return pl.pallas_call(
        kernel,
        out_shape=jax.ShapeDtypeStruct((Cout, M), jnp.float32),
        grid=grid,
        in_specs=in_specs,
        out_specs=pl.BlockSpec((Cout, tm), lambda i: (0, i)),
        compiler_params=pltpu.CompilerParams(dimension_semantics=("parallel",)),
        cost_estimate=cost,
    )(*args)


def pool_fc(h_cnhw, fc):
    """Fused global average pool + Linear(64, 10). Returns (N, 10)."""
    C, N, H, W = h_cnhw.shape
    hw = H * W
    x3 = h_cnhw.reshape(C, N, hw)
    kernel = functools.partial(_pool_fc_kernel, inv_hw=1.0 / hw)
    n_cls = fc["w"].shape[0]
    out_t = pl.pallas_call(
        kernel,
        out_shape=jax.ShapeDtypeStruct((n_cls, N), jnp.float32),
        in_specs=[pl.BlockSpec(memory_space=pltpu.MemorySpace.VMEM)] * 3,
        out_specs=pl.BlockSpec(memory_space=pltpu.MemorySpace.VMEM),
    )(x3, fc["w"], fc["bias"])
    return out_t.T                                   # (N, 10)


# --------------------------------------------------------------------------
# Conv glue: transposed im2col (channels-first) — compute goes to the kernel
# --------------------------------------------------------------------------
def im2col_t(x_cnhw, ksize, stride, padding):
    """x: (C, N, H, W) f32 -> cols^T: (k*k*C, N*Ho*Wo) bf16."""
    C, N, H, W = x_cnhw.shape
    if padding > 0:
        xp = jnp.pad(x_cnhw, ((0, 0), (0, 0),
                              (padding, padding), (padding, padding)))
    else:
        xp = x_cnhw
    Ho = (H + 2 * padding - ksize) // stride + 1
    Wo = (W + 2 * padding - ksize) // stride + 1
    taps = []
    for dh in range(ksize):
        for dw in range(ksize):
            taps.append(xp[:, :, dh:dh + stride * Ho:stride,
                           dw:dw + stride * Wo:stride])
    cols = jnp.stack(taps, axis=0)                       # (k*k, C, N, Ho, Wo)
    cols = cols.reshape(ksize * ksize * C, N * Ho * Wo)  # K-order: (dh, dw, c)
    return cols.astype(jnp.bfloat16), Ho, Wo


def conv_bn_act(x_cnhw, p, *, stride, relu, ksize, padding, residual=None):
    """Folded Conv+BN [+residual] [+ReLU]. x, residual, output: (C, N, H, W)."""
    Cout = p["wT"].shape[0]
    cols_t, Ho, Wo = im2col_t(x_cnhw, ksize, stride, padding)
    r = residual.reshape(Cout, -1) if residual is not None else None
    out = fused_matmul_t(p["wT"], cols_t, p["bias"], residual=r, relu=relu)
    N = x_cnhw.shape[1]
    return out.reshape(Cout, N, Ho, Wo)


def residual_block(x_cnhw, blk, stride):
    t = conv_bn_act(x_cnhw, blk["conv1"], stride=stride, relu=True,
                    ksize=3, padding=1)
    if "down" in blk:
        b = conv_bn_act(x_cnhw, blk["down"], stride=stride, relu=False,
                        ksize=1, padding=0)
    else:
        b = x_cnhw
    # second conv: BN + residual add + ReLU fused in the same kernel
    return conv_bn_act(t, blk["conv2"], stride=1, relu=True, ksize=3,
                       padding=1, residual=b)


# --------------------------------------------------------------------------
# Parameters: raw init (matches module shapes / kaiming fan-out), then a
# one-time fold (BN folding + weight transpose + bf16 cast) outside jit.
# --------------------------------------------------------------------------
def block_plan(scale=1):
    plan = []
    for _ in range(2 * scale):
        plan.append((16, 16, 1))
    for i in range(2 * scale):
        plan.append((16 if i == 0 else 32, 32, 2 if i == 0 else 1))
    for i in range(2 * scale):
        plan.append((32 if i == 0 else 64, 64, 2 if i == 0 else 1))
    return plan


def _conv_bn_params(key, cin, cout, k):
    fan_out = cout * k * k
    std = (2.0 / fan_out) ** 0.5
    w = jax.random.normal(key, (cout, cin, k, k), jnp.float32) * std
    return dict(
        w=w,
        b=jnp.zeros((cout,), jnp.float32),
        gamma=jnp.ones((cout,), jnp.float32),
        beta=jnp.zeros((cout,), jnp.float32),
        mean=jnp.zeros((cout,), jnp.float32),
        var=jnp.ones((cout,), jnp.float32),
    )


def init_net_params(key, scale=1):
    keys = iter(jax.random.split(key, 64))
    raw = {"stem": _conv_bn_params(next(keys), 3, 16, 3), "blocks": []}
    for cin, cout, stride in block_plan(scale):
        blk = {"conv1": _conv_bn_params(next(keys), cin, cout, 3),
               "conv2": _conv_bn_params(next(keys), cout, cout, 3)}
        if cin != cout or stride != 1:
            blk["down"] = _conv_bn_params(next(keys), cin, cout, 1)
        raw["blocks"].append(blk)
    raw["fc"] = {
        "w": jax.random.normal(next(keys), (10, 64), jnp.float32) * (1.0 / 64.0) ** 0.5,
        "b": jnp.zeros((10,), jnp.float32),
    }
    return raw


def fold_conv_bn(p):
    """Fold eval-mode BN into conv; return lane-friendly transposed weight."""
    cout = p["w"].shape[0]
    scale = p["gamma"] / jnp.sqrt(p["var"] + BN_EPS)                 # (Cout,)
    w_fold = p["w"] * scale[:, None, None, None]                     # (Cout,Cin,kh,kw)
    # K-order (dh, dw, cin) to match im2col_t
    wT = jnp.transpose(w_fold, (0, 2, 3, 1)).reshape(cout, -1).astype(jnp.bfloat16)
    bias = ((p["b"] - p["mean"]) * scale + p["beta"]).reshape(cout, 1)
    return dict(wT=wT, bias=bias.astype(jnp.float32))


def prepare_params(raw):
    prep = {"stem": fold_conv_bn(raw["stem"]), "blocks": []}
    for blk in raw["blocks"]:
        p = {"conv1": fold_conv_bn(blk["conv1"]),
             "conv2": fold_conv_bn(blk["conv2"])}
        if "down" in blk:
            p["down"] = fold_conv_bn(blk["down"])
        prep["blocks"].append(p)
    prep["fc"] = {"w": raw["fc"]["w"].astype(jnp.float32),
                  "bias": raw["fc"]["b"].reshape(-1, 1).astype(jnp.float32)}
    return prep


# --------------------------------------------------------------------------
# Forward pass  (returns (logits, stem_output) like the PyTorch module)
# --------------------------------------------------------------------------
def build_forward(scale=1):
    strides = tuple(int(s) for (_, _, s) in block_plan(scale))  # STATIC config

    def forward(x_nchw, params):
        x = jnp.transpose(x_nchw, (1, 0, 2, 3))            # NCHW -> (C,N,H,W)
        s = conv_bn_act(x, params["stem"], stride=1, relu=True,
                        ksize=3, padding=1)
        h = s
        for blk, stride in zip(params["blocks"], strides):
            h = residual_block(h, blk, stride)
        logits = pool_fc(h, params["fc"])                  # (N, 10)
        s_nchw = jnp.transpose(s, (1, 0, 2, 3))            # back to NCHW
        return logits, s_nchw

    return jax.jit(forward)


if __name__ == "__main__":
    key = jax.random.PRNGKey(0)
    pkey, xkey = jax.random.split(key)

    raw = init_net_params(pkey, scale=1)
    params = prepare_params(raw)        # BN fold / transposes hoisted, run once

    # CIFAR-like input: batch=8, channels=3 (stem requirement), 16x16 spatial
    # (batch 8 keeps every matmul's M a multiple of 128 -> lane-dense stores)
    x = jax.random.normal(xkey, (8, 3, 16, 16), jnp.float32)

    fwd = build_forward(scale=1)
    logits, stem_out = fwd(x, params)
    jax.block_until_ready((logits, stem_out))

    assert logits.shape == (8, 10) and logits.dtype == jnp.float32
    assert stem_out.shape == (8, 16, 16, 16) and stem_out.dtype == jnp.float32
    assert bool(jnp.all(jnp.isfinite(logits)))
    assert bool(jnp.all(jnp.isfinite(stem_out)))
    print("KERNEL_OK")
</pallas_src>

<mosaic_0001>
module attributes {stable_mosaic.version = 11 : i64} {
  func.func @_mmT_kernel(%arg0: i32, %arg1: memref<16x27xbf16, #tpu.memory_space<vmem>>, %arg2: memref<27x1024xbf16, #tpu.memory_space<vmem>>, %arg3: memref<16x1xf32, #tpu.memory_space<vmem>>, %arg4: memref<16x1024xf32, #tpu.memory_space<vmem>>) attributes {dimension_semantics = [#tpu.dimension_semantics<parallel>], iteration_bounds = array<i64: 2>, scalar_prefetch = 0 : i64, scratch_operands = 0 : i64, tpu.core_type = #tpu.core_type<tc>, window_params = [{pipeline_mode = #tpu.pipeline_mode<synchronous>, transform_indices = @transform_0, window_bounds = array<i64: 16, 27>}, {transform_indices = @transform_1, window_bounds = array<i64: 27, 1024>}, {pipeline_mode = #tpu.pipeline_mode<synchronous>, transform_indices = @transform_2, window_bounds = array<i64: 16, 1>}, {transform_indices = @transform_3, window_bounds = array<i64: 16, 1024>}]} {
    %c0 = arith.constant 0 : index
    %c0_0 = arith.constant 0 : index
    %0 = vector.load %arg1[%c0, %c0_0] : memref<16x27xbf16, #tpu.memory_space<vmem>>, vector<16x27xbf16>
    %c0_1 = arith.constant 0 : index
    %c0_2 = arith.constant 0 : index
    %1 = vector.load %arg2[%c0_1, %c0_2] : memref<27x1024xbf16, #tpu.memory_space<vmem>>, vector<27x1024xbf16>
    %cst = arith.constant dense<0.000000e+00> : vector<16x1024xf32>
    %2 = tpu.matmul %0, %1, %cst {dimension_numbers = #tpu.dot_dimension_numbers<[1], [0], [0], [1], [0, 0, 1, 1], [], []>} : vector<16x27xbf16>, vector<27x1024xbf16>, vector<16x1024xf32> -> vector<16x1024xf32>
    %c0_3 = arith.constant 0 : index
    %c0_4 = arith.constant 0 : index
    %3 = vector.load %arg3[%c0_3, %c0_4] : memref<16x1xf32, #tpu.memory_space<vmem>>, vector<16x1xf32>
    %4 = vector.broadcast %3 : vector<16x1xf32> to vector<16x1024xf32>
    %5 = arith.addf %2, %4 : vector<16x1024xf32>
    %cst_5 = arith.constant 0.000000e+00 : f32
    %6 = vector.broadcast %cst_5 : f32 to vector<16x1024xf32>
    %7 = arith.maximumf %5, %6 : vector<16x1024xf32>
    %c0_6 = arith.constant 0 : index
    %c0_7 = arith.constant 0 : index
    %8 = vector.load %arg4[%c0_6, %c0_7] : memref<16x1024xf32, #tpu.memory_space<vmem>>, vector<16x1024xf32>
    tpu.vector_store %arg4[%c0_6, %c0_7], %7 {strides = array<i32>} : memref<16x1024xf32, #tpu.memory_space<vmem>>, vector<16x1024xf32>,
    return
  }
  func.func @transform_0(%arg0: i32) -> (i32, i32) {
    %c0_i32 = arith.constant 0 : i32
    %c0_i32_0 = arith.constant 0 : i32
    %c0_i32_1 = arith.constant 0 : i32
    return %c0_i32, %c0_i32_0 : i32, i32
  }
  func.func @transform_1(%arg0: i32) -> (i32, i32) {
    %c0_i32 = arith.constant 0 : i32
    %c0_i32_0 = arith.constant 0 : i32
    return %c0_i32, %arg0 : i32, i32
  }
  func.func @transform_2(%arg0: i32) -> (i32, i32) {
    %c0_i32 = arith.constant 0 : i32
    %c0_i32_0 = arith.constant 0 : i32
    %c0_i32_1 = arith.constant 0 : i32
    return %c0_i32, %c0_i32_0 : i32, i32
  }
  func.func @transform_3(%arg0: i32) -> (i32, i32) {
    %c0_i32 = arith.constant 0 : i32
    %c0_i32_0 = arith.constant 0 : i32
    return %c0_i32, %arg0 : i32, i32
  }
}

module attributes {stable_mosaic.version = 11 : i64} {
  func.func @_mmT_kernel(%arg0: i32, %arg1: memref<16x144xbf16, #tpu.memory_space<vmem>>, %arg2: memref<144x1024xbf16, #tpu.memory_space<vmem>>, %arg3: memref<16x1xf32, #tpu.memory_space<vmem>>, %arg4: memref<16x1024xf32, #tpu.memory_space<vmem>>) attributes {dimension_semantics = [#tpu.dimension_semantics<parallel>], iteration_bounds = array<i64: 2>, scalar_prefetch = 0 : i64, scratch_operands = 0 : i64, tpu.core_type = #tpu.core_type<tc>, window_params = [{pipeline_mode = #tpu.pipeline_mode<synchronous>, transform_indices = @transform_0, window_bounds = array<i64: 16, 144>}, {transform_indices = @transform_1, window_bounds = array<i64: 144, 1024>}, {pipeline_mode = #tpu.pipeline_mode<synchronous>, transform_indices = @transform_2, window_bounds = array<i64: 16, 1>}, {transform_indices = @transform_3, window_bounds = array<i64: 16, 1024>}]} {
    %c0 = arith.constant 0 : index
    %c0_0 = arith.constant 0 : index
    %0 = vector.load %arg1[%c0, %c0_0] : memref<16x144xbf16, #tpu.memory_space<vmem>>, vector<16x144xbf16>
    %c0_1 = arith.constant 0 : index
    %c0_2 = arith.constant 0 : index
    %1 = vector.load %arg2[%c0_1, %c0_2] : memref<144x1024xbf16, #tpu.memory_space<vmem>>, vector<144x1024xbf16>
    %cst = arith.constant dense<0.000000e+00> : vector<16x1024xf32>
    %2 = tpu.matmul %0, %1, %cst {dimension_numbers = #tpu.dot_dimension_numbers<[1], [0], [0], [1], [0, 0, 1, 1], [], []>} : vector<16x144xbf16>, vector<144x1024xbf16>, vector<16x1024xf32> -> vector<16x1024xf32>
    %c0_3 = arith.constant 0 : index
    %c0_4 = arith.constant 0 : index
    %3 = vector.load %arg3[%c0_3, %c0_4] : memref<16x1xf32, #tpu.memory_space<vmem>>, vector<16x1xf32>
    %4 = vector.broadcast %3 : vector<16x1xf32> to vector<16x1024xf32>
    %5 = arith.addf %2, %4 : vector<16x1024xf32>
    %cst_5 = arith.constant 0.000000e+00 : f32
    %6 = vector.broadcast %cst_5 : f32 to vector<16x1024xf32>
    %7 = arith.maximumf %5, %6 : vector<16x1024xf32>
    %c0_6 = arith.constant 0 : index
    %c0_7 = arith.constant 0 : index
    %8 = vector.load %arg4[%c0_6, %c0_7] : memref<16x1024xf32, #tpu.memory_space<vmem>>, vector<16x1024xf32>
    tpu.vector_store %arg4[%c0_6, %c0_7], %7 {strides = array<i32>} : memref<16x1024xf32, #tpu.memory_space<vmem>>, vector<16x1024xf32>,
    return
  }
  func.func @transform_0(%arg0: i32) -> (i32, i32) {
    %c0_i32 = arith.constant 0 : i32
    %c0_i32_0 = arith.constant 0 : i32
    %c0_i32_1 = arith.constant 0 : i32
    return %c0_i32, %c0_i32_0 : i32, i32
  }
  func.func @transform_1(%arg0: i32) -> (i32, i32) {
    %c0_i32 = arith.constant 0 : i32
    %c0_i32_0 = arith.constant 0 : i32
    return %c0_i32, %arg0 : i32, i32
  }
  func.func @transform_2(%arg0: i32) -> (i32, i32) {
    %c0_i32 = arith.constant 0 : i32
    %c0_i32_0 = arith.constant 0 : i32
    %c0_i32_1 = arith.constant 0 : i32
    return %c0_i32, %c0_i32_0 : i32, i32
  }
  func.func @transform_3(%arg0: i32) -> (i32, i32) {
    %c0_i32 = arith.constant 0 : i32
    %c0_i32_0 = arith.constant 0 : i32
    return %c0_i32, %arg0 : i32, i32
  }
}

module attributes {stable_mosaic.version = 11 : i64} {
  func.func @_mmT_res_kernel(%arg0: i32, %arg1: memref<16x144xbf16, #tpu.memory_space<vmem>>, %arg2: memref<144x1024xbf16, #tpu.memory_space<vmem>>, %arg3: memref<16x1xf32, #tpu.memory_space<vmem>>, %arg4: memref<16x1024xf32, #tpu.memory_space<vmem>>, %arg5: memref<16x1024xf32, #tpu.memory_space<vmem>>) attributes {dimension_semantics = [#tpu.dimension_semantics<parallel>], iteration_bounds = array<i64: 2>, scalar_prefetch = 0 : i64, scratch_operands = 0 : i64, tpu.core_type = #tpu.core_type<tc>, window_params = [{pipeline_mode = #tpu.pipeline_mode<synchronous>, transform_indices = @transform_0, window_bounds = array<i64: 16, 144>}, {transform_indices = @transform_1, window_bounds = array<i64: 144, 1024>}, {pipeline_mode = #tpu.pipeline_mode<synchronous>, transform_indices = @transform_2, window_bounds = array<i64: 16, 1>}, {transform_indices = @transform_3, window_bounds = array<i64: 16, 1024>}, {transform_indices = @transform_4, window_bounds = array<i64: 16, 1024>}]} {
    %c0 = arith.constant 0 : index
    %c0_0 = arith.constant 0 : index
    %0 = vector.load %arg1[%c0, %c0_0] : memref<16x144xbf16, #tpu.memory_space<vmem>>, vector<16x144xbf16>
    %c0_1 = arith.constant 0 : index
    %c0_2 = arith.constant 0 : index
    %1 = vector.load %arg2[%c0_1, %c0_2] : memref<144x1024xbf16, #tpu.memory_space<vmem>>, vector<144x1024xbf16>
    %cst = arith.constant dense<0.000000e+00> : vector<16x1024xf32>
    %2 = tpu.matmul %0, %1, %cst {dimension_numbers = #tpu.dot_dimension_numbers<[1], [0], [0], [1], [0, 0, 1, 1], [], []>} : vector<16x144xbf16>, vector<144x1024xbf16>, vector<16x1024xf32> -> vector<16x1024xf32>
    %c0_3 = arith.constant 0 : index
    %c0_4 = arith.constant 0 : index
    %3 = vector.load %arg3[%c0_3, %c0_4] : memref<16x1xf32, #tpu.memory_space<vmem>>, vector<16x1xf32>
    %4 = vector.broadcast %3 : vector<16x1xf32> to vector<16x1024xf32>
    %5 = arith.addf %2, %4 : vector<16x1024xf32>
    %c0_5 = arith.constant 0 : index
    %c0_6 = arith.constant 0 : index
    %6 = vector.load %arg4[%c0_5, %c0_6] : memref<16x1024xf32, #tpu.memory_space<vmem>>, vector<16x1024xf32>
    %7 = arith.addf %5, %6 : vector<16x1024xf32>
    %cst_7 = arith.constant 0.000000e+00 : f32
    %8 = vector.broadcast %cst_7 : f32 to vector<16x1024xf32>
    %9 = arith.maximumf %7, %8 : vector<16x1024xf32>
    %c0_8 = arith.constant 0 : index
    %c0_9 = arith.constant 0 : index
    %10 = vector.load %arg5[%c0_8, %c0_9] : memref<16x1024xf32, #tpu.memory_space<vmem>>, vector<16x1024xf32>
    tpu.vector_store %arg5[%c0_8, %c0_9], %9 {strides = array<i32>} : memref<16x1024xf32, #tpu.memory_space<vmem>>, vector<16x1024xf32>,
    return
  }
  func.func @transform_0(%arg0: i32) -> (i32, i32) {
    %c0_i32 = arith.constant 0 : i32
    %c0_i32_0 = arith.constant 0 : i32
    %c0_i32_1 = arith.constant 0 : i32
    return %c0_i32, %c0_i32_0 : i32, i32
  }
  func.func @transform_1(%arg0: i32) -> (i32, i32) {
    %c0_i32 = arith.constant 0 : i32
    %c0_i32_0 = arith.constant 0 : i32
    return %c0_i32, %arg0 : i32, i32
  }
  func.func @transform_2(%arg0: i32) -> (i32, i32) {
    %c0_i32 = arith.constant 0 : i32
    %c0_i32_0 = arith.constant 0 : i32
    %c0_i32_1 = arith.constant 0 : i32
    return %c0_i32, %c0_i32_0 : i32, i32
  }
  func.func @transform_3(%arg0: i32) -> (i32, i32) {
    %c0_i32 = arith.constant 0 : i32
    %c0_i32_0 = arith.constant 0 : i32
    return %c0_i32, %arg0 : i32, i32
  }
  func.func @transform_4(%arg0: i32) -> (i32, i32) {
    %c0_i32 = arith.constant 0 : i32
    %c0_i32_0 = arith.constant 0 : i32
    return %c0_i32, %arg0 : i32, i32
  }
}

module attributes {stable_mosaic.version = 11 : i64} {
  func.func @_mmT_kernel(%arg0: i32, %arg1: memref<32x144xbf16, #tpu.memory_space<vmem>>, %arg2: memref<144x512xbf16, #tpu.memory_space<vmem>>, %arg3: memref<32x1xf32, #tpu.memory_space<vmem>>, %arg4: memref<32x512xf32, #tpu.memory_space<vmem>>) attributes {dimension_semantics = [#tpu.dimension_semantics<parallel>], iteration_bounds = array<i64: 1>, scalar_prefetch = 0 : i64, scratch_operands = 0 : i64, tpu.core_type = #tpu.core_type<tc>, window_params = [{pipeline_mode = #tpu.pipeline_mode<synchronous>, transform_indices = @transform_0, window_bounds = array<i64: 32, 144>}, {transform_indices = @transform_1, window_bounds = array<i64: 144, 512>}, {pipeline_mode = #tpu.pipeline_mode<synchronous>, transform_indices = @transform_2, window_bounds = array<i64: 32, 1>}, {transform_indices = @transform_3, window_bounds = array<i64: 32, 512>}]} {
    %c0 = arith.constant 0 : index
    %c0_0 = arith.constant 0 : index
    %0 = vector.load %arg1[%c0, %c0_0] : memref<32x144xbf16, #tpu.memory_space<vmem>>, vector<32x144xbf16>
    %c0_1 = arith.constant 0 : index
    %c0_2 = arith.constant 0 : index
    %1 = vector.load %arg2[%c0_1, %c0_2] : memref<144x512xbf16, #tpu.memory_space<vmem>>, vector<144x512xbf16>
    %cst = arith.constant dense<0.000000e+00> : vector<32x512xf32>
    %2 = tpu.matmul %0, %1, %cst {dimension_numbers = #tpu.dot_dimension_numbers<[1], [0], [0], [1], [0, 0, 1, 1], [], []>} : vector<32x144xbf16>, vector<144x512xbf16>, vector<32x512xf32> -> vector<32x512xf32>
    %c0_3 = arith.constant 0 : index
    %c0_4 = arith.constant 0 : index
    %3 = vector.load %arg3[%c0_3, %c0_4] : memref<32x1xf32, #tpu.memory_space<vmem>>, vector<32x1xf32>
    %4 = vector.broadcast %3 : vector<32x1xf32> to vector<32x512xf32>
    %5 = arith.addf %2, %4 : vector<32x512xf32>
    %cst_5 = arith.constant 0.000000e+00 : f32
    %6 = vector.broadcast %cst_5 : f32 to vector<32x512xf32>
    %7 = arith.maximumf %5, %6 : vector<32x512xf32>
    %c0_6 = arith.constant 0 : index
    %c0_7 = arith.constant 0 : index
    %8 = vector.load %arg4[%c0_6, %c0_7] : memref<32x512xf32, #tpu.memory_space<vmem>>, vector<32x512xf32>
    tpu.vector_store %arg4[%c0_6, %c0_7], %7 {strides = array<i32>} : memref<32x512xf32, #tpu.memory_space<vmem>>, vector<32x512xf32>,
    return
  }
  func.func @transform_0(%arg0: i32) -> (i32, i32) {
    %c0_i32 = arith.constant 0 : i32
    %c0_i32_0 = arith.constant 0 : i32
    %c0_i32_1 = arith.constant 0 : i32
    return %c0_i32, %c0_i32_0 : i32, i32
  }
  func.func @transform_1(%arg0: i32) -> (i32, i32) {
    %c0_i32 = arith.constant 0 : i32
    %c0_i32_0 = arith.constant 0 : i32
    return %c0_i32, %arg0 : i32, i32
  }
  func.func @transform_2(%arg0: i32) -> (i32, i32) {
    %c0_i32 = arith.constant 0 : i32
    %c0_i32_0 = arith.constant 0 : i32
    %c0_i32_1 = arith.constant 0 : i32
    return %c0_i32, %c0_i32_0 : i32, i32
  }
  func.func @transform_3(%arg0: i32) -> (i32, i32) {
    %c0_i32 = arith.constant 0 : i32
    %c0_i32_0 = arith.constant 0 : i32
    return %c0_i32, %arg0 : i32, i32
  }
}

module attributes {stable_mosaic.version = 11 : i64} {
  func.func @_mmT_kernel(%arg0: i32, %arg1: memref<32x16xbf16, #tpu.memory_space<vmem>>, %arg2: memref<16x512xbf16, #tpu.memory_space<vmem>>, %arg3: memref<32x1xf32, #tpu.memory_space<vmem>>, %arg4: memref<32x512xf32, #tpu.memory_space<vmem>>) attributes {dimension_semantics = [#tpu.dimension_semantics<parallel>], iteration_bounds = array<i64: 1>, scalar_prefetch = 0 : i64, scratch_operands = 0 : i64, tpu.core_type = #tpu.core_type<tc>, window_params = [{pipeline_mode = #tpu.pipeline_mode<synchronous>, transform_indices = @transform_0, window_bounds = array<i64: 32, 16>}, {transform_indices = @transform_1, window_bounds = array<i64: 16, 512>}, {pipeline_mode = #tpu.pipeline_mode<synchronous>, transform_indices = @transform_2, window_bounds = array<i64: 32, 1>}, {transform_indices = @transform_3, window_bounds = array<i64: 32, 512>}]} {
    %c0 = arith.constant 0 : index
    %c0_0 = arith.constant 0 : index
    %0 = vector.load %arg1[%c0, %c0_0] : memref<32x16xbf16, #tpu.memory_space<vmem>>, vector<32x16xbf16>
    %c0_1 = arith.constant 0 : index
    %c0_2 = arith.constant 0 : index
    %1 = vector.load %arg2[%c0_1, %c0_2] : memref<16x512xbf16, #tpu.memory_space<vmem>>, vector<16x512xbf16>
    %cst = arith.constant dense<0.000000e+00> : vector<32x512xf32>
    %2 = tpu.matmul %0, %1, %cst {dimension_numbers = #tpu.dot_dimension_numbers<[1], [0], [0], [1], [0, 0, 1, 1], [], []>} : vector<32x16xbf16>, vector<16x512xbf16>, vector<32x512xf32> -> vector<32x512xf32>
    %c0_3 = arith.constant 0 : index
    %c0_4 = arith.constant 0 : index
    %3 = vector.load %arg3[%c0_3, %c0_4] : memref<32x1xf32, #tpu.memory_space<vmem>>, vector<32x1xf32>
    %4 = vector.broadcast %3 : vector<32x1xf32> to vector<32x512xf32>
    %5 = arith.addf %2, %4 : vector<32x512xf32>
    %c0_5 = arith.constant 0 : index
    %c0_6 = arith.constant 0 : index
    %6 = vector.load %arg4[%c0_5, %c0_6] : memref<32x512xf32, #tpu.memory_space<vmem>>, vector<32x512xf32>
    tpu.vector_store %arg4[%c0_5, %c0_6], %5 {strides = array<i32>} : memref<32x512xf32, #tpu.memory_space<vmem>>, vector<32x512xf32>,
    return
  }
  func.func @transform_0(%arg0: i32) -> (i32, i32) {
    %c0_i32 = arith.constant 0 : i32
    %c0_i32_0 = arith.constant 0 : i32
    %c0_i32_1 = arith.constant 0 : i32
    return %c0_i32, %c0_i32_0 : i32, i32
  }
  func.func @transform_1(%arg0: i32) -> (i32, i32) {
    %c0_i32 = arith.constant 0 : i32
    %c0_i32_0 = arith.constant 0 : i32
    return %c0_i32, %arg0 : i32, i32
  }
  func.func @transform_2(%arg0: i32) -> (i32, i32) {
    %c0_i32 = arith.constant 0 : i32
    %c0_i32_0 = arith.constant 0 : i32
    %c0_i32_1 = arith.constant 0 : i32
    return %c0_i32, %c0_i32_0 : i32, i32
  }
  func.func @transform_3(%arg0: i32) -> (i32, i32) {
    %c0_i32 = arith.constant 0 : i32
    %c0_i32_0 = arith.constant 0 : i32
    return %c0_i32, %arg0 : i32, i32
  }
}

module attributes {stable_mosaic.version = 11 : i64} {
  func.func @_mmT_res_kernel(%arg0: i32, %arg1: memref<32x288xbf16, #tpu.memory_space<vmem>>, %arg2: memref<288x512xbf16, #tpu.memory_space<vmem>>, %arg3: memref<32x1xf32, #tpu.memory_space<vmem>>, %arg4: memref<32x512xf32, #tpu.memory_space<vmem>>, %arg5: memref<32x512xf32, #tpu.memory_space<vmem>>) attributes {dimension_semantics = [#tpu.dimension_semantics<parallel>], iteration_bounds = array<i64: 1>, scalar_prefetch = 0 : i64, scratch_operands = 0 : i64, tpu.core_type = #tpu.core_type<tc>, window_params = [{pipeline_mode = #tpu.pipeline_mode<synchronous>, transform_indices = @transform_0, window_bounds = array<i64: 32, 288>}, {transform_indices = @transform_1, window_bounds = array<i64: 288, 512>}, {pipeline_mode = #tpu.pipeline_mode<synchronous>, transform_indices = @transform_2, window_bounds = array<i64: 32, 1>}, {transform_indices = @transform_3, window_bounds = array<i64: 32, 512>}, {transform_indices = @transform_4, window_bounds = array<i64: 32, 512>}]} {
    %c0 = arith.constant 0 : index
    %c0_0 = arith.constant 0 : index
    %0 = vector.load %arg1[%c0, %c0_0] : memref<32x288xbf16, #tpu.memory_space<vmem>>, vector<32x288xbf16>
    %c0_1 = arith.constant 0 : index
    %c0_2 = arith.constant 0 : index
    %1 = vector.load %arg2[%c0_1, %c0_2] : memref<288x512xbf16, #tpu.memory_space<vmem>>, vector<288x512xbf16>
    %cst = arith.constant dense<0.000000e+00> : vector<32x512xf32>
    %2 = tpu.matmul %0, %1, %cst {dimension_numbers = #tpu.dot_dimension_numbers<[1], [0], [0], [1], [0, 0, 1, 1], [], []>} : vector<32x288xbf16>, vector<288x512xbf16>, vector<32x512xf32> -> vector<32x512xf32>
    %c0_3 = arith.constant 0 : index
    %c0_4 = arith.constant 0 : index
    %3 = vector.load %arg3[%c0_3, %c0_4] : memref<32x1xf32, #tpu.memory_space<vmem>>, vector<32x1xf32>
    %4 = vector.broadcast %3 : vector<32x1xf32> to vector<32x512xf32>
    %5 = arith.addf %2, %4 : vector<32x512xf32>
    %c0_5 = arith.constant 0 : index
    %c0_6 = arith.constant 0 : index
    %6 = vector.load %arg4[%c0_5, %c0_6] : memref<32x512xf32, #tpu.memory_space<vmem>>, vector<32x512xf32>
    %7 = arith.addf %5, %6 : vector<32x512xf32>
    %cst_7 = arith.constant 0.000000e+00 : f32
    %8 = vector.broadcast %cst_7 : f32 to vector<32x512xf32>
    %9 = arith.maximumf %7, %8 : vector<32x512xf32>
    %c0_8 = arith.constant 0 : index
    %c0_9 = arith.constant 0 : index
    %10 = vector.load %arg5[%c0_8, %c0_9] : memref<32x512xf32, #tpu.memory_space<vmem>>, vector<32x512xf32>
    tpu.vector_store %arg5[%c0_8, %c0_9], %9 {strides = array<i32>} : memref<32x512xf32, #tpu.memory_space<vmem>>, vector<32x512xf32>,
    return
  }
  func.func @transform_0(%arg0: i32) -> (i32, i32) {
    %c0_i32 = arith.constant 0 : i32
    %c0_i32_0 = arith.constant 0 : i32
    %c0_i32_1 = arith.constant 0 : i32
    return %c0_i32, %c0_i32_0 : i32, i32
  }
  func.func @transform_1(%arg0: i32) -> (i32, i32) {
    %c0_i32 = arith.constant 0 : i32
    %c0_i32_0 = arith.constant 0 : i32
    return %c0_i32, %arg0 : i32, i32
  }
  func.func @transform_2(%arg0: i32) -> (i32, i32) {
    %c0_i32 = arith.constant 0 : i32
    %c0_i32_0 = arith.constant 0 : i32
    %c0_i32_1 = arith.constant 0 : i32
    return %c0_i32, %c0_i32_0 : i32, i32
  }
  func.func @transform_3(%arg0: i32) -> (i32, i32) {
    %c0_i32 = arith.constant 0 : i32
    %c0_i32_0 = arith.constant 0 : i32
    return %c0_i32, %arg0 : i32, i32
  }
  func.func @transform_4(%arg0: i32) -> (i32, i32) {
    %c0_i32 = arith.constant 0 : i32
    %c0_i32_0 = arith.constant 0 : i32
    return %c0_i32, %arg0 : i32, i32
  }
}

module attributes {stable_mosaic.version = 11 : i64} {
  func.func @_mmT_kernel(%arg0: i32, %arg1: memref<32x288xbf16, #tpu.memory_space<vmem>>, %arg2: memref<288x512xbf16, #tpu.memory_space<vmem>>, %arg3: memref<32x1xf32, #tpu.memory_space<vmem>>, %arg4: memref<32x512xf32, #tpu.memory_space<vmem>>) attributes {dimension_semantics = [#tpu.dimension_semantics<parallel>], iteration_bounds = array<i64: 1>, scalar_prefetch = 0 : i64, scratch_operands = 0 : i64, tpu.core_type = #tpu.core_type<tc>, window_params = [{pipeline_mode = #tpu.pipeline_mode<synchronous>, transform_indices = @transform_0, window_bounds = array<i64: 32, 288>}, {transform_indices = @transform_1, window_bounds = array<i64: 288, 512>}, {pipeline_mode = #tpu.pipeline_mode<synchronous>, transform_indices = @transform_2, window_bounds = array<i64: 32, 1>}, {transform_indices = @transform_3, window_bounds = array<i64: 32, 512>}]} {
    %c0 = arith.constant 0 : index
    %c0_0 = arith.constant 0 : index
    %0 = vector.load %arg1[%c0, %c0_0] : memref<32x288xbf16, #tpu.memory_space<vmem>>, vector<32x288xbf16>
    %c0_1 = arith.constant 0 : index
    %c0_2 = arith.constant 0 : index
    %1 = vector.load %arg2[%c0_1, %c0_2] : memref<288x512xbf16, #tpu.memory_space<vmem>>, vector<288x512xbf16>
    %cst = arith.constant dense<0.000000e+00> : vector<32x512xf32>
    %2 = tpu.matmul %0, %1, %cst {dimension_numbers = #tpu.dot_dimension_numbers<[1], [0], [0], [1], [0, 0, 1, 1], [], []>} : vector<32x288xbf16>, vector<288x512xbf16>, vector<32x512xf32> -> vector<32x512xf32>
    %c0_3 = arith.constant 0 : index
    %c0_4 = arith.constant 0 : index
    %3 = vector.load %arg3[%c0_3, %c0_4] : memref<32x1xf32, #tpu.memory_space<vmem>>, vector<32x1xf32>
    %4 = vector.broadcast %3 : vector<32x1xf32> to vector<32x512xf32>
    %5 = arith.addf %2, %4 : vector<32x512xf32>
    %cst_5 = arith.constant 0.000000e+00 : f32
    %6 = vector.broadcast %cst_5 : f32 to vector<32x512xf32>
    %7 = arith.maximumf %5, %6 : vector<32x512xf32>
    %c0_6 = arith.constant 0 : index
    %c0_7 = arith.constant 0 : index
    %8 = vector.load %arg4[%c0_6, %c0_7] : memref<32x512xf32, #tpu.memory_space<vmem>>, vector<32x512xf32>
    tpu.vector_store %arg4[%c0_6, %c0_7], %7 {strides = array<i32>} : memref<32x512xf32, #tpu.memory_space<vmem>>, vector<32x512xf32>,
    return
  }
  func.func @transform_0(%arg0: i32) -> (i32, i32) {
    %c0_i32 = arith.constant 0 : i32
    %c0_i32_0 = arith.constant 0 : i32
    %c0_i32_1 = arith.constant 0 : i32
    return %c0_i32, %c0_i32_0 : i32, i32
  }
  func.func @transform_1(%arg0: i32) -> (i32, i32) {
    %c0_i32 = arith.constant 0 : i32
    %c0_i32_0 = arith.constant 0 : i32
    return %c0_i32, %arg0 : i32, i32
  }
  func.func @transform_2(%arg0: i32) -> (i32, i32) {
    %c0_i32 = arith.constant 0 : i32
    %c0_i32_0 = arith.constant 0 : i32
    %c0_i32_1 = arith.constant 0 : i32
    return %c0_i32, %c0_i32_0 : i32, i32
  }
  func.func @transform_3(%arg0: i32) -> (i32, i32) {
    %c0_i32 = arith.constant 0 : i32
    %c0_i32_0 = arith.constant 0 : i32
    return %c0_i32, %arg0 : i32, i32
  }
}

module attributes {stable_mosaic.version = 11 : i64} {
  func.func @_mmT_kernel(%arg0: i32, %arg1: memref<64x288xbf16, #tpu.memory_space<vmem>>, %arg2: memref<288x128xbf16, #tpu.memory_space<vmem>>, %arg3: memref<64x1xf32, #tpu.memory_space<vmem>>, %arg4: memref<64x128xf32, #tpu.memory_space<vmem>>) attributes {dimension_semantics = [#tpu.dimension_semantics<parallel>], iteration_bounds = array<i64: 1>, scalar_prefetch = 0 : i64, scratch_operands = 0 : i64, tpu.core_type = #tpu.core_type<tc>, window_params = [{pipeline_mode = #tpu.pipeline_mode<synchronous>, transform_indices = @transform_0, window_bounds = array<i64: 64, 288>}, {transform_indices = @transform_1, window_bounds = array<i64: 288, 128>}, {pipeline_mode = #tpu.pipeline_mode<synchronous>, transform_indices = @transform_2, window_bounds = array<i64: 64, 1>}, {transform_indices = @transform_3, window_bounds = array<i64: 64, 128>}]} {
    %c0 = arith.constant 0 : index
    %c0_0 = arith.constant 0 : index
    %0 = vector.load %arg1[%c0, %c0_0] : memref<64x288xbf16, #tpu.memory_space<vmem>>, vector<64x288xbf16>
    %c0_1 = arith.constant 0 : index
    %c0_2 = arith.constant 0 : index
    %1 = vector.load %arg2[%c0_1, %c0_2] : memref<288x128xbf16, #tpu.memory_space<vmem>>, vector<288x128xbf16>
    %cst = arith.constant dense<0.000000e+00> : vector<64x128xf32>
    %2 = tpu.matmul %0, %1, %cst {dimension_numbers = #tpu.dot_dimension_numbers<[1], [0], [0], [1], [0, 0, 1, 1], [], []>} : vector<64x288xbf16>, vector<288x128xbf16>, vector<64x128xf32> -> vector<64x128xf32>
    %c0_3 = arith.constant 0 : index
    %c0_4 = arith.constant 0 : index
    %3 = vector.load %arg3[%c0_3, %c0_4] : memref<64x1xf32, #tpu.memory_space<vmem>>, vector<64x1xf32>
    %4 = vector.broadcast %3 : vector<64x1xf32> to vector<64x128xf32>
    %5 = arith.addf %2, %4 : vector<64x128xf32>
    %cst_5 = arith.constant 0.000000e+00 : f32
    %6 = vector.broadcast %cst_5 : f32 to vector<64x128xf32>
    %7 = arith.maximumf %5, %6 : vector<64x128xf32>
    %c0_6 = arith.constant 0 : index
    %c0_7 = arith.constant 0 : index
    %8 = vector.load %arg4[%c0_6, %c0_7] : memref<64x128xf32, #tpu.memory_space<vmem>>, vector<64x128xf32>
    tpu.vector_store %arg4[%c0_6, %c0_7], %7 {strides = array<i32>} : memref<64x128xf32, #tpu.memory_space<vmem>>, vector<64x128xf32>,
    return
  }
  func.func @transform_0(%arg0: i32) -> (i32, i32) {
    %c0_i32 = arith.constant 0 : i32
    %c0_i32_0 = arith.constant 0 : i32
    %c0_i32_1 = arith.constant 0 : i32
    return %c0_i32, %c0_i32_0 : i32, i32
  }
  func.func @transform_1(%arg0: i32) -> (i32, i32) {
    %c0_i32 = arith.constant 0 : i32
    %c0_i32_0 = arith.constant 0 : i32
    return %c0_i32, %arg0 : i32, i32
  }
  func.func @transform_2(%arg0: i32) -> (i32, i32) {
    %c0_i32 = arith.constant 0 : i32
    %c0_i32_0 = arith.constant 0 : i32
    %c0_i32_1 = arith.constant 0 : i32
    return %c0_i32, %c0_i32_0 : i32, i32
  }
  func.func @transform_3(%arg0: i32) -> (i32, i32) {
    %c0_i32 = arith.constant 0 : i32
    %c0_i32_0 = arith.constant 0 : i32
    return %c0_i32, %arg0 : i32, i32
  }
}

module attributes {stable_mosaic.version = 11 : i64} {
  func.func @_mmT_res_kernel(%arg0: i32, %arg1: memref<64x576xbf16, #tpu.memory_space<vmem>>, %arg2: memref<576x128xbf16, #tpu.memory_space<vmem>>, %arg3: memref<64x1xf32, #tpu.memory_space<vmem>>, %arg4: memref<64x128xf32, #tpu.memory_space<vmem>>, %arg5: memref<64x128xf32, #tpu.memory_space<vmem>>) attributes {dimension_semantics = [#tpu.dimension_semantics<parallel>], iteration_bounds = array<i64: 1>, scalar_prefetch = 0 : i64, scratch_operands = 0 : i64, tpu.core_type = #tpu.core_type<tc>, window_params = [{pipeline_mode = #tpu.pipeline_mode<synchronous>, transform_indices = @transform_0, window_bounds = array<i64: 64, 576>}, {transform_indices = @transform_1, window_bounds = array<i64: 576, 128>}, {pipeline_mode = #tpu.pipeline_mode<synchronous>, transform_indices = @transform_2, window_bounds = array<i64: 64, 1>}, {transform_indices = @transform_3, window_bounds = array<i64: 64, 128>}, {transform_indices = @transform_4, window_bounds = array<i64: 64, 128>}]} {
    %c0 = arith.constant 0 : index
    %c0_0 = arith.constant 0 : index
    %0 = vector.load %arg1[%c0, %c0_0] : memref<64x576xbf16, #tpu.memory_space<vmem>>, vector<64x576xbf16>
    %c0_1 = arith.constant 0 : index
    %c0_2 = arith.constant 0 : index
    %1 = vector.load %arg2[%c0_1, %c0_2] : memref<576x128xbf16, #tpu.memory_space<vmem>>, vector<576x128xbf16>
    %cst = arith.constant dense<0.000000e+00> : vector<64x128xf32>
    %2 = tpu.matmul %0, %1, %cst {dimension_numbers = #tpu.dot_dimension_numbers<[1], [0], [0], [1], [0, 0, 1, 1], [], []>} : vector<64x576xbf16>, vector<576x128xbf16>, vector<64x128xf32> -> vector<64x128xf32>
    %c0_3 = arith.constant 0 : index
    %c0_4 = arith.constant 0 : index
    %3 = vector.load %arg3[%c0_3, %c0_4] : memref<64x1xf32, #tpu.memory_space<vmem>>, vector<64x1xf32>
    %4 = vector.broadcast %3 : vector<64x1xf32> to vector<64x128xf32>
    %5 = arith.addf %2, %4 : vector<64x128xf32>
    %c0_5 = arith.constant 0 : index
    %c0_6 = arith.constant 0 : index
    %6 = vector.load %arg4[%c0_5, %c0_6] : memref<64x128xf32, #tpu.memory_space<vmem>>, vector<64x128xf32>
    %7 = arith.addf %5, %6 : vector<64x128xf32>
    %cst_7 = arith.constant 0.000000e+00 : f32
    %8 = vector.broadcast %cst_7 : f32 to vector<64x128xf32>
    %9 = arith.maximumf %7, %8 : vector<64x128xf32>
    %c0_8 = arith.constant 0 : index
    %c0_9 = arith.constant 0 : index
    %10 = vector.load %arg5[%c0_8, %c0_9] : memref<64x128xf32, #tpu.memory_space<vmem>>, vector<64x128xf32>
    tpu.vector_store %arg5[%c0_8, %c0_9], %9 {strides = array<i32>} : memref<64x128xf32, #tpu.memory_space<vmem>>, vector<64x128xf32>,
    return
  }
  func.func @transform_0(%arg0: i32) -> (i32, i32) {
    %c0_i32 = arith.constant 0 : i32
    %c0_i32_0 = arith.constant 0 : i32
    %c0_i32_1 = arith.constant 0 : i32
    return %c0_i32, %c0_i32_0 : i32, i32
  }
  func.func @transform_1(%arg0: i32) -> (i32, i32) {
    %c0_i32 = arith.constant 0 : i32
    %c0_i32_0 = arith.constant 0 : i32
    return %c0_i32, %arg0 : i32, i32
  }
  func.func @transform_2(%arg0: i32) -> (i32, i32) {
    %c0_i32 = arith.constant 0 : i32
    %c0_i32_0 = arith.constant 0 : i32
    %c0_i32_1 = arith.constant 0 : i32
    return %c0_i32, %c0_i32_0 : i32, i32
  }
  func.func @transform_3(%arg0: i32) -> (i32, i32) {
    %c0_i32 = arith.constant 0 : i32
    %c0_i32_0 = arith.constant 0 : i32
    return %c0_i32, %arg0 : i32, i32
  }
  func.func @transform_4(%arg0: i32) -> (i32, i32) {
    %c0_i32 = arith.constant 0 : i32
    %c0_i32_0 = arith.constant 0 : i32
    return %c0_i32, %arg0 : i32, i32
  }
}

module attributes {stable_mosaic.version = 11 : i64} {
  func.func @_mmT_kernel(%arg0: i32, %arg1: memref<64x32xbf16, #tpu.memory_space<vmem>>, %arg2: memref<32x128xbf16, #tpu.memory_space<vmem>>, %arg3: memref<64x1xf32, #tpu.memory_space<vmem>>, %arg4: memref<64x128xf32, #tpu.memory_space<vmem>>) attributes {dimension_semantics = [#tpu.dimension_semantics<parallel>], iteration_bounds = array<i64: 1>, scalar_prefetch = 0 : i64, scratch_operands = 0 : i64, tpu.core_type = #tpu.core_type<tc>, window_params = [{pipeline_mode = #tpu.pipeline_mode<synchronous>, transform_indices = @transform_0, window_bounds = array<i64: 64, 32>}, {transform_indices = @transform_1, window_bounds = array<i64: 32, 128>}, {pipeline_mode = #tpu.pipeline_mode<synchronous>, transform_indices = @transform_2, window_bounds = array<i64: 64, 1>}, {transform_indices = @transform_3, window_bounds = array<i64: 64, 128>}]} {
    %c0 = arith.constant 0 : index
    %c0_0 = arith.constant 0 : index
    %0 = vector.load %arg1[%c0, %c0_0] : memref<64x32xbf16, #tpu.memory_space<vmem>>, vector<64x32xbf16>
    %c0_1 = arith.constant 0 : index
    %c0_2 = arith.constant 0 : index
    %1 = vector.load %arg2[%c0_1, %c0_2] : memref<32x128xbf16, #tpu.memory_space<vmem>>, vector<32x128xbf16>
    %cst = arith.constant dense<0.000000e+00> : vector<64x128xf32>
    %2 = tpu.matmul %0, %1, %cst {dimension_numbers = #tpu.dot_dimension_numbers<[1], [0], [0], [1], [0, 0, 1, 1], [], []>} : vector<64x32xbf16>, vector<32x128xbf16>, vector<64x128xf32> -> vector<64x128xf32>
    %c0_3 = arith.constant 0 : index
    %c0_4 = arith.constant 0 : index
    %3 = vector.load %arg3[%c0_3, %c0_4] : memref<64x1xf32, #tpu.memory_space<vmem>>, vector<64x1xf32>
    %4 = vector.broadcast %3 : vector<64x1xf32> to vector<64x128xf32>
    %5 = arith.addf %2, %4 : vector<64x128xf32>
    %c0_5 = arith.constant 0 : index
    %c0_6 = arith.constant 0 : index
    %6 = vector.load %arg4[%c0_5, %c0_6] : memref<64x128xf32, #tpu.memory_space<vmem>>, vector<64x128xf32>
    tpu.vector_store %arg4[%c0_5, %c0_6], %5 {strides = array<i32>} : memref<64x128xf32, #tpu.memory_space<vmem>>, vector<64x128xf32>,
    return
  }
  func.func @transform_0(%arg0: i32) -> (i32, i32) {
    %c0_i32 = arith.constant 0 : i32
    %c0_i32_0 = arith.constant 0 : i32
    %c0_i32_1 = arith.constant 0 : i32
    return %c0_i32, %c0_i32_0 : i32, i32
  }
  func.func @transform_1(%arg0: i32) -> (i32, i32) {
    %c0_i32 = arith.constant 0 : i32
    %c0_i32_0 = arith.constant 0 : i32
    return %c0_i32, %arg0 : i32, i32
  }
  func.func @transform_2(%arg0: i32) -> (i32, i32) {
    %c0_i32 = arith.constant 0 : i32
    %c0_i32_0 = arith.constant 0 : i32
    %c0_i32_1 = arith.constant 0 : i32
    return %c0_i32, %c0_i32_0 : i32, i32
  }
  func.func @transform_3(%arg0: i32) -> (i32, i32) {
    %c0_i32 = arith.constant 0 : i32
    %c0_i32_0 = arith.constant 0 : i32
    return %c0_i32, %arg0 : i32, i32
  }
}

module attributes {stable_mosaic.version = 11 : i64} {
  func.func @_mmT_kernel(%arg0: i32, %arg1: memref<64x576xbf16, #tpu.memory_space<vmem>>, %arg2: memref<576x128xbf16, #tpu.memory_space<vmem>>, %arg3: memref<64x1xf32, #tpu.memory_space<vmem>>, %arg4: memref<64x128xf32, #tpu.memory_space<vmem>>) attributes {dimension_semantics = [#tpu.dimension_semantics<parallel>], iteration_bounds = array<i64: 1>, scalar_prefetch = 0 : i64, scratch_operands = 0 : i64, tpu.core_type = #tpu.core_type<tc>, window_params = [{pipeline_mode = #tpu.pipeline_mode<synchronous>, transform_indices = @transform_0, window_bounds = array<i64: 64, 576>}, {transform_indices = @transform_1, window_bounds = array<i64: 576, 128>}, {pipeline_mode = #tpu.pipeline_mode<synchronous>, transform_indices = @transform_2, window_bounds = array<i64: 64, 1>}, {transform_indices = @transform_3, window_bounds = array<i64: 64, 128>}]} {
    %c0 = arith.constant 0 : index
    %c0_0 = arith.constant 0 : index
    %0 = vector.load %arg1[%c0, %c0_0] : memref<64x576xbf16, #tpu.memory_space<vmem>>, vector<64x576xbf16>
    %c0_1 = arith.constant 0 : index
    %c0_2 = arith.constant 0 : index
    %1 = vector.load %arg2[%c0_1, %c0_2] : memref<576x128xbf16, #tpu.memory_space<vmem>>, vector<576x128xbf16>
    %cst = arith.constant dense<0.000000e+00> : vector<64x128xf32>
    %2 = tpu.matmul %0, %1, %cst {dimension_numbers = #tpu.dot_dimension_numbers<[1], [0], [0], [1], [0, 0, 1, 1], [], []>} : vector<64x576xbf16>, vector<576x128xbf16>, vector<64x128xf32> -> vector<64x128xf32>
    %c0_3 = arith.constant 0 : index
    %c0_4 = arith.constant 0 : index
    %3 = vector.load %arg3[%c0_3, %c0_4] : memref<64x1xf32, #tpu.memory_space<vmem>>, vector<64x1xf32>
    %4 = vector.broadcast %3 : vector<64x1xf32> to vector<64x128xf32>
    %5 = arith.addf %2, %4 : vector<64x128xf32>
    %cst_5 = arith.constant 0.000000e+00 : f32
    %6 = vector.broadcast %cst_5 : f32 to vector<64x128xf32>
    %7 = arith.maximumf %5, %6 : vector<64x128xf32>
    %c0_6 = arith.constant 0 : index
    %c0_7 = arith.constant 0 : index
    %8 = vector.load %arg4[%c0_6, %c0_7] : memref<64x128xf32, #tpu.memory_space<vmem>>, vector<64x128xf32>
    tpu.vector_store %arg4[%c0_6, %c0_7], %7 {strides = array<i32>} : memref<64x128xf32, #tpu.memory_space<vmem>>, vector<64x128xf32>,
    return
  }
  func.func @transform_0(%arg0: i32) -> (i32, i32) {
    %c0_i32 = arith.constant 0 : i32
    %c0_i32_0 = arith.constant 0 : i32
    %c0_i32_1 = arith.constant 0 : i32
    return %c0_i32, %c0_i32_0 : i32, i32
  }
  func.func @transform_1(%arg0: i32) -> (i32, i32) {
    %c0_i32 = arith.constant 0 : i32
    %c0_i32_0 = arith.constant 0 : i32
    return %c0_i32, %arg0 : i32, i32
  }
  func.func @transform_2(%arg0: i32) -> (i32, i32) {
    %c0_i32 = arith.constant 0 : i32
    %c0_i32_0 = arith.constant 0 : i32
    %c0_i32_1 = arith.constant 0 : i32
    return %c0_i32, %c0_i32_0 : i32, i32
  }
  func.func @transform_3(%arg0: i32) -> (i32, i32) {
    %c0_i32 = arith.constant 0 : i32
    %c0_i32_0 = arith.constant 0 : i32
    return %c0_i32, %arg0 : i32, i32
  }
}

module attributes {stable_mosaic.version = 11 : i64} {
  func.func @_pool_fc_kernel(%arg0: memref<64x8x16xf32, #tpu.memory_space<vmem>>, %arg1: memref<10x64xf32, #tpu.memory_space<vmem>>, %arg2: memref<10x1xf32, #tpu.memory_space<vmem>>, %arg3: memref<10x8xf32, #tpu.memory_space<vmem>>) attributes {dimension_semantics = [], scalar_prefetch = 0 : i64, scratch_operands = 0 : i64, tpu.core_type = #tpu.core_type<tc>} {
    %c0 = arith.constant 0 : index
    %c0_0 = arith.constant 0 : index
    %c0_1 = arith.constant 0 : index
    %0 = vector.load %arg0[%c0, %c0_0, %c0_1] : memref<64x8x16xf32, #tpu.memory_space<vmem>>, vector<64x8x16xf32>
    %cst = arith.constant dense<0.000000e+00> : vector<64x8xf32>
    %1 = vector.multi_reduction <add>, %0, %cst [2] : vector<64x8x16xf32> to vector<64x8xf32>
    %cst_2 = arith.constant 6.250000e-02 : f32
    %2 = vector.broadcast %cst_2 : f32 to vector<64x8xf32>
    %3 = arith.mulf %1, %2 : vector<64x8xf32>
    %c0_3 = arith.constant 0 : index
    %c0_4 = arith.constant 0 : index
    %4 = vector.load %arg1[%c0_3, %c0_4] : memref<10x64xf32, #tpu.memory_space<vmem>>, vector<10x64xf32>
    %cst_5 = arith.constant dense<0.000000e+00> : vector<10x8xf32>
    %5 = tpu.matmul %4, %3, %cst_5 {dimension_numbers = #tpu.dot_dimension_numbers<[1], [0], [0], [1], [0, 0, 1, 1], [], []>} : vector<10x64xf32>, vector<64x8xf32>, vector<10x8xf32> -> vector<10x8xf32>
    %c0_6 = arith.constant 0 : index
    %c0_7 = arith.constant 0 : index
    %6 = vector.load %arg2[%c0_6, %c0_7] : memref<10x1xf32, #tpu.memory_space<vmem>>, vector<10x1xf32>
    %7 = vector.broadcast %6 : vector<10x1xf32> to vector<10x8xf32>
    %8 = arith.addf %5, %7 : vector<10x8xf32>
    %c0_8 = arith.constant 0 : index
    %c0_9 = arith.constant 0 : index
    %9 = vector.load %arg3[%c0_8, %c0_9] : memref<10x8xf32, #tpu.memory_space<vmem>>, vector<10x8xf32>
    tpu.vector_store %arg3[%c0_8, %c0_9], %8 {strides = array<i32>} : memref<10x8xf32, #tpu.memory_space<vmem>>, vector<10x8xf32>,
    return
  }
}

</mosaic_0001>

<llo_original>
// kernel: forward.16
$region0: #{forward.16}
  #allocation0 [shape = 'u32[]', space=smem, size = 0x4, offset = 0x4, fixed_abs, tag = 'smem constant byte address 0x4 - core index']
  #allocation1 [shape = 'u32[144,128]{1,0:T(1,128)}', space=vmem, size = 0x12000, scoped, tag = 'internal scratch']
  %s0 = inlined_call_operand.vmem [shape: bf16[16,27], index: 0, kind: input, shape index: {}]
  %s1 = inlined_call_operand.vmem [shape: bf16[27,2048], index: 1, kind: input, shape index: {}]
  %s2 = inlined_call_operand.vmem [shape: f32[16,1], index: 2, kind: input, shape index: {}]
  %s3 = inlined_call_operand.vmem [shape: f32[16,2048], index: 3, kind: output, shape index: {}]
  %s4 = sld [smem:[#allocation0]]
  $region87: #{forward.16} parent=0
    _
  %s6 = ssub.s32 1, %s4
  %s7 = scalar_select 0, %s6, %s4
  $region1: #{forward.16} parent=0
    #allocation2 [shape = 'u8[131072]{0}', space=vmem, size = 0x20000, scoped, tag = 'input window, operand 1']
    #allocation3 [shape = 'u8[131072]{0}', space=vmem, size = 0x20000, scoped, tag = 'output window, operand 0']
    loop: start=0, step=1, limit=4
    $region2: #{forward.16} parent=1 // loop_pre_header
      _
    $region3: #{forward.16} parent=1 // loop_header
      %s9 = sphi 0, %s13
      %p10 = scmp.ge.s32.totalorder %s9, 4
      %s17 = sphi 0, %s17
      %s19 = sphi 0, %s17
      %s20 = sphi 0, %s19
      %s34 = sphi 0, %s20
      %s40 = sphi 0, %s42
      %s43 = sphi 0, %s40
      %s44 = sphi 0, %s43
      %s60 = sphi 0, %s44
      %s64 = sphi 0, %s64
      %s66 = sphi 0, %s64
      %s67 = sphi 0, %s66
      %s81 = sphi 0, %s67
      %s87 = sphi 0, %s89
      %s90 = sphi 0, %s87
      %s91 = sphi 0, %s90
      %s107 = sphi 0, %s91
    $region4: #{forward.16} parent=1 // loop_header_branch
      %12 = sbr.rel (%p10) target = $region8
    $region5: #{forward.16} parent=1 // loop_body
      %s14 = ssub.s32 %s9, 1
      %s15 = ssub.s32 %s9, 2
      %s16 = sadd.s32 %s9, 1
      %s18 = sadd.s32 %s17, 1
      %p21 = scmp.eq.s32.totalorder %s9, 1
      %p22 = scmp.ne.s32.totalorder %s17, %s19
      %p23 = scmp.eq.s32.totalorder %s9, 0
      %p24 = por %p22, %p23
      %p25 = scmp.ne.s32.totalorder %s17, %s19
      %p26 = scmp.eq.s32.totalorder %s14, 1
      %p27 = por %p25, %p26
      %p28 = scmp.ne.s32.totalorder %s19, %s20
      %p29 = scmp.eq.s32.totalorder %s14, 0
      %p30 = por %p28, %p29
      %p31 = scmp.ne.s32.totalorder %s19, %s20
      %p32 = scmp.eq.s32.totalorder %s15, 1
      %p33 = por %p31, %p32
      %p35 = scmp.ne.s32.totalorder %s20, %s34
      %p36 = scmp.eq.s32.totalorder %s15, 0
      %p37 = por %p35, %p36
      %s38 = ssub.s32 %s9, %s16
      %p39 = scmp.eq.s32.totalorder %s38, 0
      %s41 = sadd.s32 %s40, 1
      %s42 = scalar_select %p39, %s40, %s41
      %p45 = pneg %p39
      %p46 = scmp.eq.s32.totalorder %s9, 1
      %p47 = por %p45, %p46
      %p48 = scmp.ne.s32.totalorder %s40, %s43
      %p49 = scmp.eq.s32.totalorder %s9, 0
      %p50 = por %p48, %p49
      %p51 = scmp.ne.s32.totalorder %s40, %s43
      %p52 = scmp.eq.s32.totalorder %s14, 1
      %p53 = por %p51, %p52
      %p54 = scmp.ne.s32.totalorder %s43, %s44
      %p55 = scmp.eq.s32.totalorder %s14, 0
      %p56 = por %p54, %p55
      %p57 = scmp.ne.s32.totalorder %s43, %s44
      %p58 = scmp.eq.s32.totalorder %s15, 1
      %p59 = por %p57, %p58
      %p61 = scmp.ne.s32.totalorder %s44, %s60
      %p62 = scmp.eq.s32.totalorder %s15, 0
      %p63 = por %p61, %p62
      %s65 = sadd.s32 %s64, 1
      %p68 = scmp.eq.s32.totalorder %s9, 1
      %p69 = scmp.ne.s32.totalorder %s64, %s66
      %p70 = scmp.eq.s32.totalorder %s9, 0
      %p71 = por %p69, %p70
      %p72 = scmp.ne.s32.totalorder %s64, %s66
      %p73 = scmp.eq.s32.totalorder %s14, 1
      %p74 = por %p72, %p73
      %p75 = scmp.ne.s32.totalorder %s66, %s67
      %p76 = scmp.eq.s32.totalorder %s14, 0
      %p77 = por %p75, %p76
      %p78 = scmp.ne.s32.totalorder %s66, %s67
      %p79 = scmp.eq.s32.totalorder %s15, 1
      %p80 = por %p78, %p79
      %p82 = scmp.ne.s32.totalorder %s67, %s81
      %p83 = scmp.eq.s32.totalorder %s15, 0
      %p84 = por %p82, %p83
      %s85 = ssub.s32 %s9, %s16
      %p86 = scmp.eq.s32.totalorder %s85, 0
      %s88 = sadd.s32 %s87, 1
      %s89 = scalar_select %p86, %s87, %s88
      %p92 = pneg %p86
      %p93 = scmp.eq.s32.totalorder %s9, 1
      %p94 = por %p92, %p93
      %p95 = scmp.ne.s32.totalorder %s87, %s90
      %p96 = scmp.eq.s32.totalorder %s9, 0
      %p97 = por %p95, %p96
      %p98 = scmp.ne.s32.totalorder %s87, %s90
      %p99 = scmp.eq.s32.totalorder %s14, 1
      %p100 = por %p98, %p99
      %p101 = scmp.ne.s32.totalorder %s90, %s91
      %p102 = scmp.eq.s32.totalorder %s14, 0
      %p103 = por %p101, %p102
      %p104 = scmp.ne.s32.totalorder %s90, %s91
      %p105 = scmp.eq.s32.totalorder %s15, 1
      %p106 = por %p104, %p105
      %p108 = scmp.ne.s32.totalorder %s91, %s107
      %p109 = scmp.eq.s32.totalorder %s15, 0
      %p110 = por %p108, %p109
      %p111 = scmp.le.s32.totalorder 1, %s9
      %p112 = scmp.lt.s32.totalorder %s9, 3
      %p113 = pnand %p111, %p112
      %p114 = pneg %p113
      // Predicated region
      $region9: #{forward.16} parent=5 // pred_check
        _
      $region10: #{forward.16} parent=5 // pred_check_branch
        %116 = sbr.rel (%p113) target = $region12
      $region11: #{forward.16} parent=5 // pred_region
        %s117 = ssub.s32 %s9, 1
        // Predicated region
        $region13: #{forward.16} parent=11 // pred_check
          %p118 = pneg %p30
        $region14: #{forward.16} parent=11 // pred_check_branch
          %120 = sbr.rel (%p118) target = $region16
        $region15: #{forward.16} parent=11 // pred_region
          _
        $region16: #{forward.16} parent=11 // pred_fallthru
          _
        // Predicated region
        $region17: #{forward.16} parent=11 // pred_check
          %p121 = pneg %p77
        $region18: #{forward.16} parent=11 // pred_check_branch
          %123 = sbr.rel (%p121) target = $region20
        $region19: #{forward.16} parent=11 // pred_region
          _
        $region20: #{forward.16} parent=11 // pred_fallthru
          _
      $region12: #{forward.16} parent=5 // pred_fallthru
        _
      %p124 = scmp.lt.s32.totalorder %s9, 2
      // Predicated region
      $region21: #{forward.16} parent=5 // pred_check
        %p125 = pneg %p124
      $region22: #{forward.16} parent=5 // pred_check_branch
        %127 = sbr.rel (%p125) target = $region24
      $region23: #{forward.16} parent=5 // pred_region
        // Predicated region
        $region25: #{forward.16} parent=23 // pred_check
          %p128 = pneg %p50
        $region26: #{forward.16} parent=23 // pred_check_branch
          %130 = sbr.rel (%p128) target = $region28
        $region27: #{forward.16} parent=23 // pred_region
          %s131 = sand.u32 %s40, 1
          %s132 = sand.u32 %s40, 1
          %s133 = smul.addr %s132, 128
          %s134 = scalar_lea.vmem [#allocation2], %s133
          %s135 = smul.u32 8, %s9
          %s136 = smul.addr %s135, 4
          %s137 = scalar_lea.vmem %s1, %s136
          // Predicated region
          $region29: #{forward.16} parent=27 // pred_check
            _
          $region30: #{forward.16} parent=27 // pred_check_branch
            %139 = sbr.rel (0) target = $region32
          $region31: #{forward.16} parent=27 // pred_region
            // Predicated region
            $region33: #{forward.16} parent=31 // pred_check
              _
            $region34: #{forward.16} parent=31 // pred_check_branch
              %141 = sbr.rel (0) target = $region36
            $region35: #{forward.16} parent=31 // pred_region
              loop: start=0, step=1, limit=1
              $region37: #{forward.16} parent=35 // loop_pre_header
                _
              $region38: #{forward.16} parent=35 // loop_header
                %s143 = sphi 0, %s147
                %p144 = scmp.ge.s32.totalorder %s143, 1
                %s148 = sphi %s137, %s137
                %s149 = sphi %s134, %s134
              $region39: #{forward.16} parent=35 // loop_header_branch
                %146 = sbr.rel (%p144) target = $region43
              $region40: #{forward.16} parent=35 // loop_body
                %v150 = vld [vmem:[%s148] sm:$0xff]
                %151 = vst [vmem:[%s149] sm:$0xff] %v150
                %v152 = vld [vmem:[%s148 + $0x8] sm:$0xff]
                %153 = vst [vmem:[%s149 + $0x8] sm:$0xff] %v152
                %v154 = vld [vmem:[%s148 + $0x10] sm:$0xff]
                %155 = vst [vmem:[%s149 + $0x10] sm:$0xff] %v154
                %v156 = vld [vmem:[%s148 + $0x18] sm:$0xff]
                %157 = vst [vmem:[%s149 + $0x18] sm:$0xff] %v156
                %v158 = vld [vmem:[%s148 + $0x40] sm:$0xff]
                %159 = vst [vmem:[%s149 + $0x20] sm:$0xff] %v158
                %v160 = vld [vmem:[%s148 + $0x48] sm:$0xff]
                %161 = vst [vmem:[%s149 + $0x28] sm:$0xff] %v160
                %v162 = vld [vmem:[%s148 + $0x50] sm:$0xff]
                %163 = vst [vmem:[%s149 + $0x30] sm:$0xff] %v162
                %v164 = vld [vmem:[%s148 + $0x58] sm:$0xff]
                %165 = vst [vmem:[%s149 + $0x38] sm:$0xff] %v164
                %v166 = vld [vmem:[%s148 + $0x80] sm:$0xff]
                %167 = vst [vmem:[%s149 + $0x40] sm:$0xff] %v166
                %v168 = vld [vmem:[%s148 + $0x88] sm:$0xff]
                %169 = vst [vmem:[%s149 + $0x48] sm:$0xff] %v168
                %v170 = vld [vmem:[%s148 + $0x90] sm:$0xff]
                %171 = vst [vmem:[%s149 + $0x50] sm:$0xff] %v170
                %v172 = vld [vmem:[%s148 + $0x98] sm:$0xff]
                %173 = vst [vmem:[%s149 + $0x58] sm:$0xff] %v172
                %v174 = vld [vmem:[%s148 + $0xc0] sm:$0xff]
                %175 = vst [vmem:[%s149 + $0x60] sm:$0xff] %v174
                %v176 = vld [vmem:[%s148 + $0xc8] sm:$0xff]
                %177 = vst [vmem:[%s149 + $0x68] sm:$0xff] %v176
                %v178 = vld [vmem:[%s148 + $0xd0] sm:$0xff]
                %179 = vst [vmem:[%s149 + $0x70] sm:$0xff] %v178
                %v180 = vld [vmem:[%s148 + $0xd8] sm:$0xff]
                %181 = vst [vmem:[%s149 + $0x78] sm:$0xff] %v180
              $region41: #{forward.16} parent=35 // loop_footer
                %s147 = sadd.s32 1, %s143
              $region42: #{forward.16} parent=35 // loop_footer_branch
                %142 = sbr.rel target = $region38
              $region43: #{forward.16} parent=35 // loop_exit
                _
            $region36: #{forward.16} parent=31 // pred_fallthru
              _
            // Predicated region
            $region44: #{forward.16} parent=31 // pred_check
              _
            $region45: #{forward.16} parent=31 // pred_check_branch
              %183 = sbr.rel target = $region47
            $region46: #{forward.16} parent=31 // pred_region
              _
            $region47: #{forward.16} parent=31 // pred_fallthru
              _
          $region32: #{forward.16} parent=27 // pred_fallthru
            _
          %184 = vnop
        $region28: #{forward.16} parent=23 // pred_fallthru
          _
      $region24: #{forward.16} parent=5 // pred_fallthru
        _
      %p185 = scmp.le.s32.totalorder 1, %s9
      %p186 = scmp.lt.s32.totalorder %s9, 3
      %p187 = pnand %p185, %p186
      %p188 = pneg %p187
      // Predicated region
      $region48: #{forward.16} parent=5 // pred_check
        _
      $region49: #{forward.16} parent=5 // pred_check_branch
        %190 = sbr.rel (%p187) target = $region51
      $region50: #{forward.16} parent=5 // pred_region
        %s191 = ssub.s32 %s9, 1
        %s192 = sand.u32 %s43, 1
        %s193 = sand.u32 %s43, 1
        %s194 = smul.addr %s193, 128
        %s195 = scalar_lea.vmem [#allocation2], %s194
        // Predicated region
        $region52: #{forward.16} parent=50 // pred_check
          %p196 = pneg %p56
        $region53: #{forward.16} parent=50 // pred_check_branch
          %198 = sbr.rel (%p196) target = $region55
        $region54: #{forward.16} parent=50 // pred_region
          _
        $region55: #{forward.16} parent=50 // pred_fallthru
          _
        %p199 = pneg %p30
        %p200 = pneg %p27
        %s201 = sand.u32 %s43, 1
        %s202 = sand.u32 %s43, 1
        %s203 = smul.addr %s202, 128
        %s204 = scalar_lea.vmem [#allocation2], %s203
        %p205 = pneg %p56
        %p206 = pneg %p53
        %p207 = pneg %p77
        %p208 = pneg %p74
        %p209 = pneg %p103
        %p210 = pneg %p100
        %s211 = sand.u32 %s90, 1
        %s212 = sand.u32 %s90, 1
        %s213 = smul.addr %s212, 128
        %s214 = scalar_lea.vmem [#allocation3], %s213
        %s215 = smul.u32 8, %s14
        %s216 = smul.u32 8, %s14
        %v218 = vld [vmem:[%s0] sm:$0xf]
        %v219 = vld [vmem:[%s0 + $0x4] sm:$0xf]
        %v220 = vld [vmem:[%s195] sm:$0xff]
        %v221 = vld [vmem:[%s195 + $0x8] sm:$0xff]
        %v222 = vld [vmem:[%s195 + $0x10] sm:$0xff]
        %v223 = vld [vmem:[%s195 + $0x18] sm:$0xff]
        %v224 = vld [vmem:[%s195 + $0x20] sm:$0xff]
        %v225 = vld [vmem:[%s195 + $0x28] sm:$0xff]
        %v226 = vld [vmem:[%s195 + $0x30] sm:$0xff]
        %v227 = vld [vmem:[%s195 + $0x38] sm:$0xff]
        %v228 = vld [vmem:[%s195 + $0x40] sm:$0xff]
        %v229 = vld [vmem:[%s195 + $0x48] sm:$0xff]
        %v230 = vld [vmem:[%s195 + $0x50] sm:$0xff]
        %v231 = vld [vmem:[%s195 + $0x58] sm:$0xff]
        %v232 = vld [vmem:[%s195 + $0x60] sm:$0x33]
        %v233 = vld [vmem:[%s195 + $0x68] sm:$0x33]
        %v234 = vld [vmem:[%s195 + $0x70] sm:$0x33]
        %v235 = vld [vmem:[%s195 + $0x78] sm:$0x33]
        %v236 = vld [vmem:[%s2] sm:$0xff]
        %v237 = vld [vmem:[%s2 + $0x8] sm:$0xff]
        %239 = vset.pattern.permute.xlu0 0
        %240 = vperm.xlu0 %239, %v236
        %v241 = vpop.permute.xlu0 %240
        %244 = vset.pattern.permute.xlu0 0
        %245 = vperm.xlu0 %244, %v237
        %v246 = vpop.permute.xlu0 %245
        %v250 = vunpack.c.l.b16 %v218
        %v251 = vunpack.c.l.b16 %v219
        %v252 = vpack.c.b16 %v251, %v250
        %v269 = vunpack.c.l.b16 %v220
        %v270 = vunpack.c.h.b16 %v220
        %v271 = vunpack.c.l.b16 %v221
        %v272 = vunpack.c.h.b16 %v221
        %v273 = vunpack.c.l.b16 %v222
        %v274 = vunpack.c.h.b16 %v222
        %v275 = vunpack.c.l.b16 %v223
        %v276 = vunpack.c.h.b16 %v223
        %v277 = vunpack.c.l.b16 %v224
        %v278 = vunpack.c.h.b16 %v224
        %v279 = vunpack.c.l.b16 %v225
        %v280 = vunpack.c.h.b16 %v225
        %v281 = vunpack.c.l.b16 %v226
        %v282 = vunpack.c.h.b16 %v226
        %v283 = vunpack.c.l.b16 %v227
        %v284 = vunpack.c.h.b16 %v227
        %v285 = vunpack.c.l.b16 %v228
        %v286 = vunpack.c.h.b16 %v228
        %v287 = vunpack.c.l.b16 %v229
        %v288 = vunpack.c.h.b16 %v229
        %v289 = vunpack.c.l.b16 %v230
        %v290 = vunpack.c.h.b16 %v230
        %v291 = vunpack.c.l.b16 %v231
        %v292 = vunpack.c.h.b16 %v231
        %v293 = vunpack.c.l.b16 %v232
        %v294 = vunpack.c.h.b16 %v232
        %v295 = vunpack.c.l.b16 %v233
        %v296 = vunpack.c.h.b16 %v233
        %v297 = vunpack.c.l.b16 %v234
        %v298 = vunpack.c.h.b16 %v234
        %v299 = vunpack.c.l.b16 %v235
        %v300 = vunpack.c.h.b16 %v235
        %v301 = vpack.c.b16 %v277, %v269
        %v302 = vpack.c.b16 %v278, %v270
        %v303 = vpack.c.b16 %v279, %v271
        %v304 = vpack.c.b16 %v280, %v272
        %v305 = vpack.c.b16 %v281, %v273
        %v306 = vpack.c.b16 %v282, %v274
        %v307 = vpack.c.b16 %v283, %v275
        %v308 = vpack.c.b16 %v284, %v276
        %v309 = vpack.c.b16 %v293, %v285
        %v310 = vpack.c.b16 %v294, %v286
        %v311 = vpack.c.b16 %v295, %v287
        %v312 = vpack.c.b16 %v296, %v288
        %v313 = vpack.c.b16 %v297, %v289
        %v314 = vpack.c.b16 %v298, %v290
        %v315 = vpack.c.b16 %v299, %v291
        %v316 = vpack.c.b16 %v300, %v292
        %vm325 = vcmask 220160
        %v327 = vsel %vm325, %v252, 0
        %vm329 = vcmask 1044480
        %vm330 = vcmask 1045504
        %v331 = vsel %vm329, 4294967295, 65535
        %v332 = vsel %vm330, %v331, 0
        %v334 = vand.u32 %v309, %v332
        %v337 = vand.u32 %v310, %v332
        %v340 = vand.u32 %v311, %v332
        %v343 = vand.u32 %v312, %v332
        %v346 = vand.u32 %v313, %v332
        %v349 = vand.u32 %v314, %v332
        %v352 = vand.u32 %v315, %v332
        %v355 = vand.u32 %v316, %v332
        %357 = vmatprep.subr.bf16.mxu0 0
        %358 = vmatpush1.bf16.msra.mxu0 0
        %359 = vmatprep.subr.bf16.mxu0 0
        %360 = vmatpush1.bf16.msra.mxu0 0
        %361 = vmatprep.subr.bf16.mxu0 0
        %362 = vmatpush1.bf16.msra.mxu0 0
        %363 = vmatprep.subr.bf16.mxu0 0
        %364 = vmatpush1.bf16.msra.mxu0 0
        %365 = vmatprep.subr.bf16.mxu0 0
        %366 = vmatpush1.bf16.msra.mxu0 0
        %367 = vmatprep.subr.bf16.mxu0 0
        %368 = vmatpush1.bf16.msra.mxu0 0
        %369 = vmatprep.subr.bf16.mxu0 %v337
        %370 = vmatpush1.bf16.msra.mxu0 %v334
        %371 = vmatprep.subr.bf16.mxu0 %v302
        %372 = vmatpush1.bf16.msra.mxu0 %v301
        %373 = vmatprep.subr.bf16.mxu0 0
        %374 = vmatpush2.bf16.msra.mxu0 0
        %375 = vmatprep.subr.bf16.mxu0 0
        %376 = vmatpush2.bf16.msra.mxu0 0
        %377 = vmatprep.subr.bf16.mxu0 0
        %378 = vmatpush2.bf16.msra.mxu0 0
        %379 = vmatprep.subr.bf16.mxu0 0
        %380 = vmatpush2.bf16.msra.mxu0 0
        %381 = vmatprep.subr.bf16.mxu0 0
        %382 = vmatpush2.bf16.msra.mxu0 0
        %383 = vmatprep.subr.bf16.mxu0 0
        %384 = vmatpush2.bf16.msra.mxu0 0
        %385 = vmatprep.subr.bf16.mxu0 0
        %386 = vmatpush2.bf16.msra.mxu0 0
        %387 = vmatprep.subr.bf16.mxu0 0
        %388 = vmatpush2.bf16.msra.mxu0 0
        %389 = vmatprep.mubr.bf16.mxu0 0
        %390 = vmatmul.mubr.bf16.gmra.mxu0 %v327
        %v391 = vpop.f32.mrf.mxu0
        %v392 = vadd.f32 %v241, %v391
        %v393 = vpop.f32.mrf.mxu0
        %v394 = vadd.f32 %v241, %v393
        %v395 = vpop.f32.mrf.mxu0
        %v396 = vadd.f32 %v246, %v395
        %v397 = vpop.f32.mrf.mxu0
        %v398 = vadd.f32 %v246, %v397
        %399 = vdwg.mxu0
        %400 = vmatprep.subr.bf16.mxu0 0
        %401 = vmatpush1.bf16.msra.mxu0 0
        %402 = vmatprep.subr.bf16.mxu0 0
        %403 = vmatpush1.bf16.msra.mxu0 0
        %404 = vmatprep.subr.bf16.mxu0 0
        %405 = vmatpush1.bf16.msra.mxu0 0
        %406 = vmatprep.subr.bf16.mxu0 0
        %407 = vmatpush1.bf16.msra.mxu0 0
        %408 = vmatprep.subr.bf16.mxu0 0
        %409 = vmatpush1.bf16.msra.mxu0 0
        %410 = vmatprep.subr.bf16.mxu0 0
        %411 = vmatpush1.bf16.msra.mxu0 0
        %412 = vmatprep.subr.bf16.mxu0 %v343
        %413 = vmatpush1.bf16.msra.mxu0 %v340
        %414 = vmatprep.subr.bf16.mxu0 %v304
        %415 = vmatpush1.bf16.msra.mxu0 %v303
        %416 = vmatprep.subr.bf16.mxu0 0
        %417 = vmatpush2.bf16.msra.mxu0 0
        %418 = vmatprep.subr.bf16.mxu0 0
        %419 = vmatpush2.bf16.msra.mxu0 0
        %420 = vmatprep.subr.bf16.mxu0 0
        %421 = vmatpush2.bf16.msra.mxu0 0
        %422 = vmatprep.subr.bf16.mxu0 0
        %423 = vmatpush2.bf16.msra.mxu0 0
        %424 = vmatprep.subr.bf16.mxu0 0
        %425 = vmatpush2.bf16.msra.mxu0 0
        %426 = vmatprep.subr.bf16.mxu0 0
        %427 = vmatpush2.bf16.msra.mxu0 0
        %428 = vmatprep.subr.bf16.mxu0 0
        %429 = vmatpush2.bf16.msra.mxu0 0
        %430 = vmatprep.subr.bf16.mxu0 0
        %431 = vmatpush2.bf16.msra.mxu0 0
        %432 = vmatprep.mubr.bf16.mxu0 0
        %433 = vmatmul.mubr.bf16.gmra.mxu0 %v327
        %v434 = vpop.f32.mrf.mxu0
        %v435 = vadd.f32 %v241, %v434
        %v436 = vpop.f32.mrf.mxu0
        %v437 = vadd.f32 %v241, %v436
        %v438 = vpop.f32.mrf.mxu0
        %v439 = vadd.f32 %v246, %v438
        %v440 = vpop.f32.mrf.mxu0
        %v441 = vadd.f32 %v246, %v440
        %442 = vdwg.mxu0
        %443 = vmatprep.subr.bf16.mxu0 0
        %444 = vmatpush1.bf16.msra.mxu0 0
        %445 = vmatprep.subr.bf16.mxu0 0
        %446 = vmatpush1.bf16.msra.mxu0 0
        %447 = vmatprep.subr.bf16.mxu0 0
        %448 = vmatpush1.bf16.msra.mxu0 0
        %449 = vmatprep.subr.bf16.mxu0 0
        %450 = vmatpush1.bf16.msra.mxu0 0
        %451 = vmatprep.subr.bf16.mxu0 0
        %452 = vmatpush1.bf16.msra.mxu0 0
        %453 = vmatprep.subr.bf16.mxu0 0
        %454 = vmatpush1.bf16.msra.mxu0 0
        %455 = vmatprep.subr.bf16.mxu0 %v349
        %456 = vmatpush1.bf16.msra.mxu0 %v346
        %457 = vmatprep.subr.bf16.mxu0 %v306
        %458 = vmatpush1.bf16.msra.mxu0 %v305
        %459 = vmatprep.subr.bf16.mxu0 0
        %460 = vmatpush2.bf16.msra.mxu0 0
        %461 = vmatprep.subr.bf16.mxu0 0
        %462 = vmatpush2.bf16.msra.mxu0 0
        %463 = vmatprep.subr.bf16.mxu0 0
        %464 = vmatpush2.bf16.msra.mxu0 0
        %465 = vmatprep.subr.bf16.mxu0 0
        %466 = vmatpush2.bf16.msra.mxu0 0
        %467 = vmatprep.subr.bf16.mxu0 0
        %468 = vmatpush2.bf16.msra.mxu0 0
        %469 = vmatprep.subr.bf16.mxu0 0
        %470 = vmatpush2.bf16.msra.mxu0 0
        %471 = vmatprep.subr.bf16.mxu0 0
        %472 = vmatpush2.bf16.msra.mxu0 0
        %473 = vmatprep.subr.bf16.mxu0 0
        %474 = vmatpush2.bf16.msra.mxu0 0
        %475 = vmatprep.mubr.bf16.mxu0 0
        %476 = vmatmul.mubr.bf16.gmra.mxu0 %v327
        %v477 = vpop.f32.mrf.mxu0
        %v478 = vadd.f32 %v241, %v477
        %v479 = vpop.f32.mrf.mxu0
        %v480 = vadd.f32 %v241, %v479
        %v481 = vpop.f32.mrf.mxu0
        %v482 = vadd.f32 %v246, %v481
        %v483 = vpop.f32.mrf.mxu0
        %v484 = vadd.f32 %v246, %v483
        %485 = vdwg.mxu0
        %486 = vmatprep.subr.bf16.mxu0 0
        %487 = vmatpush1.bf16.msra.mxu0 0
        %488 = vmatprep.subr.bf16.mxu0 0
        %489 = vmatpush1.bf16.msra.mxu0 0
        %490 = vmatprep.subr.bf16.mxu0 0
        %491 = vmatpush1.bf16.msra.mxu0 0
        %492 = vmatprep.subr.bf16.mxu0 0
        %493 = vmatpush1.bf16.msra.mxu0 0
        %494 = vmatprep.subr.bf16.mxu0 0
        %495 = vmatpush1.bf16.msra.mxu0 0
        %496 = vmatprep.subr.bf16.mxu0 0
        %497 = vmatpush1.bf16.msra.mxu0 0
        %498 = vmatprep.subr.bf16.mxu0 %v355
        %499 = vmatpush1.bf16.msra.mxu0 %v352
        %500 = vmatprep.subr.bf16.mxu0 %v308
        %501 = vmatpush1.bf16.msra.mxu0 %v307
        %502 = vmatprep.subr.bf16.mxu0 0
        %503 = vmatpush2.bf16.msra.mxu0 0
        %504 = vmatprep.subr.bf16.mxu0 0
        %505 = vmatpush2.bf16.msra.mxu0 0
        %506 = vmatprep.subr.bf16.mxu0 0
        %507 = vmatpush2.bf16.msra.mxu0 0
        %508 = vmatprep.subr.bf16.mxu0 0
        %509 = vmatpush2.bf16.msra.mxu0 0
        %510 = vmatprep.subr.bf16.mxu0 0
        %511 = vmatpush2.bf16.msra.mxu0 0
        %512 = vmatprep.subr.bf16.mxu0 0
        %513 = vmatpush2.bf16.msra.mxu0 0
        %514 = vmatprep.subr.bf16.mxu0 0
        %515 = vmatpush2.bf16.msra.mxu0 0
        %516 = vmatprep.subr.bf16.mxu0 0
        %517 = vmatpush2.bf16.msra.mxu0 0
        %518 = vmatprep.mubr.bf16.mxu0 0
        %519 = vmatmul.mubr.bf16.gmra.mxu0 %v327
        %v520 = vpop.f32.mrf.mxu0
        %v521 = vadd.f32 %v241, %v520
        %v522 = vpop.f32.mrf.mxu0
        %v523 = vadd.f32 %v241, %v522
        %v524 = vpop.f32.mrf.mxu0
        %v525 = vadd.f32 %v246, %v524
        %v526 = vpop.f32.mrf.mxu0
        %v527 = vadd.f32 %v246, %v526
        %528 = vdwg.mxu0
        %v529 = vmax.f32 %v392, 0.0
        %v530 = vmax.f32 %v394, 0.0
        %v531 = vmax.f32 %v435, 0.0
        %v532 = vmax.f32 %v437, 0.0
        %v533 = vmax.f32 %v478, 0.0
        %v534 = vmax.f32 %v480, 0.0
        %v535 = vmax.f32 %v521, 0.0
        %v536 = vmax.f32 %v523, 0.0
        %v537 = vmax.f32 %v396, 0.0
        %v538 = vmax.f32 %v398, 0.0
        %v539 = vmax.f32 %v439, 0.0
        %v540 = vmax.f32 %v441, 0.0
        %v541 = vmax.f32 %v482, 0.0
        %v542 = vmax.f32 %v484, 0.0
        %v543 = vmax.f32 %v525, 0.0
        %v544 = vmax.f32 %v527, 0.0
        %545 = vst [vmem:[%s214] sm:$0xff] %v529
        %546 = vst [vmem:[%s214 + $0x8] sm:$0xff] %v530
        %547 = vst [vmem:[%s214 + $0x10] sm:$0xff] %v531
        %548 = vst [vmem:[%s214 + $0x18] sm:$0xff] %v532
        %549 = vst [vmem:[%s214 + $0x20] sm:$0xff] %v533
        %550 = vst [vmem:[%s214 + $0x28] sm:$0xff] %v534
        %551 = vst [vmem:[%s214 + $0x30] sm:$0xff] %v535
        %552 = vst [vmem:[%s214 + $0x38] sm:$0xff] %v536
        %553 = vst [vmem:[%s214 + $0x40] sm:$0xff] %v537
        %554 = vst [vmem:[%s214 + $0x48] sm:$0xff] %v538
        %555 = vst [vmem:[%s214 + $0x50] sm:$0xff] %v539
        %556 = vst [vmem:[%s214 + $0x58] sm:$0xff] %v540
        %557 = vst [vmem:[%s214 + $0x60] sm:$0xff] %v541
        %558 = vst [vmem:[%s214 + $0x68] sm:$0xff] %v542
        %559 = vst [vmem:[%s214 + $0x70] sm:$0xff] %v543
        %560 = vst [vmem:[%s214 + $0x78] sm:$0xff] %v544
        %s561 = sand.u32 %s90, 1
        %s562 = sand.u32 %s90, 1
        %s563 = smul.addr %s562, 128
        %s564 = scalar_lea.vmem [#allocation3], %s563
        // Predicated region
        $region56: #{forward.16} parent=50 // pred_check
          %p565 = pneg %p100
        $region57: #{forward.16} parent=50 // pred_check_branch
          %567 = sbr.rel (%p565) target = $region59
        $region58: #{forward.16} parent=50 // pred_region
          %s568 = smul.u32 8, %s14
          %s569 = smul.addr %s568, 8
          %s570 = scalar_lea.vmem %s3, %s569
          // Predicated region
          $region60: #{forward.16} parent=58 // pred_check
            _
          $region61: #{forward.16} parent=58 // pred_check_branch
            %572 = sbr.rel (0) target = $region63
          $region62: #{forward.16} parent=58 // pred_region
            // Predicated region
            $region64: #{forward.16} parent=62 // pred_check
              _
            $region65: #{forward.16} parent=62 // pred_check_branch
              %574 = sbr.rel (0) target = $region67
            $region66: #{forward.16} parent=62 // pred_region
              loop: start=0, step=1, limit=1
              $region68: #{forward.16} parent=66 // loop_pre_header
                _
              $region69: #{forward.16} parent=66 // loop_header
                %s576 = sphi 0, %s580
                %p577 = scmp.ge.s32.totalorder %s576, 1
                %s581 = sphi %s564, %s564
                %s582 = sphi %s570, %s570
              $region70: #{forward.16} parent=66 // loop_header_branch
                %579 = sbr.rel (%p577) target = $region74
              $region71: #{forward.16} parent=66 // loop_body
                %v583 = vld [vmem:[%s581] sm:$0xff]
                %584 = vst [vmem:[%s582] sm:$0xff] %v583
                %v585 = vld [vmem:[%s581 + $0x8] sm:$0xff]
                %586 = vst [vmem:[%s582 + $0x8] sm:$0xff] %v585
                %v587 = vld [vmem:[%s581 + $0x10] sm:$0xff]
                %588 = vst [vmem:[%s582 + $0x10] sm:$0xff] %v587
                %v589 = vld [vmem:[%s581 + $0x18] sm:$0xff]
                %590 = vst [vmem:[%s582 + $0x18] sm:$0xff] %v589
                %v591 = vld [vmem:[%s581 + $0x20] sm:$0xff]
                %592 = vst [vmem:[%s582 + $0x20] sm:$0xff] %v591
                %v593 = vld [vmem:[%s581 + $0x28] sm:$0xff]
                %594 = vst [vmem:[%s582 + $0x28] sm:$0xff] %v593
                %v595 = vld [vmem:[%s581 + $0x30] sm:$0xff]
                %596 = vst [vmem:[%s582 + $0x30] sm:$0xff] %v595
                %v597 = vld [vmem:[%s581 + $0x38] sm:$0xff]
                %598 = vst [vmem:[%s582 + $0x38] sm:$0xff] %v597
                %v599 = vld [vmem:[%s581 + $0x40] sm:$0xff]
                %600 = vst [vmem:[%s582 + $0x80] sm:$0xff] %v599
                %v601 = vld [vmem:[%s581 + $0x48] sm:$0xff]
                %602 = vst [vmem:[%s582 + $0x88] sm:$0xff] %v601
                %v603 = vld [vmem:[%s581 + $0x50] sm:$0xff]
                %604 = vst [vmem:[%s582 + $0x90] sm:$0xff] %v603
                %v605 = vld [vmem:[%s581 + $0x58] sm:$0xff]
                %606 = vst [vmem:[%s582 + $0x98] sm:$0xff] %v605
                %v607 = vld [vmem:[%s581 + $0x60] sm:$0xff]
                %608 = vst [vmem:[%s582 + $0xa0] sm:$0xff] %v607
                %v609 = vld [vmem:[%s581 + $0x68] sm:$0xff]
                %610 = vst [vmem:[%s582 + $0xa8] sm:$0xff] %v609
                %v611 = vld [vmem:[%s581 + $0x70] sm:$0xff]
                %612 = vst [vmem:[%s582 + $0xb0] sm:$0xff] %v611
                %v613 = vld [vmem:[%s581 + $0x78] sm:$0xff]
                %614 = vst [vmem:[%s582 + $0xb8] sm:$0xff] %v613
              $region72: #{forward.16} parent=66 // loop_footer
                %s580 = sadd.s32 1, %s576
              $region73: #{forward.16} parent=66 // loop_footer_branch
                %575 = sbr.rel target = $region69
              $region74: #{forward.16} parent=66 // loop_exit
                _
            $region67: #{forward.16} parent=62 // pred_fallthru
              _
            // Predicated region
            $region75: #{forward.16} parent=62 // pred_check
              _
            $region76: #{forward.16} parent=62 // pred_check_branch
              %616 = sbr.rel target = $region78
            $region77: #{forward.16} parent=62 // pred_region
              _
            $region78: #{forward.16} parent=62 // pred_fallthru
              _
          $region63: #{forward.16} parent=58 // pred_fallthru
            _
          %617 = vnop
        $region59: #{forward.16} parent=50 // pred_fallthru
          _
      $region51: #{forward.16} parent=5 // pred_fallthru
        _
      %p618 = scmp.le.s32.totalorder 2, %s9
      // Predicated region
      $region79: #{forward.16} parent=5 // pred_check
        %p619 = pneg %p618
      $region80: #{forward.16} parent=5 // pred_check_branch
        %621 = sbr.rel (%p619) target = $region82
      $region81: #{forward.16} parent=5 // pred_region
        %s622 = ssub.s32 %s9, 2
        // Predicated region
        $region83: #{forward.16} parent=81 // pred_check
          %p623 = pneg %p106
        $region84: #{forward.16} parent=81 // pred_check_branch
          %625 = sbr.rel (%p623) target = $region86
        $region85: #{forward.16} parent=81 // pred_region
          %s626 = sand.u32 %s91, 1
          %s627 = sand.u32 %s91, 1
          %s628 = smul.addr %s627, 128
          %s629 = scalar_lea.vmem [#allocation3], %s628
        $region86: #{forward.16} parent=81 // pred_fallthru
          _
      $region82: #{forward.16} parent=5 // pred_fallthru
        _
    $region6: #{forward.16} parent=1 // loop_footer
      %s13 = sadd.s32 1, %s9
    $region7: #{forward.16} parent=1 // loop_footer_branch
      %8 = sbr.rel target = $region3
    $region8: #{forward.16} parent=1 // loop_exit
      _

// kernel: forward.17
$region0: #{forward.17}
  #allocation0 [shape = 'u32[]', space=smem, size = 0x4, offset = 0x4, fixed_abs, tag = 'smem constant byte address 0x4 - core index']
  #allocation1 [shape = 'u32[144,128]{1,0:T(1,128)}', space=vmem, size = 0x12000, scoped, tag = 'internal scratch']
  %s0 = inlined_call_operand.vmem [shape: bf16[16,144], index: 0, kind: input, shape index: {}]
  %s1 = inlined_call_operand.vmem [shape: bf16[144,2048], index: 1, kind: input, shape index: {}]
  %s2 = inlined_call_operand.vmem [shape: f32[16,1], index: 2, kind: input, shape index: {}]
  %s3 = inlined_call_operand.vmem [shape: f32[16,2048], index: 3, kind: output, shape index: {}]
  %s4 = sld [smem:[#allocation0]]
  $region87: #{forward.17} parent=0
    _
  %s6 = ssub.s32 1, %s4
  %s7 = scalar_select 0, %s6, %s4
  $region1: #{forward.17} parent=0
    #allocation2 [shape = 'u8[589824]{0}', space=vmem, size = 0x90000, scoped, tag = 'input window, operand 1']
    #allocation3 [shape = 'u8[131072]{0}', space=vmem, size = 0x20000, scoped, tag = 'output window, operand 0']
    loop: start=0, step=1, limit=4
    $region2: #{forward.17} parent=1 // loop_pre_header
      _
    $region3: #{forward.17} parent=1 // loop_header
      %s9 = sphi 0, %s13
      %p10 = scmp.ge.s32.totalorder %s9, 4
      %s17 = sphi 0, %s17
      %s19 = sphi 0, %s17
      %s20 = sphi 0, %s19
      %s34 = sphi 0, %s20
      %s40 = sphi 0, %s42
      %s43 = sphi 0, %s40
      %s44 = sphi 0, %s43
      %s60 = sphi 0, %s44
      %s64 = sphi 0, %s64
      %s66 = sphi 0, %s64
      %s67 = sphi 0, %s66
      %s81 = sphi 0, %s67
      %s87 = sphi 0, %s89
      %s90 = sphi 0, %s87
      %s91 = sphi 0, %s90
      %s107 = sphi 0, %s91
    $region4: #{forward.17} parent=1 // loop_header_branch
      %12 = sbr.rel (%p10) target = $region8
    $region5: #{forward.17} parent=1 // loop_body
      %s14 = ssub.s32 %s9, 1
      %s15 = ssub.s32 %s9, 2
      %s16 = sadd.s32 %s9, 1
      %s18 = sadd.s32 %s17, 1
      %p21 = scmp.eq.s32.totalorder %s9, 1
      %p22 = scmp.ne.s32.totalorder %s17, %s19
      %p23 = scmp.eq.s32.totalorder %s9, 0
      %p24 = por %p22, %p23
      %p25 = scmp.ne.s32.totalorder %s17, %s19
      %p26 = scmp.eq.s32.totalorder %s14, 1
      %p27 = por %p25, %p26
      %p28 = scmp.ne.s32.totalorder %s19, %s20
      %p29 = scmp.eq.s32.totalorder %s14, 0
      %p30 = por %p28, %p29
      %p31 = scmp.ne.s32.totalorder %s19, %s20
      %p32 = scmp.eq.s32.totalorder %s15, 1
      %p33 = por %p31, %p32
      %p35 = scmp.ne.s32.totalorder %s20, %s34
      %p36 = scmp.eq.s32.totalorder %s15, 0
      %p37 = por %p35, %p36
      %s38 = ssub.s32 %s9, %s16
      %p39 = scmp.eq.s32.totalorder %s38, 0
      %s41 = sadd.s32 %s40, 1
      %s42 = scalar_select %p39, %s40, %s41
      %p45 = pneg %p39
      %p46 = scmp.eq.s32.totalorder %s9, 1
      %p47 = por %p45, %p46
      %p48 = scmp.ne.s32.totalorder %s40, %s43
      %p49 = scmp.eq.s32.totalorder %s9, 0
      %p50 = por %p48, %p49
      %p51 = scmp.ne.s32.totalorder %s40, %s43
      %p52 = scmp.eq.s32.totalorder %s14, 1
      %p53 = por %p51, %p52
      %p54 = scmp.ne.s32.totalorder %s43, %s44
      %p55 = scmp.eq.s32.totalorder %s14, 0
      %p56 = por %p54, %p55
      %p57 = scmp.ne.s32.totalorder %s43, %s44
      %p58 = scmp.eq.s32.totalorder %s15, 1
      %p59 = por %p57, %p58
      %p61 = scmp.ne.s32.totalorder %s44, %s60
      %p62 = scmp.eq.s32.totalorder %s15, 0
      %p63 = por %p61, %p62
      %s65 = sadd.s32 %s64, 1
      %p68 = scmp.eq.s32.totalorder %s9, 1
      %p69 = scmp.ne.s32.totalorder %s64, %s66
      %p70 = scmp.eq.s32.totalorder %s9, 0
      %p71 = por %p69, %p70
      %p72 = scmp.ne.s32.totalorder %s64, %s66
      %p73 = scmp.eq.s32.totalorder %s14, 1
      %p74 = por %p72, %p73
      %p75 = scmp.ne.s32.totalorder %s66, %s67
      %p76 = scmp.eq.s32.totalorder %s14, 0
      %p77 = por %p75, %p76
      %p78 = scmp.ne.s32.totalorder %s66, %s67
      %p79 = scmp.eq.s32.totalorder %s15, 1
      %p80 = por %p78, %p79
      %p82 = scmp.ne.s32.totalorder %s67, %s81
      %p83 = scmp.eq.s32.totalorder %s15, 0
      %p84 = por %p82, %p83
      %s85 = ssub.s32 %s9, %s16
      %p86 = scmp.eq.s32.totalorder %s85, 0
      %s88 = sadd.s32 %s87, 1
      %s89 = scalar_select %p86, %s87, %s88
      %p92 = pneg %p86
      %p93 = scmp.eq.s32.totalorder %s9, 1
      %p94 = por %p92, %p93
      %p95 = scmp.ne.s32.totalorder %s87, %s90
      %p96 = scmp.eq.s32.totalorder %s9, 0
      %p97 = por %p95, %p96
      %p98 = scmp.ne.s32.totalorder %s87, %s90
      %p99 = scmp.eq.s32.totalorder %s14, 1
      %p100 = por %p98, %p99
      %p101 = scmp.ne.s32.totalorder %s90, %s91
      %p102 = scmp.eq.s32.totalorder %s14, 0
      %p103 = por %p101, %p102
      %p104 = scmp.ne.s32.totalorder %s90, %s91
      %p105 = scmp.eq.s32.totalorder %s15, 1
      %p106 = por %p104, %p105
      %p108 = scmp.ne.s32.totalorder %s91, %s107
      %p109 = scmp.eq.s32.totalorder %s15, 0
      %p110 = por %p108, %p109
      %p111 = scmp.le.s32.totalorder 1, %s9
      %p112 = scmp.lt.s32.totalorder %s9, 3
      %p113 = pnand %p111, %p112
      %p114 = pneg %p113
      // Predicated region
      $region9: #{forward.17} parent=5 // pred_check
        _
      $region10: #{forward.17} parent=5 // pred_check_branch
        %116 = sbr.rel (%p113) target = $region12
      $region11: #{forward.17} parent=5 // pred_region
        %s117 = ssub.s32 %s9, 1
        // Predicated region
        $region13: #{forward.17} parent=11 // pred_check
          %p118 = pneg %p30
        $region14: #{forward.17} parent=11 // pred_check_branch
          %120 = sbr.rel (%p118) target = $region16
        $region15: #{forward.17} parent=11 // pred_region
          _
        $region16: #{forward.17} parent=11 // pred_fallthru
          _
        // Predicated region
        $region17: #{forward.17} parent=11 // pred_check
          %p121 = pneg %p77
        $region18: #{forward.17} parent=11 // pred_check_branch
          %123 = sbr.rel (%p121) target = $region20
        $region19: #{forward.17} parent=11 // pred_region
          _
        $region20: #{forward.17} parent=11 // pred_fallthru
          _
      $region12: #{forward.17} parent=5 // pred_fallthru
        _
      %p124 = scmp.lt.s32.totalorder %s9, 2
      // Predicated region
      $region21: #{forward.17} parent=5 // pred_check
        %p125 = pneg %p124
      $region22: #{forward.17} parent=5 // pred_check_branch
        %127 = sbr.rel (%p125) target = $region24
      $region23: #{forward.17} parent=5 // pred_region
        // Predicated region
        $region25: #{forward.17} parent=23 // pred_check
          %p128 = pneg %p50
        $region26: #{forward.17} parent=23 // pred_check_branch
          %130 = sbr.rel (%p128) target = $region28
        $region27: #{forward.17} parent=23 // pred_region
          %s131 = sand.u32 %s40, 1
          %s132 = sand.u32 %s40, 1
          %s133 = smul.addr %s132, 576
          %s134 = scalar_lea.vmem [#allocation2], %s133
          %s135 = smul.u32 8, %s9
          %s136 = smul.addr %s135, 4
          %s137 = scalar_lea.vmem %s1, %s136
          // Predicated region
          $region29: #{forward.17} parent=27 // pred_check
            _
          $region30: #{forward.17} parent=27 // pred_check_branch
            %139 = sbr.rel (0) target = $region32
          $region31: #{forward.17} parent=27 // pred_region
            // Predicated region
            $region33: #{forward.17} parent=31 // pred_check
              _
            $region34: #{forward.17} parent=31 // pred_check_branch
              %141 = sbr.rel (0) target = $region36
            $region35: #{forward.17} parent=31 // pred_region
              loop: start=0, step=1, limit=1
              $region37: #{forward.17} parent=35 // loop_pre_header
                _
              $region38: #{forward.17} parent=35 // loop_header
                %s143 = sphi 0, %s147
                %p144 = scmp.ge.s32.totalorder %s143, 1
                %s148 = sphi %s137, %s137
                %s149 = sphi %s134, %s134
              $region39: #{forward.17} parent=35 // loop_header_branch
                %146 = sbr.rel (%p144) target = $region43
              $region40: #{forward.17} parent=35 // loop_body
                %v150 = vld [vmem:[%s148] sm:$0xff]
                %151 = vst [vmem:[%s149] sm:$0xff] %v150
                %v152 = vld [vmem:[%s148 + $0x8] sm:$0xff]
                %153 = vst [vmem:[%s149 + $0x8] sm:$0xff] %v152
                %v154 = vld [vmem:[%s148 + $0x10] sm:$0xff]
                %155 = vst [vmem:[%s149 + $0x10] sm:$0xff] %v154
                %v156 = vld [vmem:[%s148 + $0x18] sm:$0xff]
                %157 = vst [vmem:[%s149 + $0x18] sm:$0xff] %v156
                %v158 = vld [vmem:[%s148 + $0x40] sm:$0xff]
                %159 = vst [vmem:[%s149 + $0x20] sm:$0xff] %v158
                %v160 = vld [vmem:[%s148 + $0x48] sm:$0xff]
                %161 = vst [vmem:[%s149 + $0x28] sm:$0xff] %v160
                %v162 = vld [vmem:[%s148 + $0x50] sm:$0xff]
                %163 = vst [vmem:[%s149 + $0x30] sm:$0xff] %v162
                %v164 = vld [vmem:[%s148 + $0x58] sm:$0xff]
                %165 = vst [vmem:[%s149 + $0x38] sm:$0xff] %v164
                %v166 = vld [vmem:[%s148 + $0x80] sm:$0xff]
                %167 = vst [vmem:[%s149 + $0x40] sm:$0xff] %v166
                %v168 = vld [vmem:[%s148 + $0x88] sm:$0xff]
                %169 = vst [vmem:[%s149 + $0x48] sm:$0xff] %v168
                %v170 = vld [vmem:[%s148 + $0x90] sm:$0xff]
                %171 = vst [vmem:[%s149 + $0x50] sm:$0xff] %v170
                %v172 = vld [vmem:[%s148 + $0x98] sm:$0xff]
                %173 = vst [vmem:[%s149 + $0x58] sm:$0xff] %v172
                %v174 = vld [vmem:[%s148 + $0xc0] sm:$0xff]
                %175 = vst [vmem:[%s149 + $0x60] sm:$0xff] %v174
                %v176 = vld [vmem:[%s148 + $0xc8] sm:$0xff]
                %177 = vst [vmem:[%s149 + $0x68] sm:$0xff] %v176
                %v178 = vld [vmem:[%s148 + $0xd0] sm:$0xff]
                %179 = vst [vmem:[%s149 + $0x70] sm:$0xff] %v178
                %v180 = vld [vmem:[%s148 + $0xd8] sm:$0xff]
                %181 = vst [vmem:[%s149 + $0x78] sm:$0xff] %v180
                %v182 = vld [vmem:[%s148 + $0x100] sm:$0xff]
                %183 = vst [vmem:[%s149 + $0x80] sm:$0xff] %v182
                %v184 = vld [vmem:[%s148 + $0x108] sm:$0xff]
                %185 = vst [vmem:[%s149 + $0x88] sm:$0xff] %v184
                %v186 = vld [vmem:[%s148 + $0x110] sm:$0xff]
                %187 = vst [vmem:[%s149 + $0x90] sm:$0xff] %v186
                %v188 = vld [vmem:[%s148 + $0x118] sm:$0xff]
                %189 = vst [vmem:[%s149 + $0x98] sm:$0xff] %v188
                %v190 = vld [vmem:[%s148 + $0x140] sm:$0xff]
                %191 = vst [vmem:[%s149 + $0xa0] sm:$0xff] %v190
                %v192 = vld [vmem:[%s148 + $0x148] sm:$0xff]
                %193 = vst [vmem:[%s149 + $0xa8] sm:$0xff] %v192
                %v194 = vld [vmem:[%s148 + $0x150] sm:$0xff]
                %195 = vst [vmem:[%s149 + $0xb0] sm:$0xff] %v194
                %v196 = vld [vmem:[%s148 + $0x158] sm:$0xff]
                %197 = vst [vmem:[%s149 + $0xb8] sm:$0xff] %v196
                %v198 = vld [vmem:[%s148 + $0x180] sm:$0xff]
                %199 = vst [vmem:[%s149 + $0xc0] sm:$0xff] %v198
                %v200 = vld [vmem:[%s148 + $0x188] sm:$0xff]
                %201 = vst [vmem:[%s149 + $0xc8] sm:$0xff] %v200
                %v202 = vld [vmem:[%s148 + $0x190] sm:$0xff]
                %203 = vst [vmem:[%s149 + $0xd0] sm:$0xff] %v202
                %v204 = vld [vmem:[%s148 + $0x198] sm:$0xff]
                %205 = vst [vmem:[%s149 + $0xd8] sm:$0xff] %v204
                %v206 = vld [vmem:[%s148 + $0x1c0] sm:$0xff]
                %207 = vst [vmem:[%s149 + $0xe0] sm:$0xff] %v206
                %v208 = vld [vmem:[%s148 + $0x1c8] sm:$0xff]
                %209 = vst [vmem:[%s149 + $0xe8] sm:$0xff] %v208
                %v210 = vld [vmem:[%s148 + $0x1d0] sm:$0xff]
                %211 = vst [vmem:[%s149 + $0xf0] sm:$0xff] %v210
                %v212 = vld [vmem:[%s148 + $0x1d8] sm:$0xff]
                %213 = vst [vmem:[%s149 + $0xf8] sm:$0xff] %v212
                %v214 = vld [vmem:[%s148 + $0x200] sm:$0xff]
                %215 = vst [vmem:[%s149 + $0x100] sm:$0xff] %v214
                %v216 = vld [vmem:[%s148 + $0x208] sm:$0xff]
                %217 = vst [vmem:[%s149 + $0x108] sm:$0xff] %v216
                %v218 = vld [vmem:[%s148 + $0x210] sm:$0xff]
                %219 = vst [vmem:[%s149 + $0x110] sm:$0xff] %v218
                %v220 = vld [vmem:[%s148 + $0x218] sm:$0xff]
                %221 = vst [vmem:[%s149 + $0x118] sm:$0xff] %v220
                %v222 = vld [vmem:[%s148 + $0x240] sm:$0xff]
                %223 = vst [vmem:[%s149 + $0x120] sm:$0xff] %v222
                %v224 = vld [vmem:[%s148 + $0x248] sm:$0xff]
                %225 = vst [vmem:[%s149 + $0x128] sm:$0xff] %v224
                %v226 = vld [vmem:[%s148 + $0x250] sm:$0xff]
                %227 = vst [vmem:[%s149 + $0x130] sm:$0xff] %v226
                %v228 = vld [vmem:[%s148 + $0x258] sm:$0xff]
                %229 = vst [vmem:[%s149 + $0x138] sm:$0xff] %v228
                %v230 = vld [vmem:[%s148 + $0x280] sm:$0xff]
                %231 = vst [vmem:[%s149 + $0x140] sm:$0xff] %v230
                %v232 = vld [vmem:[%s148 + $0x288] sm:$0xff]
                %233 = vst [vmem:[%s149 + $0x148] sm:$0xff] %v232
                %v234 = vld [vmem:[%s148 + $0x290] sm:$0xff]
                %235 = vst [vmem:[%s149 + $0x150] sm:$0xff] %v234
                %v236 = vld [vmem:[%s148 + $0x298] sm:$0xff]
                %237 = vst [vmem:[%s149 + $0x158] sm:$0xff] %v236
                %v238 = vld [vmem:[%s148 + $0x2c0] sm:$0xff]
                %239 = vst [vmem:[%s149 + $0x160] sm:$0xff] %v238
                %v240 = vld [vmem:[%s148 + $0x2c8] sm:$0xff]
                %241 = vst [vmem:[%s149 + $0x168] sm:$0xff] %v240
                %v242 = vld [vmem:[%s148 + $0x2d0] sm:$0xff]
                %243 = vst [vmem:[%s149 + $0x170] sm:$0xff] %v242
                %v244 = vld [vmem:[%s148 + $0x2d8] sm:$0xff]
                %245 = vst [vmem:[%s149 + $0x178] sm:$0xff] %v244
                %v246 = vld [vmem:[%s148 + $0x300] sm:$0xff]
                %247 = vst [vmem:[%s149 + $0x180] sm:$0xff] %v246
                %v248 = vld [vmem:[%s148 + $0x308] sm:$0xff]
                %249 = vst [vmem:[%s149 + $0x188] sm:$0xff] %v248
                %v250 = vld [vmem:[%s148 + $0x310] sm:$0xff]
                %251 = vst [vmem:[%s149 + $0x190] sm:$0xff] %v250
                %v252 = vld [vmem:[%s148 + $0x318] sm:$0xff]
                %253 = vst [vmem:[%s149 + $0x198] sm:$0xff] %v252
                %v254 = vld [vmem:[%s148 + $0x340] sm:$0xff]
                %255 = vst [vmem:[%s149 + $0x1a0] sm:$0xff] %v254
                %v256 = vld [vmem:[%s148 + $0x348] sm:$0xff]
                %257 = vst [vmem:[%s149 + $0x1a8] sm:$0xff] %v256
                %v258 = vld [vmem:[%s148 + $0x350] sm:$0xff]
                %259 = vst [vmem:[%s149 + $0x1b0] sm:$0xff] %v258
                %v260 = vld [vmem:[%s148 + $0x358] sm:$0xff]
                %261 = vst [vmem:[%s149 + $0x1b8] sm:$0xff] %v260
                %v262 = vld [vmem:[%s148 + $0x380] sm:$0xff]
                %263 = vst [vmem:[%s149 + $0x1c0] sm:$0xff] %v262
                %v264 = vld [vmem:[%s148 + $0x388] sm:$0xff]
                %265 = vst [vmem:[%s149 + $0x1c8] sm:$0xff] %v264
                %v266 = vld [vmem:[%s148 + $0x390] sm:$0xff]
                %267 = vst [vmem:[%s149 + $0x1d0] sm:$0xff] %v266
                %v268 = vld [vmem:[%s148 + $0x398] sm:$0xff]
                %269 = vst [vmem:[%s149 + $0x1d8] sm:$0xff] %v268
                %v270 = vld [vmem:[%s148 + $0x3c0] sm:$0xff]
                %271 = vst [vmem:[%s149 + $0x1e0] sm:$0xff] %v270
                %v272 = vld [vmem:[%s148 + $0x3c8] sm:$0xff]
                %273 = vst [vmem:[%s149 + $0x1e8] sm:$0xff] %v272
                %v274 = vld [vmem:[%s148 + $0x3d0] sm:$0xff]
                %275 = vst [vmem:[%s149 + $0x1f0] sm:$0xff] %v274
                %v276 = vld [vmem:[%s148 + $0x3d8] sm:$0xff]
                %277 = vst [vmem:[%s149 + $0x1f8] sm:$0xff] %v276
                %v278 = vld [vmem:[%s148 + $0x400] sm:$0xff]
                %279 = vst [vmem:[%s149 + $0x200] sm:$0xff] %v278
                %v280 = vld [vmem:[%s148 + $0x408] sm:$0xff]
                %281 = vst [vmem:[%s149 + $0x208] sm:$0xff] %v280
                %v282 = vld [vmem:[%s148 + $0x410] sm:$0xff]
                %283 = vst [vmem:[%s149 + $0x210] sm:$0xff] %v282
                %v284 = vld [vmem:[%s148 + $0x418] sm:$0xff]
                %285 = vst [vmem:[%s149 + $0x218] sm:$0xff] %v284
                %v286 = vld [vmem:[%s148 + $0x440] sm:$0xff]
                %287 = vst [vmem:[%s149 + $0x220] sm:$0xff] %v286
                %v288 = vld [vmem:[%s148 + $0x448] sm:$0xff]
                %289 = vst [vmem:[%s149 + $0x228] sm:$0xff] %v288
                %v290 = vld [vmem:[%s148 + $0x450] sm:$0xff]
                %291 = vst [vmem:[%s149 + $0x230] sm:$0xff] %v290
                %v292 = vld [vmem:[%s148 + $0x458] sm:$0xff]
                %293 = vst [vmem:[%s149 + $0x238] sm:$0xff] %v292
              $region41: #{forward.17} parent=35 // loop_footer
                %s147 = sadd.s32 1, %s143
              $region42: #{forward.17} parent=35 // loop_footer_branch
                %142 = sbr.rel target = $region38
              $region43: #{forward.17} parent=35 // loop_exit
                _
            $region36: #{forward.17} parent=31 // pred_fallthru
              _
            // Predicated region
            $region44: #{forward.17} parent=31 // pred_check
              _
            $region45: #{forward.17} parent=31 // pred_check_branch
              %295 = sbr.rel target = $region47
            $region46: #{forward.17} parent=31 // pred_region
              _
            $region47: #{forward.17} parent=31 // pred_fallthru
              _
          $region32: #{forward.17} parent=27 // pred_fallthru
            _
          %296 = vnop
        $region28: #{forward.17} parent=23 // pred_fallthru
          _
      $region24: #{forward.17} parent=5 // pred_fallthru
        _
      %p297 = scmp.le.s32.totalorder 1, %s9
      %p298 = scmp.lt.s32.totalorder %s9, 3
      %p299 = pnand %p297, %p298
      %p300 = pneg %p299
      // Predicated region
      $region48: #{forward.17} parent=5 // pred_check
        _
      $region49: #{forward.17} parent=5 // pred_check_branch
        %302 = sbr.rel (%p299) target = $region51
      $region50: #{forward.17} parent=5 // pred_region
        %s303 = ssub.s32 %s9, 1
        %s304 = sand.u32 %s43, 1
        %s305 = sand.u32 %s43, 1
        %s306 = smul.addr %s305, 576
        %s307 = scalar_lea.vmem [#allocation2], %s306
        // Predicated region
        $region52: #{forward.17} parent=50 // pred_check
          %p308 = pneg %p56
        $region53: #{forward.17} parent=50 // pred_check_branch
          %310 = sbr.rel (%p308) target = $region55
        $region54: #{forward.17} parent=50 // pred_region
          _
        $region55: #{forward.17} parent=50 // pred_fallthru
          _
        %p311 = pneg %p30
        %p312 = pneg %p27
        %s313 = sand.u32 %s43, 1
        %s314 = sand.u32 %s43, 1
        %s315 = smul.addr %s314, 576
        %s316 = scalar_lea.vmem [#allocation2], %s315
        %p317 = pneg %p56
        %p318 = pneg %p53
        %p319 = pneg %p77
        %p320 = pneg %p74
        %p321 = pneg %p103
        %p322 = pneg %p100
        %s323 = sand.u32 %s90, 1
        %s324 = sand.u32 %s90, 1
        %s325 = smul.addr %s324, 128
        %s326 = scalar_lea.vmem [#allocation3], %s325
        %s327 = smul.u32 8, %s14
        %s328 = smul.u32 8, %s14
        %v330 = vld [vmem:[%s0] sm:$0xff]
        %v331 = vld [vmem:[%s0 + $0x8] sm:$0xff]
        %v332 = vld [vmem:[%s307] sm:$0xff]
        %v333 = vld [vmem:[%s307 + $0x8] sm:$0xff]
        %v334 = vld [vmem:[%s307 + $0x10] sm:$0xff]
        %v335 = vld [vmem:[%s307 + $0x18] sm:$0xff]
        %v336 = vld [vmem:[%s307 + $0x20] sm:$0xff]
        %v337 = vld [vmem:[%s307 + $0x28] sm:$0xff]
        %v338 = vld [vmem:[%s307 + $0x30] sm:$0xff]
        %v339 = vld [vmem:[%s307 + $0x38] sm:$0xff]
        %v340 = vld [vmem:[%s307 + $0x40] sm:$0xff]
        %v341 = vld [vmem:[%s307 + $0x48] sm:$0xff]
        %v342 = vld [vmem:[%s307 + $0x50] sm:$0xff]
        %v343 = vld [vmem:[%s307 + $0x58] sm:$0xff]
        %v344 = vld [vmem:[%s307 + $0x60] sm:$0xff]
        %v345 = vld [vmem:[%s307 + $0x68] sm:$0xff]
        %v346 = vld [vmem:[%s307 + $0x70] sm:$0xff]
        %v347 = vld [vmem:[%s307 + $0x78] sm:$0xff]
        %v348 = vld [vmem:[%s307 + $0x80] sm:$0xff]
        %v349 = vld [vmem:[%s307 + $0x88] sm:$0xff]
        %v350 = vld [vmem:[%s307 + $0x90] sm:$0xff]
        %v351 = vld [vmem:[%s307 + $0x98] sm:$0xff]
        %v352 = vld [vmem:[%s307 + $0xa0] sm:$0xff]
        %v353 = vld [vmem:[%s307 + $0xa8] sm:$0xff]
        %v354 = vld [vmem:[%s307 + $0xb0] sm:$0xff]
        %v355 = vld [vmem:[%s307 + $0xb8] sm:$0xff]
        %v356 = vld [vmem:[%s307 + $0xc0] sm:$0xff]
        %v357 = vld [vmem:[%s307 + $0xc8] sm:$0xff]
        %v358 = vld [vmem:[%s307 + $0xd0] sm:$0xff]
        %v359 = vld [vmem:[%s307 + $0xd8] sm:$0xff]
        %v360 = vld [vmem:[%s307 + $0xe0] sm:$0xff]
        %v361 = vld [vmem:[%s307 + $0xe8] sm:$0xff]
        %v362 = vld [vmem:[%s307 + $0xf0] sm:$0xff]
        %v363 = vld [vmem:[%s307 + $0xf8] sm:$0xff]
        %v364 = vld [vmem:[%s307 + $0x100] sm:$0xff]
        %v365 = vld [vmem:[%s307 + $0x108] sm:$0xff]
        %v366 = vld [vmem:[%s307 + $0x110] sm:$0xff]
        %v367 = vld [vmem:[%s307 + $0x118] sm:$0xff]
        %v368 = vld [vmem:[%s307 + $0x120] sm:$0xff]
        %v369 = vld [vmem:[%s307 + $0x128] sm:$0xff]
        %v370 = vld [vmem:[%s307 + $0x130] sm:$0xff]
        %v371 = vld [vmem:[%s307 + $0x138] sm:$0xff]
        %v372 = vld [vmem:[%s307 + $0x140] sm:$0xff]
        %v373 = vld [vmem:[%s307 + $0x148] sm:$0xff]
        %v374 = vld [vmem:[%s307 + $0x150] sm:$0xff]
        %v375 = vld [vmem:[%s307 + $0x158] sm:$0xff]
        %v376 = vld [vmem:[%s307 + $0x160] sm:$0xff]
        %v377 = vld [vmem:[%s307 + $0x168] sm:$0xff]
        %v378 = vld [vmem:[%s307 + $0x170] sm:$0xff]
        %v379 = vld [vmem:[%s307 + $0x178] sm:$0xff]
        %v380 = vld [vmem:[%s307 + $0x180] sm:$0xff]
        %v381 = vld [vmem:[%s307 + $0x188] sm:$0xff]
        %v382 = vld [vmem:[%s307 + $0x190] sm:$0xff]
        %v383 = vld [vmem:[%s307 + $0x198] sm:$0xff]
        %v384 = vld [vmem:[%s307 + $0x1a0] sm:$0xff]
        %v385 = vld [vmem:[%s307 + $0x1a8] sm:$0xff]
        %v386 = vld [vmem:[%s307 + $0x1b0] sm:$0xff]
        %v387 = vld [vmem:[%s307 + $0x1b8] sm:$0xff]
        %v388 = vld [vmem:[%s307 + $0x1c0] sm:$0xff]
        %v389 = vld [vmem:[%s307 + $0x1c8] sm:$0xff]
        %v390 = vld [vmem:[%s307 + $0x1d0] sm:$0xff]
        %v391 = vld [vmem:[%s307 + $0x1d8] sm:$0xff]
        %v392 = vld [vmem:[%s307 + $0x1e0] sm:$0xff]
        %v393 = vld [vmem:[%s307 + $0x1e8] sm:$0xff]
        %v394 = vld [vmem:[%s307 + $0x1f0] sm:$0xff]
        %v395 = vld [vmem:[%s307 + $0x1f8] sm:$0xff]
        %v396 = vld [vmem:[%s307 + $0x200] sm:$0xff]
        %v397 = vld [vmem:[%s307 + $0x208] sm:$0xff]
        %v398 = vld [vmem:[%s307 + $0x210] sm:$0xff]
        %v399 = vld [vmem:[%s307 + $0x218] sm:$0xff]
        %v400 = vld [vmem:[%s307 + $0x220] sm:$0xff]
        %v401 = vld [vmem:[%s307 + $0x228] sm:$0xff]
        %v402 = vld [vmem:[%s307 + $0x230] sm:$0xff]
        %v403 = vld [vmem:[%s307 + $0x238] sm:$0xff]
        %v404 = vld [vmem:[%s2] sm:$0xff]
        %v405 = vld [vmem:[%s2 + $0x8] sm:$0xff]
        %407 = vset.pattern.permute.xlu0 0
        %408 = vperm.xlu0 %407, %v404
        %v409 = vpop.permute.xlu0 %408
        %412 = vset.pattern.permute.xlu0 0
        %413 = vperm.xlu0 %412, %v405
        %v414 = vpop.permute.xlu0 %413
        %v418 = vunpack.c.l.b16 %v330
        %v419 = vunpack.c.h.b16 %v330
        %v420 = vunpack.c.l.b16 %v331
        %v421 = vunpack.c.h.b16 %v331
        %v422 = vpack.c.b16 %v420, %v418
        %v423 = vpack.c.b16 %v421, %v419
        %v497 = vunpack.c.l.b16 %v332
        %v498 = vunpack.c.h.b16 %v332
        %v499 = vunpack.c.l.b16 %v333
        %v500 = vunpack.c.h.b16 %v333
        %v501 = vunpack.c.l.b16 %v334
        %v502 = vunpack.c.h.b16 %v334
        %v503 = vunpack.c.l.b16 %v335
        %v504 = vunpack.c.h.b16 %v335
        %v505 = vunpack.c.l.b16 %v336
        %v506 = vunpack.c.h.b16 %v336
        %v507 = vunpack.c.l.b16 %v337
        %v508 = vunpack.c.h.b16 %v337
        %v509 = vunpack.c.l.b16 %v338
        %v510 = vunpack.c.h.b16 %v338
        %v511 = vunpack.c.l.b16 %v339
        %v512 = vunpack.c.h.b16 %v339
        %v513 = vunpack.c.l.b16 %v340
        %v514 = vunpack.c.h.b16 %v340
        %v515 = vunpack.c.l.b16 %v341
        %v516 = vunpack.c.h.b16 %v341
        %v517 = vunpack.c.l.b16 %v342
        %v518 = vunpack.c.h.b16 %v342
        %v519 = vunpack.c.l.b16 %v343
        %v520 = vunpack.c.h.b16 %v343
        %v521 = vunpack.c.l.b16 %v344
        %v522 = vunpack.c.h.b16 %v344
        %v523 = vunpack.c.l.b16 %v345
        %v524 = vunpack.c.h.b16 %v345
        %v525 = vunpack.c.l.b16 %v346
        %v526 = vunpack.c.h.b16 %v346
        %v527 = vunpack.c.l.b16 %v347
        %v528 = vunpack.c.h.b16 %v347
        %v529 = vunpack.c.l.b16 %v348
        %v530 = vunpack.c.h.b16 %v348
        %v531 = vunpack.c.l.b16 %v349
        %v532 = vunpack.c.h.b16 %v349
        %v533 = vunpack.c.l.b16 %v350
        %v534 = vunpack.c.h.b16 %v350
        %v535 = vunpack.c.l.b16 %v351
        %v536 = vunpack.c.h.b16 %v351
        %v537 = vunpack.c.l.b16 %v352
        %v538 = vunpack.c.h.b16 %v352
        %v539 = vunpack.c.l.b16 %v353
        %v540 = vunpack.c.h.b16 %v353
        %v541 = vunpack.c.l.b16 %v354
        %v542 = vunpack.c.h.b16 %v354
        %v543 = vunpack.c.l.b16 %v355
        %v544 = vunpack.c.h.b16 %v355
        %v545 = vunpack.c.l.b16 %v356
        %v546 = vunpack.c.h.b16 %v356
        %v547 = vunpack.c.l.b16 %v357
        %v548 = vunpack.c.h.b16 %v357
        %v549 = vunpack.c.l.b16 %v358
        %v550 = vunpack.c.h.b16 %v358
        %v551 = vunpack.c.l.b16 %v359
        %v552 = vunpack.c.h.b16 %v359
        %v553 = vunpack.c.l.b16 %v360
        %v554 = vunpack.c.h.b16 %v360
        %v555 = vunpack.c.l.b16 %v361
        %v556 = vunpack.c.h.b16 %v361
        %v557 = vunpack.c.l.b16 %v362
        %v558 = vunpack.c.h.b16 %v362
        %v559 = vunpack.c.l.b16 %v363
        %v560 = vunpack.c.h.b16 %v363
        %v561 = vunpack.c.l.b16 %v364
        %v562 = vunpack.c.h.b16 %v364
        %v563 = vunpack.c.l.b16 %v365
        %v564 = vunpack.c.h.b16 %v365
        %v565 = vunpack.c.l.b16 %v366
        %v566 = vunpack.c.h.b16 %v366
        %v567 = vunpack.c.l.b16 %v367
        %v568 = vunpack.c.h.b16 %v367
        %v569 = vunpack.c.l.b16 %v368
        %v570 = vunpack.c.h.b16 %v368
        %v571 = vunpack.c.l.b16 %v369
        %v572 = vunpack.c.h.b16 %v369
        %v573 = vunpack.c.l.b16 %v370
        %v574 = vunpack.c.h.b16 %v370
        %v575 = vunpack.c.l.b16 %v371
        %v576 = vunpack.c.h.b16 %v371
        %v577 = vunpack.c.l.b16 %v372
        %v578 = vunpack.c.h.b16 %v372
        %v579 = vunpack.c.l.b16 %v373
        %v580 = vunpack.c.h.b16 %v373
        %v581 = vunpack.c.l.b16 %v374
        %v582 = vunpack.c.h.b16 %v374
        %v583 = vunpack.c.l.b16 %v375
        %v584 = vunpack.c.h.b16 %v375
        %v585 = vunpack.c.l.b16 %v376
        %v586 = vunpack.c.h.b16 %v376
        %v587 = vunpack.c.l.b16 %v377
        %v588 = vunpack.c.h.b16 %v377
        %v589 = vunpack.c.l.b16 %v378
        %v590 = vunpack.c.h.b16 %v378
        %v591 = vunpack.c.l.b16 %v379
        %v592 = vunpack.c.h.b16 %v379
        %v593 = vunpack.c.l.b16 %v380
        %v594 = vunpack.c.h.b16 %v380
        %v595 = vunpack.c.l.b16 %v381
        %v596 = vunpack.c.h.b16 %v381
        %v597 = vunpack.c.l.b16 %v382
        %v598 = vunpack.c.h.b16 %v382
        %v599 = vunpack.c.l.b16 %v383
        %v600 = vunpack.c.h.b16 %v383
        %v601 = vunpack.c.l.b16 %v384
        %v602 = vunpack.c.h.b16 %v384
        %v603 = vunpack.c.l.b16 %v385
        %v604 = vunpack.c.h.b16 %v385
        %v605 = vunpack.c.l.b16 %v386
        %v606 = vunpack.c.h.b16 %v386
        %v607 = vunpack.c.l.b16 %v387
        %v608 = vunpack.c.h.b16 %v387
        %v609 = vunpack.c.l.b16 %v388
        %v610 = vunpack.c.h.b16 %v388
        %v611 = vunpack.c.l.b16 %v389
        %v612 = vunpack.c.h.b16 %v389
        %v613 = vunpack.c.l.b16 %v390
        %v614 = vunpack.c.h.b16 %v390
        %v615 = vunpack.c.l.b16 %v391
        %v616 = vunpack.c.h.b16 %v391
        %v617 = vunpack.c.l.b16 %v392
        %v618 = vunpack.c.h.b16 %v392
        %v619 = vunpack.c.l.b16 %v393
        %v620 = vunpack.c.h.b16 %v393
        %v621 = vunpack.c.l.b16 %v394
        %v622 = vunpack.c.h.b16 %v394
        %v623 = vunpack.c.l.b16 %v395
        %v624 = vunpack.c.h.b16 %v395
        %v625 = vunpack.c.l.b16 %v396
        %v626 = vunpack.c.h.b16 %v396
        %v627 = vunpack.c.l.b16 %v397
        %v628 = vunpack.c.h.b16 %v397
        %v629 = vunpack.c.l.b16 %v398
        %v630 = vunpack.c.h.b16 %v398
        %v631 = vunpack.c.l.b16 %v399
        %v632 = vunpack.c.h.b16 %v399
        %v633 = vunpack.c.l.b16 %v400
        %v634 = vunpack.c.h.b16 %v400
        %v635 = vunpack.c.l.b16 %v401
        %v636 = vunpack.c.h.b16 %v401
        %v637 = vunpack.c.l.b16 %v402
        %v638 = vunpack.c.h.b16 %v402
        %v639 = vunpack.c.l.b16 %v403
        %v640 = vunpack.c.h.b16 %v403
        %v641 = vpack.c.b16 %v505, %v497
        %v642 = vpack.c.b16 %v506, %v498
        %v643 = vpack.c.b16 %v507, %v499
        %v644 = vpack.c.b16 %v508, %v500
        %v645 = vpack.c.b16 %v509, %v501
        %v646 = vpack.c.b16 %v510, %v502
        %v647 = vpack.c.b16 %v511, %v503
        %v648 = vpack.c.b16 %v512, %v504
        %v649 = vpack.c.b16 %v521, %v513
        %v650 = vpack.c.b16 %v522, %v514
        %v651 = vpack.c.b16 %v523, %v515
        %v652 = vpack.c.b16 %v524, %v516
        %v653 = vpack.c.b16 %v525, %v517
        %v654 = vpack.c.b16 %v526, %v518
        %v655 = vpack.c.b16 %v527, %v519
        %v656 = vpack.c.b16 %v528, %v520
        %v657 = vpack.c.b16 %v537, %v529
        %v658 = vpack.c.b16 %v538, %v530
        %v659 = vpack.c.b16 %v539, %v531
        %v660 = vpack.c.b16 %v540, %v532
        %v661 = vpack.c.b16 %v541, %v533
        %v662 = vpack.c.b16 %v542, %v534
        %v663 = vpack.c.b16 %v543, %v535
        %v664 = vpack.c.b16 %v544, %v536
        %v665 = vpack.c.b16 %v553, %v545
        %v666 = vpack.c.b16 %v554, %v546
        %v667 = vpack.c.b16 %v555, %v547
        %v668 = vpack.c.b16 %v556, %v548
        %v669 = vpack.c.b16 %v557, %v549
        %v670 = vpack.c.b16 %v558, %v550
        %v671 = vpack.c.b16 %v559, %v551
        %v672 = vpack.c.b16 %v560, %v552
        %v673 = vpack.c.b16 %v569, %v561
        %v674 = vpack.c.b16 %v570, %v562
        %v675 = vpack.c.b16 %v571, %v563
        %v676 = vpack.c.b16 %v572, %v564
        %v677 = vpack.c.b16 %v573, %v565
        %v678 = vpack.c.b16 %v574, %v566
        %v679 = vpack.c.b16 %v575, %v567
        %v680 = vpack.c.b16 %v576, %v568
        %v681 = vpack.c.b16 %v585, %v577
        %v682 = vpack.c.b16 %v586, %v578
        %v683 = vpack.c.b16 %v587, %v579
        %v684 = vpack.c.b16 %v588, %v580
        %v685 = vpack.c.b16 %v589, %v581
        %v686 = vpack.c.b16 %v590, %v582
        %v687 = vpack.c.b16 %v591, %v583
        %v688 = vpack.c.b16 %v592, %v584
        %v689 = vpack.c.b16 %v601, %v593
        %v690 = vpack.c.b16 %v602, %v594
        %v691 = vpack.c.b16 %v603, %v595
        %v692 = vpack.c.b16 %v604, %v596
        %v693 = vpack.c.b16 %v605, %v597
        %v694 = vpack.c.b16 %v606, %v598
        %v695 = vpack.c.b16 %v607, %v599
        %v696 = vpack.c.b16 %v608, %v600
        %v697 = vpack.c.b16 %v617, %v609
        %v698 = vpack.c.b16 %v618, %v610
        %v699 = vpack.c.b16 %v619, %v611
        %v700 = vpack.c.b16 %v620, %v612
        %v701 = vpack.c.b16 %v621, %v613
        %v702 = vpack.c.b16 %v622, %v614
        %v703 = vpack.c.b16 %v623, %v615
        %v704 = vpack.c.b16 %v624, %v616
        %v705 = vpack.c.b16 %v633, %v625
        %v706 = vpack.c.b16 %v634, %v626
        %v707 = vpack.c.b16 %v635, %v627
        %v708 = vpack.c.b16 %v636, %v628
        %v709 = vpack.c.b16 %v637, %v629
        %v710 = vpack.c.b16 %v638, %v630
        %v711 = vpack.c.b16 %v639, %v631
        %v712 = vpack.c.b16 %v640, %v632
        %vm785 = vcmask 130048
        %v787 = vsel %vm785, %v423, 0
        %789 = vmatprep.subr.bf16.mxu0 %v698
        %790 = vmatpush1.bf16.msra.mxu0 %v697
        %791 = vmatprep.subr.bf16.mxu0 %v690
        %792 = vmatpush1.bf16.msra.mxu0 %v689
        %793 = vmatprep.subr.bf16.mxu0 %v682
        %794 = vmatpush1.bf16.msra.mxu0 %v681
        %795 = vmatprep.subr.bf16.mxu0 %v674
        %796 = vmatpush1.bf16.msra.mxu0 %v673
        %797 = vmatprep.subr.bf16.mxu0 %v666
        %798 = vmatpush1.bf16.msra.mxu0 %v665
        %799 = vmatprep.subr.bf16.mxu0 %v658
        %800 = vmatpush1.bf16.msra.mxu0 %v657
        %801 = vmatprep.subr.bf16.mxu0 %v650
        %802 = vmatpush1.bf16.msra.mxu0 %v649
        %803 = vmatprep.subr.bf16.mxu0 %v642
        %804 = vmatpush1.bf16.msra.mxu0 %v641
        %805 = vmatprep.subr.bf16.mxu0 0
        %806 = vmatpush2.bf16.msra.mxu0 0
        %807 = vmatprep.subr.bf16.mxu0 0
        %808 = vmatpush2.bf16.msra.mxu0 0
        %809 = vmatprep.subr.bf16.mxu0 0
        %810 = vmatpush2.bf16.msra.mxu0 0
        %811 = vmatprep.subr.bf16.mxu0 0
        %812 = vmatpush2.bf16.msra.mxu0 0
        %813 = vmatprep.subr.bf16.mxu0 0
        %814 = vmatpush2.bf16.msra.mxu0 0
        %815 = vmatprep.subr.bf16.mxu0 0
        %816 = vmatpush2.bf16.msra.mxu0 0
        %817 = vmatprep.subr.bf16.mxu0 0
        %818 = vmatpush2.bf16.msra.mxu0 0
        %819 = vmatprep.subr.bf16.mxu0 %v706
        %820 = vmatpush2.bf16.msra.mxu0 %v705
        %821 = vmatprep.mubr.bf16.mxu0 %v787
        %822 = vmatmul.mubr.bf16.gmra.mxu0 %v422
        %v823 = vpop.f32.mrf.mxu0
        %v824 = vadd.f32 %v409, %v823
        %v825 = vpop.f32.mrf.mxu0
        %v826 = vadd.f32 %v409, %v825
        %v827 = vpop.f32.mrf.mxu0
        %v828 = vadd.f32 %v414, %v827
        %v829 = vpop.f32.mrf.mxu0
        %v830 = vadd.f32 %v414, %v829
        %831 = vdwg.mxu0
        %832 = vmatprep.subr.bf16.mxu0 %v700
        %833 = vmatpush1.bf16.msra.mxu0 %v699
        %834 = vmatprep.subr.bf16.mxu0 %v692
        %835 = vmatpush1.bf16.msra.mxu0 %v691
        %836 = vmatprep.subr.bf16.mxu0 %v684
        %837 = vmatpush1.bf16.msra.mxu0 %v683
        %838 = vmatprep.subr.bf16.mxu0 %v676
        %839 = vmatpush1.bf16.msra.mxu0 %v675
        %840 = vmatprep.subr.bf16.mxu0 %v668
        %841 = vmatpush1.bf16.msra.mxu0 %v667
        %842 = vmatprep.subr.bf16.mxu0 %v660
        %843 = vmatpush1.bf16.msra.mxu0 %v659
        %844 = vmatprep.subr.bf16.mxu0 %v652
        %845 = vmatpush1.bf16.msra.mxu0 %v651
        %846 = vmatprep.subr.bf16.mxu0 %v644
        %847 = vmatpush1.bf16.msra.mxu0 %v643
        %848 = vmatprep.subr.bf16.mxu0 0
        %849 = vmatpush2.bf16.msra.mxu0 0
        %850 = vmatprep.subr.bf16.mxu0 0
        %851 = vmatpush2.bf16.msra.mxu0 0
        %852 = vmatprep.subr.bf16.mxu0 0
        %853 = vmatpush2.bf16.msra.mxu0 0
        %854 = vmatprep.subr.bf16.mxu0 0
        %855 = vmatpush2.bf16.msra.mxu0 0
        %856 = vmatprep.subr.bf16.mxu0 0
        %857 = vmatpush2.bf16.msra.mxu0 0
        %858 = vmatprep.subr.bf16.mxu0 0
        %859 = vmatpush2.bf16.msra.mxu0 0
        %860 = vmatprep.subr.bf16.mxu0 0
        %861 = vmatpush2.bf16.msra.mxu0 0
        %862 = vmatprep.subr.bf16.mxu0 %v708
        %863 = vmatpush2.bf16.msra.mxu0 %v707
        %864 = vmatprep.mubr.bf16.mxu0 %v787
        %865 = vmatmul.mubr.bf16.gmra.mxu0 %v422
        %v866 = vpop.f32.mrf.mxu0
        %v867 = vadd.f32 %v409, %v866
        %v868 = vpop.f32.mrf.mxu0
        %v869 = vadd.f32 %v409, %v868
        %v870 = vpop.f32.mrf.mxu0
        %v871 = vadd.f32 %v414, %v870
        %v872 = vpop.f32.mrf.mxu0
        %v873 = vadd.f32 %v414, %v872
        %874 = vdwg.mxu0
        %875 = vmatprep.subr.bf16.mxu0 %v702
        %876 = vmatpush1.bf16.msra.mxu0 %v701
        %877 = vmatprep.subr.bf16.mxu0 %v694
        %878 = vmatpush1.bf16.msra.mxu0 %v693
        %879 = vmatprep.subr.bf16.mxu0 %v686
        %880 = vmatpush1.bf16.msra.mxu0 %v685
        %881 = vmatprep.subr.bf16.mxu0 %v678
        %882 = vmatpush1.bf16.msra.mxu0 %v677
        %883 = vmatprep.subr.bf16.mxu0 %v670
        %884 = vmatpush1.bf16.msra.mxu0 %v669
        %885 = vmatprep.subr.bf16.mxu0 %v662
        %886 = vmatpush1.bf16.msra.mxu0 %v661
        %887 = vmatprep.subr.bf16.mxu0 %v654
        %888 = vmatpush1.bf16.msra.mxu0 %v653
        %889 = vmatprep.subr.bf16.mxu0 %v646
        %890 = vmatpush1.bf16.msra.mxu0 %v645
        %891 = vmatprep.subr.bf16.mxu0 0
        %892 = vmatpush2.bf16.msra.mxu0 0
        %893 = vmatprep.subr.bf16.mxu0 0
        %894 = vmatpush2.bf16.msra.mxu0 0
        %895 = vmatprep.subr.bf16.mxu0 0
        %896 = vmatpush2.bf16.msra.mxu0 0
        %897 = vmatprep.subr.bf16.mxu0 0
        %898 = vmatpush2.bf16.msra.mxu0 0
        %899 = vmatprep.subr.bf16.mxu0 0
        %900 = vmatpush2.bf16.msra.mxu0 0
        %901 = vmatprep.subr.bf16.mxu0 0
        %902 = vmatpush2.bf16.msra.mxu0 0
        %903 = vmatprep.subr.bf16.mxu0 0
        %904 = vmatpush2.bf16.msra.mxu0 0
        %905 = vmatprep.subr.bf16.mxu0 %v710
        %906 = vmatpush2.bf16.msra.mxu0 %v709
        %907 = vmatprep.mubr.bf16.mxu0 %v787
        %908 = vmatmul.mubr.bf16.gmra.mxu0 %v422
        %v909 = vpop.f32.mrf.mxu0
        %v910 = vadd.f32 %v409, %v909
        %v911 = vpop.f32.mrf.mxu0
        %v912 = vadd.f32 %v409, %v911
        %v913 = vpop.f32.mrf.mxu0
        %v914 = vadd.f32 %v414, %v913
        %v915 = vpop.f32.mrf.mxu0
        %v916 = vadd.f32 %v414, %v915
        %917 = vdwg.mxu0
        %918 = vmatprep.subr.bf16.mxu0 %v704
        %919 = vmatpush1.bf16.msra.mxu0 %v703
        %920 = vmatprep.subr.bf16.mxu0 %v696
        %921 = vmatpush1.bf16.msra.mxu0 %v695
        %922 = vmatprep.subr.bf16.mxu0 %v688
        %923 = vmatpush1.bf16.msra.mxu0 %v687
        %924 = vmatprep.subr.bf16.mxu0 %v680
        %925 = vmatpush1.bf16.msra.mxu0 %v679
        %926 = vmatprep.subr.bf16.mxu0 %v672
        %927 = vmatpush1.bf16.msra.mxu0 %v671
        %928 = vmatprep.subr.bf16.mxu0 %v664
        %929 = vmatpush1.bf16.msra.mxu0 %v663
        %930 = vmatprep.subr.bf16.mxu0 %v656
        %931 = vmatpush1.bf16.msra.mxu0 %v655
        %932 = vmatprep.subr.bf16.mxu0 %v648
        %933 = vmatpush1.bf16.msra.mxu0 %v647
        %934 = vmatprep.subr.bf16.mxu0 0
        %935 = vmatpush2.bf16.msra.mxu0 0
        %936 = vmatprep.subr.bf16.mxu0 0
        %937 = vmatpush2.bf16.msra.mxu0 0
        %938 = vmatprep.subr.bf16.mxu0 0
        %939 = vmatpush2.bf16.msra.mxu0 0
        %940 = vmatprep.subr.bf16.mxu0 0
        %941 = vmatpush2.bf16.msra.mxu0 0
        %942 = vmatprep.subr.bf16.mxu0 0
        %943 = vmatpush2.bf16.msra.mxu0 0
        %944 = vmatprep.subr.bf16.mxu0 0
        %945 = vmatpush2.bf16.msra.mxu0 0
        %946 = vmatprep.subr.bf16.mxu0 0
        %947 = vmatpush2.bf16.msra.mxu0 0
        %948 = vmatprep.subr.bf16.mxu0 %v712
        %949 = vmatpush2.bf16.msra.mxu0 %v711
        %950 = vmatprep.mubr.bf16.mxu0 %v787
        %951 = vmatmul.mubr.bf16.gmra.mxu0 %v422
        %v952 = vpop.f32.mrf.mxu0
        %v953 = vadd.f32 %v409, %v952
        %v954 = vpop.f32.mrf.mxu0
        %v955 = vadd.f32 %v409, %v954
        %v956 = vpop.f32.mrf.mxu0
        %v957 = vadd.f32 %v414, %v956
        %v958 = vpop.f32.mrf.mxu0
        %v959 = vadd.f32 %v414, %v958
        %960 = vdwg.mxu0
        %v961 = vmax.f32 %v824, 0.0
        %v962 = vmax.f32 %v826, 0.0
        %v963 = vmax.f32 %v867, 0.0
        %v964 = vmax.f32 %v869, 0.0
        %v965 = vmax.f32 %v910, 0.0
        %v966 = vmax.f32 %v912, 0.0
        %v967 = vmax.f32 %v953, 0.0
        %v968 = vmax.f32 %v955, 0.0
        %v969 = vmax.f32 %v828, 0.0
        %v970 = vmax.f32 %v830, 0.0
        %v971 = vmax.f32 %v871, 0.0
        %v972 = vmax.f32 %v873, 0.0
        %v973 = vmax.f32 %v914, 0.0
        %v974 = vmax.f32 %v916, 0.0
        %v975 = vmax.f32 %v957, 0.0
        %v976 = vmax.f32 %v959, 0.0
        %977 = vst [vmem:[%s326] sm:$0xff] %v961
        %978 = vst [vmem:[%s326 + $0x8] sm:$0xff] %v962
        %979 = vst [vmem:[%s326 + $0x10] sm:$0xff] %v963
        %980 = vst [vmem:[%s326 + $0x18] sm:$0xff] %v964
        %981 = vst [vmem:[%s326 + $0x20] sm:$0xff] %v965
        %982 = vst [vmem:[%s326 + $0x28] sm:$0xff] %v966
        %983 = vst [vmem:[%s326 + $0x30] sm:$0xff] %v967
        %984 = vst [vmem:[%s326 + $0x38] sm:$0xff] %v968
        %985 = vst [vmem:[%s326 + $0x40] sm:$0xff] %v969
        %986 = vst [vmem:[%s326 + $0x48] sm:$0xff] %v970
        %987 = vst [vmem:[%s326 + $0x50] sm:$0xff] %v971
        %988 = vst [vmem:[%s326 + $0x58] sm:$0xff] %v972
        %989 = vst [vmem:[%s326 + $0x60] sm:$0xff] %v973
        %990 = vst [vmem:[%s326 + $0x68] sm:$0xff] %v974
        %991 = vst [vmem:[%s326 + $0x70] sm:$0xff] %v975
        %992 = vst [vmem:[%s326 + $0x78] sm:$0xff] %v976
        %s993 = sand.u32 %s90, 1
        %s994 = sand.u32 %s90, 1
        %s995 = smul.addr %s994, 128
        %s996 = scalar_lea.vmem [#allocation3], %s995
        // Predicated region
        $region56: #{forward.17} parent=50 // pred_check
          %p997 = pneg %p100
        $region57: #{forward.17} parent=50 // pred_check_branch
          %999 = sbr.rel (%p997) target = $region59
        $region58: #{forward.17} parent=50 // pred_region
          %s1000 = smul.u32 8, %s14
          %s1001 = smul.addr %s1000, 8
          %s1002 = scalar_lea.vmem %s3, %s1001
          // Predicated region
          $region60: #{forward.17} parent=58 // pred_check
            _
          $region61: #{forward.17} parent=58 // pred_check_branch
            %1004 = sbr.rel (0) target = $region63
          $region62: #{forward.17} parent=58 // pred_region
            // Predicated region
            $region64: #{forward.17} parent=62 // pred_check
              _
            $region65: #{forward.17} parent=62 // pred_check_branch
              %1006 = sbr.rel (0) target = $region67
            $region66: #{forward.17} parent=62 // pred_region
              loop: start=0, step=1, limit=1
              $region68: #{forward.17} parent=66 // loop_pre_header
                _
              $region69: #{forward.17} parent=66 // loop_header
                %s1008 = sphi 0, %s1012
                %p1009 = scmp.ge.s32.totalorder %s1008, 1
                %s1013 = sphi %s996, %s996
                %s1014 = sphi %s1002, %s1002
              $region70: #{forward.17} parent=66 // loop_header_branch
                %1011 = sbr.rel (%p1009) target = $region74
              $region71: #{forward.17} parent=66 // loop_body
                %v1015 = vld [vmem:[%s1013] sm:$0xff]
                %1016 = vst [vmem:[%s1014] sm:$0xff] %v1015
                %v1017 = vld [vmem:[%s1013 + $0x8] sm:$0xff]
                %1018 = vst [vmem:[%s1014 + $0x8] sm:$0xff] %v1017
                %v1019 = vld [vmem:[%s1013 + $0x10] sm:$0xff]
                %1020 = vst [vmem:[%s1014 + $0x10] sm:$0xff] %v1019
                %v1021 = vld [vmem:[%s1013 + $0x18] sm:$0xff]
                %1022 = vst [vmem:[%s1014 + $0x18] sm:$0xff] %v1021
                %v1023 = vld [vmem:[%s1013 + $0x20] sm:$0xff]
                %1024 = vst [vmem:[%s1014 + $0x20] sm:$0xff] %v1023
                %v1025 = vld [vmem:[%s1013 + $0x28] sm:$0xff]
                %1026 = vst [vmem:[%s1014 + $0x28] sm:$0xff] %v1025
                %v1027 = vld [vmem:[%s1013 + $0x30] sm:$0xff]
                %1028 = vst [vmem:[%s1014 + $0x30] sm:$0xff] %v1027
                %v1029 = vld [vmem:[%s1013 + $0x38] sm:$0xff]
                %1030 = vst [vmem:[%s1014 + $0x38] sm:$0xff] %v1029
                %v1031 = vld [vmem:[%s1013 + $0x40] sm:$0xff]
                %1032 = vst [vmem:[%s1014 + $0x80] sm:$0xff] %v1031
                %v1033 = vld [vmem:[%s1013 + $0x48] sm:$0xff]
                %1034 = vst [vmem:[%s1014 + $0x88] sm:$0xff] %v1033
                %v1035 = vld [vmem:[%s1013 + $0x50] sm:$0xff]
                %1036 = vst [vmem:[%s1014 + $0x90] sm:$0xff] %v1035
                %v1037 = vld [vmem:[%s1013 + $0x58] sm:$0xff]
                %1038 = vst [vmem:[%s1014 + $0x98] sm:$0xff] %v1037
                %v1039 = vld [vmem:[%s1013 + $0x60] sm:$0xff]
                %1040 = vst [vmem:[%s1014 + $0xa0] sm:$0xff] %v1039
                %v1041 = vld [vmem:[%s1013 + $0x68] sm:$0xff]
                %1042 = vst [vmem:[%s1014 + $0xa8] sm:$0xff] %v1041
                %v1043 = vld [vmem:[%s1013 + $0x70] sm:$0xff]
                %1044 = vst [vmem:[%s1014 + $0xb0] sm:$0xff] %v1043
                %v1045 = vld [vmem:[%s1013 + $0x78] sm:$0xff]
                %1046 = vst [vmem:[%s1014 + $0xb8] sm:$0xff] %v1045
              $region72: #{forward.17} parent=66 // loop_footer
                %s1012 = sadd.s32 1, %s1008
              $region73: #{forward.17} parent=66 // loop_footer_branch
                %1007 = sbr.rel target = $region69
              $region74: #{forward.17} parent=66 // loop_exit
                _
            $region67: #{forward.17} parent=62 // pred_fallthru
              _
            // Predicated region
            $region75: #{forward.17} parent=62 // pred_check
              _
            $region76: #{forward.17} parent=62 // pred_check_branch
              %1048 = sbr.rel target = $region78
            $region77: #{forward.17} parent=62 // pred_region
              _
            $region78: #{forward.17} parent=62 // pred_fallthru
              _
          $region63: #{forward.17} parent=58 // pred_fallthru
            _
          %1049 = vnop
        $region59: #{forward.17} parent=50 // pred_fallthru
          _
      $region51: #{forward.17} parent=5 // pred_fallthru
        _
      %p1050 = scmp.le.s32.totalorder 2, %s9
      // Predicated region
      $region79: #{forward.17} parent=5 // pred_check
        %p1051 = pneg %p1050
      $region80: #{forward.17} parent=5 // pred_check_branch
        %1053 = sbr.rel (%p1051) target = $region82
      $region81: #{forward.17} parent=5 // pred_region
        %s1054 = ssub.s32 %s9, 2
        // Predicated region
        $region83: #{forward.17} parent=81 // pred_check
          %p1055 = pneg %p106
        $region84: #{forward.17} parent=81 // pred_check_branch
          %1057 = sbr.rel (%p1055) target = $region86
        $region85: #{forward.17} parent=81 // pred_region
          %s1058 = sand.u32 %s91, 1
          %s1059 = sand.u32 %s91, 1
          %s1060 = smul.addr %s1059, 128
          %s1061 = scalar_lea.vmem [#allocation3], %s1060
        $region86: #{forward.17} parent=81 // pred_fallthru
          _
      $region82: #{forward.17} parent=5 // pred_fallthru
        _
    $region6: #{forward.17} parent=1 // loop_footer
      %s13 = sadd.s32 1, %s9
    $region7: #{forward.17} parent=1 // loop_footer_branch
      %8 = sbr.rel target = $region3
    $region8: #{forward.17} parent=1 // loop_exit
      _

// kernel: forward.18
$region0: #{forward.18}
  #allocation0 [shape = 'u32[]', space=smem, size = 0x4, offset = 0x4, fixed_abs, tag = 'smem constant byte address 0x4 - core index']
  #allocation1 [shape = 'u32[144,128]{1,0:T(1,128)}', space=vmem, size = 0x12000, scoped, tag = 'internal scratch']
  %s0 = inlined_call_operand.vmem [shape: bf16[16,144], index: 0, kind: input, shape index: {}]
  %s1 = inlined_call_operand.vmem [shape: bf16[144,2048], index: 1, kind: input, shape index: {}]
  %s2 = inlined_call_operand.vmem [shape: f32[16,1], index: 2, kind: input, shape index: {}]
  %s3 = inlined_call_operand.vmem [shape: f32[16,2048], index: 3, kind: input, shape index: {}]
  %s4 = inlined_call_operand.vmem [shape: f32[16,2048], index: 4, kind: output, shape index: {}]
  %s5 = sld [smem:[#allocation0]]
  $region114: #{forward.18} parent=0
    _
  %s7 = ssub.s32 1, %s5
  %s8 = scalar_select 0, %s7, %s5
  $region1: #{forward.18} parent=0
    #allocation2 [shape = 'u8[589824]{0}', space=vmem, size = 0x90000, scoped, tag = 'input window, operand 1']
    #allocation3 [shape = 'u8[131072]{0}', space=vmem, size = 0x20000, scoped, tag = 'input window, operand 3']
    #allocation4 [shape = 'u8[131072]{0}', space=vmem, size = 0x20000, scoped, tag = 'output window, operand 0']
    loop: start=0, step=1, limit=4
    $region2: #{forward.18} parent=1 // loop_pre_header
      _
    $region3: #{forward.18} parent=1 // loop_header
      %s10 = sphi 0, %s14
      %p11 = scmp.ge.s32.totalorder %s10, 4
      %s18 = sphi 0, %s18
      %s20 = sphi 0, %s18
      %s21 = sphi 0, %s20
      %s35 = sphi 0, %s21
      %s41 = sphi 0, %s43
      %s44 = sphi 0, %s41
      %s45 = sphi 0, %s44
      %s61 = sphi 0, %s45
      %s65 = sphi 0, %s65
      %s67 = sphi 0, %s65
      %s68 = sphi 0, %s67
      %s82 = sphi 0, %s68
      %s88 = sphi 0, %s90
      %s91 = sphi 0, %s88
      %s92 = sphi 0, %s91
      %s108 = sphi 0, %s92
      %s114 = sphi 0, %s116
      %s117 = sphi 0, %s114
      %s118 = sphi 0, %s117
      %s134 = sphi 0, %s118
    $region4: #{forward.18} parent=1 // loop_header_branch
      %13 = sbr.rel (%p11) target = $region8
    $region5: #{forward.18} parent=1 // loop_body
      %s15 = ssub.s32 %s10, 1
      %s16 = ssub.s32 %s10, 2
      %s17 = sadd.s32 %s10, 1
      %s19 = sadd.s32 %s18, 1
      %p22 = scmp.eq.s32.totalorder %s10, 1
      %p23 = scmp.ne.s32.totalorder %s18, %s20
      %p24 = scmp.eq.s32.totalorder %s10, 0
      %p25 = por %p23, %p24
      %p26 = scmp.ne.s32.totalorder %s18, %s20
      %p27 = scmp.eq.s32.totalorder %s15, 1
      %p28 = por %p26, %p27
      %p29 = scmp.ne.s32.totalorder %s20, %s21
      %p30 = scmp.eq.s32.totalorder %s15, 0
      %p31 = por %p29, %p30
      %p32 = scmp.ne.s32.totalorder %s20, %s21
      %p33 = scmp.eq.s32.totalorder %s16, 1
      %p34 = por %p32, %p33
      %p36 = scmp.ne.s32.totalorder %s21, %s35
      %p37 = scmp.eq.s32.totalorder %s16, 0
      %p38 = por %p36, %p37
      %s39 = ssub.s32 %s10, %s17
      %p40 = scmp.eq.s32.totalorder %s39, 0
      %s42 = sadd.s32 %s41, 1
      %s43 = scalar_select %p40, %s41, %s42
      %p46 = pneg %p40
      %p47 = scmp.eq.s32.totalorder %s10, 1
      %p48 = por %p46, %p47
      %p49 = scmp.ne.s32.totalorder %s41, %s44
      %p50 = scmp.eq.s32.totalorder %s10, 0
      %p51 = por %p49, %p50
      %p52 = scmp.ne.s32.totalorder %s41, %s44
      %p53 = scmp.eq.s32.totalorder %s15, 1
      %p54 = por %p52, %p53
      %p55 = scmp.ne.s32.totalorder %s44, %s45
      %p56 = scmp.eq.s32.totalorder %s15, 0
      %p57 = por %p55, %p56
      %p58 = scmp.ne.s32.totalorder %s44, %s45
      %p59 = scmp.eq.s32.totalorder %s16, 1
      %p60 = por %p58, %p59
      %p62 = scmp.ne.s32.totalorder %s45, %s61
      %p63 = scmp.eq.s32.totalorder %s16, 0
      %p64 = por %p62, %p63
      %s66 = sadd.s32 %s65, 1
      %p69 = scmp.eq.s32.totalorder %s10, 1
      %p70 = scmp.ne.s32.totalorder %s65, %s67
      %p71 = scmp.eq.s32.totalorder %s10, 0
      %p72 = por %p70, %p71
      %p73 = scmp.ne.s32.totalorder %s65, %s67
      %p74 = scmp.eq.s32.totalorder %s15, 1
      %p75 = por %p73, %p74
      %p76 = scmp.ne.s32.totalorder %s67, %s68
      %p77 = scmp.eq.s32.totalorder %s15, 0
      %p78 = por %p76, %p77
      %p79 = scmp.ne.s32.totalorder %s67, %s68
      %p80 = scmp.eq.s32.totalorder %s16, 1
      %p81 = por %p79, %p80
      %p83 = scmp.ne.s32.totalorder %s68, %s82
      %p84 = scmp.eq.s32.totalorder %s16, 0
      %p85 = por %p83, %p84
      %s86 = ssub.s32 %s10, %s17
      %p87 = scmp.eq.s32.totalorder %s86, 0
      %s89 = sadd.s32 %s88, 1
      %s90 = scalar_select %p87, %s88, %s89
      %p93 = pneg %p87
      %p94 = scmp.eq.s32.totalorder %s10, 1
      %p95 = por %p93, %p94
      %p96 = scmp.ne.s32.totalorder %s88, %s91
      %p97 = scmp.eq.s32.totalorder %s10, 0
      %p98 = por %p96, %p97
      %p99 = scmp.ne.s32.totalorder %s88, %s91
      %p100 = scmp.eq.s32.totalorder %s15, 1
      %p101 = por %p99, %p100
      %p102 = scmp.ne.s32.totalorder %s91, %s92
      %p103 = scmp.eq.s32.totalorder %s15, 0
      %p104 = por %p102, %p103
      %p105 = scmp.ne.s32.totalorder %s91, %s92
      %p106 = scmp.eq.s32.totalorder %s16, 1
      %p107 = por %p105, %p106
      %p109 = scmp.ne.s32.totalorder %s92, %s108
      %p110 = scmp.eq.s32.totalorder %s16, 0
      %p111 = por %p109, %p110
      %s112 = ssub.s32 %s10, %s17
      %p113 = scmp.eq.s32.totalorder %s112, 0
      %s115 = sadd.s32 %s114, 1
      %s116 = scalar_select %p113, %s114, %s115
      %p119 = pneg %p113
      %p120 = scmp.eq.s32.totalorder %s10, 1
      %p121 = por %p119, %p120
      %p122 = scmp.ne.s32.totalorder %s114, %s117
      %p123 = scmp.eq.s32.totalorder %s10, 0
      %p124 = por %p122, %p123
      %p125 = scmp.ne.s32.totalorder %s114, %s117
      %p126 = scmp.eq.s32.totalorder %s15, 1
      %p127 = por %p125, %p126
      %p128 = scmp.ne.s32.totalorder %s117, %s118
      %p129 = scmp.eq.s32.totalorder %s15, 0
      %p130 = por %p128, %p129
      %p131 = scmp.ne.s32.totalorder %s117, %s118
      %p132 = scmp.eq.s32.totalorder %s16, 1
      %p133 = por %p131, %p132
      %p135 = scmp.ne.s32.totalorder %s118, %s134
      %p136 = scmp.eq.s32.totalorder %s16, 0
      %p137 = por %p135, %p136
      %p138 = scmp.le.s32.totalorder 1, %s10
      %p139 = scmp.lt.s32.totalorder %s10, 3
      %p140 = pnand %p138, %p139
      %p141 = pneg %p140
      // Predicated region
      $region9: #{forward.18} parent=5 // pred_check
        _
      $region10: #{forward.18} parent=5 // pred_check_branch
        %143 = sbr.rel (%p140) target = $region12
      $region11: #{forward.18} parent=5 // pred_region
        %s144 = ssub.s32 %s10, 1
        // Predicated region
        $region13: #{forward.18} parent=11 // pred_check
          %p145 = pneg %p31
        $region14: #{forward.18} parent=11 // pred_check_branch
          %147 = sbr.rel (%p145) target = $region16
        $region15: #{forward.18} parent=11 // pred_region
          _
        $region16: #{forward.18} parent=11 // pred_fallthru
          _
        // Predicated region
        $region17: #{forward.18} parent=11 // pred_check
          %p148 = pneg %p78
        $region18: #{forward.18} parent=11 // pred_check_branch
          %150 = sbr.rel (%p148) target = $region20
        $region19: #{forward.18} parent=11 // pred_region
          _
        $region20: #{forward.18} parent=11 // pred_fallthru
          _
      $region12: #{forward.18} parent=5 // pred_fallthru
        _
      %p151 = scmp.lt.s32.totalorder %s10, 2
      // Predicated region
      $region21: #{forward.18} parent=5 // pred_check
        %p152 = pneg %p151
      $region22: #{forward.18} parent=5 // pred_check_branch
        %154 = sbr.rel (%p152) target = $region24
      $region23: #{forward.18} parent=5 // pred_region
        // Predicated region
        $region25: #{forward.18} parent=23 // pred_check
          %p155 = pneg %p51
        $region26: #{forward.18} parent=23 // pred_check_branch
          %157 = sbr.rel (%p155) target = $region28
        $region27: #{forward.18} parent=23 // pred_region
          %s158 = sand.u32 %s41, 1
          %s159 = sand.u32 %s41, 1
          %s160 = smul.addr %s159, 576
          %s161 = scalar_lea.vmem [#allocation2], %s160
          %s162 = smul.u32 8, %s10
          %s163 = smul.addr %s162, 4
          %s164 = scalar_lea.vmem %s1, %s163
          // Predicated region
          $region29: #{forward.18} parent=27 // pred_check
            _
          $region30: #{forward.18} parent=27 // pred_check_branch
            %166 = sbr.rel (0) target = $region32
          $region31: #{forward.18} parent=27 // pred_region
            // Predicated region
            $region33: #{forward.18} parent=31 // pred_check
              _
            $region34: #{forward.18} parent=31 // pred_check_branch
              %168 = sbr.rel (0) target = $region36
            $region35: #{forward.18} parent=31 // pred_region
              loop: start=0, step=1, limit=1
              $region37: #{forward.18} parent=35 // loop_pre_header
                _
              $region38: #{forward.18} parent=35 // loop_header
                %s170 = sphi 0, %s174
                %p171 = scmp.ge.s32.totalorder %s170, 1
                %s175 = sphi %s164, %s164
                %s176 = sphi %s161, %s161
              $region39: #{forward.18} parent=35 // loop_header_branch
                %173 = sbr.rel (%p171) target = $region43
              $region40: #{forward.18} parent=35 // loop_body
                %v177 = vld [vmem:[%s175] sm:$0xff]
                %178 = vst [vmem:[%s176] sm:$0xff] %v177
                %v179 = vld [vmem:[%s175 + $0x8] sm:$0xff]
                %180 = vst [vmem:[%s176 + $0x8] sm:$0xff] %v179
                %v181 = vld [vmem:[%s175 + $0x10] sm:$0xff]
                %182 = vst [vmem:[%s176 + $0x10] sm:$0xff] %v181
                %v183 = vld [vmem:[%s175 + $0x18] sm:$0xff]
                %184 = vst [vmem:[%s176 + $0x18] sm:$0xff] %v183
                %v185 = vld [vmem:[%s175 + $0x40] sm:$0xff]
                %186 = vst [vmem:[%s176 + $0x20] sm:$0xff] %v185
                %v187 = vld [vmem:[%s175 + $0x48] sm:$0xff]
                %188 = vst [vmem:[%s176 + $0x28] sm:$0xff] %v187
                %v189 = vld [vmem:[%s175 + $0x50] sm:$0xff]
                %190 = vst [vmem:[%s176 + $0x30] sm:$0xff] %v189
                %v191 = vld [vmem:[%s175 + $0x58] sm:$0xff]
                %192 = vst [vmem:[%s176 + $0x38] sm:$0xff] %v191
                %v193 = vld [vmem:[%s175 + $0x80] sm:$0xff]
                %194 = vst [vmem:[%s176 + $0x40] sm:$0xff] %v193
                %v195 = vld [vmem:[%s175 + $0x88] sm:$0xff]
                %196 = vst [vmem:[%s176 + $0x48] sm:$0xff] %v195
                %v197 = vld [vmem:[%s175 + $0x90] sm:$0xff]
                %198 = vst [vmem:[%s176 + $0x50] sm:$0xff] %v197
                %v199 = vld [vmem:[%s175 + $0x98] sm:$0xff]
                %200 = vst [vmem:[%s176 + $0x58] sm:$0xff] %v199
                %v201 = vld [vmem:[%s175 + $0xc0] sm:$0xff]
                %202 = vst [vmem:[%s176 + $0x60] sm:$0xff] %v201
                %v203 = vld [vmem:[%s175 + $0xc8] sm:$0xff]
                %204 = vst [vmem:[%s176 + $0x68] sm:$0xff] %v203
                %v205 = vld [vmem:[%s175 + $0xd0] sm:$0xff]
                %206 = vst [vmem:[%s176 + $0x70] sm:$0xff] %v205
                %v207 = vld [vmem:[%s175 + $0xd8] sm:$0xff]
                %208 = vst [vmem:[%s176 + $0x78] sm:$0xff] %v207
                %v209 = vld [vmem:[%s175 + $0x100] sm:$0xff]
                %210 = vst [vmem:[%s176 + $0x80] sm:$0xff] %v209
                %v211 = vld [vmem:[%s175 + $0x108] sm:$0xff]
                %212 = vst [vmem:[%s176 + $0x88] sm:$0xff] %v211
                %v213 = vld [vmem:[%s175 + $0x110] sm:$0xff]
                %214 = vst [vmem:[%s176 + $0x90] sm:$0xff] %v213
                %v215 = vld [vmem:[%s175 + $0x118] sm:$0xff]
                %216 = vst [vmem:[%s176 + $0x98] sm:$0xff] %v215
                %v217 = vld [vmem:[%s175 + $0x140] sm:$0xff]
                %218 = vst [vmem:[%s176 + $0xa0] sm:$0xff] %v217
                %v219 = vld [vmem:[%s175 + $0x148] sm:$0xff]
                %220 = vst [vmem:[%s176 + $0xa8] sm:$0xff] %v219
                %v221 = vld [vmem:[%s175 + $0x150] sm:$0xff]
                %222 = vst [vmem:[%s176 + $0xb0] sm:$0xff] %v221
                %v223 = vld [vmem:[%s175 + $0x158] sm:$0xff]
                %224 = vst [vmem:[%s176 + $0xb8] sm:$0xff] %v223
                %v225 = vld [vmem:[%s175 + $0x180] sm:$0xff]
                %226 = vst [vmem:[%s176 + $0xc0] sm:$0xff] %v225
                %v227 = vld [vmem:[%s175 + $0x188] sm:$0xff]
                %228 = vst [vmem:[%s176 + $0xc8] sm:$0xff] %v227
                %v229 = vld [vmem:[%s175 + $0x190] sm:$0xff]
                %230 = vst [vmem:[%s176 + $0xd0] sm:$0xff] %v229
                %v231 = vld [vmem:[%s175 + $0x198] sm:$0xff]
                %232 = vst [vmem:[%s176 + $0xd8] sm:$0xff] %v231
                %v233 = vld [vmem:[%s175 + $0x1c0] sm:$0xff]
                %234 = vst [vmem:[%s176 + $0xe0] sm:$0xff] %v233
                %v235 = vld [vmem:[%s175 + $0x1c8] sm:$0xff]
                %236 = vst [vmem:[%s176 + $0xe8] sm:$0xff] %v235
                %v237 = vld [vmem:[%s175 + $0x1d0] sm:$0xff]
                %238 = vst [vmem:[%s176 + $0xf0] sm:$0xff] %v237
                %v239 = vld [vmem:[%s175 + $0x1d8] sm:$0xff]
                %240 = vst [vmem:[%s176 + $0xf8] sm:$0xff] %v239
                %v241 = vld [vmem:[%s175 + $0x200] sm:$0xff]
                %242 = vst [vmem:[%s176 + $0x100] sm:$0xff] %v241
                %v243 = vld [vmem:[%s175 + $0x208] sm:$0xff]
                %244 = vst [vmem:[%s176 + $0x108] sm:$0xff] %v243
                %v245 = vld [vmem:[%s175 + $0x210] sm:$0xff]
                %246 = vst [vmem:[%s176 + $0x110] sm:$0xff] %v245
                %v247 = vld [vmem:[%s175 + $0x218] sm:$0xff]
                %248 = vst [vmem:[%s176 + $0x118] sm:$0xff] %v247
                %v249 = vld [vmem:[%s175 + $0x240] sm:$0xff]
                %250 = vst [vmem:[%s176 + $0x120] sm:$0xff] %v249
                %v251 = vld [vmem:[%s175 + $0x248] sm:$0xff]
                %252 = vst [vmem:[%s176 + $0x128] sm:$0xff] %v251
                %v253 = vld [vmem:[%s175 + $0x250] sm:$0xff]
                %254 = vst [vmem:[%s176 + $0x130] sm:$0xff] %v253
                %v255 = vld [vmem:[%s175 + $0x258] sm:$0xff]
                %256 = vst [vmem:[%s176 + $0x138] sm:$0xff] %v255
                %v257 = vld [vmem:[%s175 + $0x280] sm:$0xff]
                %258 = vst [vmem:[%s176 + $0x140] sm:$0xff] %v257
                %v259 = vld [vmem:[%s175 + $0x288] sm:$0xff]
                %260 = vst [vmem:[%s176 + $0x148] sm:$0xff] %v259
                %v261 = vld [vmem:[%s175 + $0x290] sm:$0xff]
                %262 = vst [vmem:[%s176 + $0x150] sm:$0xff] %v261
                %v263 = vld [vmem:[%s175 + $0x298] sm:$0xff]
                %264 = vst [vmem:[%s176 + $0x158] sm:$0xff] %v263
                %v265 = vld [vmem:[%s175 + $0x2c0] sm:$0xff]
                %266 = vst [vmem:[%s176 + $0x160] sm:$0xff] %v265
                %v267 = vld [vmem:[%s175 + $0x2c8] sm:$0xff]
                %268 = vst [vmem:[%s176 + $0x168] sm:$0xff] %v267
                %v269 = vld [vmem:[%s175 + $0x2d0] sm:$0xff]
                %270 = vst [vmem:[%s176 + $0x170] sm:$0xff] %v269
                %v271 = vld [vmem:[%s175 + $0x2d8] sm:$0xff]
                %272 = vst [vmem:[%s176 + $0x178] sm:$0xff] %v271
                %v273 = vld [vmem:[%s175 + $0x300] sm:$0xff]
                %274 = vst [vmem:[%s176 + $0x180] sm:$0xff] %v273
                %v275 = vld [vmem:[%s175 + $0x308] sm:$0xff]
                %276 = vst [vmem:[%s176 + $0x188] sm:$0xff] %v275
                %v277 = vld [vmem:[%s175 + $0x310] sm:$0xff]
                %278 = vst [vmem:[%s176 + $0x190] sm:$0xff] %v277
                %v279 = vld [vmem:[%s175 + $0x318] sm:$0xff]
                %280 = vst [vmem:[%s176 + $0x198] sm:$0xff] %v279
                %v281 = vld [vmem:[%s175 + $0x340] sm:$0xff]
                %282 = vst [vmem:[%s176 + $0x1a0] sm:$0xff] %v281
                %v283 = vld [vmem:[%s175 + $0x348] sm:$0xff]
                %284 = vst [vmem:[%s176 + $0x1a8] sm:$0xff] %v283
                %v285 = vld [vmem:[%s175 + $0x350] sm:$0xff]
                %286 = vst [vmem:[%s176 + $0x1b0] sm:$0xff] %v285
                %v287 = vld [vmem:[%s175 + $0x358] sm:$0xff]
                %288 = vst [vmem:[%s176 + $0x1b8] sm:$0xff] %v287
                %v289 = vld [vmem:[%s175 + $0x380] sm:$0xff]
                %290 = vst [vmem:[%s176 + $0x1c0] sm:$0xff] %v289
                %v291 = vld [vmem:[%s175 + $0x388] sm:$0xff]
                %292 = vst [vmem:[%s176 + $0x1c8] sm:$0xff] %v291
                %v293 = vld [vmem:[%s175 + $0x390] sm:$0xff]
                %294 = vst [vmem:[%s176 + $0x1d0] sm:$0xff] %v293
                %v295 = vld [vmem:[%s175 + $0x398] sm:$0xff]
                %296 = vst [vmem:[%s176 + $0x1d8] sm:$0xff] %v295
                %v297 = vld [vmem:[%s175 + $0x3c0] sm:$0xff]
                %298 = vst [vmem:[%s176 + $0x1e0] sm:$0xff] %v297
                %v299 = vld [vmem:[%s175 + $0x3c8] sm:$0xff]
                %300 = vst [vmem:[%s176 + $0x1e8] sm:$0xff] %v299
                %v301 = vld [vmem:[%s175 + $0x3d0] sm:$0xff]
                %302 = vst [vmem:[%s176 + $0x1f0] sm:$0xff] %v301
                %v303 = vld [vmem:[%s175 + $0x3d8] sm:$0xff]
                %304 = vst [vmem:[%s176 + $0x1f8] sm:$0xff] %v303
                %v305 = vld [vmem:[%s175 + $0x400] sm:$0xff]
                %306 = vst [vmem:[%s176 + $0x200] sm:$0xff] %v305
                %v307 = vld [vmem:[%s175 + $0x408] sm:$0xff]
                %308 = vst [vmem:[%s176 + $0x208] sm:$0xff] %v307
                %v309 = vld [vmem:[%s175 + $0x410] sm:$0xff]
                %310 = vst [vmem:[%s176 + $0x210] sm:$0xff] %v309
                %v311 = vld [vmem:[%s175 + $0x418] sm:$0xff]
                %312 = vst [vmem:[%s176 + $0x218] sm:$0xff] %v311
                %v313 = vld [vmem:[%s175 + $0x440] sm:$0xff]
                %314 = vst [vmem:[%s176 + $0x220] sm:$0xff] %v313
                %v315 = vld [vmem:[%s175 + $0x448] sm:$0xff]
                %316 = vst [vmem:[%s176 + $0x228] sm:$0xff] %v315
                %v317 = vld [vmem:[%s175 + $0x450] sm:$0xff]
                %318 = vst [vmem:[%s176 + $0x230] sm:$0xff] %v317
                %v319 = vld [vmem:[%s175 + $0x458] sm:$0xff]
                %320 = vst [vmem:[%s176 + $0x238] sm:$0xff] %v319
              $region41: #{forward.18} parent=35 // loop_footer
                %s174 = sadd.s32 1, %s170
              $region42: #{forward.18} parent=35 // loop_footer_branch
                %169 = sbr.rel target = $region38
              $region43: #{forward.18} parent=35 // loop_exit
                _
            $region36: #{forward.18} parent=31 // pred_fallthru
              _
            // Predicated region
            $region44: #{forward.18} parent=31 // pred_check
              _
            $region45: #{forward.18} parent=31 // pred_check_branch
              %322 = sbr.rel target = $region47
            $region46: #{forward.18} parent=31 // pred_region
              _
            $region47: #{forward.18} parent=31 // pred_fallthru
              _
          $region32: #{forward.18} parent=27 // pred_fallthru
            _
          %323 = vnop
        $region28: #{forward.18} parent=23 // pred_fallthru
          _
        // Predicated region
        $region48: #{forward.18} parent=23 // pred_check
          %p324 = pneg %p98
        $region49: #{forward.18} parent=23 // pred_check_branch
          %326 = sbr.rel (%p324) target = $region51
        $region50: #{forward.18} parent=23 // pred_region
          %s327 = sand.u32 %s88, 1
          %s328 = sand.u32 %s88, 1
          %s329 = smul.addr %s328, 128
          %s330 = scalar_lea.vmem [#allocation3], %s329
          %s331 = smul.u32 8, %s10
          %s332 = smul.addr %s331, 8
          %s333 = scalar_lea.vmem %s3, %s332
          // Predicated region
          $region52: #{forward.18} parent=50 // pred_check
            _
          $region53: #{forward.18} parent=50 // pred_check_branch
            %335 = sbr.rel (0) target = $region55
          $region54: #{forward.18} parent=50 // pred_region
            // Predicated region
            $region56: #{forward.18} parent=54 // pred_check
              _
            $region57: #{forward.18} parent=54 // pred_check_branch
              %337 = sbr.rel (0) target = $region59
            $region58: #{forward.18} parent=54 // pred_region
              loop: start=0, step=1, limit=1
              $region60: #{forward.18} parent=58 // loop_pre_header
                _
              $region61: #{forward.18} parent=58 // loop_header
                %s339 = sphi 0, %s343
                %p340 = scmp.ge.s32.totalorder %s339, 1
                %s344 = sphi %s333, %s333
                %s345 = sphi %s330, %s330
              $region62: #{forward.18} parent=58 // loop_header_branch
                %342 = sbr.rel (%p340) target = $region66
              $region63: #{forward.18} parent=58 // loop_body
                %v346 = vld [vmem:[%s344] sm:$0xff]
                %347 = vst [vmem:[%s345] sm:$0xff] %v346
                %v348 = vld [vmem:[%s344 + $0x8] sm:$0xff]
                %349 = vst [vmem:[%s345 + $0x8] sm:$0xff] %v348
                %v350 = vld [vmem:[%s344 + $0x10] sm:$0xff]
                %351 = vst [vmem:[%s345 + $0x10] sm:$0xff] %v350
                %v352 = vld [vmem:[%s344 + $0x18] sm:$0xff]
                %353 = vst [vmem:[%s345 + $0x18] sm:$0xff] %v352
                %v354 = vld [vmem:[%s344 + $0x20] sm:$0xff]
                %355 = vst [vmem:[%s345 + $0x20] sm:$0xff] %v354
                %v356 = vld [vmem:[%s344 + $0x28] sm:$0xff]
                %357 = vst [vmem:[%s345 + $0x28] sm:$0xff] %v356
                %v358 = vld [vmem:[%s344 + $0x30] sm:$0xff]
                %359 = vst [vmem:[%s345 + $0x30] sm:$0xff] %v358
                %v360 = vld [vmem:[%s344 + $0x38] sm:$0xff]
                %361 = vst [vmem:[%s345 + $0x38] sm:$0xff] %v360
                %v362 = vld [vmem:[%s344 + $0x80] sm:$0xff]
                %363 = vst [vmem:[%s345 + $0x40] sm:$0xff] %v362
                %v364 = vld [vmem:[%s344 + $0x88] sm:$0xff]
                %365 = vst [vmem:[%s345 + $0x48] sm:$0xff] %v364
                %v366 = vld [vmem:[%s344 + $0x90] sm:$0xff]
                %367 = vst [vmem:[%s345 + $0x50] sm:$0xff] %v366
                %v368 = vld [vmem:[%s344 + $0x98] sm:$0xff]
                %369 = vst [vmem:[%s345 + $0x58] sm:$0xff] %v368
                %v370 = vld [vmem:[%s344 + $0xa0] sm:$0xff]
                %371 = vst [vmem:[%s345 + $0x60] sm:$0xff] %v370
                %v372 = vld [vmem:[%s344 + $0xa8] sm:$0xff]
                %373 = vst [vmem:[%s345 + $0x68] sm:$0xff] %v372
                %v374 = vld [vmem:[%s344 + $0xb0] sm:$0xff]
                %375 = vst [vmem:[%s345 + $0x70] sm:$0xff] %v374
                %v376 = vld [vmem:[%s344 + $0xb8] sm:$0xff]
                %377 = vst [vmem:[%s345 + $0x78] sm:$0xff] %v376
              $region64: #{forward.18} parent=58 // loop_footer
                %s343 = sadd.s32 1, %s339
              $region65: #{forward.18} parent=58 // loop_footer_branch
                %338 = sbr.rel target = $region61
              $region66: #{forward.18} parent=58 // loop_exit
                _
            $region59: #{forward.18} parent=54 // pred_fallthru
              _
            // Predicated region
            $region67: #{forward.18} parent=54 // pred_check
              _
            $region68: #{forward.18} parent=54 // pred_check_branch
              %379 = sbr.rel target = $region70
            $region69: #{forward.18} parent=54 // pred_region
              _
            $region70: #{forward.18} parent=54 // pred_fallthru
              _
          $region55: #{forward.18} parent=50 // pred_fallthru
            _
          %380 = vnop
        $region51: #{forward.18} parent=23 // pred_fallthru
          _
      $region24: #{forward.18} parent=5 // pred_fallthru
        _
      %p381 = scmp.le.s32.totalorder 1, %s10
      %p382 = scmp.lt.s32.totalorder %s10, 3
      %p383 = pnand %p381, %p382
      %p384 = pneg %p383
      // Predicated region
      $region71: #{forward.18} parent=5 // pred_check
        _
      $region72: #{forward.18} parent=5 // pred_check_branch
        %386 = sbr.rel (%p383) target = $region74
      $region73: #{forward.18} parent=5 // pred_region
        %s387 = ssub.s32 %s10, 1
        %s388 = sand.u32 %s44, 1
        %s389 = sand.u32 %s44, 1
        %s390 = smul.addr %s389, 576
        %s391 = scalar_lea.vmem [#allocation2], %s390
        // Predicated region
        $region75: #{forward.18} parent=73 // pred_check
          %p392 = pneg %p57
        $region76: #{forward.18} parent=73 // pred_check_branch
          %394 = sbr.rel (%p392) target = $region78
        $region77: #{forward.18} parent=73 // pred_region
          _
        $region78: #{forward.18} parent=73 // pred_fallthru
          _
        %s395 = sand.u32 %s91, 1
        %s396 = sand.u32 %s91, 1
        %s397 = smul.addr %s396, 128
        %s398 = scalar_lea.vmem [#allocation3], %s397
        // Predicated region
        $region79: #{forward.18} parent=73 // pred_check
          %p399 = pneg %p104
        $region80: #{forward.18} parent=73 // pred_check_branch
          %401 = sbr.rel (%p399) target = $region82
        $region81: #{forward.18} parent=73 // pred_region
          _
        $region82: #{forward.18} parent=73 // pred_fallthru
          _
        %p402 = pneg %p31
        %p403 = pneg %p28
        %s404 = sand.u32 %s44, 1
        %s405 = sand.u32 %s44, 1
        %s406 = smul.addr %s405, 576
        %s407 = scalar_lea.vmem [#allocation2], %s406
        %p408 = pneg %p57
        %p409 = pneg %p54
        %p410 = pneg %p78
        %p411 = pneg %p75
        %s412 = sand.u32 %s91, 1
        %s413 = sand.u32 %s91, 1
        %s414 = smul.addr %s413, 128
        %s415 = scalar_lea.vmem [#allocation3], %s414
        %p416 = pneg %p104
        %p417 = pneg %p101
        %p418 = pneg %p130
        %p419 = pneg %p127
        %s420 = sand.u32 %s117, 1
        %s421 = sand.u32 %s117, 1
        %s422 = smul.addr %s421, 128
        %s423 = scalar_lea.vmem [#allocation4], %s422
        %s424 = smul.u32 8, %s15
        %s425 = smul.u32 8, %s15
        %s426 = smul.u32 8, %s15
        %v428 = vld [vmem:[%s0] sm:$0xff]
        %v429 = vld [vmem:[%s0 + $0x8] sm:$0xff]
        %v430 = vld [vmem:[%s391] sm:$0xff]
        %v431 = vld [vmem:[%s391 + $0x8] sm:$0xff]
        %v432 = vld [vmem:[%s391 + $0x10] sm:$0xff]
        %v433 = vld [vmem:[%s391 + $0x18] sm:$0xff]
        %v434 = vld [vmem:[%s391 + $0x20] sm:$0xff]
        %v435 = vld [vmem:[%s391 + $0x28] sm:$0xff]
        %v436 = vld [vmem:[%s391 + $0x30] sm:$0xff]
        %v437 = vld [vmem:[%s391 + $0x38] sm:$0xff]
        %v438 = vld [vmem:[%s391 + $0x40] sm:$0xff]
        %v439 = vld [vmem:[%s391 + $0x48] sm:$0xff]
        %v440 = vld [vmem:[%s391 + $0x50] sm:$0xff]
        %v441 = vld [vmem:[%s391 + $0x58] sm:$0xff]
        %v442 = vld [vmem:[%s391 + $0x60] sm:$0xff]
        %v443 = vld [vmem:[%s391 + $0x68] sm:$0xff]
        %v444 = vld [vmem:[%s391 + $0x70] sm:$0xff]
        %v445 = vld [vmem:[%s391 + $0x78] sm:$0xff]
        %v446 = vld [vmem:[%s391 + $0x80] sm:$0xff]
        %v447 = vld [vmem:[%s391 + $0x88] sm:$0xff]
        %v448 = vld [vmem:[%s391 + $0x90] sm:$0xff]
        %v449 = vld [vmem:[%s391 + $0x98] sm:$0xff]
        %v450 = vld [vmem:[%s391 + $0xa0] sm:$0xff]
        %v451 = vld [vmem:[%s391 + $0xa8] sm:$0xff]
        %v452 = vld [vmem:[%s391 + $0xb0] sm:$0xff]
        %v453 = vld [vmem:[%s391 + $0xb8] sm:$0xff]
        %v454 = vld [vmem:[%s391 + $0xc0] sm:$0xff]
        %v455 = vld [vmem:[%s391 + $0xc8] sm:$0xff]
        %v456 = vld [vmem:[%s391 + $0xd0] sm:$0xff]
        %v457 = vld [vmem:[%s391 + $0xd8] sm:$0xff]
        %v458 = vld [vmem:[%s391 + $0xe0] sm:$0xff]
        %v459 = vld [vmem:[%s391 + $0xe8] sm:$0xff]
        %v460 = vld [vmem:[%s391 + $0xf0] sm:$0xff]
        %v461 = vld [vmem:[%s391 + $0xf8] sm:$0xff]
        %v462 = vld [vmem:[%s391 + $0x100] sm:$0xff]
        %v463 = vld [vmem:[%s391 + $0x108] sm:$0xff]
        %v464 = vld [vmem:[%s391 + $0x110] sm:$0xff]
        %v465 = vld [vmem:[%s391 + $0x118] sm:$0xff]
        %v466 = vld [vmem:[%s391 + $0x120] sm:$0xff]
        %v467 = vld [vmem:[%s391 + $0x128] sm:$0xff]
        %v468 = vld [vmem:[%s391 + $0x130] sm:$0xff]
        %v469 = vld [vmem:[%s391 + $0x138] sm:$0xff]
        %v470 = vld [vmem:[%s391 + $0x140] sm:$0xff]
        %v471 = vld [vmem:[%s391 + $0x148] sm:$0xff]
        %v472 = vld [vmem:[%s391 + $0x150] sm:$0xff]
        %v473 = vld [vmem:[%s391 + $0x158] sm:$0xff]
        %v474 = vld [vmem:[%s391 + $0x160] sm:$0xff]
        %v475 = vld [vmem:[%s391 + $0x168] sm:$0xff]
        %v476 = vld [vmem:[%s391 + $0x170] sm:$0xff]
        %v477 = vld [vmem:[%s391 + $0x178] sm:$0xff]
        %v478 = vld [vmem:[%s391 + $0x180] sm:$0xff]
        %v479 = vld [vmem:[%s391 + $0x188] sm:$0xff]
        %v480 = vld [vmem:[%s391 + $0x190] sm:$0xff]
        %v481 = vld [vmem:[%s391 + $0x198] sm:$0xff]
        %v482 = vld [vmem:[%s391 + $0x1a0] sm:$0xff]
        %v483 = vld [vmem:[%s391 + $0x1a8] sm:$0xff]
        %v484 = vld [vmem:[%s391 + $0x1b0] sm:$0xff]
        %v485 = vld [vmem:[%s391 + $0x1b8] sm:$0xff]
        %v486 = vld [vmem:[%s391 + $0x1c0] sm:$0xff]
        %v487 = vld [vmem:[%s391 + $0x1c8] sm:$0xff]
        %v488 = vld [vmem:[%s391 + $0x1d0] sm:$0xff]
        %v489 = vld [vmem:[%s391 + $0x1d8] sm:$0xff]
        %v490 = vld [vmem:[%s391 + $0x1e0] sm:$0xff]
        %v491 = vld [vmem:[%s391 + $0x1e8] sm:$0xff]
        %v492 = vld [vmem:[%s391 + $0x1f0] sm:$0xff]
        %v493 = vld [vmem:[%s391 + $0x1f8] sm:$0xff]
        %v494 = vld [vmem:[%s391 + $0x200] sm:$0xff]
        %v495 = vld [vmem:[%s391 + $0x208] sm:$0xff]
        %v496 = vld [vmem:[%s391 + $0x210] sm:$0xff]
        %v497 = vld [vmem:[%s391 + $0x218] sm:$0xff]
        %v498 = vld [vmem:[%s391 + $0x220] sm:$0xff]
        %v499 = vld [vmem:[%s391 + $0x228] sm:$0xff]
        %v500 = vld [vmem:[%s391 + $0x230] sm:$0xff]
        %v501 = vld [vmem:[%s391 + $0x238] sm:$0xff]
        %v502 = vld [vmem:[%s2] sm:$0xff]
        %v503 = vld [vmem:[%s2 + $0x8] sm:$0xff]
        %505 = vset.pattern.permute.xlu0 0
        %506 = vperm.xlu0 %505, %v502
        %v507 = vpop.permute.xlu0 %506
        %510 = vset.pattern.permute.xlu0 0
        %511 = vperm.xlu0 %510, %v503
        %v512 = vpop.permute.xlu0 %511
        %v516 = vunpack.c.l.b16 %v428
        %v517 = vunpack.c.h.b16 %v428
        %v518 = vunpack.c.l.b16 %v429
        %v519 = vunpack.c.h.b16 %v429
        %v520 = vpack.c.b16 %v518, %v516
        %v521 = vpack.c.b16 %v519, %v517
        %v595 = vunpack.c.l.b16 %v430
        %v596 = vunpack.c.h.b16 %v430
        %v597 = vunpack.c.l.b16 %v431
        %v598 = vunpack.c.h.b16 %v431
        %v599 = vunpack.c.l.b16 %v432
        %v600 = vunpack.c.h.b16 %v432
        %v601 = vunpack.c.l.b16 %v433
        %v602 = vunpack.c.h.b16 %v433
        %v603 = vunpack.c.l.b16 %v434
        %v604 = vunpack.c.h.b16 %v434
        %v605 = vunpack.c.l.b16 %v435
        %v606 = vunpack.c.h.b16 %v435
        %v607 = vunpack.c.l.b16 %v436
        %v608 = vunpack.c.h.b16 %v436
        %v609 = vunpack.c.l.b16 %v437
        %v610 = vunpack.c.h.b16 %v437
        %v611 = vunpack.c.l.b16 %v438
        %v612 = vunpack.c.h.b16 %v438
        %v613 = vunpack.c.l.b16 %v439
        %v614 = vunpack.c.h.b16 %v439
        %v615 = vunpack.c.l.b16 %v440
        %v616 = vunpack.c.h.b16 %v440
        %v617 = vunpack.c.l.b16 %v441
        %v618 = vunpack.c.h.b16 %v441
        %v619 = vunpack.c.l.b16 %v442
        %v620 = vunpack.c.h.b16 %v442
        %v621 = vunpack.c.l.b16 %v443
        %v622 = vunpack.c.h.b16 %v443
        %v623 = vunpack.c.l.b16 %v444
        %v624 = vunpack.c.h.b16 %v444
        %v625 = vunpack.c.l.b16 %v445
        %v626 = vunpack.c.h.b16 %v445
        %v627 = vunpack.c.l.b16 %v446
        %v628 = vunpack.c.h.b16 %v446
        %v629 = vunpack.c.l.b16 %v447
        %v630 = vunpack.c.h.b16 %v447
        %v631 = vunpack.c.l.b16 %v448
        %v632 = vunpack.c.h.b16 %v448
        %v633 = vunpack.c.l.b16 %v449
        %v634 = vunpack.c.h.b16 %v449
        %v635 = vunpack.c.l.b16 %v450
        %v636 = vunpack.c.h.b16 %v450
        %v637 = vunpack.c.l.b16 %v451
        %v638 = vunpack.c.h.b16 %v451
        %v639 = vunpack.c.l.b16 %v452
        %v640 = vunpack.c.h.b16 %v452
        %v641 = vunpack.c.l.b16 %v453
        %v642 = vunpack.c.h.b16 %v453
        %v643 = vunpack.c.l.b16 %v454
        %v644 = vunpack.c.h.b16 %v454
        %v645 = vunpack.c.l.b16 %v455
        %v646 = vunpack.c.h.b16 %v455
        %v647 = vunpack.c.l.b16 %v456
        %v648 = vunpack.c.h.b16 %v456
        %v649 = vunpack.c.l.b16 %v457
        %v650 = vunpack.c.h.b16 %v457
        %v651 = vunpack.c.l.b16 %v458
        %v652 = vunpack.c.h.b16 %v458
        %v653 = vunpack.c.l.b16 %v459
        %v654 = vunpack.c.h.b16 %v459
        %v655 = vunpack.c.l.b16 %v460
        %v656 = vunpack.c.h.b16 %v460
        %v657 = vunpack.c.l.b16 %v461
        %v658 = vunpack.c.h.b16 %v461
        %v659 = vunpack.c.l.b16 %v462
        %v660 = vunpack.c.h.b16 %v462
        %v661 = vunpack.c.l.b16 %v463
        %v662 = vunpack.c.h.b16 %v463
        %v663 = vunpack.c.l.b16 %v464
        %v664 = vunpack.c.h.b16 %v464
        %v665 = vunpack.c.l.b16 %v465
        %v666 = vunpack.c.h.b16 %v465
        %v667 = vunpack.c.l.b16 %v466
        %v668 = vunpack.c.h.b16 %v466
        %v669 = vunpack.c.l.b16 %v467
        %v670 = vunpack.c.h.b16 %v467
        %v671 = vunpack.c.l.b16 %v468
        %v672 = vunpack.c.h.b16 %v468
        %v673 = vunpack.c.l.b16 %v469
        %v674 = vunpack.c.h.b16 %v469
        %v675 = vunpack.c.l.b16 %v470
        %v676 = vunpack.c.h.b16 %v470
        %v677 = vunpack.c.l.b16 %v471
        %v678 = vunpack.c.h.b16 %v471
        %v679 = vunpack.c.l.b16 %v472
        %v680 = vunpack.c.h.b16 %v472
        %v681 = vunpack.c.l.b16 %v473
        %v682 = vunpack.c.h.b16 %v473
        %v683 = vunpack.c.l.b16 %v474
        %v684 = vunpack.c.h.b16 %v474
        %v685 = vunpack.c.l.b16 %v475
        %v686 = vunpack.c.h.b16 %v475
        %v687 = vunpack.c.l.b16 %v476
        %v688 = vunpack.c.h.b16 %v476
        %v689 = vunpack.c.l.b16 %v477
        %v690 = vunpack.c.h.b16 %v477
        %v691 = vunpack.c.l.b16 %v478
        %v692 = vunpack.c.h.b16 %v478
        %v693 = vunpack.c.l.b16 %v479
        %v694 = vunpack.c.h.b16 %v479
        %v695 = vunpack.c.l.b16 %v480
        %v696 = vunpack.c.h.b16 %v480
        %v697 = vunpack.c.l.b16 %v481
        %v698 = vunpack.c.h.b16 %v481
        %v699 = vunpack.c.l.b16 %v482
        %v700 = vunpack.c.h.b16 %v482
        %v701 = vunpack.c.l.b16 %v483
        %v702 = vunpack.c.h.b16 %v483
        %v703 = vunpack.c.l.b16 %v484
        %v704 = vunpack.c.h.b16 %v484
        %v705 = vunpack.c.l.b16 %v485
        %v706 = vunpack.c.h.b16 %v485
        %v707 = vunpack.c.l.b16 %v486
        %v708 = vunpack.c.h.b16 %v486
        %v709 = vunpack.c.l.b16 %v487
        %v710 = vunpack.c.h.b16 %v487
        %v711 = vunpack.c.l.b16 %v488
        %v712 = vunpack.c.h.b16 %v488
        %v713 = vunpack.c.l.b16 %v489
        %v714 = vunpack.c.h.b16 %v489
        %v715 = vunpack.c.l.b16 %v490
        %v716 = vunpack.c.h.b16 %v490
        %v717 = vunpack.c.l.b16 %v491
        %v718 = vunpack.c.h.b16 %v491
        %v719 = vunpack.c.l.b16 %v492
        %v720 = vunpack.c.h.b16 %v492
        %v721 = vunpack.c.l.b16 %v493
        %v722 = vunpack.c.h.b16 %v493
        %v723 = vunpack.c.l.b16 %v494
        %v724 = vunpack.c.h.b16 %v494
        %v725 = vunpack.c.l.b16 %v495
        %v726 = vunpack.c.h.b16 %v495
        %v727 = vunpack.c.l.b16 %v496
        %v728 = vunpack.c.h.b16 %v496
        %v729 = vunpack.c.l.b16 %v497
        %v730 = vunpack.c.h.b16 %v497
        %v731 = vunpack.c.l.b16 %v498
        %v732 = vunpack.c.h.b16 %v498
        %v733 = vunpack.c.l.b16 %v499
        %v734 = vunpack.c.h.b16 %v499
        %v735 = vunpack.c.l.b16 %v500
        %v736 = vunpack.c.h.b16 %v500
        %v737 = vunpack.c.l.b16 %v501
        %v738 = vunpack.c.h.b16 %v501
        %v739 = vpack.c.b16 %v603, %v595
        %v740 = vpack.c.b16 %v604, %v596
        %v741 = vpack.c.b16 %v605, %v597
        %v742 = vpack.c.b16 %v606, %v598
        %v743 = vpack.c.b16 %v607, %v599
        %v744 = vpack.c.b16 %v608, %v600
        %v745 = vpack.c.b16 %v609, %v601
        %v746 = vpack.c.b16 %v610, %v602
        %v747 = vpack.c.b16 %v619, %v611
        %v748 = vpack.c.b16 %v620, %v612
        %v749 = vpack.c.b16 %v621, %v613
        %v750 = vpack.c.b16 %v622, %v614
        %v751 = vpack.c.b16 %v623, %v615
        %v752 = vpack.c.b16 %v624, %v616
        %v753 = vpack.c.b16 %v625, %v617
        %v754 = vpack.c.b16 %v626, %v618
        %v755 = vpack.c.b16 %v635, %v627
        %v756 = vpack.c.b16 %v636, %v628
        %v757 = vpack.c.b16 %v637, %v629
        %v758 = vpack.c.b16 %v638, %v630
        %v759 = vpack.c.b16 %v639, %v631
        %v760 = vpack.c.b16 %v640, %v632
        %v761 = vpack.c.b16 %v641, %v633
        %v762 = vpack.c.b16 %v642, %v634
        %v763 = vpack.c.b16 %v651, %v643
        %v764 = vpack.c.b16 %v652, %v644
        %v765 = vpack.c.b16 %v653, %v645
        %v766 = vpack.c.b16 %v654, %v646
        %v767 = vpack.c.b16 %v655, %v647
        %v768 = vpack.c.b16 %v656, %v648
        %v769 = vpack.c.b16 %v657, %v649
        %v770 = vpack.c.b16 %v658, %v650
        %v771 = vpack.c.b16 %v667, %v659
        %v772 = vpack.c.b16 %v668, %v660
        %v773 = vpack.c.b16 %v669, %v661
        %v774 = vpack.c.b16 %v670, %v662
        %v775 = vpack.c.b16 %v671, %v663
        %v776 = vpack.c.b16 %v672, %v664
        %v777 = vpack.c.b16 %v673, %v665
        %v778 = vpack.c.b16 %v674, %v666
        %v779 = vpack.c.b16 %v683, %v675
        %v780 = vpack.c.b16 %v684, %v676
        %v781 = vpack.c.b16 %v685, %v677
        %v782 = vpack.c.b16 %v686, %v678
        %v783 = vpack.c.b16 %v687, %v679
        %v784 = vpack.c.b16 %v688, %v680
        %v785 = vpack.c.b16 %v689, %v681
        %v786 = vpack.c.b16 %v690, %v682
        %v787 = vpack.c.b16 %v699, %v691
        %v788 = vpack.c.b16 %v700, %v692
        %v789 = vpack.c.b16 %v701, %v693
        %v790 = vpack.c.b16 %v702, %v694
        %v791 = vpack.c.b16 %v703, %v695
        %v792 = vpack.c.b16 %v704, %v696
        %v793 = vpack.c.b16 %v705, %v697
        %v794 = vpack.c.b16 %v706, %v698
        %v795 = vpack.c.b16 %v715, %v707
        %v796 = vpack.c.b16 %v716, %v708
        %v797 = vpack.c.b16 %v717, %v709
        %v798 = vpack.c.b16 %v718, %v710
        %v799 = vpack.c.b16 %v719, %v711
        %v800 = vpack.c.b16 %v720, %v712
        %v801 = vpack.c.b16 %v721, %v713
        %v802 = vpack.c.b16 %v722, %v714
        %v803 = vpack.c.b16 %v731, %v723
        %v804 = vpack.c.b16 %v732, %v724
        %v805 = vpack.c.b16 %v733, %v725
        %v806 = vpack.c.b16 %v734, %v726
        %v807 = vpack.c.b16 %v735, %v727
        %v808 = vpack.c.b16 %v736, %v728
        %v809 = vpack.c.b16 %v737, %v729
        %v810 = vpack.c.b16 %v738, %v730
        %vm883 = vcmask 130048
        %v885 = vsel %vm883, %v521, 0
        %887 = vmatprep.subr.bf16.mxu0 %v796
        %888 = vmatpush1.bf16.msra.mxu0 %v795
        %889 = vmatprep.subr.bf16.mxu0 %v788
        %890 = vmatpush1.bf16.msra.mxu0 %v787
        %891 = vmatprep.subr.bf16.mxu0 %v780
        %892 = vmatpush1.bf16.msra.mxu0 %v779
        %893 = vmatprep.subr.bf16.mxu0 %v772
        %894 = vmatpush1.bf16.msra.mxu0 %v771
        %895 = vmatprep.subr.bf16.mxu0 %v764
        %896 = vmatpush1.bf16.msra.mxu0 %v763
        %897 = vmatprep.subr.bf16.mxu0 %v756
        %898 = vmatpush1.bf16.msra.mxu0 %v755
        %899 = vmatprep.subr.bf16.mxu0 %v748
        %900 = vmatpush1.bf16.msra.mxu0 %v747
        %901 = vmatprep.subr.bf16.mxu0 %v740
        %902 = vmatpush1.bf16.msra.mxu0 %v739
        %903 = vmatprep.subr.bf16.mxu0 0
        %904 = vmatpush2.bf16.msra.mxu0 0
        %905 = vmatprep.subr.bf16.mxu0 0
        %906 = vmatpush2.bf16.msra.mxu0 0
        %907 = vmatprep.subr.bf16.mxu0 0
        %908 = vmatpush2.bf16.msra.mxu0 0
        %909 = vmatprep.subr.bf16.mxu0 0
        %910 = vmatpush2.bf16.msra.mxu0 0
        %911 = vmatprep.subr.bf16.mxu0 0
        %912 = vmatpush2.bf16.msra.mxu0 0
        %913 = vmatprep.subr.bf16.mxu0 0
        %914 = vmatpush2.bf16.msra.mxu0 0
        %915 = vmatprep.subr.bf16.mxu0 0
        %916 = vmatpush2.bf16.msra.mxu0 0
        %917 = vmatprep.subr.bf16.mxu0 %v804
        %918 = vmatpush2.bf16.msra.mxu0 %v803
        %919 = vmatprep.mubr.bf16.mxu0 %v885
        %920 = vmatmul.mubr.bf16.gmra.mxu0 %v520
        %v921 = vpop.f32.mrf.mxu0
        %v922 = vadd.f32 %v507, %v921
        %v923 = vpop.f32.mrf.mxu0
        %v924 = vadd.f32 %v507, %v923
        %v925 = vpop.f32.mrf.mxu0
        %v926 = vadd.f32 %v512, %v925
        %v927 = vpop.f32.mrf.mxu0
        %v928 = vadd.f32 %v512, %v927
        %929 = vdwg.mxu0
        %930 = vmatprep.subr.bf16.mxu0 %v798
        %931 = vmatpush1.bf16.msra.mxu0 %v797
        %932 = vmatprep.subr.bf16.mxu0 %v790
        %933 = vmatpush1.bf16.msra.mxu0 %v789
        %934 = vmatprep.subr.bf16.mxu0 %v782
        %935 = vmatpush1.bf16.msra.mxu0 %v781
        %936 = vmatprep.subr.bf16.mxu0 %v774
        %937 = vmatpush1.bf16.msra.mxu0 %v773
        %938 = vmatprep.subr.bf16.mxu0 %v766
        %939 = vmatpush1.bf16.msra.mxu0 %v765
        %940 = vmatprep.subr.bf16.mxu0 %v758
        %941 = vmatpush1.bf16.msra.mxu0 %v757
        %942 = vmatprep.subr.bf16.mxu0 %v750
        %943 = vmatpush1.bf16.msra.mxu0 %v749
        %944 = vmatprep.subr.bf16.mxu0 %v742
        %945 = vmatpush1.bf16.msra.mxu0 %v741
        %946 = vmatprep.subr.bf16.mxu0 0
        %947 = vmatpush2.bf16.msra.mxu0 0
        %948 = vmatprep.subr.bf16.mxu0 0
        %949 = vmatpush2.bf16.msra.mxu0 0
        %950 = vmatprep.subr.bf16.mxu0 0
        %951 = vmatpush2.bf16.msra.mxu0 0
        %952 = vmatprep.subr.bf16.mxu0 0
        %953 = vmatpush2.bf16.msra.mxu0 0
        %954 = vmatprep.subr.bf16.mxu0 0
        %955 = vmatpush2.bf16.msra.mxu0 0
        %956 = vmatprep.subr.bf16.mxu0 0
        %957 = vmatpush2.bf16.msra.mxu0 0
        %958 = vmatprep.subr.bf16.mxu0 0
        %959 = vmatpush2.bf16.msra.mxu0 0
        %960 = vmatprep.subr.bf16.mxu0 %v806
        %961 = vmatpush2.bf16.msra.mxu0 %v805
        %962 = vmatprep.mubr.bf16.mxu0 %v885
        %963 = vmatmul.mubr.bf16.gmra.mxu0 %v520
        %v964 = vpop.f32.mrf.mxu0
        %v965 = vadd.f32 %v507, %v964
        %v966 = vpop.f32.mrf.mxu0
        %v967 = vadd.f32 %v507, %v966
        %v968 = vpop.f32.mrf.mxu0
        %v969 = vadd.f32 %v512, %v968
        %v970 = vpop.f32.mrf.mxu0
        %v971 = vadd.f32 %v512, %v970
        %972 = vdwg.mxu0
        %973 = vmatprep.subr.bf16.mxu0 %v800
        %974 = vmatpush1.bf16.msra.mxu0 %v799
        %975 = vmatprep.subr.bf16.mxu0 %v792
        %976 = vmatpush1.bf16.msra.mxu0 %v791
        %977 = vmatprep.subr.bf16.mxu0 %v784
        %978 = vmatpush1.bf16.msra.mxu0 %v783
        %979 = vmatprep.subr.bf16.mxu0 %v776
        %980 = vmatpush1.bf16.msra.mxu0 %v775
        %981 = vmatprep.subr.bf16.mxu0 %v768
        %982 = vmatpush1.bf16.msra.mxu0 %v767
        %983 = vmatprep.subr.bf16.mxu0 %v760
        %984 = vmatpush1.bf16.msra.mxu0 %v759
        %985 = vmatprep.subr.bf16.mxu0 %v752
        %986 = vmatpush1.bf16.msra.mxu0 %v751
        %987 = vmatprep.subr.bf16.mxu0 %v744
        %988 = vmatpush1.bf16.msra.mxu0 %v743
        %989 = vmatprep.subr.bf16.mxu0 0
        %990 = vmatpush2.bf16.msra.mxu0 0
        %991 = vmatprep.subr.bf16.mxu0 0
        %992 = vmatpush2.bf16.msra.mxu0 0
        %993 = vmatprep.subr.bf16.mxu0 0
        %994 = vmatpush2.bf16.msra.mxu0 0
        %995 = vmatprep.subr.bf16.mxu0 0
        %996 = vmatpush2.bf16.msra.mxu0 0
        %997 = vmatprep.subr.bf16.mxu0 0
        %998 = vmatpush2.bf16.msra.mxu0 0
        %999 = vmatprep.subr.bf16.mxu0 0
        %1000 = vmatpush2.bf16.msra.mxu0 0
        %1001 = vmatprep.subr.bf16.mxu0 0
        %1002 = vmatpush2.bf16.msra.mxu0 0
        %1003 = vmatprep.subr.bf16.mxu0 %v808
        %1004 = vmatpush2.bf16.msra.mxu0 %v807
        %1005 = vmatprep.mubr.bf16.mxu0 %v885
        %1006 = vmatmul.mubr.bf16.gmra.mxu0 %v520
        %v1007 = vpop.f32.mrf.mxu0
        %v1008 = vadd.f32 %v507, %v1007
        %v1009 = vpop.f32.mrf.mxu0
        %v1010 = vadd.f32 %v507, %v1009
        %v1011 = vpop.f32.mrf.mxu0
        %v1012 = vadd.f32 %v512, %v1011
        %v1013 = vpop.f32.mrf.mxu0
        %v1014 = vadd.f32 %v512, %v1013
        %1015 = vdwg.mxu0
        %1016 = vmatprep.subr.bf16.mxu0 %v802
        %1017 = vmatpush1.bf16.msra.mxu0 %v801
        %1018 = vmatprep.subr.bf16.mxu0 %v794
        %1019 = vmatpush1.bf16.msra.mxu0 %v793
        %1020 = vmatprep.subr.bf16.mxu0 %v786
        %1021 = vmatpush1.bf16.msra.mxu0 %v785
        %1022 = vmatprep.subr.bf16.mxu0 %v778
        %1023 = vmatpush1.bf16.msra.mxu0 %v777
        %1024 = vmatprep.subr.bf16.mxu0 %v770
        %1025 = vmatpush1.bf16.msra.mxu0 %v769
        %1026 = vmatprep.subr.bf16.mxu0 %v762
        %1027 = vmatpush1.bf16.msra.mxu0 %v761
        %1028 = vmatprep.subr.bf16.mxu0 %v754
        %1029 = vmatpush1.bf16.msra.mxu0 %v753
        %1030 = vmatprep.subr.bf16.mxu0 %v746
        %1031 = vmatpush1.bf16.msra.mxu0 %v745
        %1032 = vmatprep.subr.bf16.mxu0 0
        %1033 = vmatpush2.bf16.msra.mxu0 0
        %1034 = vmatprep.subr.bf16.mxu0 0
        %1035 = vmatpush2.bf16.msra.mxu0 0
        %1036 = vmatprep.subr.bf16.mxu0 0
        %1037 = vmatpush2.bf16.msra.mxu0 0
        %1038 = vmatprep.subr.bf16.mxu0 0
        %1039 = vmatpush2.bf16.msra.mxu0 0
        %1040 = vmatprep.subr.bf16.mxu0 0
        %1041 = vmatpush2.bf16.msra.mxu0 0
        %1042 = vmatprep.subr.bf16.mxu0 0
        %1043 = vmatpush2.bf16.msra.mxu0 0
        %1044 = vmatprep.subr.bf16.mxu0 0
        %1045 = vmatpush2.bf16.msra.mxu0 0
        %1046 = vmatprep.subr.bf16.mxu0 %v810
        %1047 = vmatpush2.bf16.msra.mxu0 %v809
        %1048 = vmatprep.mubr.bf16.mxu0 %v885
        %1049 = vmatmul.mubr.bf16.gmra.mxu0 %v520
        %v1050 = vpop.f32.mrf.mxu0
        %v1051 = vadd.f32 %v507, %v1050
        %v1052 = vpop.f32.mrf.mxu0
        %v1053 = vadd.f32 %v507, %v1052
        %v1054 = vpop.f32.mrf.mxu0
        %v1055 = vadd.f32 %v512, %v1054
        %v1056 = vpop.f32.mrf.mxu0
        %v1057 = vadd.f32 %v512, %v1056
        %1058 = vdwg.mxu0
        %v1059 = vld [vmem:[%s398] sm:$0xff]
        %v1060 = vld [vmem:[%s398 + $0x8] sm:$0xff]
        %v1061 = vld [vmem:[%s398 + $0x10] sm:$0xff]
        %v1062 = vld [vmem:[%s398 + $0x18] sm:$0xff]
        %v1063 = vld [vmem:[%s398 + $0x20] sm:$0xff]
        %v1064 = vld [vmem:[%s398 + $0x28] sm:$0xff]
        %v1065 = vld [vmem:[%s398 + $0x30] sm:$0xff]
        %v1066 = vld [vmem:[%s398 + $0x38] sm:$0xff]
        %v1067 = vld [vmem:[%s398 + $0x40] sm:$0xff]
        %v1068 = vld [vmem:[%s398 + $0x48] sm:$0xff]
        %v1069 = vld [vmem:[%s398 + $0x50] sm:$0xff]
        %v1070 = vld [vmem:[%s398 + $0x58] sm:$0xff]
        %v1071 = vld [vmem:[%s398 + $0x60] sm:$0xff]
        %v1072 = vld [vmem:[%s398 + $0x68] sm:$0xff]
        %v1073 = vld [vmem:[%s398 + $0x70] sm:$0xff]
        %v1074 = vld [vmem:[%s398 + $0x78] sm:$0xff]
        %v1075 = vadd.f32 %v922, %v1059
        %v1076 = vadd.f32 %v924, %v1060
        %v1077 = vadd.f32 %v965, %v1061
        %v1078 = vadd.f32 %v967, %v1062
        %v1079 = vadd.f32 %v1008, %v1063
        %v1080 = vadd.f32 %v1010, %v1064
        %v1081 = vadd.f32 %v1051, %v1065
        %v1082 = vadd.f32 %v1053, %v1066
        %v1083 = vadd.f32 %v926, %v1067
        %v1084 = vadd.f32 %v928, %v1068
        %v1085 = vadd.f32 %v969, %v1069
        %v1086 = vadd.f32 %v971, %v1070
        %v1087 = vadd.f32 %v1012, %v1071
        %v1088 = vadd.f32 %v1014, %v1072
        %v1089 = vadd.f32 %v1055, %v1073
        %v1090 = vadd.f32 %v1057, %v1074
        %v1091 = vmax.f32 %v1075, 0.0
        %v1092 = vmax.f32 %v1076, 0.0
        %v1093 = vmax.f32 %v1077, 0.0
        %v1094 = vmax.f32 %v1078, 0.0
        %v1095 = vmax.f32 %v1079, 0.0
        %v1096 = vmax.f32 %v1080, 0.0
        %v1097 = vmax.f32 %v1081, 0.0
        %v1098 = vmax.f32 %v1082, 0.0
        %v1099 = vmax.f32 %v1083, 0.0
        %v1100 = vmax.f32 %v1084, 0.0
        %v1101 = vmax.f32 %v1085, 0.0
        %v1102 = vmax.f32 %v1086, 0.0
        %v1103 = vmax.f32 %v1087, 0.0
        %v1104 = vmax.f32 %v1088, 0.0
        %v1105 = vmax.f32 %v1089, 0.0
        %v1106 = vmax.f32 %v1090, 0.0
        %1107 = vst [vmem:[%s423] sm:$0xff] %v1091
        %1108 = vst [vmem:[%s423 + $0x8] sm:$0xff] %v1092
        %1109 = vst [vmem:[%s423 + $0x10] sm:$0xff] %v1093
        %1110 = vst [vmem:[%s423 + $0x18] sm:$0xff] %v1094
        %1111 = vst [vmem:[%s423 + $0x20] sm:$0xff] %v1095
        %1112 = vst [vmem:[%s423 + $0x28] sm:$0xff] %v1096
        %1113 = vst [vmem:[%s423 + $0x30] sm:$0xff] %v1097
        %1114 = vst [vmem:[%s423 + $0x38] sm:$0xff] %v1098
        %1115 = vst [vmem:[%s423 + $0x40] sm:$0xff] %v1099
        %1116 = vst [vmem:[%s423 + $0x48] sm:$0xff] %v1100
        %1117 = vst [vmem:[%s423 + $0x50] sm:$0xff] %v1101
        %1118 = vst [vmem:[%s423 + $0x58] sm:$0xff] %v1102
        %1119 = vst [vmem:[%s423 + $0x60] sm:$0xff] %v1103
        %1120 = vst [vmem:[%s423 + $0x68] sm:$0xff] %v1104
        %1121 = vst [vmem:[%s423 + $0x70] sm:$0xff] %v1105
        %1122 = vst [vmem:[%s423 + $0x78] sm:$0xff] %v1106
        %s1123 = sand.u32 %s117, 1
        %s1124 = sand.u32 %s117, 1
        %s1125 = smul.addr %s1124, 128
        %s1126 = scalar_lea.vmem [#allocation4], %s1125
        // Predicated region
        $region83: #{forward.18} parent=73 // pred_check
          %p1127 = pneg %p127
        $region84: #{forward.18} parent=73 // pred_check_branch
          %1129 = sbr.rel (%p1127) target = $region86
        $region85: #{forward.18} parent=73 // pred_region
          %s1130 = smul.u32 8, %s15
          %s1131 = smul.addr %s1130, 8
          %s1132 = scalar_lea.vmem %s4, %s1131
          // Predicated region
          $region87: #{forward.18} parent=85 // pred_check
            _
          $region88: #{forward.18} parent=85 // pred_check_branch
            %1134 = sbr.rel (0) target = $region90
          $region89: #{forward.18} parent=85 // pred_region
            // Predicated region
            $region91: #{forward.18} parent=89 // pred_check
              _
            $region92: #{forward.18} parent=89 // pred_check_branch
              %1136 = sbr.rel (0) target = $region94
            $region93: #{forward.18} parent=89 // pred_region
              loop: start=0, step=1, limit=1
              $region95: #{forward.18} parent=93 // loop_pre_header
                _
              $region96: #{forward.18} parent=93 // loop_header
                %s1138 = sphi 0, %s1142
                %p1139 = scmp.ge.s32.totalorder %s1138, 1
                %s1143 = sphi %s1126, %s1126
                %s1144 = sphi %s1132, %s1132
              $region97: #{forward.18} parent=93 // loop_header_branch
                %1141 = sbr.rel (%p1139) target = $region101
              $region98: #{forward.18} parent=93 // loop_body
                %v1145 = vld [vmem:[%s1143] sm:$0xff]
                %1146 = vst [vmem:[%s1144] sm:$0xff] %v1145
                %v1147 = vld [vmem:[%s1143 + $0x8] sm:$0xff]
                %1148 = vst [vmem:[%s1144 + $0x8] sm:$0xff] %v1147
                %v1149 = vld [vmem:[%s1143 + $0x10] sm:$0xff]
                %1150 = vst [vmem:[%s1144 + $0x10] sm:$0xff] %v1149
                %v1151 = vld [vmem:[%s1143 + $0x18] sm:$0xff]
                %1152 = vst [vmem:[%s1144 + $0x18] sm:$0xff] %v1151
                %v1153 = vld [vmem:[%s1143 + $0x20] sm:$0xff]
                %1154 = vst [vmem:[%s1144 + $0x20] sm:$0xff] %v1153
                %v1155 = vld [vmem:[%s1143 + $0x28] sm:$0xff]
                %1156 = vst [vmem:[%s1144 + $0x28] sm:$0xff] %v1155
                %v1157 = vld [vmem:[%s1143 + $0x30] sm:$0xff]
                %1158 = vst [vmem:[%s1144 + $0x30] sm:$0xff] %v1157
                %v1159 = vld [vmem:[%s1143 + $0x38] sm:$0xff]
                %1160 = vst [vmem:[%s1144 + $0x38] sm:$0xff] %v1159
                %v1161 = vld [vmem:[%s1143 + $0x40] sm:$0xff]
                %1162 = vst [vmem:[%s1144 + $0x80] sm:$0xff] %v1161
                %v1163 = vld [vmem:[%s1143 + $0x48] sm:$0xff]
                %1164 = vst [vmem:[%s1144 + $0x88] sm:$0xff] %v1163
                %v1165 = vld [vmem:[%s1143 + $0x50] sm:$0xff]
                %1166 = vst [vmem:[%s1144 + $0x90] sm:$0xff] %v1165
                %v1167 = vld [vmem:[%s1143 + $0x58] sm:$0xff]
                %1168 = vst [vmem:[%s1144 + $0x98] sm:$0xff] %v1167
                %v1169 = vld [vmem:[%s1143 + $0x60] sm:$0xff]
                %1170 = vst [vmem:[%s1144 + $0xa0] sm:$0xff] %v1169
                %v1171 = vld [vmem:[%s1143 + $0x68] sm:$0xff]
                %1172 = vst [vmem:[%s1144 + $0xa8] sm:$0xff] %v1171
                %v1173 = vld [vmem:[%s1143 + $0x70] sm:$0xff]
                %1174 = vst [vmem:[%s1144 + $0xb0] sm:$0xff] %v1173
                %v1175 = vld [vmem:[%s1143 + $0x78] sm:$0xff]
                %1176 = vst [vmem:[%s1144 + $0xb8] sm:$0xff] %v1175
              $region99: #{forward.18} parent=93 // loop_footer
                %s1142 = sadd.s32 1, %s1138
              $region100: #{forward.18} parent=93 // loop_footer_branch
                %1137 = sbr.rel target = $region96
              $region101: #{forward.18} parent=93 // loop_exit
                _
            $region94: #{forward.18} parent=89 // pred_fallthru
              _
            // Predicated region
            $region102: #{forward.18} parent=89 // pred_check
              _
            $region103: #{forward.18} parent=89 // pred_check_branch
              %1178 = sbr.rel target = $region105
            $region104: #{forward.18} parent=89 // pred_region
              _
            $region105: #{forward.18} parent=89 // pred_fallthru
              _
          $region90: #{forward.18} parent=85 // pred_fallthru
            _
          %1179 = vnop
        $region86: #{forward.18} parent=73 // pred_fallthru
          _
      $region74: #{forward.18} parent=5 // pred_fallthru
        _
      %p1180 = scmp.le.s32.totalorder 2, %s10
      // Predicated region
      $region106: #{forward.18} parent=5 // pred_check
        %p1181 = pneg %p1180
      $region107: #{forward.18} parent=5 // pred_check_branch
        %1183 = sbr.rel (%p1181) target = $region109
      $region108: #{forward.18} parent=5 // pred_region
        %s1184 = ssub.s32 %s10, 2
        // Predicated region
        $region110: #{forward.18} parent=108 // pred_check
          %p1185 = pneg %p133
        $region111: #{forward.18} parent=108 // pred_check_branch
          %1187 = sbr.rel (%p1185) target = $region113
        $region112: #{forward.18} parent=108 // pred_region
          %s1188 = sand.u32 %s118, 1
          %s1189 = sand.u32 %s118, 1
          %s1190 = smul.addr %s1189, 128
          %s1191 = scalar_lea.vmem [#allocation4], %s1190
        $region113: #{forward.18} parent=108 // pred_fallthru
          _
      $region109: #{forward.18} parent=5 // pred_fallthru
        _
    $region6: #{forward.18} parent=1 // loop_footer
      %s14 = sadd.s32 1, %s10
    $region7: #{forward.18} parent=1 // loop_footer_branch
      %9 = sbr.rel target = $region3
    $region8: #{forward.18} parent=1 // loop_exit
      _

// kernel: forward.21
$region0: #{forward.21}
  #allocation0 [shape = 'u32[]', space=smem, size = 0x4, offset = 0x4, fixed_abs, tag = 'smem constant byte address 0x4 - core index']
  #allocation1 [shape = 'u32[144,128]{1,0:T(1,128)}', space=vmem, size = 0x12000, scoped, tag = 'internal scratch']
  %s0 = inlined_call_operand.vmem [shape: bf16[32,144], index: 0, kind: input, shape index: {}]
  %s1 = inlined_call_operand.vmem [shape: bf16[144,512], index: 1, kind: input, shape index: {}]
  %s2 = inlined_call_operand.vmem [shape: f32[32,1], index: 2, kind: input, shape index: {}]
  %s3 = inlined_call_operand.vmem [shape: f32[32,512], index: 3, kind: output, shape index: {}]
  %s4 = sld [smem:[#allocation0]]
  $region22: #{forward.21} parent=0
    _
  %s6 = ssub.s32 1, %s4
  %s7 = scalar_select 0, %s6, %s4
  // Predicated region
  $region2: #{forward.21} parent=0 // pred_check
    _
  $region3: #{forward.21} parent=0 // pred_check_branch
    %9 = sbr.rel (0) target = $region5
  $region4: #{forward.21} parent=0 // pred_region
    _
  $region5: #{forward.21} parent=0 // pred_fallthru
    _
  // Predicated region
  $region6: #{forward.21} parent=0 // pred_check
    _
  $region7: #{forward.21} parent=0 // pred_check_branch
    %11 = sbr.rel (0) target = $region9
  $region8: #{forward.21} parent=0 // pred_region
    _
  $region9: #{forward.21} parent=0 // pred_fallthru
    _
  // Predicated region
  $region10: #{forward.21} parent=0 // pred_check
    _
  $region11: #{forward.21} parent=0 // pred_check_branch
    %13 = sbr.rel (0) target = $region13
  $region12: #{forward.21} parent=0 // pred_region
    _
  $region13: #{forward.21} parent=0 // pred_fallthru
    _
  %v15 = vld [vmem:[%s0] sm:$0xff]
  %v16 = vld [vmem:[%s0 + $0x8] sm:$0xff]
  %v17 = vld [vmem:[%s0 + $0x10] sm:$0xff]
  %v18 = vld [vmem:[%s0 + $0x18] sm:$0xff]
  %v19 = vld [vmem:[%s1] sm:$0xff]
  %v20 = vld [vmem:[%s1 + $0x8] sm:$0xff]
  %v21 = vld [vmem:[%s1 + $0x10] sm:$0xff]
  %v22 = vld [vmem:[%s1 + $0x18] sm:$0xff]
  %v23 = vld [vmem:[%s1 + $0x20] sm:$0xff]
  %v24 = vld [vmem:[%s1 + $0x28] sm:$0xff]
  %v25 = vld [vmem:[%s1 + $0x30] sm:$0xff]
  %v26 = vld [vmem:[%s1 + $0x38] sm:$0xff]
  %v27 = vld [vmem:[%s1 + $0x40] sm:$0xff]
  %v28 = vld [vmem:[%s1 + $0x48] sm:$0xff]
  %v29 = vld [vmem:[%s1 + $0x50] sm:$0xff]
  %v30 = vld [vmem:[%s1 + $0x58] sm:$0xff]
  %v31 = vld [vmem:[%s1 + $0x60] sm:$0xff]
  %v32 = vld [vmem:[%s1 + $0x68] sm:$0xff]
  %v33 = vld [vmem:[%s1 + $0x70] sm:$0xff]
  %v34 = vld [vmem:[%s1 + $0x78] sm:$0xff]
  %v35 = vld [vmem:[%s1 + $0x80] sm:$0xff]
  %v36 = vld [vmem:[%s1 + $0x88] sm:$0xff]
  %v37 = vld [vmem:[%s1 + $0x90] sm:$0xff]
  %v38 = vld [vmem:[%s1 + $0x98] sm:$0xff]
  %v39 = vld [vmem:[%s1 + $0xa0] sm:$0xff]
  %v40 = vld [vmem:[%s1 + $0xa8] sm:$0xff]
  %v41 = vld [vmem:[%s1 + $0xb0] sm:$0xff]
  %v42 = vld [vmem:[%s1 + $0xb8] sm:$0xff]
  %v43 = vld [vmem:[%s1 + $0xc0] sm:$0xff]
  %v44 = vld [vmem:[%s1 + $0xc8] sm:$0xff]
  %v45 = vld [vmem:[%s1 + $0xd0] sm:$0xff]
  %v46 = vld [vmem:[%s1 + $0xd8] sm:$0xff]
  %v47 = vld [vmem:[%s1 + $0xe0] sm:$0xff]
  %v48 = vld [vmem:[%s1 + $0xe8] sm:$0xff]
  %v49 = vld [vmem:[%s1 + $0xf0] sm:$0xff]
  %v50 = vld [vmem:[%s1 + $0xf8] sm:$0xff]
  %v51 = vld [vmem:[%s1 + $0x100] sm:$0xff]
  %v52 = vld [vmem:[%s1 + $0x108] sm:$0xff]
  %v53 = vld [vmem:[%s1 + $0x110] sm:$0xff]
  %v54 = vld [vmem:[%s1 + $0x118] sm:$0xff]
  %v55 = vld [vmem:[%s2] sm:$0xff]
  %v56 = vld [vmem:[%s2 + $0x8] sm:$0xff]
  %v57 = vld [vmem:[%s2 + $0x10] sm:$0xff]
  %v58 = vld [vmem:[%s2 + $0x18] sm:$0xff]
  %60 = vset.pattern.permute.xlu0 0
  %61 = vperm.xlu0 %60, %v55
  %v62 = vpop.permute.xlu0 %61
  %65 = vset.pattern.permute.xlu0 0
  %66 = vperm.xlu0 %65, %v56
  %v67 = vpop.permute.xlu0 %66
  %70 = vset.pattern.permute.xlu0 0
  %71 = vperm.xlu0 %70, %v57
  %v72 = vpop.permute.xlu0 %71
  %75 = vset.pattern.permute.xlu0 0
  %76 = vperm.xlu0 %75, %v58
  %v77 = vpop.permute.xlu0 %76
  %v83 = vunpack.c.l.b16 %v15
  %v84 = vunpack.c.h.b16 %v15
  %v85 = vunpack.c.l.b16 %v16
  %v86 = vunpack.c.h.b16 %v16
  %v87 = vunpack.c.l.b16 %v17
  %v88 = vunpack.c.h.b16 %v17
  %v89 = vunpack.c.l.b16 %v18
  %v90 = vunpack.c.h.b16 %v18
  %v91 = vpack.c.b16 %v85, %v83
  %v92 = vpack.c.b16 %v86, %v84
  %v93 = vpack.c.b16 %v89, %v87
  %v94 = vpack.c.b16 %v90, %v88
  %v133 = vunpack.c.l.b16 %v19
  %v134 = vunpack.c.h.b16 %v19
  %v135 = vunpack.c.l.b16 %v20
  %v136 = vunpack.c.h.b16 %v20
  %v137 = vunpack.c.l.b16 %v21
  %v138 = vunpack.c.h.b16 %v21
  %v139 = vunpack.c.l.b16 %v22
  %v140 = vunpack.c.h.b16 %v22
  %v141 = vunpack.c.l.b16 %v23
  %v142 = vunpack.c.h.b16 %v23
  %v143 = vunpack.c.l.b16 %v24
  %v144 = vunpack.c.h.b16 %v24
  %v145 = vunpack.c.l.b16 %v25
  %v146 = vunpack.c.h.b16 %v25
  %v147 = vunpack.c.l.b16 %v26
  %v148 = vunpack.c.h.b16 %v26
  %v149 = vunpack.c.l.b16 %v27
  %v150 = vunpack.c.h.b16 %v27
  %v151 = vunpack.c.l.b16 %v28
  %v152 = vunpack.c.h.b16 %v28
  %v153 = vunpack.c.l.b16 %v29
  %v154 = vunpack.c.h.b16 %v29
  %v155 = vunpack.c.l.b16 %v30
  %v156 = vunpack.c.h.b16 %v30
  %v157 = vunpack.c.l.b16 %v31
  %v158 = vunpack.c.h.b16 %v31
  %v159 = vunpack.c.l.b16 %v32
  %v160 = vunpack.c.h.b16 %v32
  %v161 = vunpack.c.l.b16 %v33
  %v162 = vunpack.c.h.b16 %v33
  %v163 = vunpack.c.l.b16 %v34
  %v164 = vunpack.c.h.b16 %v34
  %v165 = vunpack.c.l.b16 %v35
  %v166 = vunpack.c.h.b16 %v35
  %v167 = vunpack.c.l.b16 %v36
  %v168 = vunpack.c.h.b16 %v36
  %v169 = vunpack.c.l.b16 %v37
  %v170 = vunpack.c.h.b16 %v37
  %v171 = vunpack.c.l.b16 %v38
  %v172 = vunpack.c.h.b16 %v38
  %v173 = vunpack.c.l.b16 %v39
  %v174 = vunpack.c.h.b16 %v39
  %v175 = vunpack.c.l.b16 %v40
  %v176 = vunpack.c.h.b16 %v40
  %v177 = vunpack.c.l.b16 %v41
  %v178 = vunpack.c.h.b16 %v41
  %v179 = vunpack.c.l.b16 %v42
  %v180 = vunpack.c.h.b16 %v42
  %v181 = vunpack.c.l.b16 %v43
  %v182 = vunpack.c.h.b16 %v43
  %v183 = vunpack.c.l.b16 %v44
  %v184 = vunpack.c.h.b16 %v44
  %v185 = vunpack.c.l.b16 %v45
  %v186 = vunpack.c.h.b16 %v45
  %v187 = vunpack.c.l.b16 %v46
  %v188 = vunpack.c.h.b16 %v46
  %v189 = vunpack.c.l.b16 %v47
  %v190 = vunpack.c.h.b16 %v47
  %v191 = vunpack.c.l.b16 %v48
  %v192 = vunpack.c.h.b16 %v48
  %v193 = vunpack.c.l.b16 %v49
  %v194 = vunpack.c.h.b16 %v49
  %v195 = vunpack.c.l.b16 %v50
  %v196 = vunpack.c.h.b16 %v50
  %v197 = vunpack.c.l.b16 %v51
  %v198 = vunpack.c.h.b16 %v51
  %v199 = vunpack.c.l.b16 %v52
  %v200 = vunpack.c.h.b16 %v52
  %v201 = vunpack.c.l.b16 %v53
  %v202 = vunpack.c.h.b16 %v53
  %v203 = vunpack.c.l.b16 %v54
  %v204 = vunpack.c.h.b16 %v54
  %v205 = vpack.c.b16 %v137, %v133
  %v206 = vpack.c.b16 %v138, %v134
  %v207 = vpack.c.b16 %v139, %v135
  %v208 = vpack.c.b16 %v140, %v136
  %v209 = vpack.c.b16 %v145, %v141
  %v210 = vpack.c.b16 %v146, %v142
  %v211 = vpack.c.b16 %v147, %v143
  %v212 = vpack.c.b16 %v148, %v144
  %v213 = vpack.c.b16 %v153, %v149
  %v214 = vpack.c.b16 %v154, %v150
  %v215 = vpack.c.b16 %v155, %v151
  %v216 = vpack.c.b16 %v156, %v152
  %v217 = vpack.c.b16 %v161, %v157
  %v218 = vpack.c.b16 %v162, %v158
  %v219 = vpack.c.b16 %v163, %v159
  %v220 = vpack.c.b16 %v164, %v160
  %v221 = vpack.c.b16 %v169, %v165
  %v222 = vpack.c.b16 %v170, %v166
  %v223 = vpack.c.b16 %v171, %v167
  %v224 = vpack.c.b16 %v172, %v168
  %v225 = vpack.c.b16 %v177, %v173
  %v226 = vpack.c.b16 %v178, %v174
  %v227 = vpack.c.b16 %v179, %v175
  %v228 = vpack.c.b16 %v180, %v176
  %v229 = vpack.c.b16 %v185, %v181
  %v230 = vpack.c.b16 %v186, %v182
  %v231 = vpack.c.b16 %v187, %v183
  %v232 = vpack.c.b16 %v188, %v184
  %v233 = vpack.c.b16 %v193, %v189
  %v234 = vpack.c.b16 %v194, %v190
  %v235 = vpack.c.b16 %v195, %v191
  %v236 = vpack.c.b16 %v196, %v192
  %v237 = vpack.c.b16 %v201, %v197
  %v238 = vpack.c.b16 %v202, %v198
  %v239 = vpack.c.b16 %v203, %v199
  %v240 = vpack.c.b16 %v204, %v200
  %vm277 = vcmask 130048
  %v279 = vsel %vm277, %v92, 0
  %v282 = vsel %vm277, %v94, 0
  %284 = vmatprep.subr.bf16.mxu0 %v234
  %285 = vmatpush1.bf16.msra.mxu0 %v233
  %286 = vmatprep.subr.bf16.mxu0 %v230
  %287 = vmatpush1.bf16.msra.mxu0 %v229
  %288 = vmatprep.subr.bf16.mxu0 %v226
  %289 = vmatpush1.bf16.msra.mxu0 %v225
  %290 = vmatprep.subr.bf16.mxu0 %v222
  %291 = vmatpush1.bf16.msra.mxu0 %v221
  %292 = vmatprep.subr.bf16.mxu0 %v218
  %293 = vmatpush1.bf16.msra.mxu0 %v217
  %294 = vmatprep.subr.bf16.mxu0 %v214
  %295 = vmatpush1.bf16.msra.mxu0 %v213
  %296 = vmatprep.subr.bf16.mxu0 %v210
  %297 = vmatpush1.bf16.msra.mxu0 %v209
  %298 = vmatprep.subr.bf16.mxu0 %v206
  %299 = vmatpush1.bf16.msra.mxu0 %v205
  %300 = vmatprep.subr.bf16.mxu0 0
  %301 = vmatpush2.bf16.msra.mxu0 0
  %302 = vmatprep.subr.bf16.mxu0 0
  %303 = vmatpush2.bf16.msra.mxu0 0
  %304 = vmatprep.subr.bf16.mxu0 0
  %305 = vmatpush2.bf16.msra.mxu0 0
  %306 = vmatprep.subr.bf16.mxu0 0
  %307 = vmatpush2.bf16.msra.mxu0 0
  %308 = vmatprep.subr.bf16.mxu0 0
  %309 = vmatpush2.bf16.msra.mxu0 0
  %310 = vmatprep.subr.bf16.mxu0 0
  %311 = vmatpush2.bf16.msra.mxu0 0
  %312 = vmatprep.subr.bf16.mxu0 0
  %313 = vmatpush2.bf16.msra.mxu0 0
  %314 = vmatprep.subr.bf16.mxu0 %v238
  %315 = vmatpush2.bf16.msra.mxu0 %v237
  %316 = vmatprep.mubr.bf16.mxu0 %v279
  %317 = vmatmul.mubr.bf16.gmra.mxu0 %v91
  %v318 = vpop.f32.mrf.mxu0
  %v319 = vadd.f32 %v62, %v318
  %v320 = vpop.f32.mrf.mxu0
  %v321 = vadd.f32 %v62, %v320
  %v322 = vpop.f32.mrf.mxu0
  %v323 = vadd.f32 %v67, %v322
  %v324 = vpop.f32.mrf.mxu0
  %v325 = vadd.f32 %v67, %v324
  %326 = vmatprep.mubr.bf16.mxu0 %v282
  %327 = vmatmul.mubr.bf16.gmra.mxu0 %v93
  %v328 = vpop.f32.mrf.mxu0
  %v329 = vadd.f32 %v72, %v328
  %v330 = vpop.f32.mrf.mxu0
  %v331 = vadd.f32 %v72, %v330
  %v332 = vpop.f32.mrf.mxu0
  %v333 = vadd.f32 %v77, %v332
  %v334 = vpop.f32.mrf.mxu0
  %v335 = vadd.f32 %v77, %v334
  %336 = vdwg.mxu0
  %337 = vmatprep.subr.bf16.mxu0 %v236
  %338 = vmatpush1.bf16.msra.mxu0 %v235
  %339 = vmatprep.subr.bf16.mxu0 %v232
  %340 = vmatpush1.bf16.msra.mxu0 %v231
  %341 = vmatprep.subr.bf16.mxu0 %v228
  %342 = vmatpush1.bf16.msra.mxu0 %v227
  %343 = vmatprep.subr.bf16.mxu0 %v224
  %344 = vmatpush1.bf16.msra.mxu0 %v223
  %345 = vmatprep.subr.bf16.mxu0 %v220
  %346 = vmatpush1.bf16.msra.mxu0 %v219
  %347 = vmatprep.subr.bf16.mxu0 %v216
  %348 = vmatpush1.bf16.msra.mxu0 %v215
  %349 = vmatprep.subr.bf16.mxu0 %v212
  %350 = vmatpush1.bf16.msra.mxu0 %v211
  %351 = vmatprep.subr.bf16.mxu0 %v208
  %352 = vmatpush1.bf16.msra.mxu0 %v207
  %353 = vmatprep.subr.bf16.mxu0 0
  %354 = vmatpush2.bf16.msra.mxu0 0
  %355 = vmatprep.subr.bf16.mxu0 0
  %356 = vmatpush2.bf16.msra.mxu0 0
  %357 = vmatprep.subr.bf16.mxu0 0
  %358 = vmatpush2.bf16.msra.mxu0 0
  %359 = vmatprep.subr.bf16.mxu0 0
  %360 = vmatpush2.bf16.msra.mxu0 0
  %361 = vmatprep.subr.bf16.mxu0 0
  %362 = vmatpush2.bf16.msra.mxu0 0
  %363 = vmatprep.subr.bf16.mxu0 0
  %364 = vmatpush2.bf16.msra.mxu0 0
  %365 = vmatprep.subr.bf16.mxu0 0
  %366 = vmatpush2.bf16.msra.mxu0 0
  %367 = vmatprep.subr.bf16.mxu0 %v240
  %368 = vmatpush2.bf16.msra.mxu0 %v239
  %369 = vmatprep.mubr.bf16.mxu0 %v279
  %370 = vmatmul.mubr.bf16.gmra.mxu0 %v91
  %v371 = vpop.f32.mrf.mxu0
  %v372 = vadd.f32 %v62, %v371
  %v373 = vpop.f32.mrf.mxu0
  %v374 = vadd.f32 %v62, %v373
  %v375 = vpop.f32.mrf.mxu0
  %v376 = vadd.f32 %v67, %v375
  %v377 = vpop.f32.mrf.mxu0
  %v378 = vadd.f32 %v67, %v377
  %379 = vmatprep.mubr.bf16.mxu0 %v282
  %380 = vmatmul.mubr.bf16.gmra.mxu0 %v93
  %v381 = vpop.f32.mrf.mxu0
  %v382 = vadd.f32 %v72, %v381
  %v383 = vpop.f32.mrf.mxu0
  %v384 = vadd.f32 %v72, %v383
  %v385 = vpop.f32.mrf.mxu0
  %v386 = vadd.f32 %v77, %v385
  %v387 = vpop.f32.mrf.mxu0
  %v388 = vadd.f32 %v77, %v387
  %389 = vdwg.mxu0
  %v390 = vmax.f32 %v319, 0.0
  %v391 = vmax.f32 %v321, 0.0
  %v392 = vmax.f32 %v372, 0.0
  %v393 = vmax.f32 %v374, 0.0
  %v394 = vmax.f32 %v323, 0.0
  %v395 = vmax.f32 %v325, 0.0
  %v396 = vmax.f32 %v376, 0.0
  %v397 = vmax.f32 %v378, 0.0
  %v398 = vmax.f32 %v329, 0.0
  %v399 = vmax.f32 %v331, 0.0
  %v400 = vmax.f32 %v382, 0.0
  %v401 = vmax.f32 %v384, 0.0
  %v402 = vmax.f32 %v333, 0.0
  %v403 = vmax.f32 %v335, 0.0
  %v404 = vmax.f32 %v386, 0.0
  %v405 = vmax.f32 %v388, 0.0
  %406 = vst [vmem:[%s3] sm:$0xff] %v390
  %407 = vst [vmem:[%s3 + $0x8] sm:$0xff] %v391
  %408 = vst [vmem:[%s3 + $0x10] sm:$0xff] %v392
  %409 = vst [vmem:[%s3 + $0x18] sm:$0xff] %v393
  %410 = vst [vmem:[%s3 + $0x20] sm:$0xff] %v394
  %411 = vst [vmem:[%s3 + $0x28] sm:$0xff] %v395
  %412 = vst [vmem:[%s3 + $0x30] sm:$0xff] %v396
  %413 = vst [vmem:[%s3 + $0x38] sm:$0xff] %v397
  %414 = vst [vmem:[%s3 + $0x40] sm:$0xff] %v398
  %415 = vst [vmem:[%s3 + $0x48] sm:$0xff] %v399
  %416 = vst [vmem:[%s3 + $0x50] sm:$0xff] %v400
  %417 = vst [vmem:[%s3 + $0x58] sm:$0xff] %v401
  %418 = vst [vmem:[%s3 + $0x60] sm:$0xff] %v402
  %419 = vst [vmem:[%s3 + $0x68] sm:$0xff] %v403
  %420 = vst [vmem:[%s3 + $0x70] sm:$0xff] %v404
  %421 = vst [vmem:[%s3 + $0x78] sm:$0xff] %v405
  // Predicated region
  $region14: #{forward.21} parent=0 // pred_check
    _
  $region15: #{forward.21} parent=0 // pred_check_branch
    %423 = sbr.rel (0) target = $region17
  $region16: #{forward.21} parent=0 // pred_region
    _
  $region17: #{forward.21} parent=0 // pred_fallthru
    _
  // Predicated region
  $region18: #{forward.21} parent=0 // pred_check
    _
  $region19: #{forward.21} parent=0 // pred_check_branch
    %425 = sbr.rel (0) target = $region21
  $region20: #{forward.21} parent=0 // pred_region
    _
  $region21: #{forward.21} parent=0 // pred_fallthru
    _

// kernel: forward.22
$region0: #{forward.22}
  #allocation0 [shape = 'u32[]', space=smem, size = 0x4, offset = 0x4, fixed_abs, tag = 'smem constant byte address 0x4 - core index']
  #allocation1 [shape = 'u32[144,128]{1,0:T(1,128)}', space=vmem, size = 0x12000, scoped, tag = 'internal scratch']
  %s0 = inlined_call_operand.vmem [shape: bf16[32,16], index: 0, kind: input, shape index: {}]
  %s1 = inlined_call_operand.vmem [shape: bf16[16,512], index: 1, kind: input, shape index: {}]
  %s2 = inlined_call_operand.vmem [shape: f32[32,1], index: 2, kind: input, shape index: {}]
  %s3 = inlined_call_operand.vmem [shape: f32[32,512], index: 3, kind: output, shape index: {}]
  %s4 = sld [smem:[#allocation0]]
  $region22: #{forward.22} parent=0
    _
  %s6 = ssub.s32 1, %s4
  %s7 = scalar_select 0, %s6, %s4
  // Predicated region
  $region2: #{forward.22} parent=0 // pred_check
    _
  $region3: #{forward.22} parent=0 // pred_check_branch
    %9 = sbr.rel (0) target = $region5
  $region4: #{forward.22} parent=0 // pred_region
    _
  $region5: #{forward.22} parent=0 // pred_fallthru
    _
  // Predicated region
  $region6: #{forward.22} parent=0 // pred_check
    _
  $region7: #{forward.22} parent=0 // pred_check_branch
    %11 = sbr.rel (0) target = $region9
  $region8: #{forward.22} parent=0 // pred_region
    _
  $region9: #{forward.22} parent=0 // pred_fallthru
    _
  // Predicated region
  $region10: #{forward.22} parent=0 // pred_check
    _
  $region11: #{forward.22} parent=0 // pred_check_branch
    %13 = sbr.rel (0) target = $region13
  $region12: #{forward.22} parent=0 // pred_region
    _
  $region13: #{forward.22} parent=0 // pred_fallthru
    _
  %v15 = vld [vmem:[%s0] sm:$0xf]
  %v16 = vld [vmem:[%s0 + $0x4] sm:$0xf]
  %v17 = vld [vmem:[%s0 + $0x8] sm:$0xf]
  %v18 = vld [vmem:[%s0 + $0xc] sm:$0xf]
  %v19 = vld [vmem:[%s1] sm:$0xff]
  %v20 = vld [vmem:[%s1 + $0x8] sm:$0xff]
  %v21 = vld [vmem:[%s1 + $0x10] sm:$0xff]
  %v22 = vld [vmem:[%s1 + $0x18] sm:$0xff]
  %v23 = vld [vmem:[%s2] sm:$0xff]
  %v24 = vld [vmem:[%s2 + $0x8] sm:$0xff]
  %v25 = vld [vmem:[%s2 + $0x10] sm:$0xff]
  %v26 = vld [vmem:[%s2 + $0x18] sm:$0xff]
  %28 = vset.pattern.permute.xlu0 0
  %29 = vperm.xlu0 %28, %v23
  %v30 = vpop.permute.xlu0 %29
  %33 = vset.pattern.permute.xlu0 0
  %34 = vperm.xlu0 %33, %v24
  %v35 = vpop.permute.xlu0 %34
  %38 = vset.pattern.permute.xlu0 0
  %39 = vperm.xlu0 %38, %v25
  %v40 = vpop.permute.xlu0 %39
  %43 = vset.pattern.permute.xlu0 0
  %44 = vperm.xlu0 %43, %v26
  %v45 = vpop.permute.xlu0 %44
  %v51 = vunpack.c.l.b16 %v15
  %v52 = vunpack.c.l.b16 %v16
  %v53 = vunpack.c.l.b16 %v17
  %v54 = vunpack.c.l.b16 %v18
  %v55 = vpack.c.b16 %v52, %v51
  %v56 = vpack.c.b16 %v54, %v53
  %v61 = vunpack.c.l.b16 %v19
  %v62 = vunpack.c.h.b16 %v19
  %v63 = vunpack.c.l.b16 %v20
  %v64 = vunpack.c.h.b16 %v20
  %v65 = vunpack.c.l.b16 %v21
  %v66 = vunpack.c.h.b16 %v21
  %v67 = vunpack.c.l.b16 %v22
  %v68 = vunpack.c.h.b16 %v22
  %v69 = vpack.c.b16 %v65, %v61
  %v70 = vpack.c.b16 %v66, %v62
  %v71 = vpack.c.b16 %v67, %v63
  %v72 = vpack.c.b16 %v68, %v64
  %vm77 = vcmask 130048
  %v79 = vsel %vm77, %v55, 0
  %v82 = vsel %vm77, %v56, 0
  %84 = vmatprep.subr.bf16.mxu0 0
  %85 = vmatpush1.bf16.msra.mxu0 0
  %86 = vmatprep.subr.bf16.mxu0 0
  %87 = vmatpush1.bf16.msra.mxu0 0
  %88 = vmatprep.subr.bf16.mxu0 0
  %89 = vmatpush1.bf16.msra.mxu0 0
  %90 = vmatprep.subr.bf16.mxu0 0
  %91 = vmatpush1.bf16.msra.mxu0 0
  %92 = vmatprep.subr.bf16.mxu0 0
  %93 = vmatpush1.bf16.msra.mxu0 0
  %94 = vmatprep.subr.bf16.mxu0 0
  %95 = vmatpush1.bf16.msra.mxu0 0
  %96 = vmatprep.subr.bf16.mxu0 0
  %97 = vmatpush1.bf16.msra.mxu0 0
  %98 = vmatprep.subr.bf16.mxu0 %v70
  %99 = vmatpush1.bf16.msra.mxu0 %v69
  %100 = vmatprep.subr.bf16.mxu0 0
  %101 = vmatpush2.bf16.msra.mxu0 0
  %102 = vmatprep.subr.bf16.mxu0 0
  %103 = vmatpush2.bf16.msra.mxu0 0
  %104 = vmatprep.subr.bf16.mxu0 0
  %105 = vmatpush2.bf16.msra.mxu0 0
  %106 = vmatprep.subr.bf16.mxu0 0
  %107 = vmatpush2.bf16.msra.mxu0 0
  %108 = vmatprep.subr.bf16.mxu0 0
  %109 = vmatpush2.bf16.msra.mxu0 0
  %110 = vmatprep.subr.bf16.mxu0 0
  %111 = vmatpush2.bf16.msra.mxu0 0
  %112 = vmatprep.subr.bf16.mxu0 0
  %113 = vmatpush2.bf16.msra.mxu0 0
  %114 = vmatprep.subr.bf16.mxu0 0
  %115 = vmatpush2.bf16.msra.mxu0 0
  %116 = vmatprep.mubr.bf16.mxu0 0
  %117 = vmatmul.mubr.bf16.gmra.mxu0 %v79
  %v118 = vpop.f32.mrf.mxu0
  %v119 = vadd.f32 %v30, %v118
  %v120 = vpop.f32.mrf.mxu0
  %v121 = vadd.f32 %v30, %v120
  %v122 = vpop.f32.mrf.mxu0
  %v123 = vadd.f32 %v35, %v122
  %v124 = vpop.f32.mrf.mxu0
  %v125 = vadd.f32 %v35, %v124
  %126 = vmatprep.mubr.bf16.mxu0 0
  %127 = vmatmul.mubr.bf16.gmra.mxu0 %v82
  %v128 = vpop.f32.mrf.mxu0
  %v129 = vadd.f32 %v40, %v128
  %v130 = vpop.f32.mrf.mxu0
  %v131 = vadd.f32 %v40, %v130
  %v132 = vpop.f32.mrf.mxu0
  %v133 = vadd.f32 %v45, %v132
  %v134 = vpop.f32.mrf.mxu0
  %v135 = vadd.f32 %v45, %v134
  %136 = vdwg.mxu0
  %137 = vmatprep.subr.bf16.mxu0 0
  %138 = vmatpush1.bf16.msra.mxu0 0
  %139 = vmatprep.subr.bf16.mxu0 0
  %140 = vmatpush1.bf16.msra.mxu0 0
  %141 = vmatprep.subr.bf16.mxu0 0
  %142 = vmatpush1.bf16.msra.mxu0 0
  %143 = vmatprep.subr.bf16.mxu0 0
  %144 = vmatpush1.bf16.msra.mxu0 0
  %145 = vmatprep.subr.bf16.mxu0 0
  %146 = vmatpush1.bf16.msra.mxu0 0
  %147 = vmatprep.subr.bf16.mxu0 0
  %148 = vmatpush1.bf16.msra.mxu0 0
  %149 = vmatprep.subr.bf16.mxu0 0
  %150 = vmatpush1.bf16.msra.mxu0 0
  %151 = vmatprep.subr.bf16.mxu0 %v72
  %152 = vmatpush1.bf16.msra.mxu0 %v71
  %153 = vmatprep.subr.bf16.mxu0 0
  %154 = vmatpush2.bf16.msra.mxu0 0
  %155 = vmatprep.subr.bf16.mxu0 0
  %156 = vmatpush2.bf16.msra.mxu0 0
  %157 = vmatprep.subr.bf16.mxu0 0
  %158 = vmatpush2.bf16.msra.mxu0 0
  %159 = vmatprep.subr.bf16.mxu0 0
  %160 = vmatpush2.bf16.msra.mxu0 0
  %161 = vmatprep.subr.bf16.mxu0 0
  %162 = vmatpush2.bf16.msra.mxu0 0
  %163 = vmatprep.subr.bf16.mxu0 0
  %164 = vmatpush2.bf16.msra.mxu0 0
  %165 = vmatprep.subr.bf16.mxu0 0
  %166 = vmatpush2.bf16.msra.mxu0 0
  %167 = vmatprep.subr.bf16.mxu0 0
  %168 = vmatpush2.bf16.msra.mxu0 0
  %169 = vmatprep.mubr.bf16.mxu0 0
  %170 = vmatmul.mubr.bf16.gmra.mxu0 %v79
  %v171 = vpop.f32.mrf.mxu0
  %v172 = vadd.f32 %v30, %v171
  %v173 = vpop.f32.mrf.mxu0
  %v174 = vadd.f32 %v30, %v173
  %v175 = vpop.f32.mrf.mxu0
  %v176 = vadd.f32 %v35, %v175
  %v177 = vpop.f32.mrf.mxu0
  %v178 = vadd.f32 %v35, %v177
  %179 = vmatprep.mubr.bf16.mxu0 0
  %180 = vmatmul.mubr.bf16.gmra.mxu0 %v82
  %v181 = vpop.f32.mrf.mxu0
  %v182 = vadd.f32 %v40, %v181
  %v183 = vpop.f32.mrf.mxu0
  %v184 = vadd.f32 %v40, %v183
  %v185 = vpop.f32.mrf.mxu0
  %v186 = vadd.f32 %v45, %v185
  %v187 = vpop.f32.mrf.mxu0
  %v188 = vadd.f32 %v45, %v187
  %189 = vdwg.mxu0
  %190 = vst [vmem:[%s3] sm:$0xff] %v119
  %191 = vst [vmem:[%s3 + $0x8] sm:$0xff] %v121
  %192 = vst [vmem:[%s3 + $0x10] sm:$0xff] %v172
  %193 = vst [vmem:[%s3 + $0x18] sm:$0xff] %v174
  %194 = vst [vmem:[%s3 + $0x20] sm:$0xff] %v123
  %195 = vst [vmem:[%s3 + $0x28] sm:$0xff] %v125
  %196 = vst [vmem:[%s3 + $0x30] sm:$0xff] %v176
  %197 = vst [vmem:[%s3 + $0x38] sm:$0xff] %v178
  %198 = vst [vmem:[%s3 + $0x40] sm:$0xff] %v129
  %199 = vst [vmem:[%s3 + $0x48] sm:$0xff] %v131
  %200 = vst [vmem:[%s3 + $0x50] sm:$0xff] %v182
  %201 = vst [vmem:[%s3 + $0x58] sm:$0xff] %v184
  %202 = vst [vmem:[%s3 + $0x60] sm:$0xff] %v133
  %203 = vst [vmem:[%s3 + $0x68] sm:$0xff] %v135
  %204 = vst [vmem:[%s3 + $0x70] sm:$0xff] %v186
  %205 = vst [vmem:[%s3 + $0x78] sm:$0xff] %v188
  // Predicated region
  $region14: #{forward.22} parent=0 // pred_check
    _
  $region15: #{forward.22} parent=0 // pred_check_branch
    %207 = sbr.rel (0) target = $region17
  $region16: #{forward.22} parent=0 // pred_region
    _
  $region17: #{forward.22} parent=0 // pred_fallthru
    _
  // Predicated region
  $region18: #{forward.22} parent=0 // pred_check
    _
  $region19: #{forward.22} parent=0 // pred_check_branch
    %209 = sbr.rel (0) target = $region21
  $region20: #{forward.22} parent=0 // pred_region
    _
  $region21: #{forward.22} parent=0 // pred_fallthru
    _

// kernel: forward.23
$region0: #{forward.23}
  #allocation0 [shape = 'u32[]', space=smem, size = 0x4, offset = 0x4, fixed_abs, tag = 'smem constant byte address 0x4 - core index']
  #allocation1 [shape = 'u32[144,128]{1,0:T(1,128)}', space=vmem, size = 0x12000, scoped, tag = 'internal scratch']
  %s0 = inlined_call_operand.vmem [shape: bf16[32,288], index: 0, kind: input, shape index: {}]
  %s1 = inlined_call_operand.vmem [shape: bf16[288,512], index: 1, kind: input, shape index: {}]
  %s2 = inlined_call_operand.vmem [shape: f32[32,1], index: 2, kind: input, shape index: {}]
  %s3 = inlined_call_operand.vmem [shape: f32[32,512], index: 3, kind: input, shape index: {}]
  %s4 = inlined_call_operand.vmem [shape: f32[32,512], index: 4, kind: output, shape index: {}]
  %s5 = sld [smem:[#allocation0]]
  $region26: #{forward.23} parent=0
    _
  %s7 = ssub.s32 1, %s5
  %s8 = scalar_select 0, %s7, %s5
  // Predicated region
  $region2: #{forward.23} parent=0 // pred_check
    _
  $region3: #{forward.23} parent=0 // pred_check_branch
    %10 = sbr.rel (0) target = $region5
  $region4: #{forward.23} parent=0 // pred_region
    _
  $region5: #{forward.23} parent=0 // pred_fallthru
    _
  // Predicated region
  $region6: #{forward.23} parent=0 // pred_check
    _
  $region7: #{forward.23} parent=0 // pred_check_branch
    %12 = sbr.rel (0) target = $region9
  $region8: #{forward.23} parent=0 // pred_region
    _
  $region9: #{forward.23} parent=0 // pred_fallthru
    _
  // Predicated region
  $region10: #{forward.23} parent=0 // pred_check
    _
  $region11: #{forward.23} parent=0 // pred_check_branch
    %14 = sbr.rel (0) target = $region13
  $region12: #{forward.23} parent=0 // pred_region
    _
  $region13: #{forward.23} parent=0 // pred_fallthru
    _
  // Predicated region
  $region14: #{forward.23} parent=0 // pred_check
    _
  $region15: #{forward.23} parent=0 // pred_check_branch
    %16 = sbr.rel (0) target = $region17
  $region16: #{forward.23} parent=0 // pred_region
    _
  $region17: #{forward.23} parent=0 // pred_fallthru
    _
  %v18 = vld [vmem:[%s0] sm:$0xff]
  %v19 = vld [vmem:[%s0 + $0x8] sm:$0xf]
  %v20 = vld [vmem:[%s0 + $0xc] sm:$0xff]
  %v21 = vld [vmem:[%s0 + $0x14] sm:$0xf]
  %v22 = vld [vmem:[%s0 + $0x18] sm:$0xff]
  %v23 = vld [vmem:[%s0 + $0x20] sm:$0xf]
  %v24 = vld [vmem:[%s0 + $0x24] sm:$0xff]
  %v25 = vld [vmem:[%s0 + $0x2c] sm:$0xf]
  %v26 = vld [vmem:[%s1] sm:$0xff]
  %v27 = vld [vmem:[%s1 + $0x8] sm:$0xff]
  %v28 = vld [vmem:[%s1 + $0x10] sm:$0xff]
  %v29 = vld [vmem:[%s1 + $0x18] sm:$0xff]
  %v30 = vld [vmem:[%s1 + $0x20] sm:$0xff]
  %v31 = vld [vmem:[%s1 + $0x28] sm:$0xff]
  %v32 = vld [vmem:[%s1 + $0x30] sm:$0xff]
  %v33 = vld [vmem:[%s1 + $0x38] sm:$0xff]
  %v34 = vld [vmem:[%s1 + $0x40] sm:$0xff]
  %v35 = vld [vmem:[%s1 + $0x48] sm:$0xff]
  %v36 = vld [vmem:[%s1 + $0x50] sm:$0xff]
  %v37 = vld [vmem:[%s1 + $0x58] sm:$0xff]
  %v38 = vld [vmem:[%s1 + $0x60] sm:$0xff]
  %v39 = vld [vmem:[%s1 + $0x68] sm:$0xff]
  %v40 = vld [vmem:[%s1 + $0x70] sm:$0xff]
  %v41 = vld [vmem:[%s1 + $0x78] sm:$0xff]
  %v42 = vld [vmem:[%s1 + $0x80] sm:$0xff]
  %v43 = vld [vmem:[%s1 + $0x88] sm:$0xff]
  %v44 = vld [vmem:[%s1 + $0x90] sm:$0xff]
  %v45 = vld [vmem:[%s1 + $0x98] sm:$0xff]
  %v46 = vld [vmem:[%s1 + $0xa0] sm:$0xff]
  %v47 = vld [vmem:[%s1 + $0xa8] sm:$0xff]
  %v48 = vld [vmem:[%s1 + $0xb0] sm:$0xff]
  %v49 = vld [vmem:[%s1 + $0xb8] sm:$0xff]
  %v50 = vld [vmem:[%s1 + $0xc0] sm:$0xff]
  %v51 = vld [vmem:[%s1 + $0xc8] sm:$0xff]
  %v52 = vld [vmem:[%s1 + $0xd0] sm:$0xff]
  %v53 = vld [vmem:[%s1 + $0xd8] sm:$0xff]
  %v54 = vld [vmem:[%s1 + $0xe0] sm:$0xff]
  %v55 = vld [vmem:[%s1 + $0xe8] sm:$0xff]
  %v56 = vld [vmem:[%s1 + $0xf0] sm:$0xff]
  %v57 = vld [vmem:[%s1 + $0xf8] sm:$0xff]
  %v58 = vld [vmem:[%s1 + $0x100] sm:$0xff]
  %v59 = vld [vmem:[%s1 + $0x108] sm:$0xff]
  %v60 = vld [vmem:[%s1 + $0x110] sm:$0xff]
  %v61 = vld [vmem:[%s1 + $0x118] sm:$0xff]
  %v62 = vld [vmem:[%s1 + $0x120] sm:$0xff]
  %v63 = vld [vmem:[%s1 + $0x128] sm:$0xff]
  %v64 = vld [vmem:[%s1 + $0x130] sm:$0xff]
  %v65 = vld [vmem:[%s1 + $0x138] sm:$0xff]
  %v66 = vld [vmem:[%s1 + $0x140] sm:$0xff]
  %v67 = vld [vmem:[%s1 + $0x148] sm:$0xff]
  %v68 = vld [vmem:[%s1 + $0x150] sm:$0xff]
  %v69 = vld [vmem:[%s1 + $0x158] sm:$0xff]
  %v70 = vld [vmem:[%s1 + $0x160] sm:$0xff]
  %v71 = vld [vmem:[%s1 + $0x168] sm:$0xff]
  %v72 = vld [vmem:[%s1 + $0x170] sm:$0xff]
  %v73 = vld [vmem:[%s1 + $0x178] sm:$0xff]
  %v74 = vld [vmem:[%s1 + $0x180] sm:$0xff]
  %v75 = vld [vmem:[%s1 + $0x188] sm:$0xff]
  %v76 = vld [vmem:[%s1 + $0x190] sm:$0xff]
  %v77 = vld [vmem:[%s1 + $0x198] sm:$0xff]
  %v78 = vld [vmem:[%s1 + $0x1a0] sm:$0xff]
  %v79 = vld [vmem:[%s1 + $0x1a8] sm:$0xff]
  %v80 = vld [vmem:[%s1 + $0x1b0] sm:$0xff]
  %v81 = vld [vmem:[%s1 + $0x1b8] sm:$0xff]
  %v82 = vld [vmem:[%s1 + $0x1c0] sm:$0xff]
  %v83 = vld [vmem:[%s1 + $0x1c8] sm:$0xff]
  %v84 = vld [vmem:[%s1 + $0x1d0] sm:$0xff]
  %v85 = vld [vmem:[%s1 + $0x1d8] sm:$0xff]
  %v86 = vld [vmem:[%s1 + $0x1e0] sm:$0xff]
  %v87 = vld [vmem:[%s1 + $0x1e8] sm:$0xff]
  %v88 = vld [vmem:[%s1 + $0x1f0] sm:$0xff]
  %v89 = vld [vmem:[%s1 + $0x1f8] sm:$0xff]
  %v90 = vld [vmem:[%s1 + $0x200] sm:$0xff]
  %v91 = vld [vmem:[%s1 + $0x208] sm:$0xff]
  %v92 = vld [vmem:[%s1 + $0x210] sm:$0xff]
  %v93 = vld [vmem:[%s1 + $0x218] sm:$0xff]
  %v94 = vld [vmem:[%s1 + $0x220] sm:$0xff]
  %v95 = vld [vmem:[%s1 + $0x228] sm:$0xff]
  %v96 = vld [vmem:[%s1 + $0x230] sm:$0xff]
  %v97 = vld [vmem:[%s1 + $0x238] sm:$0xff]
  %v98 = vld [vmem:[%s2] sm:$0xff]
  %v99 = vld [vmem:[%s2 + $0x8] sm:$0xff]
  %v100 = vld [vmem:[%s2 + $0x10] sm:$0xff]
  %v101 = vld [vmem:[%s2 + $0x18] sm:$0xff]
  %103 = vset.pattern.permute.xlu0 0
  %104 = vperm.xlu0 %103, %v98
  %v105 = vpop.permute.xlu0 %104
  %108 = vset.pattern.permute.xlu0 0
  %109 = vperm.xlu0 %108, %v99
  %v110 = vpop.permute.xlu0 %109
  %113 = vset.pattern.permute.xlu0 0
  %114 = vperm.xlu0 %113, %v100
  %v115 = vpop.permute.xlu0 %114
  %118 = vset.pattern.permute.xlu0 0
  %119 = vperm.xlu0 %118, %v101
  %v120 = vpop.permute.xlu0 %119
  %v130 = vunpack.c.l.b16 %v18
  %v131 = vunpack.c.h.b16 %v18
  %v132 = vunpack.c.l.b16 %v19
  %v133 = vunpack.c.l.b16 %v20
  %v134 = vunpack.c.h.b16 %v20
  %v135 = vunpack.c.l.b16 %v21
  %v136 = vunpack.c.l.b16 %v22
  %v137 = vunpack.c.h.b16 %v22
  %v138 = vunpack.c.l.b16 %v23
  %v139 = vunpack.c.l.b16 %v24
  %v140 = vunpack.c.h.b16 %v24
  %v141 = vunpack.c.l.b16 %v25
  %v142 = vpack.c.b16 %v133, %v130
  %v143 = vpack.c.b16 %v134, %v131
  %v144 = vpack.c.b16 %v135, %v132
  %v145 = vpack.c.b16 %v139, %v136
  %v146 = vpack.c.b16 %v140, %v137
  %v147 = vpack.c.b16 %v141, %v138
  %v224 = vunpack.c.l.b16 %v26
  %v225 = vunpack.c.h.b16 %v26
  %v226 = vunpack.c.l.b16 %v27
  %v227 = vunpack.c.h.b16 %v27
  %v228 = vunpack.c.l.b16 %v28
  %v229 = vunpack.c.h.b16 %v28
  %v230 = vunpack.c.l.b16 %v29
  %v231 = vunpack.c.h.b16 %v29
  %v232 = vunpack.c.l.b16 %v30
  %v233 = vunpack.c.h.b16 %v30
  %v234 = vunpack.c.l.b16 %v31
  %v235 = vunpack.c.h.b16 %v31
  %v236 = vunpack.c.l.b16 %v32
  %v237 = vunpack.c.h.b16 %v32
  %v238 = vunpack.c.l.b16 %v33
  %v239 = vunpack.c.h.b16 %v33
  %v240 = vunpack.c.l.b16 %v34
  %v241 = vunpack.c.h.b16 %v34
  %v242 = vunpack.c.l.b16 %v35
  %v243 = vunpack.c.h.b16 %v35
  %v244 = vunpack.c.l.b16 %v36
  %v245 = vunpack.c.h.b16 %v36
  %v246 = vunpack.c.l.b16 %v37
  %v247 = vunpack.c.h.b16 %v37
  %v248 = vunpack.c.l.b16 %v38
  %v249 = vunpack.c.h.b16 %v38
  %v250 = vunpack.c.l.b16 %v39
  %v251 = vunpack.c.h.b16 %v39
  %v252 = vunpack.c.l.b16 %v40
  %v253 = vunpack.c.h.b16 %v40
  %v254 = vunpack.c.l.b16 %v41
  %v255 = vunpack.c.h.b16 %v41
  %v256 = vunpack.c.l.b16 %v42
  %v257 = vunpack.c.h.b16 %v42
  %v258 = vunpack.c.l.b16 %v43
  %v259 = vunpack.c.h.b16 %v43
  %v260 = vunpack.c.l.b16 %v44
  %v261 = vunpack.c.h.b16 %v44
  %v262 = vunpack.c.l.b16 %v45
  %v263 = vunpack.c.h.b16 %v45
  %v264 = vunpack.c.l.b16 %v46
  %v265 = vunpack.c.h.b16 %v46
  %v266 = vunpack.c.l.b16 %v47
  %v267 = vunpack.c.h.b16 %v47
  %v268 = vunpack.c.l.b16 %v48
  %v269 = vunpack.c.h.b16 %v48
  %v270 = vunpack.c.l.b16 %v49
  %v271 = vunpack.c.h.b16 %v49
  %v272 = vunpack.c.l.b16 %v50
  %v273 = vunpack.c.h.b16 %v50
  %v274 = vunpack.c.l.b16 %v51
  %v275 = vunpack.c.h.b16 %v51
  %v276 = vunpack.c.l.b16 %v52
  %v277 = vunpack.c.h.b16 %v52
  %v278 = vunpack.c.l.b16 %v53
  %v279 = vunpack.c.h.b16 %v53
  %v280 = vunpack.c.l.b16 %v54
  %v281 = vunpack.c.h.b16 %v54
  %v282 = vunpack.c.l.b16 %v55
  %v283 = vunpack.c.h.b16 %v55
  %v284 = vunpack.c.l.b16 %v56
  %v285 = vunpack.c.h.b16 %v56
  %v286 = vunpack.c.l.b16 %v57
  %v287 = vunpack.c.h.b16 %v57
  %v288 = vunpack.c.l.b16 %v58
  %v289 = vunpack.c.h.b16 %v58
  %v290 = vunpack.c.l.b16 %v59
  %v291 = vunpack.c.h.b16 %v59
  %v292 = vunpack.c.l.b16 %v60
  %v293 = vunpack.c.h.b16 %v60
  %v294 = vunpack.c.l.b16 %v61
  %v295 = vunpack.c.h.b16 %v61
  %v296 = vunpack.c.l.b16 %v62
  %v297 = vunpack.c.h.b16 %v62
  %v298 = vunpack.c.l.b16 %v63
  %v299 = vunpack.c.h.b16 %v63
  %v300 = vunpack.c.l.b16 %v64
  %v301 = vunpack.c.h.b16 %v64
  %v302 = vunpack.c.l.b16 %v65
  %v303 = vunpack.c.h.b16 %v65
  %v304 = vunpack.c.l.b16 %v66
  %v305 = vunpack.c.h.b16 %v66
  %v306 = vunpack.c.l.b16 %v67
  %v307 = vunpack.c.h.b16 %v67
  %v308 = vunpack.c.l.b16 %v68
  %v309 = vunpack.c.h.b16 %v68
  %v310 = vunpack.c.l.b16 %v69
  %v311 = vunpack.c.h.b16 %v69
  %v312 = vunpack.c.l.b16 %v70
  %v313 = vunpack.c.h.b16 %v70
  %v314 = vunpack.c.l.b16 %v71
  %v315 = vunpack.c.h.b16 %v71
  %v316 = vunpack.c.l.b16 %v72
  %v317 = vunpack.c.h.b16 %v72
  %v318 = vunpack.c.l.b16 %v73
  %v319 = vunpack.c.h.b16 %v73
  %v320 = vunpack.c.l.b16 %v74
  %v321 = vunpack.c.h.b16 %v74
  %v322 = vunpack.c.l.b16 %v75
  %v323 = vunpack.c.h.b16 %v75
  %v324 = vunpack.c.l.b16 %v76
  %v325 = vunpack.c.h.b16 %v76
  %v326 = vunpack.c.l.b16 %v77
  %v327 = vunpack.c.h.b16 %v77
  %v328 = vunpack.c.l.b16 %v78
  %v329 = vunpack.c.h.b16 %v78
  %v330 = vunpack.c.l.b16 %v79
  %v331 = vunpack.c.h.b16 %v79
  %v332 = vunpack.c.l.b16 %v80
  %v333 = vunpack.c.h.b16 %v80
  %v334 = vunpack.c.l.b16 %v81
  %v335 = vunpack.c.h.b16 %v81
  %v336 = vunpack.c.l.b16 %v82
  %v337 = vunpack.c.h.b16 %v82
  %v338 = vunpack.c.l.b16 %v83
  %v339 = vunpack.c.h.b16 %v83
  %v340 = vunpack.c.l.b16 %v84
  %v341 = vunpack.c.h.b16 %v84
  %v342 = vunpack.c.l.b16 %v85
  %v343 = vunpack.c.h.b16 %v85
  %v344 = vunpack.c.l.b16 %v86
  %v345 = vunpack.c.h.b16 %v86
  %v346 = vunpack.c.l.b16 %v87
  %v347 = vunpack.c.h.b16 %v87
  %v348 = vunpack.c.l.b16 %v88
  %v349 = vunpack.c.h.b16 %v88
  %v350 = vunpack.c.l.b16 %v89
  %v351 = vunpack.c.h.b16 %v89
  %v352 = vunpack.c.l.b16 %v90
  %v353 = vunpack.c.h.b16 %v90
  %v354 = vunpack.c.l.b16 %v91
  %v355 = vunpack.c.h.b16 %v91
  %v356 = vunpack.c.l.b16 %v92
  %v357 = vunpack.c.h.b16 %v92
  %v358 = vunpack.c.l.b16 %v93
  %v359 = vunpack.c.h.b16 %v93
  %v360 = vunpack.c.l.b16 %v94
  %v361 = vunpack.c.h.b16 %v94
  %v362 = vunpack.c.l.b16 %v95
  %v363 = vunpack.c.h.b16 %v95
  %v364 = vunpack.c.l.b16 %v96
  %v365 = vunpack.c.h.b16 %v96
  %v366 = vunpack.c.l.b16 %v97
  %v367 = vunpack.c.h.b16 %v97
  %v368 = vpack.c.b16 %v228, %v224
  %v369 = vpack.c.b16 %v229, %v225
  %v370 = vpack.c.b16 %v230, %v226
  %v371 = vpack.c.b16 %v231, %v227
  %v372 = vpack.c.b16 %v236, %v232
  %v373 = vpack.c.b16 %v237, %v233
  %v374 = vpack.c.b16 %v238, %v234
  %v375 = vpack.c.b16 %v239, %v235
  %v376 = vpack.c.b16 %v244, %v240
  %v377 = vpack.c.b16 %v245, %v241
  %v378 = vpack.c.b16 %v246, %v242
  %v379 = vpack.c.b16 %v247, %v243
  %v380 = vpack.c.b16 %v252, %v248
  %v381 = vpack.c.b16 %v253, %v249
  %v382 = vpack.c.b16 %v254, %v250
  %v383 = vpack.c.b16 %v255, %v251
  %v384 = vpack.c.b16 %v260, %v256
  %v385 = vpack.c.b16 %v261, %v257
  %v386 = vpack.c.b16 %v262, %v258
  %v387 = vpack.c.b16 %v263, %v259
  %v388 = vpack.c.b16 %v268, %v264
  %v389 = vpack.c.b16 %v269, %v265
  %v390 = vpack.c.b16 %v270, %v266
  %v391 = vpack.c.b16 %v271, %v267
  %v392 = vpack.c.b16 %v276, %v272
  %v393 = vpack.c.b16 %v277, %v273
  %v394 = vpack.c.b16 %v278, %v274
  %v395 = vpack.c.b16 %v279, %v275
  %v396 = vpack.c.b16 %v284, %v280
  %v397 = vpack.c.b16 %v285, %v281
  %v398 = vpack.c.b16 %v286, %v282
  %v399 = vpack.c.b16 %v287, %v283
  %v400 = vpack.c.b16 %v292, %v288
  %v401 = vpack.c.b16 %v293, %v289
  %v402 = vpack.c.b16 %v294, %v290
  %v403 = vpack.c.b16 %v295, %v291
  %v404 = vpack.c.b16 %v300, %v296
  %v405 = vpack.c.b16 %v301, %v297
  %v406 = vpack.c.b16 %v302, %v298
  %v407 = vpack.c.b16 %v303, %v299
  %v408 = vpack.c.b16 %v308, %v304
  %v409 = vpack.c.b16 %v309, %v305
  %v410 = vpack.c.b16 %v310, %v306
  %v411 = vpack.c.b16 %v311, %v307
  %v412 = vpack.c.b16 %v316, %v312
  %v413 = vpack.c.b16 %v317, %v313
  %v414 = vpack.c.b16 %v318, %v314
  %v415 = vpack.c.b16 %v319, %v315
  %v416 = vpack.c.b16 %v324, %v320
  %v417 = vpack.c.b16 %v325, %v321
  %v418 = vpack.c.b16 %v326, %v322
  %v419 = vpack.c.b16 %v327, %v323
  %v420 = vpack.c.b16 %v332, %v328
  %v421 = vpack.c.b16 %v333, %v329
  %v422 = vpack.c.b16 %v334, %v330
  %v423 = vpack.c.b16 %v335, %v331
  %v424 = vpack.c.b16 %v340, %v336
  %v425 = vpack.c.b16 %v341, %v337
  %v426 = vpack.c.b16 %v342, %v338
  %v427 = vpack.c.b16 %v343, %v339
  %v428 = vpack.c.b16 %v348, %v344
  %v429 = vpack.c.b16 %v349, %v345
  %v430 = vpack.c.b16 %v350, %v346
  %v431 = vpack.c.b16 %v351, %v347
  %v432 = vpack.c.b16 %v356, %v352
  %v433 = vpack.c.b16 %v357, %v353
  %v434 = vpack.c.b16 %v358, %v354
  %v435 = vpack.c.b16 %v359, %v355
  %v436 = vpack.c.b16 %v364, %v360
  %v437 = vpack.c.b16 %v365, %v361
  %v438 = vpack.c.b16 %v366, %v362
  %v439 = vpack.c.b16 %v367, %v363
  %vm512 = vcmask 261120
  %v514 = vsel %vm512, %v144, 0
  %v517 = vsel %vm512, %v147, 0
  %519 = vmatprep.subr.bf16.mxu0 %v397
  %520 = vmatpush1.bf16.msra.mxu0 %v396
  %521 = vmatprep.subr.bf16.mxu0 %v393
  %522 = vmatpush1.bf16.msra.mxu0 %v392
  %523 = vmatprep.subr.bf16.mxu0 %v389
  %524 = vmatpush1.bf16.msra.mxu0 %v388
  %525 = vmatprep.subr.bf16.mxu0 %v385
  %526 = vmatpush1.bf16.msra.mxu0 %v384
  %527 = vmatprep.subr.bf16.mxu0 %v381
  %528 = vmatpush1.bf16.msra.mxu0 %v380
  %529 = vmatprep.subr.bf16.mxu0 %v377
  %530 = vmatpush1.bf16.msra.mxu0 %v376
  %531 = vmatprep.subr.bf16.mxu0 %v373
  %532 = vmatpush1.bf16.msra.mxu0 %v372
  %533 = vmatprep.subr.bf16.mxu0 %v369
  %534 = vmatpush1.bf16.msra.mxu0 %v368
  %535 = vmatprep.subr.bf16.mxu0 %v429
  %536 = vmatpush2.bf16.msra.mxu0 %v428
  %537 = vmatprep.subr.bf16.mxu0 %v425
  %538 = vmatpush2.bf16.msra.mxu0 %v424
  %539 = vmatprep.subr.bf16.mxu0 %v421
  %540 = vmatpush2.bf16.msra.mxu0 %v420
  %541 = vmatprep.subr.bf16.mxu0 %v417
  %542 = vmatpush2.bf16.msra.mxu0 %v416
  %543 = vmatprep.subr.bf16.mxu0 %v413
  %544 = vmatpush2.bf16.msra.mxu0 %v412
  %545 = vmatprep.subr.bf16.mxu0 %v409
  %546 = vmatpush2.bf16.msra.mxu0 %v408
  %547 = vmatprep.subr.bf16.mxu0 %v405
  %548 = vmatpush2.bf16.msra.mxu0 %v404
  %549 = vmatprep.subr.bf16.mxu0 %v401
  %550 = vmatpush2.bf16.msra.mxu0 %v400
  %551 = vmatprep.mubr.bf16.mxu0 %v143
  %552 = vmatmul.mubr.bf16.gmra.mxu0 %v142
  %v553 = vpop.f32.mrf.mxu0
  %v554 = vadd.f32 %v105, %v553
  %v555 = vpop.f32.mrf.mxu0
  %v556 = vadd.f32 %v105, %v555
  %v557 = vpop.f32.mrf.mxu0
  %v558 = vadd.f32 %v110, %v557
  %v559 = vpop.f32.mrf.mxu0
  %v560 = vadd.f32 %v110, %v559
  %561 = vmatprep.mubr.bf16.mxu0 %v146
  %562 = vmatmul.mubr.bf16.gmra.mxu0 %v145
  %v563 = vpop.f32.mrf.mxu0
  %v564 = vadd.f32 %v115, %v563
  %v565 = vpop.f32.mrf.mxu0
  %v566 = vadd.f32 %v115, %v565
  %v567 = vpop.f32.mrf.mxu0
  %v568 = vadd.f32 %v120, %v567
  %v569 = vpop.f32.mrf.mxu0
  %v570 = vadd.f32 %v120, %v569
  %571 = vdwg.mxu0
  %572 = vmatprep.subr.bf16.mxu0 0
  %573 = vmatpush1.bf16.msra.mxu0 0
  %574 = vmatprep.subr.bf16.mxu0 0
  %575 = vmatpush1.bf16.msra.mxu0 0
  %576 = vmatprep.subr.bf16.mxu0 0
  %577 = vmatpush1.bf16.msra.mxu0 0
  %578 = vmatprep.subr.bf16.mxu0 0
  %579 = vmatpush1.bf16.msra.mxu0 0
  %580 = vmatprep.subr.bf16.mxu0 0
  %581 = vmatpush1.bf16.msra.mxu0 0
  %582 = vmatprep.subr.bf16.mxu0 0
  %583 = vmatpush1.bf16.msra.mxu0 0
  %584 = vmatprep.subr.bf16.mxu0 %v437
  %585 = vmatpush1.bf16.msra.mxu0 %v436
  %586 = vmatprep.subr.bf16.mxu0 %v433
  %587 = vmatpush1.bf16.msra.mxu0 %v432
  %588 = vmatprep.subr.bf16.mxu0 0
  %589 = vmatpush2.bf16.msra.mxu0 0
  %590 = vmatprep.subr.bf16.mxu0 0
  %591 = vmatpush2.bf16.msra.mxu0 0
  %592 = vmatprep.subr.bf16.mxu0 0
  %593 = vmatpush2.bf16.msra.mxu0 0
  %594 = vmatprep.subr.bf16.mxu0 0
  %595 = vmatpush2.bf16.msra.mxu0 0
  %596 = vmatprep.subr.bf16.mxu0 0
  %597 = vmatpush2.bf16.msra.mxu0 0
  %598 = vmatprep.subr.bf16.mxu0 0
  %599 = vmatpush2.bf16.msra.mxu0 0
  %600 = vmatprep.subr.bf16.mxu0 0
  %601 = vmatpush2.bf16.msra.mxu0 0
  %602 = vmatprep.subr.bf16.mxu0 0
  %603 = vmatpush2.bf16.msra.mxu0 0
  %604 = vmatprep.mubr.bf16.mxu0 0
  %605 = vmatmul.mubr.bf16.gmra.mxu0 %v514
  %v606 = vpop.f32.mrf.mxu0
  %v607 = vadd.f32 %v554, %v606
  %v608 = vpop.f32.mrf.mxu0
  %v609 = vadd.f32 %v556, %v608
  %v610 = vpop.f32.mrf.mxu0
  %v611 = vadd.f32 %v558, %v610
  %v612 = vpop.f32.mrf.mxu0
  %v613 = vadd.f32 %v560, %v612
  %614 = vmatprep.mubr.bf16.mxu0 0
  %615 = vmatmul.mubr.bf16.gmra.mxu0 %v517
  %v616 = vpop.f32.mrf.mxu0
  %v617 = vadd.f32 %v564, %v616
  %v618 = vpop.f32.mrf.mxu0
  %v619 = vadd.f32 %v566, %v618
  %v620 = vpop.f32.mrf.mxu0
  %v621 = vadd.f32 %v568, %v620
  %v622 = vpop.f32.mrf.mxu0
  %v623 = vadd.f32 %v570, %v622
  %624 = vdwg.mxu0
  %625 = vmatprep.subr.bf16.mxu0 %v399
  %626 = vmatpush1.bf16.msra.mxu0 %v398
  %627 = vmatprep.subr.bf16.mxu0 %v395
  %628 = vmatpush1.bf16.msra.mxu0 %v394
  %629 = vmatprep.subr.bf16.mxu0 %v391
  %630 = vmatpush1.bf16.msra.mxu0 %v390
  %631 = vmatprep.subr.bf16.mxu0 %v387
  %632 = vmatpush1.bf16.msra.mxu0 %v386
  %633 = vmatprep.subr.bf16.mxu0 %v383
  %634 = vmatpush1.bf16.msra.mxu0 %v382
  %635 = vmatprep.subr.bf16.mxu0 %v379
  %636 = vmatpush1.bf16.msra.mxu0 %v378
  %637 = vmatprep.subr.bf16.mxu0 %v375
  %638 = vmatpush1.bf16.msra.mxu0 %v374
  %639 = vmatprep.subr.bf16.mxu0 %v371
  %640 = vmatpush1.bf16.msra.mxu0 %v370
  %641 = vmatprep.subr.bf16.mxu0 %v431
  %642 = vmatpush2.bf16.msra.mxu0 %v430
  %643 = vmatprep.subr.bf16.mxu0 %v427
  %644 = vmatpush2.bf16.msra.mxu0 %v426
  %645 = vmatprep.subr.bf16.mxu0 %v423
  %646 = vmatpush2.bf16.msra.mxu0 %v422
  %647 = vmatprep.subr.bf16.mxu0 %v419
  %648 = vmatpush2.bf16.msra.mxu0 %v418
  %649 = vmatprep.subr.bf16.mxu0 %v415
  %650 = vmatpush2.bf16.msra.mxu0 %v414
  %651 = vmatprep.subr.bf16.mxu0 %v411
  %652 = vmatpush2.bf16.msra.mxu0 %v410
  %653 = vmatprep.subr.bf16.mxu0 %v407
  %654 = vmatpush2.bf16.msra.mxu0 %v406
  %655 = vmatprep.subr.bf16.mxu0 %v403
  %656 = vmatpush2.bf16.msra.mxu0 %v402
  %657 = vmatprep.mubr.bf16.mxu0 %v143
  %658 = vmatmul.mubr.bf16.gmra.mxu0 %v142
  %v659 = vpop.f32.mrf.mxu0
  %v660 = vadd.f32 %v105, %v659
  %v661 = vpop.f32.mrf.mxu0
  %v662 = vadd.f32 %v105, %v661
  %v663 = vpop.f32.mrf.mxu0
  %v664 = vadd.f32 %v110, %v663
  %v665 = vpop.f32.mrf.mxu0
  %v666 = vadd.f32 %v110, %v665
  %667 = vmatprep.mubr.bf16.mxu0 %v146
  %668 = vmatmul.mubr.bf16.gmra.mxu0 %v145
  %v669 = vpop.f32.mrf.mxu0
  %v670 = vadd.f32 %v115, %v669
  %v671 = vpop.f32.mrf.mxu0
  %v672 = vadd.f32 %v115, %v671
  %v673 = vpop.f32.mrf.mxu0
  %v674 = vadd.f32 %v120, %v673
  %v675 = vpop.f32.mrf.mxu0
  %v676 = vadd.f32 %v120, %v675
  %677 = vdwg.mxu0
  %678 = vmatprep.subr.bf16.mxu0 0
  %679 = vmatpush1.bf16.msra.mxu0 0
  %680 = vmatprep.subr.bf16.mxu0 0
  %681 = vmatpush1.bf16.msra.mxu0 0
  %682 = vmatprep.subr.bf16.mxu0 0
  %683 = vmatpush1.bf16.msra.mxu0 0
  %684 = vmatprep.subr.bf16.mxu0 0
  %685 = vmatpush1.bf16.msra.mxu0 0
  %686 = vmatprep.subr.bf16.mxu0 0
  %687 = vmatpush1.bf16.msra.mxu0 0
  %688 = vmatprep.subr.bf16.mxu0 0
  %689 = vmatpush1.bf16.msra.mxu0 0
  %690 = vmatprep.subr.bf16.mxu0 %v439
  %691 = vmatpush1.bf16.msra.mxu0 %v438
  %692 = vmatprep.subr.bf16.mxu0 %v435
  %693 = vmatpush1.bf16.msra.mxu0 %v434
  %694 = vmatprep.subr.bf16.mxu0 0
  %695 = vmatpush2.bf16.msra.mxu0 0
  %696 = vmatprep.subr.bf16.mxu0 0
  %697 = vmatpush2.bf16.msra.mxu0 0
  %698 = vmatprep.subr.bf16.mxu0 0
  %699 = vmatpush2.bf16.msra.mxu0 0
  %700 = vmatprep.subr.bf16.mxu0 0
  %701 = vmatpush2.bf16.msra.mxu0 0
  %702 = vmatprep.subr.bf16.mxu0 0
  %703 = vmatpush2.bf16.msra.mxu0 0
  %704 = vmatprep.subr.bf16.mxu0 0
  %705 = vmatpush2.bf16.msra.mxu0 0
  %706 = vmatprep.subr.bf16.mxu0 0
  %707 = vmatpush2.bf16.msra.mxu0 0
  %708 = vmatprep.subr.bf16.mxu0 0
  %709 = vmatpush2.bf16.msra.mxu0 0
  %710 = vmatprep.mubr.bf16.mxu0 0
  %711 = vmatmul.mubr.bf16.gmra.mxu0 %v514
  %v712 = vpop.f32.mrf.mxu0
  %v713 = vadd.f32 %v660, %v712
  %v714 = vpop.f32.mrf.mxu0
  %v715 = vadd.f32 %v662, %v714
  %v716 = vpop.f32.mrf.mxu0
  %v717 = vadd.f32 %v664, %v716
  %v718 = vpop.f32.mrf.mxu0
  %v719 = vadd.f32 %v666, %v718
  %720 = vmatprep.mubr.bf16.mxu0 0
  %721 = vmatmul.mubr.bf16.gmra.mxu0 %v517
  %v722 = vpop.f32.mrf.mxu0
  %v723 = vadd.f32 %v670, %v722
  %v724 = vpop.f32.mrf.mxu0
  %v725 = vadd.f32 %v672, %v724
  %v726 = vpop.f32.mrf.mxu0
  %v727 = vadd.f32 %v674, %v726
  %v728 = vpop.f32.mrf.mxu0
  %v729 = vadd.f32 %v676, %v728
  %730 = vdwg.mxu0
  %v731 = vld [vmem:[%s3] sm:$0xff]
  %v732 = vld [vmem:[%s3 + $0x8] sm:$0xff]
  %v733 = vld [vmem:[%s3 + $0x10] sm:$0xff]
  %v734 = vld [vmem:[%s3 + $0x18] sm:$0xff]
  %v735 = vld [vmem:[%s3 + $0x20] sm:$0xff]
  %v736 = vld [vmem:[%s3 + $0x28] sm:$0xff]
  %v737 = vld [vmem:[%s3 + $0x30] sm:$0xff]
  %v738 = vld [vmem:[%s3 + $0x38] sm:$0xff]
  %v739 = vld [vmem:[%s3 + $0x40] sm:$0xff]
  %v740 = vld [vmem:[%s3 + $0x48] sm:$0xff]
  %v741 = vld [vmem:[%s3 + $0x50] sm:$0xff]
  %v742 = vld [vmem:[%s3 + $0x58] sm:$0xff]
  %v743 = vld [vmem:[%s3 + $0x60] sm:$0xff]
  %v744 = vld [vmem:[%s3 + $0x68] sm:$0xff]
  %v745 = vld [vmem:[%s3 + $0x70] sm:$0xff]
  %v746 = vld [vmem:[%s3 + $0x78] sm:$0xff]
  %v747 = vadd.f32 %v607, %v731
  %v748 = vadd.f32 %v609, %v732
  %v749 = vadd.f32 %v713, %v733
  %v750 = vadd.f32 %v715, %v734
  %v751 = vadd.f32 %v611, %v735
  %v752 = vadd.f32 %v613, %v736
  %v753 = vadd.f32 %v717, %v737
  %v754 = vadd.f32 %v719, %v738
  %v755 = vadd.f32 %v617, %v739
  %v756 = vadd.f32 %v619, %v740
  %v757 = vadd.f32 %v723, %v741
  %v758 = vadd.f32 %v725, %v742
  %v759 = vadd.f32 %v621, %v743
  %v760 = vadd.f32 %v623, %v744
  %v761 = vadd.f32 %v727, %v745
  %v762 = vadd.f32 %v729, %v746
  %v763 = vmax.f32 %v747, 0.0
  %v764 = vmax.f32 %v748, 0.0
  %v765 = vmax.f32 %v749, 0.0
  %v766 = vmax.f32 %v750, 0.0
  %v767 = vmax.f32 %v751, 0.0
  %v768 = vmax.f32 %v752, 0.0
  %v769 = vmax.f32 %v753, 0.0
  %v770 = vmax.f32 %v754, 0.0
  %v771 = vmax.f32 %v755, 0.0
  %v772 = vmax.f32 %v756, 0.0
  %v773 = vmax.f32 %v757, 0.0
  %v774 = vmax.f32 %v758, 0.0
  %v775 = vmax.f32 %v759, 0.0
  %v776 = vmax.f32 %v760, 0.0
  %v777 = vmax.f32 %v761, 0.0
  %v778 = vmax.f32 %v762, 0.0
  %779 = vst [vmem:[%s4] sm:$0xff] %v763
  %780 = vst [vmem:[%s4 + $0x8] sm:$0xff] %v764
  %781 = vst [vmem:[%s4 + $0x10] sm:$0xff] %v765
  %782 = vst [vmem:[%s4 + $0x18] sm:$0xff] %v766
  %783 = vst [vmem:[%s4 + $0x20] sm:$0xff] %v767
  %784 = vst [vmem:[%s4 + $0x28] sm:$0xff] %v768
  %785 = vst [vmem:[%s4 + $0x30] sm:$0xff] %v769
  %786 = vst [vmem:[%s4 + $0x38] sm:$0xff] %v770
  %787 = vst [vmem:[%s4 + $0x40] sm:$0xff] %v771
  %788 = vst [vmem:[%s4 + $0x48] sm:$0xff] %v772
  %789 = vst [vmem:[%s4 + $0x50] sm:$0xff] %v773
  %790 = vst [vmem:[%s4 + $0x58] sm:$0xff] %v774
  %791 = vst [vmem:[%s4 + $0x60] sm:$0xff] %v775
  %792 = vst [vmem:[%s4 + $0x68] sm:$0xff] %v776
  %793 = vst [vmem:[%s4 + $0x70] sm:$0xff] %v777
  %794 = vst [vmem:[%s4 + $0x78] sm:$0xff] %v778
  // Predicated region
  $region18: #{forward.23} parent=0 // pred_check
    _
  $region19: #{forward.23} parent=0 // pred_check_branch
    %796 = sbr.rel (0) target = $region21
  $region20: #{forward.23} parent=0 // pred_region
    _
  $region21: #{forward.23} parent=0 // pred_fallthru
    _
  // Predicated region
  $region22: #{forward.23} parent=0 // pred_check
    _
  $region23: #{forward.23} parent=0 // pred_check_branch
    %798 = sbr.rel (0) target = $region25
  $region24: #{forward.23} parent=0 // pred_region
    _
  $region25: #{forward.23} parent=0 // pred_fallthru
    _

// kernel: forward.24
$region0: #{forward.24}
  #allocation0 [shape = 'u32[]', space=smem, size = 0x4, offset = 0x4, fixed_abs, tag = 'smem constant byte address 0x4 - core index']
  #allocation1 [shape = 'u32[144,128]{1,0:T(1,128)}', space=vmem, size = 0x12000, scoped, tag = 'internal scratch']
  %s0 = inlined_call_operand.vmem [shape: bf16[32,288], index: 0, kind: input, shape index: {}]
  %s1 = inlined_call_operand.vmem [shape: bf16[288,512], index: 1, kind: input, shape index: {}]
  %s2 = inlined_call_operand.vmem [shape: f32[32,1], index: 2, kind: input, shape index: {}]
  %s3 = inlined_call_operand.vmem [shape: f32[32,512], index: 3, kind: output, shape index: {}]
  %s4 = sld [smem:[#allocation0]]
  $region22: #{forward.24} parent=0
    _
  %s6 = ssub.s32 1, %s4
  %s7 = scalar_select 0, %s6, %s4
  // Predicated region
  $region2: #{forward.24} parent=0 // pred_check
    _
  $region3: #{forward.24} parent=0 // pred_check_branch
    %9 = sbr.rel (0) target = $region5
  $region4: #{forward.24} parent=0 // pred_region
    _
  $region5: #{forward.24} parent=0 // pred_fallthru
    _
  // Predicated region
  $region6: #{forward.24} parent=0 // pred_check
    _
  $region7: #{forward.24} parent=0 // pred_check_branch
    %11 = sbr.rel (0) target = $region9
  $region8: #{forward.24} parent=0 // pred_region
    _
  $region9: #{forward.24} parent=0 // pred_fallthru
    _
  // Predicated region
  $region10: #{forward.24} parent=0 // pred_check
    _
  $region11: #{forward.24} parent=0 // pred_check_branch
    %13 = sbr.rel (0) target = $region13
  $region12: #{forward.24} parent=0 // pred_region
    _
  $region13: #{forward.24} parent=0 // pred_fallthru
    _
  %v15 = vld [vmem:[%s0] sm:$0xff]
  %v16 = vld [vmem:[%s0 + $0x8] sm:$0xf]
  %v17 = vld [vmem:[%s0 + $0xc] sm:$0xff]
  %v18 = vld [vmem:[%s0 + $0x14] sm:$0xf]
  %v19 = vld [vmem:[%s0 + $0x18] sm:$0xff]
  %v20 = vld [vmem:[%s0 + $0x20] sm:$0xf]
  %v21 = vld [vmem:[%s0 + $0x24] sm:$0xff]
  %v22 = vld [vmem:[%s0 + $0x2c] sm:$0xf]
  %v23 = vld [vmem:[%s1] sm:$0xff]
  %v24 = vld [vmem:[%s1 + $0x8] sm:$0xff]
  %v25 = vld [vmem:[%s1 + $0x10] sm:$0xff]
  %v26 = vld [vmem:[%s1 + $0x18] sm:$0xff]
  %v27 = vld [vmem:[%s1 + $0x20] sm:$0xff]
  %v28 = vld [vmem:[%s1 + $0x28] sm:$0xff]
  %v29 = vld [vmem:[%s1 + $0x30] sm:$0xff]
  %v30 = vld [vmem:[%s1 + $0x38] sm:$0xff]
  %v31 = vld [vmem:[%s1 + $0x40] sm:$0xff]
  %v32 = vld [vmem:[%s1 + $0x48] sm:$0xff]
  %v33 = vld [vmem:[%s1 + $0x50] sm:$0xff]
  %v34 = vld [vmem:[%s1 + $0x58] sm:$0xff]
  %v35 = vld [vmem:[%s1 + $0x60] sm:$0xff]
  %v36 = vld [vmem:[%s1 + $0x68] sm:$0xff]
  %v37 = vld [vmem:[%s1 + $0x70] sm:$0xff]
  %v38 = vld [vmem:[%s1 + $0x78] sm:$0xff]
  %v39 = vld [vmem:[%s1 + $0x80] sm:$0xff]
  %v40 = vld [vmem:[%s1 + $0x88] sm:$0xff]
  %v41 = vld [vmem:[%s1 + $0x90] sm:$0xff]
  %v42 = vld [vmem:[%s1 + $0x98] sm:$0xff]
  %v43 = vld [vmem:[%s1 + $0xa0] sm:$0xff]
  %v44 = vld [vmem:[%s1 + $0xa8] sm:$0xff]
  %v45 = vld [vmem:[%s1 + $0xb0] sm:$0xff]
  %v46 = vld [vmem:[%s1 + $0xb8] sm:$0xff]
  %v47 = vld [vmem:[%s1 + $0xc0] sm:$0xff]
  %v48 = vld [vmem:[%s1 + $0xc8] sm:$0xff]
  %v49 = vld [vmem:[%s1 + $0xd0] sm:$0xff]
  %v50 = vld [vmem:[%s1 + $0xd8] sm:$0xff]
  %v51 = vld [vmem:[%s1 + $0xe0] sm:$0xff]
  %v52 = vld [vmem:[%s1 + $0xe8] sm:$0xff]
  %v53 = vld [vmem:[%s1 + $0xf0] sm:$0xff]
  %v54 = vld [vmem:[%s1 + $0xf8] sm:$0xff]
  %v55 = vld [vmem:[%s1 + $0x100] sm:$0xff]
  %v56 = vld [vmem:[%s1 + $0x108] sm:$0xff]
  %v57 = vld [vmem:[%s1 + $0x110] sm:$0xff]
  %v58 = vld [vmem:[%s1 + $0x118] sm:$0xff]
  %v59 = vld [vmem:[%s1 + $0x120] sm:$0xff]
  %v60 = vld [vmem:[%s1 + $0x128] sm:$0xff]
  %v61 = vld [vmem:[%s1 + $0x130] sm:$0xff]
  %v62 = vld [vmem:[%s1 + $0x138] sm:$0xff]
  %v63 = vld [vmem:[%s1 + $0x140] sm:$0xff]
  %v64 = vld [vmem:[%s1 + $0x148] sm:$0xff]
  %v65 = vld [vmem:[%s1 + $0x150] sm:$0xff]
  %v66 = vld [vmem:[%s1 + $0x158] sm:$0xff]
  %v67 = vld [vmem:[%s1 + $0x160] sm:$0xff]
  %v68 = vld [vmem:[%s1 + $0x168] sm:$0xff]
  %v69 = vld [vmem:[%s1 + $0x170] sm:$0xff]
  %v70 = vld [vmem:[%s1 + $0x178] sm:$0xff]
  %v71 = vld [vmem:[%s1 + $0x180] sm:$0xff]
  %v72 = vld [vmem:[%s1 + $0x188] sm:$0xff]
  %v73 = vld [vmem:[%s1 + $0x190] sm:$0xff]
  %v74 = vld [vmem:[%s1 + $0x198] sm:$0xff]
  %v75 = vld [vmem:[%s1 + $0x1a0] sm:$0xff]
  %v76 = vld [vmem:[%s1 + $0x1a8] sm:$0xff]
  %v77 = vld [vmem:[%s1 + $0x1b0] sm:$0xff]
  %v78 = vld [vmem:[%s1 + $0x1b8] sm:$0xff]
  %v79 = vld [vmem:[%s1 + $0x1c0] sm:$0xff]
  %v80 = vld [vmem:[%s1 + $0x1c8] sm:$0xff]
  %v81 = vld [vmem:[%s1 + $0x1d0] sm:$0xff]
  %v82 = vld [vmem:[%s1 + $0x1d8] sm:$0xff]
  %v83 = vld [vmem:[%s1 + $0x1e0] sm:$0xff]
  %v84 = vld [vmem:[%s1 + $0x1e8] sm:$0xff]
  %v85 = vld [vmem:[%s1 + $0x1f0] sm:$0xff]
  %v86 = vld [vmem:[%s1 + $0x1f8] sm:$0xff]
  %v87 = vld [vmem:[%s1 + $0x200] sm:$0xff]
  %v88 = vld [vmem:[%s1 + $0x208] sm:$0xff]
  %v89 = vld [vmem:[%s1 + $0x210] sm:$0xff]
  %v90 = vld [vmem:[%s1 + $0x218] sm:$0xff]
  %v91 = vld [vmem:[%s1 + $0x220] sm:$0xff]
  %v92 = vld [vmem:[%s1 + $0x228] sm:$0xff]
  %v93 = vld [vmem:[%s1 + $0x230] sm:$0xff]
  %v94 = vld [vmem:[%s1 + $0x238] sm:$0xff]
  %v95 = vld [vmem:[%s2] sm:$0xff]
  %v96 = vld [vmem:[%s2 + $0x8] sm:$0xff]
  %v97 = vld [vmem:[%s2 + $0x10] sm:$0xff]
  %v98 = vld [vmem:[%s2 + $0x18] sm:$0xff]
  %100 = vset.pattern.permute.xlu0 0
  %101 = vperm.xlu0 %100, %v95
  %v102 = vpop.permute.xlu0 %101
  %105 = vset.pattern.permute.xlu0 0
  %106 = vperm.xlu0 %105, %v96
  %v107 = vpop.permute.xlu0 %106
  %110 = vset.pattern.permute.xlu0 0
  %111 = vperm.xlu0 %110, %v97
  %v112 = vpop.permute.xlu0 %111
  %115 = vset.pattern.permute.xlu0 0
  %116 = vperm.xlu0 %115, %v98
  %v117 = vpop.permute.xlu0 %116
  %v127 = vunpack.c.l.b16 %v15
  %v128 = vunpack.c.h.b16 %v15
  %v129 = vunpack.c.l.b16 %v16
  %v130 = vunpack.c.l.b16 %v17
  %v131 = vunpack.c.h.b16 %v17
  %v132 = vunpack.c.l.b16 %v18
  %v133 = vunpack.c.l.b16 %v19
  %v134 = vunpack.c.h.b16 %v19
  %v135 = vunpack.c.l.b16 %v20
  %v136 = vunpack.c.l.b16 %v21
  %v137 = vunpack.c.h.b16 %v21
  %v138 = vunpack.c.l.b16 %v22
  %v139 = vpack.c.b16 %v130, %v127
  %v140 = vpack.c.b16 %v131, %v128
  %v141 = vpack.c.b16 %v132, %v129
  %v142 = vpack.c.b16 %v136, %v133
  %v143 = vpack.c.b16 %v137, %v134
  %v144 = vpack.c.b16 %v138, %v135
  %v221 = vunpack.c.l.b16 %v23
  %v222 = vunpack.c.h.b16 %v23
  %v223 = vunpack.c.l.b16 %v24
  %v224 = vunpack.c.h.b16 %v24
  %v225 = vunpack.c.l.b16 %v25
  %v226 = vunpack.c.h.b16 %v25
  %v227 = vunpack.c.l.b16 %v26
  %v228 = vunpack.c.h.b16 %v26
  %v229 = vunpack.c.l.b16 %v27
  %v230 = vunpack.c.h.b16 %v27
  %v231 = vunpack.c.l.b16 %v28
  %v232 = vunpack.c.h.b16 %v28
  %v233 = vunpack.c.l.b16 %v29
  %v234 = vunpack.c.h.b16 %v29
  %v235 = vunpack.c.l.b16 %v30
  %v236 = vunpack.c.h.b16 %v30
  %v237 = vunpack.c.l.b16 %v31
  %v238 = vunpack.c.h.b16 %v31
  %v239 = vunpack.c.l.b16 %v32
  %v240 = vunpack.c.h.b16 %v32
  %v241 = vunpack.c.l.b16 %v33
  %v242 = vunpack.c.h.b16 %v33
  %v243 = vunpack.c.l.b16 %v34
  %v244 = vunpack.c.h.b16 %v34
  %v245 = vunpack.c.l.b16 %v35
  %v246 = vunpack.c.h.b16 %v35
  %v247 = vunpack.c.l.b16 %v36
  %v248 = vunpack.c.h.b16 %v36
  %v249 = vunpack.c.l.b16 %v37
  %v250 = vunpack.c.h.b16 %v37
  %v251 = vunpack.c.l.b16 %v38
  %v252 = vunpack.c.h.b16 %v38
  %v253 = vunpack.c.l.b16 %v39
  %v254 = vunpack.c.h.b16 %v39
  %v255 = vunpack.c.l.b16 %v40
  %v256 = vunpack.c.h.b16 %v40
  %v257 = vunpack.c.l.b16 %v41
  %v258 = vunpack.c.h.b16 %v41
  %v259 = vunpack.c.l.b16 %v42
  %v260 = vunpack.c.h.b16 %v42
  %v261 = vunpack.c.l.b16 %v43
  %v262 = vunpack.c.h.b16 %v43
  %v263 = vunpack.c.l.b16 %v44
  %v264 = vunpack.c.h.b16 %v44
  %v265 = vunpack.c.l.b16 %v45
  %v266 = vunpack.c.h.b16 %v45
  %v267 = vunpack.c.l.b16 %v46
  %v268 = vunpack.c.h.b16 %v46
  %v269 = vunpack.c.l.b16 %v47
  %v270 = vunpack.c.h.b16 %v47
  %v271 = vunpack.c.l.b16 %v48
  %v272 = vunpack.c.h.b16 %v48
  %v273 = vunpack.c.l.b16 %v49
  %v274 = vunpack.c.h.b16 %v49
  %v275 = vunpack.c.l.b16 %v50
  %v276 = vunpack.c.h.b16 %v50
  %v277 = vunpack.c.l.b16 %v51
  %v278 = vunpack.c.h.b16 %v51
  %v279 = vunpack.c.l.b16 %v52
  %v280 = vunpack.c.h.b16 %v52
  %v281 = vunpack.c.l.b16 %v53
  %v282 = vunpack.c.h.b16 %v53
  %v283 = vunpack.c.l.b16 %v54
  %v284 = vunpack.c.h.b16 %v54
  %v285 = vunpack.c.l.b16 %v55
  %v286 = vunpack.c.h.b16 %v55
  %v287 = vunpack.c.l.b16 %v56
  %v288 = vunpack.c.h.b16 %v56
  %v289 = vunpack.c.l.b16 %v57
  %v290 = vunpack.c.h.b16 %v57
  %v291 = vunpack.c.l.b16 %v58
  %v292 = vunpack.c.h.b16 %v58
  %v293 = vunpack.c.l.b16 %v59
  %v294 = vunpack.c.h.b16 %v59
  %v295 = vunpack.c.l.b16 %v60
  %v296 = vunpack.c.h.b16 %v60
  %v297 = vunpack.c.l.b16 %v61
  %v298 = vunpack.c.h.b16 %v61
  %v299 = vunpack.c.l.b16 %v62
  %v300 = vunpack.c.h.b16 %v62
  %v301 = vunpack.c.l.b16 %v63
  %v302 = vunpack.c.h.b16 %v63
  %v303 = vunpack.c.l.b16 %v64
  %v304 = vunpack.c.h.b16 %v64
  %v305 = vunpack.c.l.b16 %v65
  %v306 = vunpack.c.h.b16 %v65
  %v307 = vunpack.c.l.b16 %v66
  %v308 = vunpack.c.h.b16 %v66
  %v309 = vunpack.c.l.b16 %v67
  %v310 = vunpack.c.h.b16 %v67
  %v311 = vunpack.c.l.b16 %v68
  %v312 = vunpack.c.h.b16 %v68
  %v313 = vunpack.c.l.b16 %v69
  %v314 = vunpack.c.h.b16 %v69
  %v315 = vunpack.c.l.b16 %v70
  %v316 = vunpack.c.h.b16 %v70
  %v317 = vunpack.c.l.b16 %v71
  %v318 = vunpack.c.h.b16 %v71
  %v319 = vunpack.c.l.b16 %v72
  %v320 = vunpack.c.h.b16 %v72
  %v321 = vunpack.c.l.b16 %v73
  %v322 = vunpack.c.h.b16 %v73
  %v323 = vunpack.c.l.b16 %v74
  %v324 = vunpack.c.h.b16 %v74
  %v325 = vunpack.c.l.b16 %v75
  %v326 = vunpack.c.h.b16 %v75
  %v327 = vunpack.c.l.b16 %v76
  %v328 = vunpack.c.h.b16 %v76
  %v329 = vunpack.c.l.b16 %v77
  %v330 = vunpack.c.h.b16 %v77
  %v331 = vunpack.c.l.b16 %v78
  %v332 = vunpack.c.h.b16 %v78
  %v333 = vunpack.c.l.b16 %v79
  %v334 = vunpack.c.h.b16 %v79
  %v335 = vunpack.c.l.b16 %v80
  %v336 = vunpack.c.h.b16 %v80
  %v337 = vunpack.c.l.b16 %v81
  %v338 = vunpack.c.h.b16 %v81
  %v339 = vunpack.c.l.b16 %v82
  %v340 = vunpack.c.h.b16 %v82
  %v341 = vunpack.c.l.b16 %v83
  %v342 = vunpack.c.h.b16 %v83
  %v343 = vunpack.c.l.b16 %v84
  %v344 = vunpack.c.h.b16 %v84
  %v345 = vunpack.c.l.b16 %v85
  %v346 = vunpack.c.h.b16 %v85
  %v347 = vunpack.c.l.b16 %v86
  %v348 = vunpack.c.h.b16 %v86
  %v349 = vunpack.c.l.b16 %v87
  %v350 = vunpack.c.h.b16 %v87
  %v351 = vunpack.c.l.b16 %v88
  %v352 = vunpack.c.h.b16 %v88
  %v353 = vunpack.c.l.b16 %v89
  %v354 = vunpack.c.h.b16 %v89
  %v355 = vunpack.c.l.b16 %v90
  %v356 = vunpack.c.h.b16 %v90
  %v357 = vunpack.c.l.b16 %v91
  %v358 = vunpack.c.h.b16 %v91
  %v359 = vunpack.c.l.b16 %v92
  %v360 = vunpack.c.h.b16 %v92
  %v361 = vunpack.c.l.b16 %v93
  %v362 = vunpack.c.h.b16 %v93
  %v363 = vunpack.c.l.b16 %v94
  %v364 = vunpack.c.h.b16 %v94
  %v365 = vpack.c.b16 %v225, %v221
  %v366 = vpack.c.b16 %v226, %v222
  %v367 = vpack.c.b16 %v227, %v223
  %v368 = vpack.c.b16 %v228, %v224
  %v369 = vpack.c.b16 %v233, %v229
  %v370 = vpack.c.b16 %v234, %v230
  %v371 = vpack.c.b16 %v235, %v231
  %v372 = vpack.c.b16 %v236, %v232
  %v373 = vpack.c.b16 %v241, %v237
  %v374 = vpack.c.b16 %v242, %v238
  %v375 = vpack.c.b16 %v243, %v239
  %v376 = vpack.c.b16 %v244, %v240
  %v377 = vpack.c.b16 %v249, %v245
  %v378 = vpack.c.b16 %v250, %v246
  %v379 = vpack.c.b16 %v251, %v247
  %v380 = vpack.c.b16 %v252, %v248
  %v381 = vpack.c.b16 %v257, %v253
  %v382 = vpack.c.b16 %v258, %v254
  %v383 = vpack.c.b16 %v259, %v255
  %v384 = vpack.c.b16 %v260, %v256
  %v385 = vpack.c.b16 %v265, %v261
  %v386 = vpack.c.b16 %v266, %v262
  %v387 = vpack.c.b16 %v267, %v263
  %v388 = vpack.c.b16 %v268, %v264
  %v389 = vpack.c.b16 %v273, %v269
  %v390 = vpack.c.b16 %v274, %v270
  %v391 = vpack.c.b16 %v275, %v271
  %v392 = vpack.c.b16 %v276, %v272
  %v393 = vpack.c.b16 %v281, %v277
  %v394 = vpack.c.b16 %v282, %v278
  %v395 = vpack.c.b16 %v283, %v279
  %v396 = vpack.c.b16 %v284, %v280
  %v397 = vpack.c.b16 %v289, %v285
  %v398 = vpack.c.b16 %v290, %v286
  %v399 = vpack.c.b16 %v291, %v287
  %v400 = vpack.c.b16 %v292, %v288
  %v401 = vpack.c.b16 %v297, %v293
  %v402 = vpack.c.b16 %v298, %v294
  %v403 = vpack.c.b16 %v299, %v295
  %v404 = vpack.c.b16 %v300, %v296
  %v405 = vpack.c.b16 %v305, %v301
  %v406 = vpack.c.b16 %v306, %v302
  %v407 = vpack.c.b16 %v307, %v303
  %v408 = vpack.c.b16 %v308, %v304
  %v409 = vpack.c.b16 %v313, %v309
  %v410 = vpack.c.b16 %v314, %v310
  %v411 = vpack.c.b16 %v315, %v311
  %v412 = vpack.c.b16 %v316, %v312
  %v413 = vpack.c.b16 %v321, %v317
  %v414 = vpack.c.b16 %v322, %v318
  %v415 = vpack.c.b16 %v323, %v319
  %v416 = vpack.c.b16 %v324, %v320
  %v417 = vpack.c.b16 %v329, %v325
  %v418 = vpack.c.b16 %v330, %v326
  %v419 = vpack.c.b16 %v331, %v327
  %v420 = vpack.c.b16 %v332, %v328
  %v421 = vpack.c.b16 %v337, %v333
  %v422 = vpack.c.b16 %v338, %v334
  %v423 = vpack.c.b16 %v339, %v335
  %v424 = vpack.c.b16 %v340, %v336
  %v425 = vpack.c.b16 %v345, %v341
  %v426 = vpack.c.b16 %v346, %v342
  %v427 = vpack.c.b16 %v347, %v343
  %v428 = vpack.c.b16 %v348, %v344
  %v429 = vpack.c.b16 %v353, %v349
  %v430 = vpack.c.b16 %v354, %v350
  %v431 = vpack.c.b16 %v355, %v351
  %v432 = vpack.c.b16 %v356, %v352
  %v433 = vpack.c.b16 %v361, %v357
  %v434 = vpack.c.b16 %v362, %v358
  %v435 = vpack.c.b16 %v363, %v359
  %v436 = vpack.c.b16 %v364, %v360
  %vm509 = vcmask 261120
  %v511 = vsel %vm509, %v141, 0
  %v514 = vsel %vm509, %v144, 0
  %516 = vmatprep.subr.bf16.mxu0 %v394
  %517 = vmatpush1.bf16.msra.mxu0 %v393
  %518 = vmatprep.subr.bf16.mxu0 %v390
  %519 = vmatpush1.bf16.msra.mxu0 %v389
  %520 = vmatprep.subr.bf16.mxu0 %v386
  %521 = vmatpush1.bf16.msra.mxu0 %v385
  %522 = vmatprep.subr.bf16.mxu0 %v382
  %523 = vmatpush1.bf16.msra.mxu0 %v381
  %524 = vmatprep.subr.bf16.mxu0 %v378
  %525 = vmatpush1.bf16.msra.mxu0 %v377
  %526 = vmatprep.subr.bf16.mxu0 %v374
  %527 = vmatpush1.bf16.msra.mxu0 %v373
  %528 = vmatprep.subr.bf16.mxu0 %v370
  %529 = vmatpush1.bf16.msra.mxu0 %v369
  %530 = vmatprep.subr.bf16.mxu0 %v366
  %531 = vmatpush1.bf16.msra.mxu0 %v365
  %532 = vmatprep.subr.bf16.mxu0 %v426
  %533 = vmatpush2.bf16.msra.mxu0 %v425
  %534 = vmatprep.subr.bf16.mxu0 %v422
  %535 = vmatpush2.bf16.msra.mxu0 %v421
  %536 = vmatprep.subr.bf16.mxu0 %v418
  %537 = vmatpush2.bf16.msra.mxu0 %v417
  %538 = vmatprep.subr.bf16.mxu0 %v414
  %539 = vmatpush2.bf16.msra.mxu0 %v413
  %540 = vmatprep.subr.bf16.mxu0 %v410
  %541 = vmatpush2.bf16.msra.mxu0 %v409
  %542 = vmatprep.subr.bf16.mxu0 %v406
  %543 = vmatpush2.bf16.msra.mxu0 %v405
  %544 = vmatprep.subr.bf16.mxu0 %v402
  %545 = vmatpush2.bf16.msra.mxu0 %v401
  %546 = vmatprep.subr.bf16.mxu0 %v398
  %547 = vmatpush2.bf16.msra.mxu0 %v397
  %548 = vmatprep.mubr.bf16.mxu0 %v140
  %549 = vmatmul.mubr.bf16.gmra.mxu0 %v139
  %v550 = vpop.f32.mrf.mxu0
  %v551 = vadd.f32 %v102, %v550
  %v552 = vpop.f32.mrf.mxu0
  %v553 = vadd.f32 %v102, %v552
  %v554 = vpop.f32.mrf.mxu0
  %v555 = vadd.f32 %v107, %v554
  %v556 = vpop.f32.mrf.mxu0
  %v557 = vadd.f32 %v107, %v556
  %558 = vmatprep.mubr.bf16.mxu0 %v143
  %559 = vmatmul.mubr.bf16.gmra.mxu0 %v142
  %v560 = vpop.f32.mrf.mxu0
  %v561 = vadd.f32 %v112, %v560
  %v562 = vpop.f32.mrf.mxu0
  %v563 = vadd.f32 %v112, %v562
  %v564 = vpop.f32.mrf.mxu0
  %v565 = vadd.f32 %v117, %v564
  %v566 = vpop.f32.mrf.mxu0
  %v567 = vadd.f32 %v117, %v566
  %568 = vdwg.mxu0
  %569 = vmatprep.subr.bf16.mxu0 0
  %570 = vmatpush1.bf16.msra.mxu0 0
  %571 = vmatprep.subr.bf16.mxu0 0
  %572 = vmatpush1.bf16.msra.mxu0 0
  %573 = vmatprep.subr.bf16.mxu0 0
  %574 = vmatpush1.bf16.msra.mxu0 0
  %575 = vmatprep.subr.bf16.mxu0 0
  %576 = vmatpush1.bf16.msra.mxu0 0
  %577 = vmatprep.subr.bf16.mxu0 0
  %578 = vmatpush1.bf16.msra.mxu0 0
  %579 = vmatprep.subr.bf16.mxu0 0
  %580 = vmatpush1.bf16.msra.mxu0 0
  %581 = vmatprep.subr.bf16.mxu0 %v434
  %582 = vmatpush1.bf16.msra.mxu0 %v433
  %583 = vmatprep.subr.bf16.mxu0 %v430
  %584 = vmatpush1.bf16.msra.mxu0 %v429
  %585 = vmatprep.subr.bf16.mxu0 0
  %586 = vmatpush2.bf16.msra.mxu0 0
  %587 = vmatprep.subr.bf16.mxu0 0
  %588 = vmatpush2.bf16.msra.mxu0 0
  %589 = vmatprep.subr.bf16.mxu0 0
  %590 = vmatpush2.bf16.msra.mxu0 0
  %591 = vmatprep.subr.bf16.mxu0 0
  %592 = vmatpush2.bf16.msra.mxu0 0
  %593 = vmatprep.subr.bf16.mxu0 0
  %594 = vmatpush2.bf16.msra.mxu0 0
  %595 = vmatprep.subr.bf16.mxu0 0
  %596 = vmatpush2.bf16.msra.mxu0 0
  %597 = vmatprep.subr.bf16.mxu0 0
  %598 = vmatpush2.bf16.msra.mxu0 0
  %599 = vmatprep.subr.bf16.mxu0 0
  %600 = vmatpush2.bf16.msra.mxu0 0
  %601 = vmatprep.mubr.bf16.mxu0 0
  %602 = vmatmul.mubr.bf16.gmra.mxu0 %v511
  %v603 = vpop.f32.mrf.mxu0
  %v604 = vadd.f32 %v551, %v603
  %v605 = vpop.f32.mrf.mxu0
  %v606 = vadd.f32 %v553, %v605
  %v607 = vpop.f32.mrf.mxu0
  %v608 = vadd.f32 %v555, %v607
  %v609 = vpop.f32.mrf.mxu0
  %v610 = vadd.f32 %v557, %v609
  %611 = vmatprep.mubr.bf16.mxu0 0
  %612 = vmatmul.mubr.bf16.gmra.mxu0 %v514
  %v613 = vpop.f32.mrf.mxu0
  %v614 = vadd.f32 %v561, %v613
  %v615 = vpop.f32.mrf.mxu0
  %v616 = vadd.f32 %v563, %v615
  %v617 = vpop.f32.mrf.mxu0
  %v618 = vadd.f32 %v565, %v617
  %v619 = vpop.f32.mrf.mxu0
  %v620 = vadd.f32 %v567, %v619
  %621 = vdwg.mxu0
  %622 = vmatprep.subr.bf16.mxu0 %v396
  %623 = vmatpush1.bf16.msra.mxu0 %v395
  %624 = vmatprep.subr.bf16.mxu0 %v392
  %625 = vmatpush1.bf16.msra.mxu0 %v391
  %626 = vmatprep.subr.bf16.mxu0 %v388
  %627 = vmatpush1.bf16.msra.mxu0 %v387
  %628 = vmatprep.subr.bf16.mxu0 %v384
  %629 = vmatpush1.bf16.msra.mxu0 %v383
  %630 = vmatprep.subr.bf16.mxu0 %v380
  %631 = vmatpush1.bf16.msra.mxu0 %v379
  %632 = vmatprep.subr.bf16.mxu0 %v376
  %633 = vmatpush1.bf16.msra.mxu0 %v375
  %634 = vmatprep.subr.bf16.mxu0 %v372
  %635 = vmatpush1.bf16.msra.mxu0 %v371
  %636 = vmatprep.subr.bf16.mxu0 %v368
  %637 = vmatpush1.bf16.msra.mxu0 %v367
  %638 = vmatprep.subr.bf16.mxu0 %v428
  %639 = vmatpush2.bf16.msra.mxu0 %v427
  %640 = vmatprep.subr.bf16.mxu0 %v424
  %641 = vmatpush2.bf16.msra.mxu0 %v423
  %642 = vmatprep.subr.bf16.mxu0 %v420
  %643 = vmatpush2.bf16.msra.mxu0 %v419
  %644 = vmatprep.subr.bf16.mxu0 %v416
  %645 = vmatpush2.bf16.msra.mxu0 %v415
  %646 = vmatprep.subr.bf16.mxu0 %v412
  %647 = vmatpush2.bf16.msra.mxu0 %v411
  %648 = vmatprep.subr.bf16.mxu0 %v408
  %649 = vmatpush2.bf16.msra.mxu0 %v407
  %650 = vmatprep.subr.bf16.mxu0 %v404
  %651 = vmatpush2.bf16.msra.mxu0 %v403
  %652 = vmatprep.subr.bf16.mxu0 %v400
  %653 = vmatpush2.bf16.msra.mxu0 %v399
  %654 = vmatprep.mubr.bf16.mxu0 %v140
  %655 = vmatmul.mubr.bf16.gmra.mxu0 %v139
  %v656 = vpop.f32.mrf.mxu0
  %v657 = vadd.f32 %v102, %v656
  %v658 = vpop.f32.mrf.mxu0
  %v659 = vadd.f32 %v102, %v658
  %v660 = vpop.f32.mrf.mxu0
  %v661 = vadd.f32 %v107, %v660
  %v662 = vpop.f32.mrf.mxu0
  %v663 = vadd.f32 %v107, %v662
  %664 = vmatprep.mubr.bf16.mxu0 %v143
  %665 = vmatmul.mubr.bf16.gmra.mxu0 %v142
  %v666 = vpop.f32.mrf.mxu0
  %v667 = vadd.f32 %v112, %v666
  %v668 = vpop.f32.mrf.mxu0
  %v669 = vadd.f32 %v112, %v668
  %v670 = vpop.f32.mrf.mxu0
  %v671 = vadd.f32 %v117, %v670
  %v672 = vpop.f32.mrf.mxu0
  %v673 = vadd.f32 %v117, %v672
  %674 = vdwg.mxu0
  %675 = vmatprep.subr.bf16.mxu0 0
  %676 = vmatpush1.bf16.msra.mxu0 0
  %677 = vmatprep.subr.bf16.mxu0 0
  %678 = vmatpush1.bf16.msra.mxu0 0
  %679 = vmatprep.subr.bf16.mxu0 0
  %680 = vmatpush1.bf16.msra.mxu0 0
  %681 = vmatprep.subr.bf16.mxu0 0
  %682 = vmatpush1.bf16.msra.mxu0 0
  %683 = vmatprep.subr.bf16.mxu0 0
  %684 = vmatpush1.bf16.msra.mxu0 0
  %685 = vmatprep.subr.bf16.mxu0 0
  %686 = vmatpush1.bf16.msra.mxu0 0
  %687 = vmatprep.subr.bf16.mxu0 %v436
  %688 = vmatpush1.bf16.msra.mxu0 %v435
  %689 = vmatprep.subr.bf16.mxu0 %v432
  %690 = vmatpush1.bf16.msra.mxu0 %v431
  %691 = vmatprep.subr.bf16.mxu0 0
  %692 = vmatpush2.bf16.msra.mxu0 0
  %693 = vmatprep.subr.bf16.mxu0 0
  %694 = vmatpush2.bf16.msra.mxu0 0
  %695 = vmatprep.subr.bf16.mxu0 0
  %696 = vmatpush2.bf16.msra.mxu0 0
  %697 = vmatprep.subr.bf16.mxu0 0
  %698 = vmatpush2.bf16.msra.mxu0 0
  %699 = vmatprep.subr.bf16.mxu0 0
  %700 = vmatpush2.bf16.msra.mxu0 0
  %701 = vmatprep.subr.bf16.mxu0 0
  %702 = vmatpush2.bf16.msra.mxu0 0
  %703 = vmatprep.subr.bf16.mxu0 0
  %704 = vmatpush2.bf16.msra.mxu0 0
  %705 = vmatprep.subr.bf16.mxu0 0
  %706 = vmatpush2.bf16.msra.mxu0 0
  %707 = vmatprep.mubr.bf16.mxu0 0
  %708 = vmatmul.mubr.bf16.gmra.mxu0 %v511
  %v709 = vpop.f32.mrf.mxu0
  %v710 = vadd.f32 %v657, %v709
  %v711 = vpop.f32.mrf.mxu0
  %v712 = vadd.f32 %v659, %v711
  %v713 = vpop.f32.mrf.mxu0
  %v714 = vadd.f32 %v661, %v713
  %v715 = vpop.f32.mrf.mxu0
  %v716 = vadd.f32 %v663, %v715
  %717 = vmatprep.mubr.bf16.mxu0 0
  %718 = vmatmul.mubr.bf16.gmra.mxu0 %v514
  %v719 = vpop.f32.mrf.mxu0
  %v720 = vadd.f32 %v667, %v719
  %v721 = vpop.f32.mrf.mxu0
  %v722 = vadd.f32 %v669, %v721
  %v723 = vpop.f32.mrf.mxu0
  %v724 = vadd.f32 %v671, %v723
  %v725 = vpop.f32.mrf.mxu0
  %v726 = vadd.f32 %v673, %v725
  %727 = vdwg.mxu0
  %v728 = vmax.f32 %v604, 0.0
  %v729 = vmax.f32 %v606, 0.0
  %v730 = vmax.f32 %v710, 0.0
  %v731 = vmax.f32 %v712, 0.0
  %v732 = vmax.f32 %v608, 0.0
  %v733 = vmax.f32 %v610, 0.0
  %v734 = vmax.f32 %v714, 0.0
  %v735 = vmax.f32 %v716, 0.0
  %v736 = vmax.f32 %v614, 0.0
  %v737 = vmax.f32 %v616, 0.0
  %v738 = vmax.f32 %v720, 0.0
  %v739 = vmax.f32 %v722, 0.0
  %v740 = vmax.f32 %v618, 0.0
  %v741 = vmax.f32 %v620, 0.0
  %v742 = vmax.f32 %v724, 0.0
  %v743 = vmax.f32 %v726, 0.0
  %744 = vst [vmem:[%s3] sm:$0xff] %v728
  %745 = vst [vmem:[%s3 + $0x8] sm:$0xff] %v729
  %746 = vst [vmem:[%s3 + $0x10] sm:$0xff] %v730
  %747 = vst [vmem:[%s3 + $0x18] sm:$0xff] %v731
  %748 = vst [vmem:[%s3 + $0x20] sm:$0xff] %v732
  %749 = vst [vmem:[%s3 + $0x28] sm:$0xff] %v733
  %750 = vst [vmem:[%s3 + $0x30] sm:$0xff] %v734
  %751 = vst [vmem:[%s3 + $0x38] sm:$0xff] %v735
  %752 = vst [vmem:[%s3 + $0x40] sm:$0xff] %v736
  %753 = vst [vmem:[%s3 + $0x48] sm:$0xff] %v737
  %754 = vst [vmem:[%s3 + $0x50] sm:$0xff] %v738
  %755 = vst [vmem:[%s3 + $0x58] sm:$0xff] %v739
  %756 = vst [vmem:[%s3 + $0x60] sm:$0xff] %v740
  %757 = vst [vmem:[%s3 + $0x68] sm:$0xff] %v741
  %758 = vst [vmem:[%s3 + $0x70] sm:$0xff] %v742
  %759 = vst [vmem:[%s3 + $0x78] sm:$0xff] %v743
  // Predicated region
  $region14: #{forward.24} parent=0 // pred_check
    _
  $region15: #{forward.24} parent=0 // pred_check_branch
    %761 = sbr.rel (0) target = $region17
  $region16: #{forward.24} parent=0 // pred_region
    _
  $region17: #{forward.24} parent=0 // pred_fallthru
    _
  // Predicated region
  $region18: #{forward.24} parent=0 // pred_check
    _
  $region19: #{forward.24} parent=0 // pred_check_branch
    %763 = sbr.rel (0) target = $region21
  $region20: #{forward.24} parent=0 // pred_region
    _
  $region21: #{forward.24} parent=0 // pred_fallthru
    _

// kernel: forward.26
$region0: #{forward.26}
  #allocation0 [shape = 'u32[]', space=smem, size = 0x4, offset = 0x4, fixed_abs, tag = 'smem constant byte address 0x4 - core index']
  #allocation1 [shape = 'u32[144,128]{1,0:T(1,128)}', space=vmem, size = 0x12000, scoped, tag = 'internal scratch']
  %s0 = inlined_call_operand.vmem [shape: bf16[64,288], index: 0, kind: input, shape index: {}]
  %s1 = inlined_call_operand.vmem [shape: bf16[288,128], index: 1, kind: input, shape index: {}]
  %s2 = inlined_call_operand.vmem [shape: f32[64,1], index: 2, kind: input, shape index: {}]
  %s3 = inlined_call_operand.vmem [shape: f32[64,128], index: 3, kind: output, shape index: {}]
  %s4 = sld [smem:[#allocation0]]
  $region22: #{forward.26} parent=0
    _
  %s6 = ssub.s32 1, %s4
  %s7 = scalar_select 0, %s6, %s4
  // Predicated region
  $region2: #{forward.26} parent=0 // pred_check
    _
  $region3: #{forward.26} parent=0 // pred_check_branch
    %9 = sbr.rel (0) target = $region5
  $region4: #{forward.26} parent=0 // pred_region
    _
  $region5: #{forward.26} parent=0 // pred_fallthru
    _
  // Predicated region
  $region6: #{forward.26} parent=0 // pred_check
    _
  $region7: #{forward.26} parent=0 // pred_check_branch
    %11 = sbr.rel (0) target = $region9
  $region8: #{forward.26} parent=0 // pred_region
    _
  $region9: #{forward.26} parent=0 // pred_fallthru
    _
  // Predicated region
  $region10: #{forward.26} parent=0 // pred_check
    _
  $region11: #{forward.26} parent=0 // pred_check_branch
    %13 = sbr.rel (0) target = $region13
  $region12: #{forward.26} parent=0 // pred_region
    _
  $region13: #{forward.26} parent=0 // pred_fallthru
    _
  %v15 = vld [vmem:[%s0] sm:$0xff]
  %v16 = vld [vmem:[%s0 + $0x8] sm:$0xf]
  %v17 = vld [vmem:[%s0 + $0xc] sm:$0xff]
  %v18 = vld [vmem:[%s0 + $0x14] sm:$0xf]
  %v19 = vld [vmem:[%s0 + $0x18] sm:$0xff]
  %v20 = vld [vmem:[%s0 + $0x20] sm:$0xf]
  %v21 = vld [vmem:[%s0 + $0x24] sm:$0xff]
  %v22 = vld [vmem:[%s0 + $0x2c] sm:$0xf]
  %v23 = vld [vmem:[%s0 + $0x30] sm:$0xff]
  %v24 = vld [vmem:[%s0 + $0x38] sm:$0xf]
  %v25 = vld [vmem:[%s0 + $0x3c] sm:$0xff]
  %v26 = vld [vmem:[%s0 + $0x44] sm:$0xf]
  %v27 = vld [vmem:[%s0 + $0x48] sm:$0xff]
  %v28 = vld [vmem:[%s0 + $0x50] sm:$0xf]
  %v29 = vld [vmem:[%s0 + $0x54] sm:$0xff]
  %v30 = vld [vmem:[%s0 + $0x5c] sm:$0xf]
  %v31 = vld [vmem:[%s1] sm:$0xf]
  %v32 = vld [vmem:[%s1 + $0x4] sm:$0xf]
  %v33 = vld [vmem:[%s1 + $0x8] sm:$0xf]
  %v34 = vld [vmem:[%s1 + $0xc] sm:$0xf]
  %v35 = vld [vmem:[%s1 + $0x10] sm:$0xf]
  %v36 = vld [vmem:[%s1 + $0x14] sm:$0xf]
  %v37 = vld [vmem:[%s1 + $0x18] sm:$0xf]
  %v38 = vld [vmem:[%s1 + $0x1c] sm:$0xf]
  %v39 = vld [vmem:[%s1 + $0x20] sm:$0xf]
  %v40 = vld [vmem:[%s1 + $0x24] sm:$0xf]
  %v41 = vld [vmem:[%s1 + $0x28] sm:$0xf]
  %v42 = vld [vmem:[%s1 + $0x2c] sm:$0xf]
  %v43 = vld [vmem:[%s1 + $0x30] sm:$0xf]
  %v44 = vld [vmem:[%s1 + $0x34] sm:$0xf]
  %v45 = vld [vmem:[%s1 + $0x38] sm:$0xf]
  %v46 = vld [vmem:[%s1 + $0x3c] sm:$0xf]
  %v47 = vld [vmem:[%s1 + $0x40] sm:$0xf]
  %v48 = vld [vmem:[%s1 + $0x44] sm:$0xf]
  %v49 = vld [vmem:[%s1 + $0x48] sm:$0xf]
  %v50 = vld [vmem:[%s1 + $0x4c] sm:$0xf]
  %v51 = vld [vmem:[%s1 + $0x50] sm:$0xf]
  %v52 = vld [vmem:[%s1 + $0x54] sm:$0xf]
  %v53 = vld [vmem:[%s1 + $0x58] sm:$0xf]
  %v54 = vld [vmem:[%s1 + $0x5c] sm:$0xf]
  %v55 = vld [vmem:[%s1 + $0x60] sm:$0xf]
  %v56 = vld [vmem:[%s1 + $0x64] sm:$0xf]
  %v57 = vld [vmem:[%s1 + $0x68] sm:$0xf]
  %v58 = vld [vmem:[%s1 + $0x6c] sm:$0xf]
  %v59 = vld [vmem:[%s1 + $0x70] sm:$0xf]
  %v60 = vld [vmem:[%s1 + $0x74] sm:$0xf]
  %v61 = vld [vmem:[%s1 + $0x78] sm:$0xf]
  %v62 = vld [vmem:[%s1 + $0x7c] sm:$0xf]
  %v63 = vld [vmem:[%s1 + $0x80] sm:$0xf]
  %v64 = vld [vmem:[%s1 + $0x84] sm:$0xf]
  %v65 = vld [vmem:[%s1 + $0x88] sm:$0xf]
  %v66 = vld [vmem:[%s1 + $0x8c] sm:$0xf]
  %v67 = vld [vmem:[%s2] sm:$0xff]
  %v68 = vld [vmem:[%s2 + $0x8] sm:$0xff]
  %v69 = vld [vmem:[%s2 + $0x10] sm:$0xff]
  %v70 = vld [vmem:[%s2 + $0x18] sm:$0xff]
  %v71 = vld [vmem:[%s2 + $0x20] sm:$0xff]
  %v72 = vld [vmem:[%s2 + $0x28] sm:$0xff]
  %v73 = vld [vmem:[%s2 + $0x30] sm:$0xff]
  %v74 = vld [vmem:[%s2 + $0x38] sm:$0xff]
  %76 = vset.pattern.permute.xlu0 0
  %77 = vperm.xlu0 %76, %v67
  %v78 = vpop.permute.xlu0 %77
  %81 = vset.pattern.permute.xlu0 0
  %82 = vperm.xlu0 %81, %v68
  %v83 = vpop.permute.xlu0 %82
  %86 = vset.pattern.permute.xlu0 0
  %87 = vperm.xlu0 %86, %v69
  %v88 = vpop.permute.xlu0 %87
  %91 = vset.pattern.permute.xlu0 0
  %92 = vperm.xlu0 %91, %v70
  %v93 = vpop.permute.xlu0 %92
  %96 = vset.pattern.permute.xlu0 0
  %97 = vperm.xlu0 %96, %v71
  %v98 = vpop.permute.xlu0 %97
  %101 = vset.pattern.permute.xlu0 0
  %102 = vperm.xlu0 %101, %v72
  %v103 = vpop.permute.xlu0 %102
  %106 = vset.pattern.permute.xlu0 0
  %107 = vperm.xlu0 %106, %v73
  %v108 = vpop.permute.xlu0 %107
  %111 = vset.pattern.permute.xlu0 0
  %112 = vperm.xlu0 %111, %v74
  %v113 = vpop.permute.xlu0 %112
  %v131 = vunpack.c.l.b16 %v15
  %v132 = vunpack.c.h.b16 %v15
  %v133 = vunpack.c.l.b16 %v16
  %v134 = vunpack.c.l.b16 %v17
  %v135 = vunpack.c.h.b16 %v17
  %v136 = vunpack.c.l.b16 %v18
  %v137 = vunpack.c.l.b16 %v19
  %v138 = vunpack.c.h.b16 %v19
  %v139 = vunpack.c.l.b16 %v20
  %v140 = vunpack.c.l.b16 %v21
  %v141 = vunpack.c.h.b16 %v21
  %v142 = vunpack.c.l.b16 %v22
  %v143 = vunpack.c.l.b16 %v23
  %v144 = vunpack.c.h.b16 %v23
  %v145 = vunpack.c.l.b16 %v24
  %v146 = vunpack.c.l.b16 %v25
  %v147 = vunpack.c.h.b16 %v25
  %v148 = vunpack.c.l.b16 %v26
  %v149 = vunpack.c.l.b16 %v27
  %v150 = vunpack.c.h.b16 %v27
  %v151 = vunpack.c.l.b16 %v28
  %v152 = vunpack.c.l.b16 %v29
  %v153 = vunpack.c.h.b16 %v29
  %v154 = vunpack.c.l.b16 %v30
  %v155 = vpack.c.b16 %v134, %v131
  %v156 = vpack.c.b16 %v135, %v132
  %v157 = vpack.c.b16 %v136, %v133
  %v158 = vpack.c.b16 %v140, %v137
  %v159 = vpack.c.b16 %v141, %v138
  %v160 = vpack.c.b16 %v142, %v139
  %v161 = vpack.c.b16 %v146, %v143
  %v162 = vpack.c.b16 %v147, %v144
  %v163 = vpack.c.b16 %v148, %v145
  %v164 = vpack.c.b16 %v152, %v149
  %v165 = vpack.c.b16 %v153, %v150
  %v166 = vpack.c.b16 %v154, %v151
  %v211 = vunpack.c.l.b16 %v31
  %v212 = vunpack.c.l.b16 %v32
  %v213 = vunpack.c.l.b16 %v33
  %v214 = vunpack.c.l.b16 %v34
  %v215 = vunpack.c.l.b16 %v35
  %v216 = vunpack.c.l.b16 %v36
  %v217 = vunpack.c.l.b16 %v37
  %v218 = vunpack.c.l.b16 %v38
  %v219 = vunpack.c.l.b16 %v39
  %v220 = vunpack.c.l.b16 %v40
  %v221 = vunpack.c.l.b16 %v41
  %v222 = vunpack.c.l.b16 %v42
  %v223 = vunpack.c.l.b16 %v43
  %v224 = vunpack.c.l.b16 %v44
  %v225 = vunpack.c.l.b16 %v45
  %v226 = vunpack.c.l.b16 %v46
  %v227 = vunpack.c.l.b16 %v47
  %v228 = vunpack.c.l.b16 %v48
  %v229 = vunpack.c.l.b16 %v49
  %v230 = vunpack.c.l.b16 %v50
  %v231 = vunpack.c.l.b16 %v51
  %v232 = vunpack.c.l.b16 %v52
  %v233 = vunpack.c.l.b16 %v53
  %v234 = vunpack.c.l.b16 %v54
  %v235 = vunpack.c.l.b16 %v55
  %v236 = vunpack.c.l.b16 %v56
  %v237 = vunpack.c.l.b16 %v57
  %v238 = vunpack.c.l.b16 %v58
  %v239 = vunpack.c.l.b16 %v59
  %v240 = vunpack.c.l.b16 %v60
  %v241 = vunpack.c.l.b16 %v61
  %v242 = vunpack.c.l.b16 %v62
  %v243 = vunpack.c.l.b16 %v63
  %v244 = vunpack.c.l.b16 %v64
  %v245 = vunpack.c.l.b16 %v65
  %v246 = vunpack.c.l.b16 %v66
  %v247 = vpack.c.b16 %v212, %v211
  %v248 = vpack.c.b16 %v214, %v213
  %v249 = vpack.c.b16 %v216, %v215
  %v250 = vpack.c.b16 %v218, %v217
  %v251 = vpack.c.b16 %v220, %v219
  %v252 = vpack.c.b16 %v222, %v221
  %v253 = vpack.c.b16 %v224, %v223
  %v254 = vpack.c.b16 %v226, %v225
  %v255 = vpack.c.b16 %v228, %v227
  %v256 = vpack.c.b16 %v230, %v229
  %v257 = vpack.c.b16 %v232, %v231
  %v258 = vpack.c.b16 %v234, %v233
  %v259 = vpack.c.b16 %v236, %v235
  %v260 = vpack.c.b16 %v238, %v237
  %v261 = vpack.c.b16 %v240, %v239
  %v262 = vpack.c.b16 %v242, %v241
  %v263 = vpack.c.b16 %v244, %v243
  %v264 = vpack.c.b16 %v246, %v245
  %vm283 = vcmask 261120
  %v285 = vsel %vm283, %v157, 0
  %v288 = vsel %vm283, %v160, 0
  %v291 = vsel %vm283, %v163, 0
  %v294 = vsel %vm283, %v166, 0
  %296 = vmatprep.subr.bf16.mxu0 0
  %297 = vmatpush1.bf16.msra.mxu0 %v254
  %298 = vmatprep.subr.bf16.mxu0 0
  %299 = vmatpush1.bf16.msra.mxu0 %v253
  %300 = vmatprep.subr.bf16.mxu0 0
  %301 = vmatpush1.bf16.msra.mxu0 %v252
  %302 = vmatprep.subr.bf16.mxu0 0
  %303 = vmatpush1.bf16.msra.mxu0 %v251
  %304 = vmatprep.subr.bf16.mxu0 0
  %305 = vmatpush1.bf16.msra.mxu0 %v250
  %306 = vmatprep.subr.bf16.mxu0 0
  %307 = vmatpush1.bf16.msra.mxu0 %v249
  %308 = vmatprep.subr.bf16.mxu0 0
  %309 = vmatpush1.bf16.msra.mxu0 %v248
  %310 = vmatprep.subr.bf16.mxu0 0
  %311 = vmatpush1.bf16.msra.mxu0 %v247
  %312 = vmatprep.subr.bf16.mxu0 0
  %313 = vmatpush2.bf16.msra.mxu0 %v262
  %314 = vmatprep.subr.bf16.mxu0 0
  %315 = vmatpush2.bf16.msra.mxu0 %v261
  %316 = vmatprep.subr.bf16.mxu0 0
  %317 = vmatpush2.bf16.msra.mxu0 %v260
  %318 = vmatprep.subr.bf16.mxu0 0
  %319 = vmatpush2.bf16.msra.mxu0 %v259
  %320 = vmatprep.subr.bf16.mxu0 0
  %321 = vmatpush2.bf16.msra.mxu0 %v258
  %322 = vmatprep.subr.bf16.mxu0 0
  %323 = vmatpush2.bf16.msra.mxu0 %v257
  %324 = vmatprep.subr.bf16.mxu0 0
  %325 = vmatpush2.bf16.msra.mxu0 %v256
  %326 = vmatprep.subr.bf16.mxu0 0
  %327 = vmatpush2.bf16.msra.mxu0 %v255
  %328 = vmatprep.mubr.bf16.mxu0 %v156
  %329 = vmatmul.mubr.bf16.gmra.mxu0 %v155
  %v330 = vpop.f32.mrf.mxu0
  %v331 = vadd.f32 %v78, %v330
  %v332 = vpop.f32.mrf.mxu0
  %v333 = vpop.f32.mrf.mxu0
  %v334 = vadd.f32 %v83, %v333
  %v335 = vpop.f32.mrf.mxu0
  %336 = vmatprep.mubr.bf16.mxu0 %v159
  %337 = vmatmul.mubr.bf16.gmra.mxu0 %v158
  %v338 = vpop.f32.mrf.mxu0
  %v339 = vadd.f32 %v88, %v338
  %v340 = vpop.f32.mrf.mxu0
  %v341 = vpop.f32.mrf.mxu0
  %v342 = vadd.f32 %v93, %v341
  %v343 = vpop.f32.mrf.mxu0
  %344 = vmatprep.mubr.bf16.mxu0 %v162
  %345 = vmatmul.mubr.bf16.gmra.mxu0 %v161
  %v346 = vpop.f32.mrf.mxu0
  %v347 = vadd.f32 %v98, %v346
  %v348 = vpop.f32.mrf.mxu0
  %v349 = vpop.f32.mrf.mxu0
  %v350 = vadd.f32 %v103, %v349
  %v351 = vpop.f32.mrf.mxu0
  %352 = vmatprep.mubr.bf16.mxu0 %v165
  %353 = vmatmul.mubr.bf16.gmra.mxu0 %v164
  %v354 = vpop.f32.mrf.mxu0
  %v355 = vadd.f32 %v108, %v354
  %v356 = vpop.f32.mrf.mxu0
  %v357 = vpop.f32.mrf.mxu0
  %v358 = vadd.f32 %v113, %v357
  %v359 = vpop.f32.mrf.mxu0
  %360 = vdwg.mxu0
  %361 = vmatprep.subr.bf16.mxu0 0
  %362 = vmatpush1.bf16.msra.mxu0 0
  %363 = vmatprep.subr.bf16.mxu0 0
  %364 = vmatpush1.bf16.msra.mxu0 0
  %365 = vmatprep.subr.bf16.mxu0 0
  %366 = vmatpush1.bf16.msra.mxu0 0
  %367 = vmatprep.subr.bf16.mxu0 0
  %368 = vmatpush1.bf16.msra.mxu0 0
  %369 = vmatprep.subr.bf16.mxu0 0
  %370 = vmatpush1.bf16.msra.mxu0 0
  %371 = vmatprep.subr.bf16.mxu0 0
  %372 = vmatpush1.bf16.msra.mxu0 0
  %373 = vmatprep.subr.bf16.mxu0 0
  %374 = vmatpush1.bf16.msra.mxu0 %v264
  %375 = vmatprep.subr.bf16.mxu0 0
  %376 = vmatpush1.bf16.msra.mxu0 %v263
  %377 = vmatprep.subr.bf16.mxu0 0
  %378 = vmatpush2.bf16.msra.mxu0 0
  %379 = vmatprep.subr.bf16.mxu0 0
  %380 = vmatpush2.bf16.msra.mxu0 0
  %381 = vmatprep.subr.bf16.mxu0 0
  %382 = vmatpush2.bf16.msra.mxu0 0
  %383 = vmatprep.subr.bf16.mxu0 0
  %384 = vmatpush2.bf16.msra.mxu0 0
  %385 = vmatprep.subr.bf16.mxu0 0
  %386 = vmatpush2.bf16.msra.mxu0 0
  %387 = vmatprep.subr.bf16.mxu0 0
  %388 = vmatpush2.bf16.msra.mxu0 0
  %389 = vmatprep.subr.bf16.mxu0 0
  %390 = vmatpush2.bf16.msra.mxu0 0
  %391 = vmatprep.subr.bf16.mxu0 0
  %392 = vmatpush2.bf16.msra.mxu0 0
  %393 = vmatprep.mubr.bf16.mxu0 0
  %394 = vmatmul.mubr.bf16.gmra.mxu0 %v285
  %v395 = vpop.f32.mrf.mxu0
  %v396 = vadd.f32 %v331, %v395
  %v397 = vpop.f32.mrf.mxu0
  %v398 = vpop.f32.mrf.mxu0
  %v399 = vadd.f32 %v334, %v398
  %v400 = vpop.f32.mrf.mxu0
  %401 = vmatprep.mubr.bf16.mxu0 0
  %402 = vmatmul.mubr.bf16.gmra.mxu0 %v288
  %v403 = vpop.f32.mrf.mxu0
  %v404 = vadd.f32 %v339, %v403
  %v405 = vpop.f32.mrf.mxu0
  %v406 = vpop.f32.mrf.mxu0
  %v407 = vadd.f32 %v342, %v406
  %v408 = vpop.f32.mrf.mxu0
  %409 = vmatprep.mubr.bf16.mxu0 0
  %410 = vmatmul.mubr.bf16.gmra.mxu0 %v291
  %v411 = vpop.f32.mrf.mxu0
  %v412 = vadd.f32 %v347, %v411
  %v413 = vpop.f32.mrf.mxu0
  %v414 = vpop.f32.mrf.mxu0
  %v415 = vadd.f32 %v350, %v414
  %v416 = vpop.f32.mrf.mxu0
  %417 = vmatprep.mubr.bf16.mxu0 0
  %418 = vmatmul.mubr.bf16.gmra.mxu0 %v294
  %v419 = vpop.f32.mrf.mxu0
  %v420 = vadd.f32 %v355, %v419
  %v421 = vpop.f32.mrf.mxu0
  %v422 = vpop.f32.mrf.mxu0
  %v423 = vadd.f32 %v358, %v422
  %v424 = vpop.f32.mrf.mxu0
  %425 = vdwg.mxu0
  %v426 = vmax.f32 %v396, 0.0
  %v427 = vmax.f32 %v399, 0.0
  %v428 = vmax.f32 %v404, 0.0
  %v429 = vmax.f32 %v407, 0.0
  %v430 = vmax.f32 %v412, 0.0
  %v431 = vmax.f32 %v415, 0.0
  %v432 = vmax.f32 %v420, 0.0
  %v433 = vmax.f32 %v423, 0.0
  %434 = vst [vmem:[%s3] sm:$0xff] %v426
  %435 = vst [vmem:[%s3 + $0x8] sm:$0xff] %v427
  %436 = vst [vmem:[%s3 + $0x10] sm:$0xff] %v428
  %437 = vst [vmem:[%s3 + $0x18] sm:$0xff] %v429
  %438 = vst [vmem:[%s3 + $0x20] sm:$0xff] %v430
  %439 = vst [vmem:[%s3 + $0x28] sm:$0xff] %v431
  %440 = vst [vmem:[%s3 + $0x30] sm:$0xff] %v432
  %441 = vst [vmem:[%s3 + $0x38] sm:$0xff] %v433
  // Predicated region
  $region14: #{forward.26} parent=0 // pred_check
    _
  $region15: #{forward.26} parent=0 // pred_check_branch
    %443 = sbr.rel (0) target = $region17
  $region16: #{forward.26} parent=0 // pred_region
    _
  $region17: #{forward.26} parent=0 // pred_fallthru
    _
  // Predicated region
  $region18: #{forward.26} parent=0 // pred_check
    _
  $region19: #{forward.26} parent=0 // pred_check_branch
    %445 = sbr.rel (0) target = $region21
  $region20: #{forward.26} parent=0 // pred_region
    _
  $region21: #{forward.26} parent=0 // pred_fallthru
    _

// kernel: forward.27
$region0: #{forward.27}
  #allocation0 [shape = 'u32[]', space=smem, size = 0x4, offset = 0x4, fixed_abs, tag = 'smem constant byte address 0x4 - core index']
  #allocation1 [shape = 'u32[144,128]{1,0:T(1,128)}', space=vmem, size = 0x12000, scoped, tag = 'internal scratch']
  %s0 = inlined_call_operand.vmem [shape: bf16[64,32], index: 0, kind: input, shape index: {}]
  %s1 = inlined_call_operand.vmem [shape: bf16[32,128], index: 1, kind: input, shape index: {}]
  %s2 = inlined_call_operand.vmem [shape: f32[64,1], index: 2, kind: input, shape index: {}]
  %s3 = inlined_call_operand.vmem [shape: f32[64,128], index: 3, kind: output, shape index: {}]
  %s4 = sld [smem:[#allocation0]]
  $region22: #{forward.27} parent=0
    _
  %s6 = ssub.s32 1, %s4
  %s7 = scalar_select 0, %s6, %s4
  // Predicated region
  $region2: #{forward.27} parent=0 // pred_check
    _
  $region3: #{forward.27} parent=0 // pred_check_branch
    %9 = sbr.rel (0) target = $region5
  $region4: #{forward.27} parent=0 // pred_region
    _
  $region5: #{forward.27} parent=0 // pred_fallthru
    _
  // Predicated region
  $region6: #{forward.27} parent=0 // pred_check
    _
  $region7: #{forward.27} parent=0 // pred_check_branch
    %11 = sbr.rel (0) target = $region9
  $region8: #{forward.27} parent=0 // pred_region
    _
  $region9: #{forward.27} parent=0 // pred_fallthru
    _
  // Predicated region
  $region10: #{forward.27} parent=0 // pred_check
    _
  $region11: #{forward.27} parent=0 // pred_check_branch
    %13 = sbr.rel (0) target = $region13
  $region12: #{forward.27} parent=0 // pred_region
    _
  $region13: #{forward.27} parent=0 // pred_fallthru
    _
  %v15 = vld [vmem:[%s0] sm:$0xf]
  %v16 = vld [vmem:[%s0 + $0x4] sm:$0xf]
  %v17 = vld [vmem:[%s0 + $0x8] sm:$0xf]
  %v18 = vld [vmem:[%s0 + $0xc] sm:$0xf]
  %v19 = vld [vmem:[%s0 + $0x10] sm:$0xf]
  %v20 = vld [vmem:[%s0 + $0x14] sm:$0xf]
  %v21 = vld [vmem:[%s0 + $0x18] sm:$0xf]
  %v22 = vld [vmem:[%s0 + $0x1c] sm:$0xf]
  %v23 = vld [vmem:[%s1] sm:$0xf]
  %v24 = vld [vmem:[%s1 + $0x4] sm:$0xf]
  %v25 = vld [vmem:[%s1 + $0x8] sm:$0xf]
  %v26 = vld [vmem:[%s1 + $0xc] sm:$0xf]
  %v27 = vld [vmem:[%s2] sm:$0xff]
  %v28 = vld [vmem:[%s2 + $0x8] sm:$0xff]
  %v29 = vld [vmem:[%s2 + $0x10] sm:$0xff]
  %v30 = vld [vmem:[%s2 + $0x18] sm:$0xff]
  %v31 = vld [vmem:[%s2 + $0x20] sm:$0xff]
  %v32 = vld [vmem:[%s2 + $0x28] sm:$0xff]
  %v33 = vld [vmem:[%s2 + $0x30] sm:$0xff]
  %v34 = vld [vmem:[%s2 + $0x38] sm:$0xff]
  %36 = vset.pattern.permute.xlu0 0
  %37 = vperm.xlu0 %36, %v27
  %v38 = vpop.permute.xlu0 %37
  %41 = vset.pattern.permute.xlu0 0
  %42 = vperm.xlu0 %41, %v28
  %v43 = vpop.permute.xlu0 %42
  %46 = vset.pattern.permute.xlu0 0
  %47 = vperm.xlu0 %46, %v29
  %v48 = vpop.permute.xlu0 %47
  %51 = vset.pattern.permute.xlu0 0
  %52 = vperm.xlu0 %51, %v30
  %v53 = vpop.permute.xlu0 %52
  %56 = vset.pattern.permute.xlu0 0
  %57 = vperm.xlu0 %56, %v31
  %v58 = vpop.permute.xlu0 %57
  %61 = vset.pattern.permute.xlu0 0
  %62 = vperm.xlu0 %61, %v32
  %v63 = vpop.permute.xlu0 %62
  %66 = vset.pattern.permute.xlu0 0
  %67 = vperm.xlu0 %66, %v33
  %v68 = vpop.permute.xlu0 %67
  %71 = vset.pattern.permute.xlu0 0
  %72 = vperm.xlu0 %71, %v34
  %v73 = vpop.permute.xlu0 %72
  %v83 = vunpack.c.l.b16 %v15
  %v84 = vunpack.c.l.b16 %v16
  %v85 = vunpack.c.l.b16 %v17
  %v86 = vunpack.c.l.b16 %v18
  %v87 = vunpack.c.l.b16 %v19
  %v88 = vunpack.c.l.b16 %v20
  %v89 = vunpack.c.l.b16 %v21
  %v90 = vunpack.c.l.b16 %v22
  %v91 = vpack.c.b16 %v84, %v83
  %v92 = vpack.c.b16 %v86, %v85
  %v93 = vpack.c.b16 %v88, %v87
  %v94 = vpack.c.b16 %v90, %v89
  %v99 = vunpack.c.l.b16 %v23
  %v100 = vunpack.c.l.b16 %v24
  %v101 = vunpack.c.l.b16 %v25
  %v102 = vunpack.c.l.b16 %v26
  %v103 = vpack.c.b16 %v100, %v99
  %v104 = vpack.c.b16 %v102, %v101
  %vm107 = vcmask 261120
  %v109 = vsel %vm107, %v91, 0
  %v112 = vsel %vm107, %v92, 0
  %v115 = vsel %vm107, %v93, 0
  %v118 = vsel %vm107, %v94, 0
  %120 = vmatprep.subr.bf16.mxu0 0
  %121 = vmatpush1.bf16.msra.mxu0 0
  %122 = vmatprep.subr.bf16.mxu0 0
  %123 = vmatpush1.bf16.msra.mxu0 0
  %124 = vmatprep.subr.bf16.mxu0 0
  %125 = vmatpush1.bf16.msra.mxu0 0
  %126 = vmatprep.subr.bf16.mxu0 0
  %127 = vmatpush1.bf16.msra.mxu0 0
  %128 = vmatprep.subr.bf16.mxu0 0
  %129 = vmatpush1.bf16.msra.mxu0 0
  %130 = vmatprep.subr.bf16.mxu0 0
  %131 = vmatpush1.bf16.msra.mxu0 0
  %132 = vmatprep.subr.bf16.mxu0 0
  %133 = vmatpush1.bf16.msra.mxu0 %v104
  %134 = vmatprep.subr.bf16.mxu0 0
  %135 = vmatpush1.bf16.msra.mxu0 %v103
  %136 = vmatprep.subr.bf16.mxu0 0
  %137 = vmatpush2.bf16.msra.mxu0 0
  %138 = vmatprep.subr.bf16.mxu0 0
  %139 = vmatpush2.bf16.msra.mxu0 0
  %140 = vmatprep.subr.bf16.mxu0 0
  %141 = vmatpush2.bf16.msra.mxu0 0
  %142 = vmatprep.subr.bf16.mxu0 0
  %143 = vmatpush2.bf16.msra.mxu0 0
  %144 = vmatprep.subr.bf16.mxu0 0
  %145 = vmatpush2.bf16.msra.mxu0 0
  %146 = vmatprep.subr.bf16.mxu0 0
  %147 = vmatpush2.bf16.msra.mxu0 0
  %148 = vmatprep.subr.bf16.mxu0 0
  %149 = vmatpush2.bf16.msra.mxu0 0
  %150 = vmatprep.subr.bf16.mxu0 0
  %151 = vmatpush2.bf16.msra.mxu0 0
  %152 = vmatprep.mubr.bf16.mxu0 0
  %153 = vmatmul.mubr.bf16.gmra.mxu0 %v109
  %v154 = vpop.f32.mrf.mxu0
  %v155 = vadd.f32 %v38, %v154
  %v156 = vpop.f32.mrf.mxu0
  %v157 = vpop.f32.mrf.mxu0
  %v158 = vadd.f32 %v43, %v157
  %v159 = vpop.f32.mrf.mxu0
  %160 = vmatprep.mubr.bf16.mxu0 0
  %161 = vmatmul.mubr.bf16.gmra.mxu0 %v112
  %v162 = vpop.f32.mrf.mxu0
  %v163 = vadd.f32 %v48, %v162
  %v164 = vpop.f32.mrf.mxu0
  %v165 = vpop.f32.mrf.mxu0
  %v166 = vadd.f32 %v53, %v165
  %v167 = vpop.f32.mrf.mxu0
  %168 = vmatprep.mubr.bf16.mxu0 0
  %169 = vmatmul.mubr.bf16.gmra.mxu0 %v115
  %v170 = vpop.f32.mrf.mxu0
  %v171 = vadd.f32 %v58, %v170
  %v172 = vpop.f32.mrf.mxu0
  %v173 = vpop.f32.mrf.mxu0
  %v174 = vadd.f32 %v63, %v173
  %v175 = vpop.f32.mrf.mxu0
  %176 = vmatprep.mubr.bf16.mxu0 0
  %177 = vmatmul.mubr.bf16.gmra.mxu0 %v118
  %v178 = vpop.f32.mrf.mxu0
  %v179 = vadd.f32 %v68, %v178
  %v180 = vpop.f32.mrf.mxu0
  %v181 = vpop.f32.mrf.mxu0
  %v182 = vadd.f32 %v73, %v181
  %v183 = vpop.f32.mrf.mxu0
  %184 = vdwg.mxu0
  %185 = vst [vmem:[%s3] sm:$0xff] %v155
  %186 = vst [vmem:[%s3 + $0x8] sm:$0xff] %v158
  %187 = vst [vmem:[%s3 + $0x10] sm:$0xff] %v163
  %188 = vst [vmem:[%s3 + $0x18] sm:$0xff] %v166
  %189 = vst [vmem:[%s3 + $0x20] sm:$0xff] %v171
  %190 = vst [vmem:[%s3 + $0x28] sm:$0xff] %v174
  %191 = vst [vmem:[%s3 + $0x30] sm:$0xff] %v179
  %192 = vst [vmem:[%s3 + $0x38] sm:$0xff] %v182
  // Predicated region
  $region14: #{forward.27} parent=0 // pred_check
    _
  $region15: #{forward.27} parent=0 // pred_check_branch
    %194 = sbr.rel (0) target = $region17
  $region16: #{forward.27} parent=0 // pred_region
    _
  $region17: #{forward.27} parent=0 // pred_fallthru
    _
  // Predicated region
  $region18: #{forward.27} parent=0 // pred_check
    _
  $region19: #{forward.27} parent=0 // pred_check_branch
    %196 = sbr.rel (0) target = $region21
  $region20: #{forward.27} parent=0 // pred_region
    _
  $region21: #{forward.27} parent=0 // pred_fallthru
    _

// kernel: forward.28
$region0: #{forward.28}
  #allocation0 [shape = 'u32[]', space=smem, size = 0x4, offset = 0x4, fixed_abs, tag = 'smem constant byte address 0x4 - core index']
  #allocation1 [shape = 'u32[144,128]{1,0:T(1,128)}', space=vmem, size = 0x12000, scoped, tag = 'internal scratch']
  %s0 = inlined_call_operand.vmem [shape: bf16[64,576], index: 0, kind: input, shape index: {}]
  %s1 = inlined_call_operand.vmem [shape: bf16[576,128], index: 1, kind: input, shape index: {}]
  %s2 = inlined_call_operand.vmem [shape: f32[64,1], index: 2, kind: input, shape index: {}]
  %s3 = inlined_call_operand.vmem [shape: f32[64,128], index: 3, kind: input, shape index: {}]
  %s4 = inlined_call_operand.vmem [shape: f32[64,128], index: 4, kind: output, shape index: {}]
  %s5 = sld [smem:[#allocation0]]
  $region26: #{forward.28} parent=0
    _
  %s7 = ssub.s32 1, %s5
  %s8 = scalar_select 0, %s7, %s5
  // Predicated region
  $region2: #{forward.28} parent=0 // pred_check
    _
  $region3: #{forward.28} parent=0 // pred_check_branch
    %10 = sbr.rel (0) target = $region5
  $region4: #{forward.28} parent=0 // pred_region
    _
  $region5: #{forward.28} parent=0 // pred_fallthru
    _
  // Predicated region
  $region6: #{forward.28} parent=0 // pred_check
    _
  $region7: #{forward.28} parent=0 // pred_check_branch
    %12 = sbr.rel (0) target = $region9
  $region8: #{forward.28} parent=0 // pred_region
    _
  $region9: #{forward.28} parent=0 // pred_fallthru
    _
  // Predicated region
  $region10: #{forward.28} parent=0 // pred_check
    _
  $region11: #{forward.28} parent=0 // pred_check_branch
    %14 = sbr.rel (0) target = $region13
  $region12: #{forward.28} parent=0 // pred_region
    _
  $region13: #{forward.28} parent=0 // pred_fallthru
    _
  // Predicated region
  $region14: #{forward.28} parent=0 // pred_check
    _
  $region15: #{forward.28} parent=0 // pred_check_branch
    %16 = sbr.rel (0) target = $region17
  $region16: #{forward.28} parent=0 // pred_region
    _
  $region17: #{forward.28} parent=0 // pred_fallthru
    _
  %v18 = vld [vmem:[%s0] sm:$0xff]
  %v19 = vld [vmem:[%s0 + $0x8] sm:$0xff]
  %v20 = vld [vmem:[%s0 + $0x10] sm:$0xf]
  %v21 = vld [vmem:[%s0 + $0x14] sm:$0xff]
  %v22 = vld [vmem:[%s0 + $0x1c] sm:$0xff]
  %v23 = vld [vmem:[%s0 + $0x24] sm:$0xf]
  %v24 = vld [vmem:[%s0 + $0x28] sm:$0xff]
  %v25 = vld [vmem:[%s0 + $0x30] sm:$0xff]
  %v26 = vld [vmem:[%s0 + $0x38] sm:$0xf]
  %v27 = vld [vmem:[%s0 + $0x3c] sm:$0xff]
  %v28 = vld [vmem:[%s0 + $0x44] sm:$0xff]
  %v29 = vld [vmem:[%s0 + $0x4c] sm:$0xf]
  %v30 = vld [vmem:[%s0 + $0x50] sm:$0xff]
  %v31 = vld [vmem:[%s0 + $0x58] sm:$0xff]
  %v32 = vld [vmem:[%s0 + $0x60] sm:$0xf]
  %v33 = vld [vmem:[%s0 + $0x64] sm:$0xff]
  %v34 = vld [vmem:[%s0 + $0x6c] sm:$0xff]
  %v35 = vld [vmem:[%s0 + $0x74] sm:$0xf]
  %v36 = vld [vmem:[%s0 + $0x78] sm:$0xff]
  %v37 = vld [vmem:[%s0 + $0x80] sm:$0xff]
  %v38 = vld [vmem:[%s0 + $0x88] sm:$0xf]
  %v39 = vld [vmem:[%s0 + $0x8c] sm:$0xff]
  %v40 = vld [vmem:[%s0 + $0x94] sm:$0xff]
  %v41 = vld [vmem:[%s0 + $0x9c] sm:$0xf]
  %v42 = vld [vmem:[%s1] sm:$0xf]
  %v43 = vld [vmem:[%s1 + $0x4] sm:$0xf]
  %v44 = vld [vmem:[%s1 + $0x8] sm:$0xf]
  %v45 = vld [vmem:[%s1 + $0xc] sm:$0xf]
  %v46 = vld [vmem:[%s1 + $0x10] sm:$0xf]
  %v47 = vld [vmem:[%s1 + $0x14] sm:$0xf]
  %v48 = vld [vmem:[%s1 + $0x18] sm:$0xf]
  %v49 = vld [vmem:[%s1 + $0x1c] sm:$0xf]
  %v50 = vld [vmem:[%s1 + $0x20] sm:$0xf]
  %v51 = vld [vmem:[%s1 + $0x24] sm:$0xf]
  %v52 = vld [vmem:[%s1 + $0x28] sm:$0xf]
  %v53 = vld [vmem:[%s1 + $0x2c] sm:$0xf]
  %v54 = vld [vmem:[%s1 + $0x30] sm:$0xf]
  %v55 = vld [vmem:[%s1 + $0x34] sm:$0xf]
  %v56 = vld [vmem:[%s1 + $0x38] sm:$0xf]
  %v57 = vld [vmem:[%s1 + $0x3c] sm:$0xf]
  %v58 = vld [vmem:[%s1 + $0x40] sm:$0xf]
  %v59 = vld [vmem:[%s1 + $0x44] sm:$0xf]
  %v60 = vld [vmem:[%s1 + $0x48] sm:$0xf]
  %v61 = vld [vmem:[%s1 + $0x4c] sm:$0xf]
  %v62 = vld [vmem:[%s1 + $0x50] sm:$0xf]
  %v63 = vld [vmem:[%s1 + $0x54] sm:$0xf]
  %v64 = vld [vmem:[%s1 + $0x58] sm:$0xf]
  %v65 = vld [vmem:[%s1 + $0x5c] sm:$0xf]
  %v66 = vld [vmem:[%s1 + $0x60] sm:$0xf]
  %v67 = vld [vmem:[%s1 + $0x64] sm:$0xf]
  %v68 = vld [vmem:[%s1 + $0x68] sm:$0xf]
  %v69 = vld [vmem:[%s1 + $0x6c] sm:$0xf]
  %v70 = vld [vmem:[%s1 + $0x70] sm:$0xf]
  %v71 = vld [vmem:[%s1 + $0x74] sm:$0xf]
  %v72 = vld [vmem:[%s1 + $0x78] sm:$0xf]
  %v73 = vld [vmem:[%s1 + $0x7c] sm:$0xf]
  %v74 = vld [vmem:[%s1 + $0x80] sm:$0xf]
  %v75 = vld [vmem:[%s1 + $0x84] sm:$0xf]
  %v76 = vld [vmem:[%s1 + $0x88] sm:$0xf]
  %v77 = vld [vmem:[%s1 + $0x8c] sm:$0xf]
  %v78 = vld [vmem:[%s1 + $0x90] sm:$0xf]
  %v79 = vld [vmem:[%s1 + $0x94] sm:$0xf]
  %v80 = vld [vmem:[%s1 + $0x98] sm:$0xf]
  %v81 = vld [vmem:[%s1 + $0x9c] sm:$0xf]
  %v82 = vld [vmem:[%s1 + $0xa0] sm:$0xf]
  %v83 = vld [vmem:[%s1 + $0xa4] sm:$0xf]
  %v84 = vld [vmem:[%s1 + $0xa8] sm:$0xf]
  %v85 = vld [vmem:[%s1 + $0xac] sm:$0xf]
  %v86 = vld [vmem:[%s1 + $0xb0] sm:$0xf]
  %v87 = vld [vmem:[%s1 + $0xb4] sm:$0xf]
  %v88 = vld [vmem:[%s1 + $0xb8] sm:$0xf]
  %v89 = vld [vmem:[%s1 + $0xbc] sm:$0xf]
  %v90 = vld [vmem:[%s1 + $0xc0] sm:$0xf]
  %v91 = vld [vmem:[%s1 + $0xc4] sm:$0xf]
  %v92 = vld [vmem:[%s1 + $0xc8] sm:$0xf]
  %v93 = vld [vmem:[%s1 + $0xcc] sm:$0xf]
  %v94 = vld [vmem:[%s1 + $0xd0] sm:$0xf]
  %v95 = vld [vmem:[%s1 + $0xd4] sm:$0xf]
  %v96 = vld [vmem:[%s1 + $0xd8] sm:$0xf]
  %v97 = vld [vmem:[%s1 + $0xdc] sm:$0xf]
  %v98 = vld [vmem:[%s1 + $0xe0] sm:$0xf]
  %v99 = vld [vmem:[%s1 + $0xe4] sm:$0xf]
  %v100 = vld [vmem:[%s1 + $0xe8] sm:$0xf]
  %v101 = vld [vmem:[%s1 + $0xec] sm:$0xf]
  %v102 = vld [vmem:[%s1 + $0xf0] sm:$0xf]
  %v103 = vld [vmem:[%s1 + $0xf4] sm:$0xf]
  %v104 = vld [vmem:[%s1 + $0xf8] sm:$0xf]
  %v105 = vld [vmem:[%s1 + $0xfc] sm:$0xf]
  %v106 = vld [vmem:[%s1 + $0x100] sm:$0xf]
  %v107 = vld [vmem:[%s1 + $0x104] sm:$0xf]
  %v108 = vld [vmem:[%s1 + $0x108] sm:$0xf]
  %v109 = vld [vmem:[%s1 + $0x10c] sm:$0xf]
  %v110 = vld [vmem:[%s1 + $0x110] sm:$0xf]
  %v111 = vld [vmem:[%s1 + $0x114] sm:$0xf]
  %v112 = vld [vmem:[%s1 + $0x118] sm:$0xf]
  %v113 = vld [vmem:[%s1 + $0x11c] sm:$0xf]
  %v114 = vld [vmem:[%s2] sm:$0xff]
  %v115 = vld [vmem:[%s2 + $0x8] sm:$0xff]
  %v116 = vld [vmem:[%s2 + $0x10] sm:$0xff]
  %v117 = vld [vmem:[%s2 + $0x18] sm:$0xff]
  %v118 = vld [vmem:[%s2 + $0x20] sm:$0xff]
  %v119 = vld [vmem:[%s2 + $0x28] sm:$0xff]
  %v120 = vld [vmem:[%s2 + $0x30] sm:$0xff]
  %v121 = vld [vmem:[%s2 + $0x38] sm:$0xff]
  %123 = vset.pattern.permute.xlu0 0
  %124 = vperm.xlu0 %123, %v114
  %v125 = vpop.permute.xlu0 %124
  %128 = vset.pattern.permute.xlu0 0
  %129 = vperm.xlu0 %128, %v115
  %v130 = vpop.permute.xlu0 %129
  %133 = vset.pattern.permute.xlu0 0
  %134 = vperm.xlu0 %133, %v116
  %v135 = vpop.permute.xlu0 %134
  %138 = vset.pattern.permute.xlu0 0
  %139 = vperm.xlu0 %138, %v117
  %v140 = vpop.permute.xlu0 %139
  %143 = vset.pattern.permute.xlu0 0
  %144 = vperm.xlu0 %143, %v118
  %v145 = vpop.permute.xlu0 %144
  %148 = vset.pattern.permute.xlu0 0
  %149 = vperm.xlu0 %148, %v119
  %v150 = vpop.permute.xlu0 %149
  %153 = vset.pattern.permute.xlu0 0
  %154 = vperm.xlu0 %153, %v120
  %v155 = vpop.permute.xlu0 %154
  %158 = vset.pattern.permute.xlu0 0
  %159 = vperm.xlu0 %158, %v121
  %v160 = vpop.permute.xlu0 %159
  %v186 = vunpack.c.l.b16 %v18
  %v187 = vunpack.c.h.b16 %v18
  %v188 = vunpack.c.l.b16 %v19
  %v189 = vunpack.c.h.b16 %v19
  %v190 = vunpack.c.l.b16 %v20
  %v191 = vunpack.c.l.b16 %v21
  %v192 = vunpack.c.h.b16 %v21
  %v193 = vunpack.c.l.b16 %v22
  %v194 = vunpack.c.h.b16 %v22
  %v195 = vunpack.c.l.b16 %v23
  %v196 = vunpack.c.l.b16 %v24
  %v197 = vunpack.c.h.b16 %v24
  %v198 = vunpack.c.l.b16 %v25
  %v199 = vunpack.c.h.b16 %v25
  %v200 = vunpack.c.l.b16 %v26
  %v201 = vunpack.c.l.b16 %v27
  %v202 = vunpack.c.h.b16 %v27
  %v203 = vunpack.c.l.b16 %v28
  %v204 = vunpack.c.h.b16 %v28
  %v205 = vunpack.c.l.b16 %v29
  %v206 = vunpack.c.l.b16 %v30
  %v207 = vunpack.c.h.b16 %v30
  %v208 = vunpack.c.l.b16 %v31
  %v209 = vunpack.c.h.b16 %v31
  %v210 = vunpack.c.l.b16 %v32
  %v211 = vunpack.c.l.b16 %v33
  %v212 = vunpack.c.h.b16 %v33
  %v213 = vunpack.c.l.b16 %v34
  %v214 = vunpack.c.h.b16 %v34
  %v215 = vunpack.c.l.b16 %v35
  %v216 = vunpack.c.l.b16 %v36
  %v217 = vunpack.c.h.b16 %v36
  %v218 = vunpack.c.l.b16 %v37
  %v219 = vunpack.c.h.b16 %v37
  %v220 = vunpack.c.l.b16 %v38
  %v221 = vunpack.c.l.b16 %v39
  %v222 = vunpack.c.h.b16 %v39
  %v223 = vunpack.c.l.b16 %v40
  %v224 = vunpack.c.h.b16 %v40
  %v225 = vunpack.c.l.b16 %v41
  %v226 = vpack.c.b16 %v191, %v186
  %v227 = vpack.c.b16 %v192, %v187
  %v228 = vpack.c.b16 %v193, %v188
  %v229 = vpack.c.b16 %v194, %v189
  %v230 = vpack.c.b16 %v195, %v190
  %v231 = vpack.c.b16 %v201, %v196
  %v232 = vpack.c.b16 %v202, %v197
  %v233 = vpack.c.b16 %v203, %v198
  %v234 = vpack.c.b16 %v204, %v199
  %v235 = vpack.c.b16 %v205, %v200
  %v236 = vpack.c.b16 %v211, %v206
  %v237 = vpack.c.b16 %v212, %v207
  %v238 = vpack.c.b16 %v213, %v208
  %v239 = vpack.c.b16 %v214, %v209
  %v240 = vpack.c.b16 %v215, %v210
  %v241 = vpack.c.b16 %v221, %v216
  %v242 = vpack.c.b16 %v222, %v217
  %v243 = vpack.c.b16 %v223, %v218
  %v244 = vpack.c.b16 %v224, %v219
  %v245 = vpack.c.b16 %v225, %v220
  %v334 = vunpack.c.l.b16 %v42
  %v335 = vunpack.c.l.b16 %v43
  %v336 = vunpack.c.l.b16 %v44
  %v337 = vunpack.c.l.b16 %v45
  %v338 = vunpack.c.l.b16 %v46
  %v339 = vunpack.c.l.b16 %v47
  %v340 = vunpack.c.l.b16 %v48
  %v341 = vunpack.c.l.b16 %v49
  %v342 = vunpack.c.l.b16 %v50
  %v343 = vunpack.c.l.b16 %v51
  %v344 = vunpack.c.l.b16 %v52
  %v345 = vunpack.c.l.b16 %v53
  %v346 = vunpack.c.l.b16 %v54
  %v347 = vunpack.c.l.b16 %v55
  %v348 = vunpack.c.l.b16 %v56
  %v349 = vunpack.c.l.b16 %v57
  %v350 = vunpack.c.l.b16 %v58
  %v351 = vunpack.c.l.b16 %v59
  %v352 = vunpack.c.l.b16 %v60
  %v353 = vunpack.c.l.b16 %v61
  %v354 = vunpack.c.l.b16 %v62
  %v355 = vunpack.c.l.b16 %v63
  %v356 = vunpack.c.l.b16 %v64
  %v357 = vunpack.c.l.b16 %v65
  %v358 = vunpack.c.l.b16 %v66
  %v359 = vunpack.c.l.b16 %v67
  %v360 = vunpack.c.l.b16 %v68
  %v361 = vunpack.c.l.b16 %v69
  %v362 = vunpack.c.l.b16 %v70
  %v363 = vunpack.c.l.b16 %v71
  %v364 = vunpack.c.l.b16 %v72
  %v365 = vunpack.c.l.b16 %v73
  %v366 = vunpack.c.l.b16 %v74
  %v367 = vunpack.c.l.b16 %v75
  %v368 = vunpack.c.l.b16 %v76
  %v369 = vunpack.c.l.b16 %v77
  %v370 = vunpack.c.l.b16 %v78
  %v371 = vunpack.c.l.b16 %v79
  %v372 = vunpack.c.l.b16 %v80
  %v373 = vunpack.c.l.b16 %v81
  %v374 = vunpack.c.l.b16 %v82
  %v375 = vunpack.c.l.b16 %v83
  %v376 = vunpack.c.l.b16 %v84
  %v377 = vunpack.c.l.b16 %v85
  %v378 = vunpack.c.l.b16 %v86
  %v379 = vunpack.c.l.b16 %v87
  %v380 = vunpack.c.l.b16 %v88
  %v381 = vunpack.c.l.b16 %v89
  %v382 = vunpack.c.l.b16 %v90
  %v383 = vunpack.c.l.b16 %v91
  %v384 = vunpack.c.l.b16 %v92
  %v385 = vunpack.c.l.b16 %v93
  %v386 = vunpack.c.l.b16 %v94
  %v387 = vunpack.c.l.b16 %v95
  %v388 = vunpack.c.l.b16 %v96
  %v389 = vunpack.c.l.b16 %v97
  %v390 = vunpack.c.l.b16 %v98
  %v391 = vunpack.c.l.b16 %v99
  %v392 = vunpack.c.l.b16 %v100
  %v393 = vunpack.c.l.b16 %v101
  %v394 = vunpack.c.l.b16 %v102
  %v395 = vunpack.c.l.b16 %v103
  %v396 = vunpack.c.l.b16 %v104
  %v397 = vunpack.c.l.b16 %v105
  %v398 = vunpack.c.l.b16 %v106
  %v399 = vunpack.c.l.b16 %v107
  %v400 = vunpack.c.l.b16 %v108
  %v401 = vunpack.c.l.b16 %v109
  %v402 = vunpack.c.l.b16 %v110
  %v403 = vunpack.c.l.b16 %v111
  %v404 = vunpack.c.l.b16 %v112
  %v405 = vunpack.c.l.b16 %v113
  %v406 = vpack.c.b16 %v335, %v334
  %v407 = vpack.c.b16 %v337, %v336
  %v408 = vpack.c.b16 %v339, %v338
  %v409 = vpack.c.b16 %v341, %v340
  %v410 = vpack.c.b16 %v343, %v342
  %v411 = vpack.c.b16 %v345, %v344
  %v412 = vpack.c.b16 %v347, %v346
  %v413 = vpack.c.b16 %v349, %v348
  %v414 = vpack.c.b16 %v351, %v350
  %v415 = vpack.c.b16 %v353, %v352
  %v416 = vpack.c.b16 %v355, %v354
  %v417 = vpack.c.b16 %v357, %v356
  %v418 = vpack.c.b16 %v359, %v358
  %v419 = vpack.c.b16 %v361, %v360
  %v420 = vpack.c.b16 %v363, %v362
  %v421 = vpack.c.b16 %v365, %v364
  %v422 = vpack.c.b16 %v367, %v366
  %v423 = vpack.c.b16 %v369, %v368
  %v424 = vpack.c.b16 %v371, %v370
  %v425 = vpack.c.b16 %v373, %v372
  %v426 = vpack.c.b16 %v375, %v374
  %v427 = vpack.c.b16 %v377, %v376
  %v428 = vpack.c.b16 %v379, %v378
  %v429 = vpack.c.b16 %v381, %v380
  %v430 = vpack.c.b16 %v383, %v382
  %v431 = vpack.c.b16 %v385, %v384
  %v432 = vpack.c.b16 %v387, %v386
  %v433 = vpack.c.b16 %v389, %v388
  %v434 = vpack.c.b16 %v391, %v390
  %v435 = vpack.c.b16 %v393, %v392
  %v436 = vpack.c.b16 %v395, %v394
  %v437 = vpack.c.b16 %v397, %v396
  %v438 = vpack.c.b16 %v399, %v398
  %v439 = vpack.c.b16 %v401, %v400
  %v440 = vpack.c.b16 %v403, %v402
  %v441 = vpack.c.b16 %v405, %v404
  %vm478 = vcmask 523264
  %v480 = vsel %vm478, %v230, 0
  %v483 = vsel %vm478, %v235, 0
  %v486 = vsel %vm478, %v240, 0
  %v489 = vsel %vm478, %v245, 0
  %491 = vmatprep.subr.bf16.mxu0 0
  %492 = vmatpush1.bf16.msra.mxu0 %v413
  %493 = vmatprep.subr.bf16.mxu0 0
  %494 = vmatpush1.bf16.msra.mxu0 %v412
  %495 = vmatprep.subr.bf16.mxu0 0
  %496 = vmatpush1.bf16.msra.mxu0 %v411
  %497 = vmatprep.subr.bf16.mxu0 0
  %498 = vmatpush1.bf16.msra.mxu0 %v410
  %499 = vmatprep.subr.bf16.mxu0 0
  %500 = vmatpush1.bf16.msra.mxu0 %v409
  %501 = vmatprep.subr.bf16.mxu0 0
  %502 = vmatpush1.bf16.msra.mxu0 %v408
  %503 = vmatprep.subr.bf16.mxu0 0
  %504 = vmatpush1.bf16.msra.mxu0 %v407
  %505 = vmatprep.subr.bf16.mxu0 0
  %506 = vmatpush1.bf16.msra.mxu0 %v406
  %507 = vmatprep.subr.bf16.mxu0 0
  %508 = vmatpush2.bf16.msra.mxu0 %v421
  %509 = vmatprep.subr.bf16.mxu0 0
  %510 = vmatpush2.bf16.msra.mxu0 %v420
  %511 = vmatprep.subr.bf16.mxu0 0
  %512 = vmatpush2.bf16.msra.mxu0 %v419
  %513 = vmatprep.subr.bf16.mxu0 0
  %514 = vmatpush2.bf16.msra.mxu0 %v418
  %515 = vmatprep.subr.bf16.mxu0 0
  %516 = vmatpush2.bf16.msra.mxu0 %v417
  %517 = vmatprep.subr.bf16.mxu0 0
  %518 = vmatpush2.bf16.msra.mxu0 %v416
  %519 = vmatprep.subr.bf16.mxu0 0
  %520 = vmatpush2.bf16.msra.mxu0 %v415
  %521 = vmatprep.subr.bf16.mxu0 0
  %522 = vmatpush2.bf16.msra.mxu0 %v414
  %523 = vmatprep.mubr.bf16.mxu0 %v227
  %524 = vmatmul.mubr.bf16.gmra.mxu0 %v226
  %v525 = vpop.f32.mrf.mxu0
  %v526 = vadd.f32 %v125, %v525
  %v527 = vpop.f32.mrf.mxu0
  %v528 = vpop.f32.mrf.mxu0
  %v529 = vadd.f32 %v130, %v528
  %v530 = vpop.f32.mrf.mxu0
  %531 = vmatprep.mubr.bf16.mxu0 %v232
  %532 = vmatmul.mubr.bf16.gmra.mxu0 %v231
  %v533 = vpop.f32.mrf.mxu0
  %v534 = vadd.f32 %v135, %v533
  %v535 = vpop.f32.mrf.mxu0
  %v536 = vpop.f32.mrf.mxu0
  %v537 = vadd.f32 %v140, %v536
  %v538 = vpop.f32.mrf.mxu0
  %539 = vmatprep.mubr.bf16.mxu0 %v237
  %540 = vmatmul.mubr.bf16.gmra.mxu0 %v236
  %v541 = vpop.f32.mrf.mxu0
  %v542 = vadd.f32 %v145, %v541
  %v543 = vpop.f32.mrf.mxu0
  %v544 = vpop.f32.mrf.mxu0
  %v545 = vadd.f32 %v150, %v544
  %v546 = vpop.f32.mrf.mxu0
  %547 = vmatprep.mubr.bf16.mxu0 %v242
  %548 = vmatmul.mubr.bf16.gmra.mxu0 %v241
  %v549 = vpop.f32.mrf.mxu0
  %v550 = vadd.f32 %v155, %v549
  %v551 = vpop.f32.mrf.mxu0
  %v552 = vpop.f32.mrf.mxu0
  %v553 = vadd.f32 %v160, %v552
  %v554 = vpop.f32.mrf.mxu0
  %555 = vdwg.mxu0
  %556 = vmatprep.subr.bf16.mxu0 0
  %557 = vmatpush1.bf16.msra.mxu0 %v429
  %558 = vmatprep.subr.bf16.mxu0 0
  %559 = vmatpush1.bf16.msra.mxu0 %v428
  %560 = vmatprep.subr.bf16.mxu0 0
  %561 = vmatpush1.bf16.msra.mxu0 %v427
  %562 = vmatprep.subr.bf16.mxu0 0
  %563 = vmatpush1.bf16.msra.mxu0 %v426
  %564 = vmatprep.subr.bf16.mxu0 0
  %565 = vmatpush1.bf16.msra.mxu0 %v425
  %566 = vmatprep.subr.bf16.mxu0 0
  %567 = vmatpush1.bf16.msra.mxu0 %v424
  %568 = vmatprep.subr.bf16.mxu0 0
  %569 = vmatpush1.bf16.msra.mxu0 %v423
  %570 = vmatprep.subr.bf16.mxu0 0
  %571 = vmatpush1.bf16.msra.mxu0 %v422
  %572 = vmatprep.subr.bf16.mxu0 0
  %573 = vmatpush2.bf16.msra.mxu0 %v437
  %574 = vmatprep.subr.bf16.mxu0 0
  %575 = vmatpush2.bf16.msra.mxu0 %v436
  %576 = vmatprep.subr.bf16.mxu0 0
  %577 = vmatpush2.bf16.msra.mxu0 %v435
  %578 = vmatprep.subr.bf16.mxu0 0
  %579 = vmatpush2.bf16.msra.mxu0 %v434
  %580 = vmatprep.subr.bf16.mxu0 0
  %581 = vmatpush2.bf16.msra.mxu0 %v433
  %582 = vmatprep.subr.bf16.mxu0 0
  %583 = vmatpush2.bf16.msra.mxu0 %v432
  %584 = vmatprep.subr.bf16.mxu0 0
  %585 = vmatpush2.bf16.msra.mxu0 %v431
  %586 = vmatprep.subr.bf16.mxu0 0
  %587 = vmatpush2.bf16.msra.mxu0 %v430
  %588 = vmatprep.mubr.bf16.mxu0 %v229
  %589 = vmatmul.mubr.bf16.gmra.mxu0 %v228
  %v590 = vpop.f32.mrf.mxu0
  %v591 = vadd.f32 %v526, %v590
  %v592 = vpop.f32.mrf.mxu0
  %v593 = vpop.f32.mrf.mxu0
  %v594 = vadd.f32 %v529, %v593
  %v595 = vpop.f32.mrf.mxu0
  %596 = vmatprep.mubr.bf16.mxu0 %v234
  %597 = vmatmul.mubr.bf16.gmra.mxu0 %v233
  %v598 = vpop.f32.mrf.mxu0
  %v599 = vadd.f32 %v534, %v598
  %v600 = vpop.f32.mrf.mxu0
  %v601 = vpop.f32.mrf.mxu0
  %v602 = vadd.f32 %v537, %v601
  %v603 = vpop.f32.mrf.mxu0
  %604 = vmatprep.mubr.bf16.mxu0 %v239
  %605 = vmatmul.mubr.bf16.gmra.mxu0 %v238
  %v606 = vpop.f32.mrf.mxu0
  %v607 = vadd.f32 %v542, %v606
  %v608 = vpop.f32.mrf.mxu0
  %v609 = vpop.f32.mrf.mxu0
  %v610 = vadd.f32 %v545, %v609
  %v611 = vpop.f32.mrf.mxu0
  %612 = vmatprep.mubr.bf16.mxu0 %v244
  %613 = vmatmul.mubr.bf16.gmra.mxu0 %v243
  %v614 = vpop.f32.mrf.mxu0
  %v615 = vadd.f32 %v550, %v614
  %v616 = vpop.f32.mrf.mxu0
  %v617 = vpop.f32.mrf.mxu0
  %v618 = vadd.f32 %v553, %v617
  %v619 = vpop.f32.mrf.mxu0
  %620 = vdwg.mxu0
  %621 = vmatprep.subr.bf16.mxu0 0
  %622 = vmatpush1.bf16.msra.mxu0 0
  %623 = vmatprep.subr.bf16.mxu0 0
  %624 = vmatpush1.bf16.msra.mxu0 0
  %625 = vmatprep.subr.bf16.mxu0 0
  %626 = vmatpush1.bf16.msra.mxu0 0
  %627 = vmatprep.subr.bf16.mxu0 0
  %628 = vmatpush1.bf16.msra.mxu0 0
  %629 = vmatprep.subr.bf16.mxu0 0
  %630 = vmatpush1.bf16.msra.mxu0 %v441
  %631 = vmatprep.subr.bf16.mxu0 0
  %632 = vmatpush1.bf16.msra.mxu0 %v440
  %633 = vmatprep.subr.bf16.mxu0 0
  %634 = vmatpush1.bf16.msra.mxu0 %v439
  %635 = vmatprep.subr.bf16.mxu0 0
  %636 = vmatpush1.bf16.msra.mxu0 %v438
  %637 = vmatprep.subr.bf16.mxu0 0
  %638 = vmatpush2.bf16.msra.mxu0 0
  %639 = vmatprep.subr.bf16.mxu0 0
  %640 = vmatpush2.bf16.msra.mxu0 0
  %641 = vmatprep.subr.bf16.mxu0 0
  %642 = vmatpush2.bf16.msra.mxu0 0
  %643 = vmatprep.subr.bf16.mxu0 0
  %644 = vmatpush2.bf16.msra.mxu0 0
  %645 = vmatprep.subr.bf16.mxu0 0
  %646 = vmatpush2.bf16.msra.mxu0 0
  %647 = vmatprep.subr.bf16.mxu0 0
  %648 = vmatpush2.bf16.msra.mxu0 0
  %649 = vmatprep.subr.bf16.mxu0 0
  %650 = vmatpush2.bf16.msra.mxu0 0
  %651 = vmatprep.subr.bf16.mxu0 0
  %652 = vmatpush2.bf16.msra.mxu0 0
  %653 = vmatprep.mubr.bf16.mxu0 0
  %654 = vmatmul.mubr.bf16.gmra.mxu0 %v480
  %v655 = vpop.f32.mrf.mxu0
  %v656 = vadd.f32 %v591, %v655
  %v657 = vpop.f32.mrf.mxu0
  %v658 = vpop.f32.mrf.mxu0
  %v659 = vadd.f32 %v594, %v658
  %v660 = vpop.f32.mrf.mxu0
  %661 = vmatprep.mubr.bf16.mxu0 0
  %662 = vmatmul.mubr.bf16.gmra.mxu0 %v483
  %v663 = vpop.f32.mrf.mxu0
  %v664 = vadd.f32 %v599, %v663
  %v665 = vpop.f32.mrf.mxu0
  %v666 = vpop.f32.mrf.mxu0
  %v667 = vadd.f32 %v602, %v666
  %v668 = vpop.f32.mrf.mxu0
  %669 = vmatprep.mubr.bf16.mxu0 0
  %670 = vmatmul.mubr.bf16.gmra.mxu0 %v486
  %v671 = vpop.f32.mrf.mxu0
  %v672 = vadd.f32 %v607, %v671
  %v673 = vpop.f32.mrf.mxu0
  %v674 = vpop.f32.mrf.mxu0
  %v675 = vadd.f32 %v610, %v674
  %v676 = vpop.f32.mrf.mxu0
  %677 = vmatprep.mubr.bf16.mxu0 0
  %678 = vmatmul.mubr.bf16.gmra.mxu0 %v489
  %v679 = vpop.f32.mrf.mxu0
  %v680 = vadd.f32 %v615, %v679
  %v681 = vpop.f32.mrf.mxu0
  %v682 = vpop.f32.mrf.mxu0
  %v683 = vadd.f32 %v618, %v682
  %v684 = vpop.f32.mrf.mxu0
  %685 = vdwg.mxu0
  %v686 = vld [vmem:[%s3] sm:$0xff]
  %v687 = vld [vmem:[%s3 + $0x8] sm:$0xff]
  %v688 = vld [vmem:[%s3 + $0x10] sm:$0xff]
  %v689 = vld [vmem:[%s3 + $0x18] sm:$0xff]
  %v690 = vld [vmem:[%s3 + $0x20] sm:$0xff]
  %v691 = vld [vmem:[%s3 + $0x28] sm:$0xff]
  %v692 = vld [vmem:[%s3 + $0x30] sm:$0xff]
  %v693 = vld [vmem:[%s3 + $0x38] sm:$0xff]
  %v694 = vadd.f32 %v656, %v686
  %v695 = vadd.f32 %v659, %v687
  %v696 = vadd.f32 %v664, %v688
  %v697 = vadd.f32 %v667, %v689
  %v698 = vadd.f32 %v672, %v690
  %v699 = vadd.f32 %v675, %v691
  %v700 = vadd.f32 %v680, %v692
  %v701 = vadd.f32 %v683, %v693
  %v702 = vmax.f32 %v694, 0.0
  %v703 = vmax.f32 %v695, 0.0
  %v704 = vmax.f32 %v696, 0.0
  %v705 = vmax.f32 %v697, 0.0
  %v706 = vmax.f32 %v698, 0.0
  %v707 = vmax.f32 %v699, 0.0
  %v708 = vmax.f32 %v700, 0.0
  %v709 = vmax.f32 %v701, 0.0
  %710 = vst [vmem:[%s4] sm:$0xff] %v702
  %711 = vst [vmem:[%s4 + $0x8] sm:$0xff] %v703
  %712 = vst [vmem:[%s4 + $0x10] sm:$0xff] %v704
  %713 = vst [vmem:[%s4 + $0x18] sm:$0xff] %v705
  %714 = vst [vmem:[%s4 + $0x20] sm:$0xff] %v706
  %715 = vst [vmem:[%s4 + $0x28] sm:$0xff] %v707
  %716 = vst [vmem:[%s4 + $0x30] sm:$0xff] %v708
  %717 = vst [vmem:[%s4 + $0x38] sm:$0xff] %v709
  // Predicated region
  $region18: #{forward.28} parent=0 // pred_check
    _
  $region19: #{forward.28} parent=0 // pred_check_branch
    %719 = sbr.rel (0) target = $region21
  $region20: #{forward.28} parent=0 // pred_region
    _
  $region21: #{forward.28} parent=0 // pred_fallthru
    _
  // Predicated region
  $region22: #{forward.28} parent=0 // pred_check
    _
  $region23: #{forward.28} parent=0 // pred_check_branch
    %721 = sbr.rel (0) target = $region25
  $region24: #{forward.28} parent=0 // pred_region
    _
  $region25: #{forward.28} parent=0 // pred_fallthru
    _

// kernel: forward.29
$region0: #{forward.29}
  #allocation0 [shape = 'u32[]', space=smem, size = 0x4, offset = 0x4, fixed_abs, tag = 'smem constant byte address 0x4 - core index']
  #allocation1 [shape = 'u32[144,128]{1,0:T(1,128)}', space=vmem, size = 0x12000, scoped, tag = 'internal scratch']
  %s0 = inlined_call_operand.vmem [shape: bf16[64,576], index: 0, kind: input, shape index: {}]
  %s1 = inlined_call_operand.vmem [shape: bf16[576,128], index: 1, kind: input, shape index: {}]
  %s2 = inlined_call_operand.vmem [shape: f32[64,1], index: 2, kind: input, shape index: {}]
  %s3 = inlined_call_operand.vmem [shape: f32[64,128], index: 3, kind: output, shape index: {}]
  %s4 = sld [smem:[#allocation0]]
  $region22: #{forward.29} parent=0
    _
  %s6 = ssub.s32 1, %s4
  %s7 = scalar_select 0, %s6, %s4
  // Predicated region
  $region2: #{forward.29} parent=0 // pred_check
    _
  $region3: #{forward.29} parent=0 // pred_check_branch
    %9 = sbr.rel (0) target = $region5
  $region4: #{forward.29} parent=0 // pred_region
    _
  $region5: #{forward.29} parent=0 // pred_fallthru
    _
  // Predicated region
  $region6: #{forward.29} parent=0 // pred_check
    _
  $region7: #{forward.29} parent=0 // pred_check_branch
    %11 = sbr.rel (0) target = $region9
  $region8: #{forward.29} parent=0 // pred_region
    _
  $region9: #{forward.29} parent=0 // pred_fallthru
    _
  // Predicated region
  $region10: #{forward.29} parent=0 // pred_check
    _
  $region11: #{forward.29} parent=0 // pred_check_branch
    %13 = sbr.rel (0) target = $region13
  $region12: #{forward.29} parent=0 // pred_region
    _
  $region13: #{forward.29} parent=0 // pred_fallthru
    _
  %v15 = vld [vmem:[%s0] sm:$0xff]
  %v16 = vld [vmem:[%s0 + $0x8] sm:$0xff]
  %v17 = vld [vmem:[%s0 + $0x10] sm:$0xf]
  %v18 = vld [vmem:[%s0 + $0x14] sm:$0xff]
  %v19 = vld [vmem:[%s0 + $0x1c] sm:$0xff]
  %v20 = vld [vmem:[%s0 + $0x24] sm:$0xf]
  %v21 = vld [vmem:[%s0 + $0x28] sm:$0xff]
  %v22 = vld [vmem:[%s0 + $0x30] sm:$0xff]
  %v23 = vld [vmem:[%s0 + $0x38] sm:$0xf]
  %v24 = vld [vmem:[%s0 + $0x3c] sm:$0xff]
  %v25 = vld [vmem:[%s0 + $0x44] sm:$0xff]
  %v26 = vld [vmem:[%s0 + $0x4c] sm:$0xf]
  %v27 = vld [vmem:[%s0 + $0x50] sm:$0xff]
  %v28 = vld [vmem:[%s0 + $0x58] sm:$0xff]
  %v29 = vld [vmem:[%s0 + $0x60] sm:$0xf]
  %v30 = vld [vmem:[%s0 + $0x64] sm:$0xff]
  %v31 = vld [vmem:[%s0 + $0x6c] sm:$0xff]
  %v32 = vld [vmem:[%s0 + $0x74] sm:$0xf]
  %v33 = vld [vmem:[%s0 + $0x78] sm:$0xff]
  %v34 = vld [vmem:[%s0 + $0x80] sm:$0xff]
  %v35 = vld [vmem:[%s0 + $0x88] sm:$0xf]
  %v36 = vld [vmem:[%s0 + $0x8c] sm:$0xff]
  %v37 = vld [vmem:[%s0 + $0x94] sm:$0xff]
  %v38 = vld [vmem:[%s0 + $0x9c] sm:$0xf]
  %v39 = vld [vmem:[%s1] sm:$0xf]
  %v40 = vld [vmem:[%s1 + $0x4] sm:$0xf]
  %v41 = vld [vmem:[%s1 + $0x8] sm:$0xf]
  %v42 = vld [vmem:[%s1 + $0xc] sm:$0xf]
  %v43 = vld [vmem:[%s1 + $0x10] sm:$0xf]
  %v44 = vld [vmem:[%s1 + $0x14] sm:$0xf]
  %v45 = vld [vmem:[%s1 + $0x18] sm:$0xf]
  %v46 = vld [vmem:[%s1 + $0x1c] sm:$0xf]
  %v47 = vld [vmem:[%s1 + $0x20] sm:$0xf]
  %v48 = vld [vmem:[%s1 + $0x24] sm:$0xf]
  %v49 = vld [vmem:[%s1 + $0x28] sm:$0xf]
  %v50 = vld [vmem:[%s1 + $0x2c] sm:$0xf]
  %v51 = vld [vmem:[%s1 + $0x30] sm:$0xf]
  %v52 = vld [vmem:[%s1 + $0x34] sm:$0xf]
  %v53 = vld [vmem:[%s1 + $0x38] sm:$0xf]
  %v54 = vld [vmem:[%s1 + $0x3c] sm:$0xf]
  %v55 = vld [vmem:[%s1 + $0x40] sm:$0xf]
  %v56 = vld [vmem:[%s1 + $0x44] sm:$0xf]
  %v57 = vld [vmem:[%s1 + $0x48] sm:$0xf]
  %v58 = vld [vmem:[%s1 + $0x4c] sm:$0xf]
  %v59 = vld [vmem:[%s1 + $0x50] sm:$0xf]
  %v60 = vld [vmem:[%s1 + $0x54] sm:$0xf]
  %v61 = vld [vmem:[%s1 + $0x58] sm:$0xf]
  %v62 = vld [vmem:[%s1 + $0x5c] sm:$0xf]
  %v63 = vld [vmem:[%s1 + $0x60] sm:$0xf]
  %v64 = vld [vmem:[%s1 + $0x64] sm:$0xf]
  %v65 = vld [vmem:[%s1 + $0x68] sm:$0xf]
  %v66 = vld [vmem:[%s1 + $0x6c] sm:$0xf]
  %v67 = vld [vmem:[%s1 + $0x70] sm:$0xf]
  %v68 = vld [vmem:[%s1 + $0x74] sm:$0xf]
  %v69 = vld [vmem:[%s1 + $0x78] sm:$0xf]
  %v70 = vld [vmem:[%s1 + $0x7c] sm:$0xf]
  %v71 = vld [vmem:[%s1 + $0x80] sm:$0xf]
  %v72 = vld [vmem:[%s1 + $0x84] sm:$0xf]
  %v73 = vld [vmem:[%s1 + $0x88] sm:$0xf]
  %v74 = vld [vmem:[%s1 + $0x8c] sm:$0xf]
  %v75 = vld [vmem:[%s1 + $0x90] sm:$0xf]
  %v76 = vld [vmem:[%s1 + $0x94] sm:$0xf]
  %v77 = vld [vmem:[%s1 + $0x98] sm:$0xf]
  %v78 = vld [vmem:[%s1 + $0x9c] sm:$0xf]
  %v79 = vld [vmem:[%s1 + $0xa0] sm:$0xf]
  %v80 = vld [vmem:[%s1 + $0xa4] sm:$0xf]
  %v81 = vld [vmem:[%s1 + $0xa8] sm:$0xf]
  %v82 = vld [vmem:[%s1 + $0xac] sm:$0xf]
  %v83 = vld [vmem:[%s1 + $0xb0] sm:$0xf]
  %v84 = vld [vmem:[%s1 + $0xb4] sm:$0xf]
  %v85 = vld [vmem:[%s1 + $0xb8] sm:$0xf]
  %v86 = vld [vmem:[%s1 + $0xbc] sm:$0xf]
  %v87 = vld [vmem:[%s1 + $0xc0] sm:$0xf]
  %v88 = vld [vmem:[%s1 + $0xc4] sm:$0xf]
  %v89 = vld [vmem:[%s1 + $0xc8] sm:$0xf]
  %v90 = vld [vmem:[%s1 + $0xcc] sm:$0xf]
  %v91 = vld [vmem:[%s1 + $0xd0] sm:$0xf]
  %v92 = vld [vmem:[%s1 + $0xd4] sm:$0xf]
  %v93 = vld [vmem:[%s1 + $0xd8] sm:$0xf]
  %v94 = vld [vmem:[%s1 + $0xdc] sm:$0xf]
  %v95 = vld [vmem:[%s1 + $0xe0] sm:$0xf]
  %v96 = vld [vmem:[%s1 + $0xe4] sm:$0xf]
  %v97 = vld [vmem:[%s1 + $0xe8] sm:$0xf]
  %v98 = vld [vmem:[%s1 + $0xec] sm:$0xf]
  %v99 = vld [vmem:[%s1 + $0xf0] sm:$0xf]
  %v100 = vld [vmem:[%s1 + $0xf4] sm:$0xf]
  %v101 = vld [vmem:[%s1 + $0xf8] sm:$0xf]
  %v102 = vld [vmem:[%s1 + $0xfc] sm:$0xf]
  %v103 = vld [vmem:[%s1 + $0x100] sm:$0xf]
  %v104 = vld [vmem:[%s1 + $0x104] sm:$0xf]
  %v105 = vld [vmem:[%s1 + $0x108] sm:$0xf]
  %v106 = vld [vmem:[%s1 + $0x10c] sm:$0xf]
  %v107 = vld [vmem:[%s1 + $0x110] sm:$0xf]
  %v108 = vld [vmem:[%s1 + $0x114] sm:$0xf]
  %v109 = vld [vmem:[%s1 + $0x118] sm:$0xf]
  %v110 = vld [vmem:[%s1 + $0x11c] sm:$0xf]
  %v111 = vld [vmem:[%s2] sm:$0xff]
  %v112 = vld [vmem:[%s2 + $0x8] sm:$0xff]
  %v113 = vld [vmem:[%s2 + $0x10] sm:$0xff]
  %v114 = vld [vmem:[%s2 + $0x18] sm:$0xff]
  %v115 = vld [vmem:[%s2 + $0x20] sm:$0xff]
  %v116 = vld [vmem:[%s2 + $0x28] sm:$0xff]
  %v117 = vld [vmem:[%s2 + $0x30] sm:$0xff]
  %v118 = vld [vmem:[%s2 + $0x38] sm:$0xff]
  %120 = vset.pattern.permute.xlu0 0
  %121 = vperm.xlu0 %120, %v111
  %v122 = vpop.permute.xlu0 %121
  %125 = vset.pattern.permute.xlu0 0
  %126 = vperm.xlu0 %125, %v112
  %v127 = vpop.permute.xlu0 %126
  %130 = vset.pattern.permute.xlu0 0
  %131 = vperm.xlu0 %130, %v113
  %v132 = vpop.permute.xlu0 %131
  %135 = vset.pattern.permute.xlu0 0
  %136 = vperm.xlu0 %135, %v114
  %v137 = vpop.permute.xlu0 %136
  %140 = vset.pattern.permute.xlu0 0
  %141 = vperm.xlu0 %140, %v115
  %v142 = vpop.permute.xlu0 %141
  %145 = vset.pattern.permute.xlu0 0
  %146 = vperm.xlu0 %145, %v116
  %v147 = vpop.permute.xlu0 %146
  %150 = vset.pattern.permute.xlu0 0
  %151 = vperm.xlu0 %150, %v117
  %v152 = vpop.permute.xlu0 %151
  %155 = vset.pattern.permute.xlu0 0
  %156 = vperm.xlu0 %155, %v118
  %v157 = vpop.permute.xlu0 %156
  %v183 = vunpack.c.l.b16 %v15
  %v184 = vunpack.c.h.b16 %v15
  %v185 = vunpack.c.l.b16 %v16
  %v186 = vunpack.c.h.b16 %v16
  %v187 = vunpack.c.l.b16 %v17
  %v188 = vunpack.c.l.b16 %v18
  %v189 = vunpack.c.h.b16 %v18
  %v190 = vunpack.c.l.b16 %v19
  %v191 = vunpack.c.h.b16 %v19
  %v192 = vunpack.c.l.b16 %v20
  %v193 = vunpack.c.l.b16 %v21
  %v194 = vunpack.c.h.b16 %v21
  %v195 = vunpack.c.l.b16 %v22
  %v196 = vunpack.c.h.b16 %v22
  %v197 = vunpack.c.l.b16 %v23
  %v198 = vunpack.c.l.b16 %v24
  %v199 = vunpack.c.h.b16 %v24
  %v200 = vunpack.c.l.b16 %v25
  %v201 = vunpack.c.h.b16 %v25
  %v202 = vunpack.c.l.b16 %v26
  %v203 = vunpack.c.l.b16 %v27
  %v204 = vunpack.c.h.b16 %v27
  %v205 = vunpack.c.l.b16 %v28
  %v206 = vunpack.c.h.b16 %v28
  %v207 = vunpack.c.l.b16 %v29
  %v208 = vunpack.c.l.b16 %v30
  %v209 = vunpack.c.h.b16 %v30
  %v210 = vunpack.c.l.b16 %v31
  %v211 = vunpack.c.h.b16 %v31
  %v212 = vunpack.c.l.b16 %v32
  %v213 = vunpack.c.l.b16 %v33
  %v214 = vunpack.c.h.b16 %v33
  %v215 = vunpack.c.l.b16 %v34
  %v216 = vunpack.c.h.b16 %v34
  %v217 = vunpack.c.l.b16 %v35
  %v218 = vunpack.c.l.b16 %v36
  %v219 = vunpack.c.h.b16 %v36
  %v220 = vunpack.c.l.b16 %v37
  %v221 = vunpack.c.h.b16 %v37
  %v222 = vunpack.c.l.b16 %v38
  %v223 = vpack.c.b16 %v188, %v183
  %v224 = vpack.c.b16 %v189, %v184
  %v225 = vpack.c.b16 %v190, %v185
  %v226 = vpack.c.b16 %v191, %v186
  %v227 = vpack.c.b16 %v192, %v187
  %v228 = vpack.c.b16 %v198, %v193
  %v229 = vpack.c.b16 %v199, %v194
  %v230 = vpack.c.b16 %v200, %v195
  %v231 = vpack.c.b16 %v201, %v196
  %v232 = vpack.c.b16 %v202, %v197
  %v233 = vpack.c.b16 %v208, %v203
  %v234 = vpack.c.b16 %v209, %v204
  %v235 = vpack.c.b16 %v210, %v205
  %v236 = vpack.c.b16 %v211, %v206
  %v237 = vpack.c.b16 %v212, %v207
  %v238 = vpack.c.b16 %v218, %v213
  %v239 = vpack.c.b16 %v219, %v214
  %v240 = vpack.c.b16 %v220, %v215
  %v241 = vpack.c.b16 %v221, %v216
  %v242 = vpack.c.b16 %v222, %v217
  %v331 = vunpack.c.l.b16 %v39
  %v332 = vunpack.c.l.b16 %v40
  %v333 = vunpack.c.l.b16 %v41
  %v334 = vunpack.c.l.b16 %v42
  %v335 = vunpack.c.l.b16 %v43
  %v336 = vunpack.c.l.b16 %v44
  %v337 = vunpack.c.l.b16 %v45
  %v338 = vunpack.c.l.b16 %v46
  %v339 = vunpack.c.l.b16 %v47
  %v340 = vunpack.c.l.b16 %v48
  %v341 = vunpack.c.l.b16 %v49
  %v342 = vunpack.c.l.b16 %v50
  %v343 = vunpack.c.l.b16 %v51
  %v344 = vunpack.c.l.b16 %v52
  %v345 = vunpack.c.l.b16 %v53
  %v346 = vunpack.c.l.b16 %v54
  %v347 = vunpack.c.l.b16 %v55
  %v348 = vunpack.c.l.b16 %v56
  %v349 = vunpack.c.l.b16 %v57
  %v350 = vunpack.c.l.b16 %v58
  %v351 = vunpack.c.l.b16 %v59
  %v352 = vunpack.c.l.b16 %v60
  %v353 = vunpack.c.l.b16 %v61
  %v354 = vunpack.c.l.b16 %v62
  %v355 = vunpack.c.l.b16 %v63
  %v356 = vunpack.c.l.b16 %v64
  %v357 = vunpack.c.l.b16 %v65
  %v358 = vunpack.c.l.b16 %v66
  %v359 = vunpack.c.l.b16 %v67
  %v360 = vunpack.c.l.b16 %v68
  %v361 = vunpack.c.l.b16 %v69
  %v362 = vunpack.c.l.b16 %v70
  %v363 = vunpack.c.l.b16 %v71
  %v364 = vunpack.c.l.b16 %v72
  %v365 = vunpack.c.l.b16 %v73
  %v366 = vunpack.c.l.b16 %v74
  %v367 = vunpack.c.l.b16 %v75
  %v368 = vunpack.c.l.b16 %v76
  %v369 = vunpack.c.l.b16 %v77
  %v370 = vunpack.c.l.b16 %v78
  %v371 = vunpack.c.l.b16 %v79
  %v372 = vunpack.c.l.b16 %v80
  %v373 = vunpack.c.l.b16 %v81
  %v374 = vunpack.c.l.b16 %v82
  %v375 = vunpack.c.l.b16 %v83
  %v376 = vunpack.c.l.b16 %v84
  %v377 = vunpack.c.l.b16 %v85
  %v378 = vunpack.c.l.b16 %v86
  %v379 = vunpack.c.l.b16 %v87
  %v380 = vunpack.c.l.b16 %v88
  %v381 = vunpack.c.l.b16 %v89
  %v382 = vunpack.c.l.b16 %v90
  %v383 = vunpack.c.l.b16 %v91
  %v384 = vunpack.c.l.b16 %v92
  %v385 = vunpack.c.l.b16 %v93
  %v386 = vunpack.c.l.b16 %v94
  %v387 = vunpack.c.l.b16 %v95
  %v388 = vunpack.c.l.b16 %v96
  %v389 = vunpack.c.l.b16 %v97
  %v390 = vunpack.c.l.b16 %v98
  %v391 = vunpack.c.l.b16 %v99
  %v392 = vunpack.c.l.b16 %v100
  %v393 = vunpack.c.l.b16 %v101
  %v394 = vunpack.c.l.b16 %v102
  %v395 = vunpack.c.l.b16 %v103
  %v396 = vunpack.c.l.b16 %v104
  %v397 = vunpack.c.l.b16 %v105
  %v398 = vunpack.c.l.b16 %v106
  %v399 = vunpack.c.l.b16 %v107
  %v400 = vunpack.c.l.b16 %v108
  %v401 = vunpack.c.l.b16 %v109
  %v402 = vunpack.c.l.b16 %v110
  %v403 = vpack.c.b16 %v332, %v331
  %v404 = vpack.c.b16 %v334, %v333
  %v405 = vpack.c.b16 %v336, %v335
  %v406 = vpack.c.b16 %v338, %v337
  %v407 = vpack.c.b16 %v340, %v339
  %v408 = vpack.c.b16 %v342, %v341
  %v409 = vpack.c.b16 %v344, %v343
  %v410 = vpack.c.b16 %v346, %v345
  %v411 = vpack.c.b16 %v348, %v347
  %v412 = vpack.c.b16 %v350, %v349
  %v413 = vpack.c.b16 %v352, %v351
  %v414 = vpack.c.b16 %v354, %v353
  %v415 = vpack.c.b16 %v356, %v355
  %v416 = vpack.c.b16 %v358, %v357
  %v417 = vpack.c.b16 %v360, %v359
  %v418 = vpack.c.b16 %v362, %v361
  %v419 = vpack.c.b16 %v364, %v363
  %v420 = vpack.c.b16 %v366, %v365
  %v421 = vpack.c.b16 %v368, %v367
  %v422 = vpack.c.b16 %v370, %v369
  %v423 = vpack.c.b16 %v372, %v371
  %v424 = vpack.c.b16 %v374, %v373
  %v425 = vpack.c.b16 %v376, %v375
  %v426 = vpack.c.b16 %v378, %v377
  %v427 = vpack.c.b16 %v380, %v379
  %v428 = vpack.c.b16 %v382, %v381
  %v429 = vpack.c.b16 %v384, %v383
  %v430 = vpack.c.b16 %v386, %v385
  %v431 = vpack.c.b16 %v388, %v387
  %v432 = vpack.c.b16 %v390, %v389
  %v433 = vpack.c.b16 %v392, %v391
  %v434 = vpack.c.b16 %v394, %v393
  %v435 = vpack.c.b16 %v396, %v395
  %v436 = vpack.c.b16 %v398, %v397
  %v437 = vpack.c.b16 %v400, %v399
  %v438 = vpack.c.b16 %v402, %v401
  %vm475 = vcmask 523264
  %v477 = vsel %vm475, %v227, 0
  %v480 = vsel %vm475, %v232, 0
  %v483 = vsel %vm475, %v237, 0
  %v486 = vsel %vm475, %v242, 0
  %488 = vmatprep.subr.bf16.mxu0 0
  %489 = vmatpush1.bf16.msra.mxu0 %v410
  %490 = vmatprep.subr.bf16.mxu0 0
  %491 = vmatpush1.bf16.msra.mxu0 %v409
  %492 = vmatprep.subr.bf16.mxu0 0
  %493 = vmatpush1.bf16.msra.mxu0 %v408
  %494 = vmatprep.subr.bf16.mxu0 0
  %495 = vmatpush1.bf16.msra.mxu0 %v407
  %496 = vmatprep.subr.bf16.mxu0 0
  %497 = vmatpush1.bf16.msra.mxu0 %v406
  %498 = vmatprep.subr.bf16.mxu0 0
  %499 = vmatpush1.bf16.msra.mxu0 %v405
  %500 = vmatprep.subr.bf16.mxu0 0
  %501 = vmatpush1.bf16.msra.mxu0 %v404
  %502 = vmatprep.subr.bf16.mxu0 0
  %503 = vmatpush1.bf16.msra.mxu0 %v403
  %504 = vmatprep.subr.bf16.mxu0 0
  %505 = vmatpush2.bf16.msra.mxu0 %v418
  %506 = vmatprep.subr.bf16.mxu0 0
  %507 = vmatpush2.bf16.msra.mxu0 %v417
  %508 = vmatprep.subr.bf16.mxu0 0
  %509 = vmatpush2.bf16.msra.mxu0 %v416
  %510 = vmatprep.subr.bf16.mxu0 0
  %511 = vmatpush2.bf16.msra.mxu0 %v415
  %512 = vmatprep.subr.bf16.mxu0 0
  %513 = vmatpush2.bf16.msra.mxu0 %v414
  %514 = vmatprep.subr.bf16.mxu0 0
  %515 = vmatpush2.bf16.msra.mxu0 %v413
  %516 = vmatprep.subr.bf16.mxu0 0
  %517 = vmatpush2.bf16.msra.mxu0 %v412
  %518 = vmatprep.subr.bf16.mxu0 0
  %519 = vmatpush2.bf16.msra.mxu0 %v411
  %520 = vmatprep.mubr.bf16.mxu0 %v224
  %521 = vmatmul.mubr.bf16.gmra.mxu0 %v223
  %v522 = vpop.f32.mrf.mxu0
  %v523 = vadd.f32 %v122, %v522
  %v524 = vpop.f32.mrf.mxu0
  %v525 = vpop.f32.mrf.mxu0
  %v526 = vadd.f32 %v127, %v525
  %v527 = vpop.f32.mrf.mxu0
  %528 = vmatprep.mubr.bf16.mxu0 %v229
  %529 = vmatmul.mubr.bf16.gmra.mxu0 %v228
  %v530 = vpop.f32.mrf.mxu0
  %v531 = vadd.f32 %v132, %v530
  %v532 = vpop.f32.mrf.mxu0
  %v533 = vpop.f32.mrf.mxu0
  %v534 = vadd.f32 %v137, %v533
  %v535 = vpop.f32.mrf.mxu0
  %536 = vmatprep.mubr.bf16.mxu0 %v234
  %537 = vmatmul.mubr.bf16.gmra.mxu0 %v233
  %v538 = vpop.f32.mrf.mxu0
  %v539 = vadd.f32 %v142, %v538
  %v540 = vpop.f32.mrf.mxu0
  %v541 = vpop.f32.mrf.mxu0
  %v542 = vadd.f32 %v147, %v541
  %v543 = vpop.f32.mrf.mxu0
  %544 = vmatprep.mubr.bf16.mxu0 %v239
  %545 = vmatmul.mubr.bf16.gmra.mxu0 %v238
  %v546 = vpop.f32.mrf.mxu0
  %v547 = vadd.f32 %v152, %v546
  %v548 = vpop.f32.mrf.mxu0
  %v549 = vpop.f32.mrf.mxu0
  %v550 = vadd.f32 %v157, %v549
  %v551 = vpop.f32.mrf.mxu0
  %552 = vdwg.mxu0
  %553 = vmatprep.subr.bf16.mxu0 0
  %554 = vmatpush1.bf16.msra.mxu0 %v426
  %555 = vmatprep.subr.bf16.mxu0 0
  %556 = vmatpush1.bf16.msra.mxu0 %v425
  %557 = vmatprep.subr.bf16.mxu0 0
  %558 = vmatpush1.bf16.msra.mxu0 %v424
  %559 = vmatprep.subr.bf16.mxu0 0
  %560 = vmatpush1.bf16.msra.mxu0 %v423
  %561 = vmatprep.subr.bf16.mxu0 0
  %562 = vmatpush1.bf16.msra.mxu0 %v422
  %563 = vmatprep.subr.bf16.mxu0 0
  %564 = vmatpush1.bf16.msra.mxu0 %v421
  %565 = vmatprep.subr.bf16.mxu0 0
  %566 = vmatpush1.bf16.msra.mxu0 %v420
  %567 = vmatprep.subr.bf16.mxu0 0
  %568 = vmatpush1.bf16.msra.mxu0 %v419
  %569 = vmatprep.subr.bf16.mxu0 0
  %570 = vmatpush2.bf16.msra.mxu0 %v434
  %571 = vmatprep.subr.bf16.mxu0 0
  %572 = vmatpush2.bf16.msra.mxu0 %v433
  %573 = vmatprep.subr.bf16.mxu0 0
  %574 = vmatpush2.bf16.msra.mxu0 %v432
  %575 = vmatprep.subr.bf16.mxu0 0
  %576 = vmatpush2.bf16.msra.mxu0 %v431
  %577 = vmatprep.subr.bf16.mxu0 0
  %578 = vmatpush2.bf16.msra.mxu0 %v430
  %579 = vmatprep.subr.bf16.mxu0 0
  %580 = vmatpush2.bf16.msra.mxu0 %v429
  %581 = vmatprep.subr.bf16.mxu0 0
  %582 = vmatpush2.bf16.msra.mxu0 %v428
  %583 = vmatprep.subr.bf16.mxu0 0
  %584 = vmatpush2.bf16.msra.mxu0 %v427
  %585 = vmatprep.mubr.bf16.mxu0 %v226
  %586 = vmatmul.mubr.bf16.gmra.mxu0 %v225
  %v587 = vpop.f32.mrf.mxu0
  %v588 = vadd.f32 %v523, %v587
  %v589 = vpop.f32.mrf.mxu0
  %v590 = vpop.f32.mrf.mxu0
  %v591 = vadd.f32 %v526, %v590
  %v592 = vpop.f32.mrf.mxu0
  %593 = vmatprep.mubr.bf16.mxu0 %v231
  %594 = vmatmul.mubr.bf16.gmra.mxu0 %v230
  %v595 = vpop.f32.mrf.mxu0
  %v596 = vadd.f32 %v531, %v595
  %v597 = vpop.f32.mrf.mxu0
  %v598 = vpop.f32.mrf.mxu0
  %v599 = vadd.f32 %v534, %v598
  %v600 = vpop.f32.mrf.mxu0
  %601 = vmatprep.mubr.bf16.mxu0 %v236
  %602 = vmatmul.mubr.bf16.gmra.mxu0 %v235
  %v603 = vpop.f32.mrf.mxu0
  %v604 = vadd.f32 %v539, %v603
  %v605 = vpop.f32.mrf.mxu0
  %v606 = vpop.f32.mrf.mxu0
  %v607 = vadd.f32 %v542, %v606
  %v608 = vpop.f32.mrf.mxu0
  %609 = vmatprep.mubr.bf16.mxu0 %v241
  %610 = vmatmul.mubr.bf16.gmra.mxu0 %v240
  %v611 = vpop.f32.mrf.mxu0
  %v612 = vadd.f32 %v547, %v611
  %v613 = vpop.f32.mrf.mxu0
  %v614 = vpop.f32.mrf.mxu0
  %v615 = vadd.f32 %v550, %v614
  %v616 = vpop.f32.mrf.mxu0
  %617 = vdwg.mxu0
  %618 = vmatprep.subr.bf16.mxu0 0
  %619 = vmatpush1.bf16.msra.mxu0 0
  %620 = vmatprep.subr.bf16.mxu0 0
  %621 = vmatpush1.bf16.msra.mxu0 0
  %622 = vmatprep.subr.bf16.mxu0 0
  %623 = vmatpush1.bf16.msra.mxu0 0
  %624 = vmatprep.subr.bf16.mxu0 0
  %625 = vmatpush1.bf16.msra.mxu0 0
  %626 = vmatprep.subr.bf16.mxu0 0
  %627 = vmatpush1.bf16.msra.mxu0 %v438
  %628 = vmatprep.subr.bf16.mxu0 0
  %629 = vmatpush1.bf16.msra.mxu0 %v437
  %630 = vmatprep.subr.bf16.mxu0 0
  %631 = vmatpush1.bf16.msra.mxu0 %v436
  %632 = vmatprep.subr.bf16.mxu0 0
  %633 = vmatpush1.bf16.msra.mxu0 %v435
  %634 = vmatprep.subr.bf16.mxu0 0
  %635 = vmatpush2.bf16.msra.mxu0 0
  %636 = vmatprep.subr.bf16.mxu0 0
  %637 = vmatpush2.bf16.msra.mxu0 0
  %638 = vmatprep.subr.bf16.mxu0 0
  %639 = vmatpush2.bf16.msra.mxu0 0
  %640 = vmatprep.subr.bf16.mxu0 0
  %641 = vmatpush2.bf16.msra.mxu0 0
  %642 = vmatprep.subr.bf16.mxu0 0
  %643 = vmatpush2.bf16.msra.mxu0 0
  %644 = vmatprep.subr.bf16.mxu0 0
  %645 = vmatpush2.bf16.msra.mxu0 0
  %646 = vmatprep.subr.bf16.mxu0 0
  %647 = vmatpush2.bf16.msra.mxu0 0
  %648 = vmatprep.subr.bf16.mxu0 0
  %649 = vmatpush2.bf16.msra.mxu0 0
  %650 = vmatprep.mubr.bf16.mxu0 0
  %651 = vmatmul.mubr.bf16.gmra.mxu0 %v477
  %v652 = vpop.f32.mrf.mxu0
  %v653 = vadd.f32 %v588, %v652
  %v654 = vpop.f32.mrf.mxu0
  %v655 = vpop.f32.mrf.mxu0
  %v656 = vadd.f32 %v591, %v655
  %v657 = vpop.f32.mrf.mxu0
  %658 = vmatprep.mubr.bf16.mxu0 0
  %659 = vmatmul.mubr.bf16.gmra.mxu0 %v480
  %v660 = vpop.f32.mrf.mxu0
  %v661 = vadd.f32 %v596, %v660
  %v662 = vpop.f32.mrf.mxu0
  %v663 = vpop.f32.mrf.mxu0
  %v664 = vadd.f32 %v599, %v663
  %v665 = vpop.f32.mrf.mxu0
  %666 = vmatprep.mubr.bf16.mxu0 0
  %667 = vmatmul.mubr.bf16.gmra.mxu0 %v483
  %v668 = vpop.f32.mrf.mxu0
  %v669 = vadd.f32 %v604, %v668
  %v670 = vpop.f32.mrf.mxu0
  %v671 = vpop.f32.mrf.mxu0
  %v672 = vadd.f32 %v607, %v671
  %v673 = vpop.f32.mrf.mxu0
  %674 = vmatprep.mubr.bf16.mxu0 0
  %675 = vmatmul.mubr.bf16.gmra.mxu0 %v486
  %v676 = vpop.f32.mrf.mxu0
  %v677 = vadd.f32 %v612, %v676
  %v678 = vpop.f32.mrf.mxu0
  %v679 = vpop.f32.mrf.mxu0
  %v680 = vadd.f32 %v615, %v679
  %v681 = vpop.f32.mrf.mxu0
  %682 = vdwg.mxu0
  %v683 = vmax.f32 %v653, 0.0
  %v684 = vmax.f32 %v656, 0.0
  %v685 = vmax.f32 %v661, 0.0
  %v686 = vmax.f32 %v664, 0.0
  %v687 = vmax.f32 %v669, 0.0
  %v688 = vmax.f32 %v672, 0.0
  %v689 = vmax.f32 %v677, 0.0
  %v690 = vmax.f32 %v680, 0.0
  %691 = vst [vmem:[%s3] sm:$0xff] %v683
  %692 = vst [vmem:[%s3 + $0x8] sm:$0xff] %v684
  %693 = vst [vmem:[%s3 + $0x10] sm:$0xff] %v685
  %694 = vst [vmem:[%s3 + $0x18] sm:$0xff] %v686
  %695 = vst [vmem:[%s3 + $0x20] sm:$0xff] %v687
  %696 = vst [vmem:[%s3 + $0x28] sm:$0xff] %v688
  %697 = vst [vmem:[%s3 + $0x30] sm:$0xff] %v689
  %698 = vst [vmem:[%s3 + $0x38] sm:$0xff] %v690
  // Predicated region
  $region14: #{forward.29} parent=0 // pred_check
    _
  $region15: #{forward.29} parent=0 // pred_check_branch
    %700 = sbr.rel (0) target = $region17
  $region16: #{forward.29} parent=0 // pred_region
    _
  $region17: #{forward.29} parent=0 // pred_fallthru
    _
  // Predicated region
  $region18: #{forward.29} parent=0 // pred_check
    _
  $region19: #{forward.29} parent=0 // pred_check_branch
    %702 = sbr.rel (0) target = $region21
  $region20: #{forward.29} parent=0 // pred_region
    _
  $region21: #{forward.29} parent=0 // pred_fallthru
    _

// kernel: forward.31
$region0: #{forward.31}
  #allocation0 [shape = 'u32[]', space=smem, size = 0x4, offset = 0x4, fixed_abs, tag = 'smem constant byte address 0x4 - core index']
  #allocation1 [shape = 'u32[144,128]{1,0:T(1,128)}', space=vmem, size = 0x12000, scoped, tag = 'internal scratch']
  %s0 = inlined_call_operand.vmem [shape: f32[64,8,16], index: 0, kind: input, shape index: {}]
  %s1 = inlined_call_operand.vmem [shape: f32[10,64], index: 1, kind: input, shape index: {}]
  %s2 = inlined_call_operand.vmem [shape: f32[10,1], index: 2, kind: input, shape index: {}]
  %s3 = inlined_call_operand.vmem [shape: f32[10,8], index: 3, kind: output, shape index: {}]
  %s4 = sld [smem:[#allocation0]]
  $region22: #{forward.31} parent=0
    _
  %s6 = ssub.s32 1, %s4
  %s7 = scalar_select 0, %s6, %s4
  // Predicated region
  $region2: #{forward.31} parent=0 // pred_check
    _
  $region3: #{forward.31} parent=0 // pred_check_branch
    %9 = sbr.rel (0) target = $region5
  $region4: #{forward.31} parent=0 // pred_region
    _
  $region5: #{forward.31} parent=0 // pred_fallthru
    _
  // Predicated region
  $region6: #{forward.31} parent=0 // pred_check
    _
  $region7: #{forward.31} parent=0 // pred_check_branch
    %11 = sbr.rel (0) target = $region9
  $region8: #{forward.31} parent=0 // pred_region
    _
  $region9: #{forward.31} parent=0 // pred_fallthru
    _
  // Predicated region
  $region10: #{forward.31} parent=0 // pred_check
    _
  $region11: #{forward.31} parent=0 // pred_check_branch
    %13 = sbr.rel (0) target = $region13
  $region12: #{forward.31} parent=0 // pred_region
    _
  $region13: #{forward.31} parent=0 // pred_fallthru
    _
  %v14 = vld [vmem:[%s0] sm:$0xff]
  %v15 = vld [vmem:[%s0 + $0x8] sm:$0xff]
  %v16 = vld [vmem:[%s0 + $0x10] sm:$0xff]
  %v17 = vld [vmem:[%s0 + $0x18] sm:$0xff]
  %v18 = vld [vmem:[%s0 + $0x20] sm:$0xff]
  %v19 = vld [vmem:[%s0 + $0x28] sm:$0xff]
  %v20 = vld [vmem:[%s0 + $0x30] sm:$0xff]
  %v21 = vld [vmem:[%s0 + $0x38] sm:$0xff]
  %v22 = vld [vmem:[%s0 + $0x40] sm:$0xff]
  %v23 = vld [vmem:[%s0 + $0x48] sm:$0xff]
  %v24 = vld [vmem:[%s0 + $0x50] sm:$0xff]
  %v25 = vld [vmem:[%s0 + $0x58] sm:$0xff]
  %v26 = vld [vmem:[%s0 + $0x60] sm:$0xff]
  %v27 = vld [vmem:[%s0 + $0x68] sm:$0xff]
  %v28 = vld [vmem:[%s0 + $0x70] sm:$0xff]
  %v29 = vld [vmem:[%s0 + $0x78] sm:$0xff]
  %v30 = vld [vmem:[%s0 + $0x80] sm:$0xff]
  %v31 = vld [vmem:[%s0 + $0x88] sm:$0xff]
  %v32 = vld [vmem:[%s0 + $0x90] sm:$0xff]
  %v33 = vld [vmem:[%s0 + $0x98] sm:$0xff]
  %v34 = vld [vmem:[%s0 + $0xa0] sm:$0xff]
  %v35 = vld [vmem:[%s0 + $0xa8] sm:$0xff]
  %v36 = vld [vmem:[%s0 + $0xb0] sm:$0xff]
  %v37 = vld [vmem:[%s0 + $0xb8] sm:$0xff]
  %v38 = vld [vmem:[%s0 + $0xc0] sm:$0xff]
  %v39 = vld [vmem:[%s0 + $0xc8] sm:$0xff]
  %v40 = vld [vmem:[%s0 + $0xd0] sm:$0xff]
  %v41 = vld [vmem:[%s0 + $0xd8] sm:$0xff]
  %v42 = vld [vmem:[%s0 + $0xe0] sm:$0xff]
  %v43 = vld [vmem:[%s0 + $0xe8] sm:$0xff]
  %v44 = vld [vmem:[%s0 + $0xf0] sm:$0xff]
  %v45 = vld [vmem:[%s0 + $0xf8] sm:$0xff]
  %v46 = vld [vmem:[%s0 + $0x100] sm:$0xff]
  %v47 = vld [vmem:[%s0 + $0x108] sm:$0xff]
  %v48 = vld [vmem:[%s0 + $0x110] sm:$0xff]
  %v49 = vld [vmem:[%s0 + $0x118] sm:$0xff]
  %v50 = vld [vmem:[%s0 + $0x120] sm:$0xff]
  %v51 = vld [vmem:[%s0 + $0x128] sm:$0xff]
  %v52 = vld [vmem:[%s0 + $0x130] sm:$0xff]
  %v53 = vld [vmem:[%s0 + $0x138] sm:$0xff]
  %v54 = vld [vmem:[%s0 + $0x140] sm:$0xff]
  %v55 = vld [vmem:[%s0 + $0x148] sm:$0xff]
  %v56 = vld [vmem:[%s0 + $0x150] sm:$0xff]
  %v57 = vld [vmem:[%s0 + $0x158] sm:$0xff]
  %v58 = vld [vmem:[%s0 + $0x160] sm:$0xff]
  %v59 = vld [vmem:[%s0 + $0x168] sm:$0xff]
  %v60 = vld [vmem:[%s0 + $0x170] sm:$0xff]
  %v61 = vld [vmem:[%s0 + $0x178] sm:$0xff]
  %v62 = vld [vmem:[%s0 + $0x180] sm:$0xff]
  %v63 = vld [vmem:[%s0 + $0x188] sm:$0xff]
  %v64 = vld [vmem:[%s0 + $0x190] sm:$0xff]
  %v65 = vld [vmem:[%s0 + $0x198] sm:$0xff]
  %v66 = vld [vmem:[%s0 + $0x1a0] sm:$0xff]
  %v67 = vld [vmem:[%s0 + $0x1a8] sm:$0xff]
  %v68 = vld [vmem:[%s0 + $0x1b0] sm:$0xff]
  %v69 = vld [vmem:[%s0 + $0x1b8] sm:$0xff]
  %v70 = vld [vmem:[%s0 + $0x1c0] sm:$0xff]
  %v71 = vld [vmem:[%s0 + $0x1c8] sm:$0xff]
  %v72 = vld [vmem:[%s0 + $0x1d0] sm:$0xff]
  %v73 = vld [vmem:[%s0 + $0x1d8] sm:$0xff]
  %v74 = vld [vmem:[%s0 + $0x1e0] sm:$0xff]
  %v75 = vld [vmem:[%s0 + $0x1e8] sm:$0xff]
  %v76 = vld [vmem:[%s0 + $0x1f0] sm:$0xff]
  %v77 = vld [vmem:[%s0 + $0x1f8] sm:$0xff]
  %vm78 = vcmask 130048
  %v79 = vsel %vm78, %v14, 0.0
  %80 = vadd.xlane.f32.xlu0 %v79
  %v81 = vpop.xlane.xlu0 %80
  %v82 = vsel %vm78, %v15, 0.0
  %83 = vadd.xlane.f32.xlu0 %v82
  %v84 = vpop.xlane.xlu0 %83
  %v85 = vsel %vm78, %v16, 0.0
  %86 = vadd.xlane.f32.xlu0 %v85
  %v87 = vpop.xlane.xlu0 %86
  %v88 = vsel %vm78, %v17, 0.0
  %89 = vadd.xlane.f32.xlu0 %v88
  %v90 = vpop.xlane.xlu0 %89
  %v91 = vsel %vm78, %v18, 0.0
  %92 = vadd.xlane.f32.xlu0 %v91
  %v93 = vpop.xlane.xlu0 %92
  %v94 = vsel %vm78, %v19, 0.0
  %95 = vadd.xlane.f32.xlu0 %v94
  %v96 = vpop.xlane.xlu0 %95
  %v97 = vsel %vm78, %v20, 0.0
  %98 = vadd.xlane.f32.xlu0 %v97
  %v99 = vpop.xlane.xlu0 %98
  %v100 = vsel %vm78, %v21, 0.0
  %101 = vadd.xlane.f32.xlu0 %v100
  %v102 = vpop.xlane.xlu0 %101
  %v103 = vsel %vm78, %v22, 0.0
  %104 = vadd.xlane.f32.xlu0 %v103
  %v105 = vpop.xlane.xlu0 %104
  %v106 = vsel %vm78, %v23, 0.0
  %107 = vadd.xlane.f32.xlu0 %v106
  %v108 = vpop.xlane.xlu0 %107
  %v109 = vsel %vm78, %v24, 0.0
  %110 = vadd.xlane.f32.xlu0 %v109
  %v111 = vpop.xlane.xlu0 %110
  %v112 = vsel %vm78, %v25, 0.0
  %113 = vadd.xlane.f32.xlu0 %v112
  %v114 = vpop.xlane.xlu0 %113
  %v115 = vsel %vm78, %v26, 0.0
  %116 = vadd.xlane.f32.xlu0 %v115
  %v117 = vpop.xlane.xlu0 %116
  %v118 = vsel %vm78, %v27, 0.0
  %119 = vadd.xlane.f32.xlu0 %v118
  %v120 = vpop.xlane.xlu0 %119
  %v121 = vsel %vm78, %v28, 0.0
  %122 = vadd.xlane.f32.xlu0 %v121
  %v123 = vpop.xlane.xlu0 %122
  %v124 = vsel %vm78, %v29, 0.0
  %125 = vadd.xlane.f32.xlu0 %v124
  %v126 = vpop.xlane.xlu0 %125
  %v127 = vsel %vm78, %v30, 0.0
  %128 = vadd.xlane.f32.xlu0 %v127
  %v129 = vpop.xlane.xlu0 %128
  %v130 = vsel %vm78, %v31, 0.0
  %131 = vadd.xlane.f32.xlu0 %v130
  %v132 = vpop.xlane.xlu0 %131
  %v133 = vsel %vm78, %v32, 0.0
  %134 = vadd.xlane.f32.xlu0 %v133
  %v135 = vpop.xlane.xlu0 %134
  %v136 = vsel %vm78, %v33, 0.0
  %137 = vadd.xlane.f32.xlu0 %v136
  %v138 = vpop.xlane.xlu0 %137
  %v139 = vsel %vm78, %v34, 0.0
  %140 = vadd.xlane.f32.xlu0 %v139
  %v141 = vpop.xlane.xlu0 %140
  %v142 = vsel %vm78, %v35, 0.0
  %143 = vadd.xlane.f32.xlu0 %v142
  %v144 = vpop.xlane.xlu0 %143
  %v145 = vsel %vm78, %v36, 0.0
  %146 = vadd.xlane.f32.xlu0 %v145
  %v147 = vpop.xlane.xlu0 %146
  %v148 = vsel %vm78, %v37, 0.0
  %149 = vadd.xlane.f32.xlu0 %v148
  %v150 = vpop.xlane.xlu0 %149
  %v151 = vsel %vm78, %v38, 0.0
  %152 = vadd.xlane.f32.xlu0 %v151
  %v153 = vpop.xlane.xlu0 %152
  %v154 = vsel %vm78, %v39, 0.0
  %155 = vadd.xlane.f32.xlu0 %v154
  %v156 = vpop.xlane.xlu0 %155
  %v157 = vsel %vm78, %v40, 0.0
  %158 = vadd.xlane.f32.xlu0 %v157
  %v159 = vpop.xlane.xlu0 %158
  %v160 = vsel %vm78, %v41, 0.0
  %161 = vadd.xlane.f32.xlu0 %v160
  %v162 = vpop.xlane.xlu0 %161
  %v163 = vsel %vm78, %v42, 0.0
  %164 = vadd.xlane.f32.xlu0 %v163
  %v165 = vpop.xlane.xlu0 %164
  %v166 = vsel %vm78, %v43, 0.0
  %167 = vadd.xlane.f32.xlu0 %v166
  %v168 = vpop.xlane.xlu0 %167
  %v169 = vsel %vm78, %v44, 0.0
  %170 = vadd.xlane.f32.xlu0 %v169
  %v171 = vpop.xlane.xlu0 %170
  %v172 = vsel %vm78, %v45, 0.0
  %173 = vadd.xlane.f32.xlu0 %v172
  %v174 = vpop.xlane.xlu0 %173
  %v175 = vsel %vm78, %v46, 0.0
  %176 = vadd.xlane.f32.xlu0 %v175
  %v177 = vpop.xlane.xlu0 %176
  %v178 = vsel %vm78, %v47, 0.0
  %179 = vadd.xlane.f32.xlu0 %v178
  %v180 = vpop.xlane.xlu0 %179
  %v181 = vsel %vm78, %v48, 0.0
  %182 = vadd.xlane.f32.xlu0 %v181
  %v183 = vpop.xlane.xlu0 %182
  %v184 = vsel %vm78, %v49, 0.0
  %185 = vadd.xlane.f32.xlu0 %v184
  %v186 = vpop.xlane.xlu0 %185
  %v187 = vsel %vm78, %v50, 0.0
  %188 = vadd.xlane.f32.xlu0 %v187
  %v189 = vpop.xlane.xlu0 %188
  %v190 = vsel %vm78, %v51, 0.0
  %191 = vadd.xlane.f32.xlu0 %v190
  %v192 = vpop.xlane.xlu0 %191
  %v193 = vsel %vm78, %v52, 0.0
  %194 = vadd.xlane.f32.xlu0 %v193
  %v195 = vpop.xlane.xlu0 %194
  %v196 = vsel %vm78, %v53, 0.0
  %197 = vadd.xlane.f32.xlu0 %v196
  %v198 = vpop.xlane.xlu0 %197
  %v199 = vsel %vm78, %v54, 0.0
  %200 = vadd.xlane.f32.xlu0 %v199
  %v201 = vpop.xlane.xlu0 %200
  %v202 = vsel %vm78, %v55, 0.0
  %203 = vadd.xlane.f32.xlu0 %v202
  %v204 = vpop.xlane.xlu0 %203
  %v205 = vsel %vm78, %v56, 0.0
  %206 = vadd.xlane.f32.xlu0 %v205
  %v207 = vpop.xlane.xlu0 %206
  %v208 = vsel %vm78, %v57, 0.0
  %209 = vadd.xlane.f32.xlu0 %v208
  %v210 = vpop.xlane.xlu0 %209
  %v211 = vsel %vm78, %v58, 0.0
  %212 = vadd.xlane.f32.xlu0 %v211
  %v213 = vpop.xlane.xlu0 %212
  %v214 = vsel %vm78, %v59, 0.0
  %215 = vadd.xlane.f32.xlu0 %v214
  %v216 = vpop.xlane.xlu0 %215
  %v217 = vsel %vm78, %v60, 0.0
  %218 = vadd.xlane.f32.xlu0 %v217
  %v219 = vpop.xlane.xlu0 %218
  %v220 = vsel %vm78, %v61, 0.0
  %221 = vadd.xlane.f32.xlu0 %v220
  %v222 = vpop.xlane.xlu0 %221
  %v223 = vsel %vm78, %v62, 0.0
  %224 = vadd.xlane.f32.xlu0 %v223
  %v225 = vpop.xlane.xlu0 %224
  %v226 = vsel %vm78, %v63, 0.0
  %227 = vadd.xlane.f32.xlu0 %v226
  %v228 = vpop.xlane.xlu0 %227
  %v229 = vsel %vm78, %v64, 0.0
  %230 = vadd.xlane.f32.xlu0 %v229
  %v231 = vpop.xlane.xlu0 %230
  %v232 = vsel %vm78, %v65, 0.0
  %233 = vadd.xlane.f32.xlu0 %v232
  %v234 = vpop.xlane.xlu0 %233
  %v235 = vsel %vm78, %v66, 0.0
  %236 = vadd.xlane.f32.xlu0 %v235
  %v237 = vpop.xlane.xlu0 %236
  %v238 = vsel %vm78, %v67, 0.0
  %239 = vadd.xlane.f32.xlu0 %v238
  %v240 = vpop.xlane.xlu0 %239
  %v241 = vsel %vm78, %v68, 0.0
  %242 = vadd.xlane.f32.xlu0 %v241
  %v243 = vpop.xlane.xlu0 %242
  %v244 = vsel %vm78, %v69, 0.0
  %245 = vadd.xlane.f32.xlu0 %v244
  %v246 = vpop.xlane.xlu0 %245
  %v247 = vsel %vm78, %v70, 0.0
  %248 = vadd.xlane.f32.xlu0 %v247
  %v249 = vpop.xlane.xlu0 %248
  %v250 = vsel %vm78, %v71, 0.0
  %251 = vadd.xlane.f32.xlu0 %v250
  %v252 = vpop.xlane.xlu0 %251
  %v253 = vsel %vm78, %v72, 0.0
  %254 = vadd.xlane.f32.xlu0 %v253
  %v255 = vpop.xlane.xlu0 %254
  %v256 = vsel %vm78, %v73, 0.0
  %257 = vadd.xlane.f32.xlu0 %v256
  %v258 = vpop.xlane.xlu0 %257
  %v259 = vsel %vm78, %v74, 0.0
  %260 = vadd.xlane.f32.xlu0 %v259
  %v261 = vpop.xlane.xlu0 %260
  %v262 = vsel %vm78, %v75, 0.0
  %263 = vadd.xlane.f32.xlu0 %v262
  %v264 = vpop.xlane.xlu0 %263
  %v265 = vsel %vm78, %v76, 0.0
  %266 = vadd.xlane.f32.xlu0 %v265
  %v267 = vpop.xlane.xlu0 %266
  %v268 = vsel %vm78, %v77, 0.0
  %269 = vadd.xlane.f32.xlu0 %v268
  %v270 = vpop.xlane.xlu0 %269
  %v271 = vmul.f32 %v81, 0.0625
  %v272 = vmul.f32 %v84, 0.0625
  %v273 = vmul.f32 %v87, 0.0625
  %v274 = vmul.f32 %v90, 0.0625
  %v275 = vmul.f32 %v93, 0.0625
  %v276 = vmul.f32 %v96, 0.0625
  %v277 = vmul.f32 %v99, 0.0625
  %v278 = vmul.f32 %v102, 0.0625
  %v279 = vmul.f32 %v105, 0.0625
  %v280 = vmul.f32 %v108, 0.0625
  %v281 = vmul.f32 %v111, 0.0625
  %v282 = vmul.f32 %v114, 0.0625
  %v283 = vmul.f32 %v117, 0.0625
  %v284 = vmul.f32 %v120, 0.0625
  %v285 = vmul.f32 %v123, 0.0625
  %v286 = vmul.f32 %v126, 0.0625
  %v287 = vmul.f32 %v129, 0.0625
  %v288 = vmul.f32 %v132, 0.0625
  %v289 = vmul.f32 %v135, 0.0625
  %v290 = vmul.f32 %v138, 0.0625
  %v291 = vmul.f32 %v141, 0.0625
  %v292 = vmul.f32 %v144, 0.0625
  %v293 = vmul.f32 %v147, 0.0625
  %v294 = vmul.f32 %v150, 0.0625
  %v295 = vmul.f32 %v153, 0.0625
  %v296 = vmul.f32 %v156, 0.0625
  %v297 = vmul.f32 %v159, 0.0625
  %v298 = vmul.f32 %v162, 0.0625
  %v299 = vmul.f32 %v165, 0.0625
  %v300 = vmul.f32 %v168, 0.0625
  %v301 = vmul.f32 %v171, 0.0625
  %v302 = vmul.f32 %v174, 0.0625
  %v303 = vmul.f32 %v177, 0.0625
  %v304 = vmul.f32 %v180, 0.0625
  %v305 = vmul.f32 %v183, 0.0625
  %v306 = vmul.f32 %v186, 0.0625
  %v307 = vmul.f32 %v189, 0.0625
  %v308 = vmul.f32 %v192, 0.0625
  %v309 = vmul.f32 %v195, 0.0625
  %v310 = vmul.f32 %v198, 0.0625
  %v311 = vmul.f32 %v201, 0.0625
  %v312 = vmul.f32 %v204, 0.0625
  %v313 = vmul.f32 %v207, 0.0625
  %v314 = vmul.f32 %v210, 0.0625
  %v315 = vmul.f32 %v213, 0.0625
  %v316 = vmul.f32 %v216, 0.0625
  %v317 = vmul.f32 %v219, 0.0625
  %v318 = vmul.f32 %v222, 0.0625
  %v319 = vmul.f32 %v225, 0.0625
  %v320 = vmul.f32 %v228, 0.0625
  %v321 = vmul.f32 %v231, 0.0625
  %v322 = vmul.f32 %v234, 0.0625
  %v323 = vmul.f32 %v237, 0.0625
  %v324 = vmul.f32 %v240, 0.0625
  %v325 = vmul.f32 %v243, 0.0625
  %v326 = vmul.f32 %v246, 0.0625
  %v327 = vmul.f32 %v249, 0.0625
  %v328 = vmul.f32 %v252, 0.0625
  %v329 = vmul.f32 %v255, 0.0625
  %v330 = vmul.f32 %v258, 0.0625
  %v331 = vmul.f32 %v261, 0.0625
  %v332 = vmul.f32 %v264, 0.0625
  %v333 = vmul.f32 %v267, 0.0625
  %v334 = vmul.f32 %v270, 0.0625
  %v335 = vld [vmem:[%s1] sm:$0xff]
  %v336 = vld [vmem:[%s1 + $0x8] sm:$0x3]
  %v337 = vld [vmem:[%s2] sm:$0xff]
  %v338 = vld [vmem:[%s2 + $0x8] sm:$0x3]
  %340 = vset.pattern.permute.xlu0 0
  %341 = vperm.xlu0 %340, %v337
  %v342 = vpop.permute.xlu0 %341
  %345 = vset.pattern.permute.xlu0 0
  %346 = vperm.xlu0 %345, %v338
  %v347 = vpop.permute.xlu0 %346
  %v413 = vlaneseq
  %v414 = vand.u32 %v413, 127
  %v415 = vlaneseq
  %v416 = vshrl.u32 %v415, 7
  %v417 = vsub.s32 %v414, %v416
  %v418 = vrot.slane %v271, %v417
  %v419 = vlaneseq
  %v420 = vshrl.u32 %v419, 7
  %v421 = vsub.s32 %v414, %v420
  %v422 = vrot.slane %v272, %v421
  %v423 = vlaneseq
  %v424 = vshrl.u32 %v423, 7
  %v425 = vsub.s32 %v414, %v424
  %v426 = vrot.slane %v273, %v425
  %v427 = vlaneseq
  %v428 = vshrl.u32 %v427, 7
  %v429 = vsub.s32 %v414, %v428
  %v430 = vrot.slane %v274, %v429
  %v431 = vlaneseq
  %v432 = vshrl.u32 %v431, 7
  %v433 = vsub.s32 %v414, %v432
  %v434 = vrot.slane %v275, %v433
  %v435 = vlaneseq
  %v436 = vshrl.u32 %v435, 7
  %v437 = vsub.s32 %v414, %v436
  %v438 = vrot.slane %v276, %v437
  %v439 = vlaneseq
  %v440 = vshrl.u32 %v439, 7
  %v441 = vsub.s32 %v414, %v440
  %v442 = vrot.slane %v277, %v441
  %v443 = vlaneseq
  %v444 = vshrl.u32 %v443, 7
  %v445 = vsub.s32 %v414, %v444
  %v446 = vrot.slane %v278, %v445
  %v447 = vlaneseq
  %v448 = vshrl.u32 %v447, 7
  %v449 = vsub.s32 %v414, %v448
  %v450 = vrot.slane %v279, %v449
  %v451 = vlaneseq
  %v452 = vshrl.u32 %v451, 7
  %v453 = vsub.s32 %v414, %v452
  %v454 = vrot.slane %v280, %v453
  %v455 = vlaneseq
  %v456 = vshrl.u32 %v455, 7
  %v457 = vsub.s32 %v414, %v456
  %v458 = vrot.slane %v281, %v457
  %v459 = vlaneseq
  %v460 = vshrl.u32 %v459, 7
  %v461 = vsub.s32 %v414, %v460
  %v462 = vrot.slane %v282, %v461
  %v463 = vlaneseq
  %v464 = vshrl.u32 %v463, 7
  %v465 = vsub.s32 %v414, %v464
  %v466 = vrot.slane %v283, %v465
  %v467 = vlaneseq
  %v468 = vshrl.u32 %v467, 7
  %v469 = vsub.s32 %v414, %v468
  %v470 = vrot.slane %v284, %v469
  %v471 = vlaneseq
  %v472 = vshrl.u32 %v471, 7
  %v473 = vsub.s32 %v414, %v472
  %v474 = vrot.slane %v285, %v473
  %v475 = vlaneseq
  %v476 = vshrl.u32 %v475, 7
  %v477 = vsub.s32 %v414, %v476
  %v478 = vrot.slane %v286, %v477
  %v479 = vlaneseq
  %v480 = vshrl.u32 %v479, 7
  %v481 = vsub.s32 %v414, %v480
  %v482 = vrot.slane %v287, %v481
  %v483 = vlaneseq
  %v484 = vshrl.u32 %v483, 7
  %v485 = vsub.s32 %v414, %v484
  %v486 = vrot.slane %v288, %v485
  %v487 = vlaneseq
  %v488 = vshrl.u32 %v487, 7
  %v489 = vsub.s32 %v414, %v488
  %v490 = vrot.slane %v289, %v489
  %v491 = vlaneseq
  %v492 = vshrl.u32 %v491, 7
  %v493 = vsub.s32 %v414, %v492
  %v494 = vrot.slane %v290, %v493
  %v495 = vlaneseq
  %v496 = vshrl.u32 %v495, 7
  %v497 = vsub.s32 %v414, %v496
  %v498 = vrot.slane %v291, %v497
  %v499 = vlaneseq
  %v500 = vshrl.u32 %v499, 7
  %v501 = vsub.s32 %v414, %v500
  %v502 = vrot.slane %v292, %v501
  %v503 = vlaneseq
  %v504 = vshrl.u32 %v503, 7
  %v505 = vsub.s32 %v414, %v504
  %v506 = vrot.slane %v293, %v505
  %v507 = vlaneseq
  %v508 = vshrl.u32 %v507, 7
  %v509 = vsub.s32 %v414, %v508
  %v510 = vrot.slane %v294, %v509
  %v511 = vlaneseq
  %v512 = vshrl.u32 %v511, 7
  %v513 = vsub.s32 %v414, %v512
  %v514 = vrot.slane %v295, %v513
  %v515 = vlaneseq
  %v516 = vshrl.u32 %v515, 7
  %v517 = vsub.s32 %v414, %v516
  %v518 = vrot.slane %v296, %v517
  %v519 = vlaneseq
  %v520 = vshrl.u32 %v519, 7
  %v521 = vsub.s32 %v414, %v520
  %v522 = vrot.slane %v297, %v521
  %v523 = vlaneseq
  %v524 = vshrl.u32 %v523, 7
  %v525 = vsub.s32 %v414, %v524
  %v526 = vrot.slane %v298, %v525
  %v527 = vlaneseq
  %v528 = vshrl.u32 %v527, 7
  %v529 = vsub.s32 %v414, %v528
  %v530 = vrot.slane %v299, %v529
  %v531 = vlaneseq
  %v532 = vshrl.u32 %v531, 7
  %v533 = vsub.s32 %v414, %v532
  %v534 = vrot.slane %v300, %v533
  %v535 = vlaneseq
  %v536 = vshrl.u32 %v535, 7
  %v537 = vsub.s32 %v414, %v536
  %v538 = vrot.slane %v301, %v537
  %v539 = vlaneseq
  %v540 = vshrl.u32 %v539, 7
  %v541 = vsub.s32 %v414, %v540
  %v542 = vrot.slane %v302, %v541
  %v543 = vlaneseq
  %v544 = vshrl.u32 %v543, 7
  %v545 = vsub.s32 %v414, %v544
  %v546 = vrot.slane %v303, %v545
  %v547 = vlaneseq
  %v548 = vshrl.u32 %v547, 7
  %v549 = vsub.s32 %v414, %v548
  %v550 = vrot.slane %v304, %v549
  %v551 = vlaneseq
  %v552 = vshrl.u32 %v551, 7
  %v553 = vsub.s32 %v414, %v552
  %v554 = vrot.slane %v305, %v553
  %v555 = vlaneseq
  %v556 = vshrl.u32 %v555, 7
  %v557 = vsub.s32 %v414, %v556
  %v558 = vrot.slane %v306, %v557
  %v559 = vlaneseq
  %v560 = vshrl.u32 %v559, 7
  %v561 = vsub.s32 %v414, %v560
  %v562 = vrot.slane %v307, %v561
  %v563 = vlaneseq
  %v564 = vshrl.u32 %v563, 7
  %v565 = vsub.s32 %v414, %v564
  %v566 = vrot.slane %v308, %v565
  %v567 = vlaneseq
  %v568 = vshrl.u32 %v567, 7
  %v569 = vsub.s32 %v414, %v568
  %v570 = vrot.slane %v309, %v569
  %v571 = vlaneseq
  %v572 = vshrl.u32 %v571, 7
  %v573 = vsub.s32 %v414, %v572
  %v574 = vrot.slane %v310, %v573
  %v575 = vlaneseq
  %v576 = vshrl.u32 %v575, 7
  %v577 = vsub.s32 %v414, %v576
  %v578 = vrot.slane %v311, %v577
  %v579 = vlaneseq
  %v580 = vshrl.u32 %v579, 7
  %v581 = vsub.s32 %v414, %v580
  %v582 = vrot.slane %v312, %v581
  %v583 = vlaneseq
  %v584 = vshrl.u32 %v583, 7
  %v585 = vsub.s32 %v414, %v584
  %v586 = vrot.slane %v313, %v585
  %v587 = vlaneseq
  %v588 = vshrl.u32 %v587, 7
  %v589 = vsub.s32 %v414, %v588
  %v590 = vrot.slane %v314, %v589
  %v591 = vlaneseq
  %v592 = vshrl.u32 %v591, 7
  %v593 = vsub.s32 %v414, %v592
  %v594 = vrot.slane %v315, %v593
  %v595 = vlaneseq
  %v596 = vshrl.u32 %v595, 7
  %v597 = vsub.s32 %v414, %v596
  %v598 = vrot.slane %v316, %v597
  %v599 = vlaneseq
  %v600 = vshrl.u32 %v599, 7
  %v601 = vsub.s32 %v414, %v600
  %v602 = vrot.slane %v317, %v601
  %v603 = vlaneseq
  %v604 = vshrl.u32 %v603, 7
  %v605 = vsub.s32 %v414, %v604
  %v606 = vrot.slane %v318, %v605
  %v607 = vlaneseq
  %v608 = vshrl.u32 %v607, 7
  %v609 = vsub.s32 %v414, %v608
  %v610 = vrot.slane %v319, %v609
  %v611 = vlaneseq
  %v612 = vshrl.u32 %v611, 7
  %v613 = vsub.s32 %v414, %v612
  %v614 = vrot.slane %v320, %v613
  %v615 = vlaneseq
  %v616 = vshrl.u32 %v615, 7
  %v617 = vsub.s32 %v414, %v616
  %v618 = vrot.slane %v321, %v617
  %v619 = vlaneseq
  %v620 = vshrl.u32 %v619, 7
  %v621 = vsub.s32 %v414, %v620
  %v622 = vrot.slane %v322, %v621
  %v623 = vlaneseq
  %v624 = vshrl.u32 %v623, 7
  %v625 = vsub.s32 %v414, %v624
  %v626 = vrot.slane %v323, %v625
  %v627 = vlaneseq
  %v628 = vshrl.u32 %v627, 7
  %v629 = vsub.s32 %v414, %v628
  %v630 = vrot.slane %v324, %v629
  %v631 = vlaneseq
  %v632 = vshrl.u32 %v631, 7
  %v633 = vsub.s32 %v414, %v632
  %v634 = vrot.slane %v325, %v633
  %v635 = vlaneseq
  %v636 = vshrl.u32 %v635, 7
  %v637 = vsub.s32 %v414, %v636
  %v638 = vrot.slane %v326, %v637
  %v639 = vlaneseq
  %v640 = vshrl.u32 %v639, 7
  %v641 = vsub.s32 %v414, %v640
  %v642 = vrot.slane %v327, %v641
  %v643 = vlaneseq
  %v644 = vshrl.u32 %v643, 7
  %v645 = vsub.s32 %v414, %v644
  %v646 = vrot.slane %v328, %v645
  %v647 = vlaneseq
  %v648 = vshrl.u32 %v647, 7
  %v649 = vsub.s32 %v414, %v648
  %v650 = vrot.slane %v329, %v649
  %v651 = vlaneseq
  %v652 = vshrl.u32 %v651, 7
  %v653 = vsub.s32 %v414, %v652
  %v654 = vrot.slane %v330, %v653
  %v655 = vlaneseq
  %v656 = vshrl.u32 %v655, 7
  %v657 = vsub.s32 %v414, %v656
  %v658 = vrot.slane %v331, %v657
  %v659 = vlaneseq
  %v660 = vshrl.u32 %v659, 7
  %v661 = vsub.s32 %v414, %v660
  %v662 = vrot.slane %v332, %v661
  %v663 = vlaneseq
  %v664 = vshrl.u32 %v663, 7
  %v665 = vsub.s32 %v414, %v664
  %v666 = vrot.slane %v333, %v665
  %v667 = vlaneseq
  %v668 = vshrl.u32 %v667, 7
  %v669 = vsub.s32 %v414, %v668
  %v670 = vrot.slane %v334, %v669
  %vm671 = vcmask 1041409
  %v672 = vsel %vm671, %v422, %v418
  %vm673 = vcmask 1042434
  %v674 = vsel %vm673, %v426, %v672
  %vm675 = vcmask 1043459
  %v676 = vsel %vm675, %v430, %v674
  %vm677 = vcmask 1044484
  %v678 = vsel %vm677, %v434, %v676
  %vm679 = vcmask 1045509
  %v680 = vsel %vm679, %v438, %v678
  %vm681 = vcmask 1046534
  %v682 = vsel %vm681, %v442, %v680
  %vm683 = vcmask 1047559
  %v684 = vsel %vm683, %v446, %v682
  %v685 = vsel %vm671, %v454, %v450
  %v686 = vsel %vm673, %v458, %v685
  %v687 = vsel %vm675, %v462, %v686
  %v688 = vsel %vm677, %v466, %v687
  %v689 = vsel %vm679, %v470, %v688
  %v690 = vsel %vm681, %v474, %v689
  %v691 = vsel %vm683, %v478, %v690
  %v692 = vsel %vm671, %v486, %v482
  %v693 = vsel %vm673, %v490, %v692
  %v694 = vsel %vm675, %v494, %v693
  %v695 = vsel %vm677, %v498, %v694
  %v696 = vsel %vm679, %v502, %v695
  %v697 = vsel %vm681, %v506, %v696
  %v698 = vsel %vm683, %v510, %v697
  %v699 = vsel %vm671, %v518, %v514
  %v700 = vsel %vm673, %v522, %v699
  %v701 = vsel %vm675, %v526, %v700
  %v702 = vsel %vm677, %v530, %v701
  %v703 = vsel %vm679, %v534, %v702
  %v704 = vsel %vm681, %v538, %v703
  %v705 = vsel %vm683, %v542, %v704
  %v706 = vsel %vm671, %v550, %v546
  %v707 = vsel %vm673, %v554, %v706
  %v708 = vsel %vm675, %v558, %v707
  %v709 = vsel %vm677, %v562, %v708
  %v710 = vsel %vm679, %v566, %v709
  %v711 = vsel %vm681, %v570, %v710
  %v712 = vsel %vm683, %v574, %v711
  %v713 = vsel %vm671, %v582, %v578
  %v714 = vsel %vm673, %v586, %v713
  %v715 = vsel %vm675, %v590, %v714
  %v716 = vsel %vm677, %v594, %v715
  %v717 = vsel %vm679, %v598, %v716
  %v718 = vsel %vm681, %v602, %v717
  %v719 = vsel %vm683, %v606, %v718
  %v720 = vsel %vm671, %v614, %v610
  %v721 = vsel %vm673, %v618, %v720
  %v722 = vsel %vm675, %v622, %v721
  %v723 = vsel %vm677, %v626, %v722
  %v724 = vsel %vm679, %v630, %v723
  %v725 = vsel %vm681, %v634, %v724
  %v726 = vsel %vm683, %v638, %v725
  %v727 = vsel %vm671, %v646, %v642
  %v728 = vsel %vm673, %v650, %v727
  %v729 = vsel %vm675, %v654, %v728
  %v730 = vsel %vm677, %v658, %v729
  %v731 = vsel %vm679, %v662, %v730
  %v732 = vsel %vm681, %v666, %v731
  %v733 = vsel %vm683, %v670, %v732
  %vm742 = vcmask 523264
  %v744 = vsel %vm742, %v335, 0
  %v747 = vsel %vm742, %v336, 0
  %749 = vmatprep.subr.mxu0 0.0
  %750 = vmatpush1.msra.mxu0 0.0
  %751 = vmatprep.subr.mxu0 0.0
  %752 = vmatpush1.msra.mxu0 0.0
  %753 = vmatprep.subr.mxu0 0.0
  %754 = vmatpush1.msra.mxu0 0.0
  %755 = vmatprep.subr.mxu0 0.0
  %756 = vmatpush1.msra.mxu0 0.0
  %757 = vmatprep.subr.mxu0 0.0
  %758 = vmatpush1.msra.mxu0 0.0
  %759 = vmatprep.subr.mxu0 0.0
  %760 = vmatpush1.msra.mxu0 0.0
  %761 = vmatprep.subr.mxu0 0.0
  %762 = vmatpush1.msra.mxu0 0.0
  %763 = vmatprep.subr.mxu0 0.0
  %764 = vmatpush1.msra.mxu0 0.0
  %765 = vmatprep.subr.mxu0 0.0
  %766 = vmatpush1.msra.mxu0 %v733
  %767 = vmatprep.subr.mxu0 0.0
  %768 = vmatpush1.msra.mxu0 %v726
  %769 = vmatprep.subr.mxu0 0.0
  %770 = vmatpush1.msra.mxu0 %v719
  %771 = vmatprep.subr.mxu0 0.0
  %772 = vmatpush1.msra.mxu0 %v712
  %773 = vmatprep.subr.mxu0 0.0
  %774 = vmatpush1.msra.mxu0 %v705
  %775 = vmatprep.subr.mxu0 0.0
  %776 = vmatpush1.msra.mxu0 %v698
  %777 = vmatprep.subr.mxu0 0.0
  %778 = vmatpush1.msra.mxu0 %v691
  %779 = vmatprep.subr.mxu0 0.0
  %780 = vmatpush1.msra.mxu0 %v684
  %781 = vmatprep.subr.mxu0 0.0
  %782 = vmatpush2.msra.mxu0 0.0
  %783 = vmatprep.subr.mxu0 0.0
  %784 = vmatpush2.msra.mxu0 0.0
  %785 = vmatprep.subr.mxu0 0.0
  %786 = vmatpush2.msra.mxu0 0.0
  %787 = vmatprep.subr.mxu0 0.0
  %788 = vmatpush2.msra.mxu0 0.0
  %789 = vmatprep.subr.mxu0 0.0
  %790 = vmatpush2.msra.mxu0 0.0
  %791 = vmatprep.subr.mxu0 0.0
  %792 = vmatpush2.msra.mxu0 0.0
  %793 = vmatprep.subr.mxu0 0.0
  %794 = vmatpush2.msra.mxu0 0.0
  %795 = vmatprep.subr.mxu0 0.0
  %796 = vmatpush2.msra.mxu0 0.0
  %797 = vmatprep.subr.mxu0 0.0
  %798 = vmatpush2.msra.mxu0 0.0
  %799 = vmatprep.subr.mxu0 0.0
  %800 = vmatpush2.msra.mxu0 0.0
  %801 = vmatprep.subr.mxu0 0.0
  %802 = vmatpush2.msra.mxu0 0.0
  %803 = vmatprep.subr.mxu0 0.0
  %804 = vmatpush2.msra.mxu0 0.0
  %805 = vmatprep.subr.mxu0 0.0
  %806 = vmatpush2.msra.mxu0 0.0
  %807 = vmatprep.subr.mxu0 0.0
  %808 = vmatpush2.msra.mxu0 0.0
  %809 = vmatprep.subr.mxu0 0.0
  %810 = vmatpush2.msra.mxu0 0.0
  %811 = vmatprep.subr.mxu0 0.0
  %812 = vmatpush2.msra.mxu0 0.0
  %813 = vmatprep.mubr.f32.mxu0 0.0
  %814 = vmatmul.mubr.f32.gmra.mxu0 %v744
  %v815 = vpop.f32.mrf.mxu0
  %v816 = vadd.f32 %v342, %v815
  %v817 = vpop.f32.mrf.mxu0
  %818 = vmatprep.mubr.f32.mxu0 0.0
  %819 = vmatmul.mubr.f32.gmra.mxu0 %v747
  %v820 = vpop.f32.mrf.mxu0
  %v821 = vadd.f32 %v347, %v820
  %v822 = vpop.f32.mrf.mxu0
  %823 = vdwg.mxu0
  %vm824 = vcmask 64512
  %825 = vst.msk [vmem:[%s3] sm:$0xff] %vm824, %v816
  %vm826 = vcmask 58368
  %827 = vst.msk [vmem:[%s3 + $0x8] sm:$0x3] %vm826, %v821
  // Predicated region
  $region14: #{forward.31} parent=0 // pred_check
    _
  $region15: #{forward.31} parent=0 // pred_check_branch
    %829 = sbr.rel (0) target = $region17
  $region16: #{forward.31} parent=0 // pred_region
    _
  $region17: #{forward.31} parent=0 // pred_fallthru
    _
  // Predicated region
  $region18: #{forward.31} parent=0 // pred_check
    _
  $region19: #{forward.31} parent=0 // pred_check_branch
    %831 = sbr.rel (0) target = $region21
  $region20: #{forward.31} parent=0 // pred_region
    _
  $region21: #{forward.31} parent=0 // pred_fallthru
    _

</llo_original>
